<compile_context>
chip_gen: v6e
topology: v6e:2x2x1
jax: 0.10.0
libtpu: 0.0.40
codegen_flags: <defaults>
</compile_context>

<pallas_src>
import functools

import jax
import jax.numpy as jnp
from jax import lax
from jax.experimental import pallas as pl
from jax.experimental.pallas import tpu as pltpu


# ---------------------------------------------------------------------------
# In-kernel helpers
# ---------------------------------------------------------------------------
def _layer_norm(x, g, b, eps=1e-5):
    # nn.LayerNorm over the last dim (biased variance); all math in f32.
    mean = jnp.mean(x, axis=-1, keepdims=True)
    var = jnp.mean((x - mean) ** 2, axis=-1, keepdims=True)
    return (x - mean) * lax.rsqrt(var + eps) * g + b


# ---------------------------------------------------------------------------
# Fused kernel: all transformer blocks (grid over layers) + final LN + LM head
# ---------------------------------------------------------------------------
def _gpt_kernel(x_ref, wqkv_ref, wp_ref, bp_ref,
                ln1g_ref, ln1b_ref, ln2g_ref, ln2b_ref,
                w1_ref, b1_ref, w2_ref, b2_ref,
                lng_ref, lnb_ref, wh_ref, bh_ref,
                out_ref, x_acc, *, n_head, batch, seq):
    layer = pl.program_id(0)

    # Load the input activations into the resident VMEM accumulator once.
    @pl.when(layer == 0)
    def _():
        x_acc[...] = x_ref[...].astype(jnp.float32)

    x = x_acc[...]                               # (B*T, C) f32, resident
    BT, C = x.shape
    hs = C // n_head
    scale = hs ** -0.5

    # ---- multi-head causal self-attention on LN1(x) ----
    h = _layer_norm(x, ln1g_ref[0], ln1b_ref[0]).astype(jnp.bfloat16)
    # Fused Q/K/V projection: one (BT, C) @ (C, 3C) matmul.
    qkv = jnp.dot(h, wqkv_ref[0], preferred_element_type=jnp.float32)

    # Additive causal bias (0 on/below diagonal, -1e30 above), shared by heads.
    row = lax.broadcasted_iota(jnp.int32, (seq, seq), 0)
    col = lax.broadcasted_iota(jnp.int32, (seq, seq), 1)
    mask_bias = jnp.where(col <= row, 0.0, -1e30).astype(jnp.float32)[None]

    wp = wp_ref[0]                               # (C, C) bf16
    sa = jnp.zeros((BT, C), jnp.float32)
    for hi in range(n_head):                     # n_head is small & static
        lo = hi * hs
        # Fold the 1/sqrt(hs) scale into q (cheaper than scaling (B,T,T) wei).
        q_h = (qkv[:, lo:lo + hs] * scale).astype(jnp.bfloat16).reshape(batch, seq, hs)
        k_h = qkv[:, C + lo:C + lo + hs].astype(jnp.bfloat16).reshape(batch, seq, hs)
        v_h = qkv[:, 2 * C + lo:2 * C + lo + hs].astype(jnp.bfloat16).reshape(batch, seq, hs)
        wei = jnp.einsum('btd,bsd->bts', q_h, k_h,
                         preferred_element_type=jnp.float32) + mask_bias
        wei = wei - jnp.max(wei, axis=-1, keepdims=True)
        p = jnp.exp(wei)
        p = p * pl.reciprocal(jnp.sum(p, axis=-1, keepdims=True), approx=True)
        o_h = jnp.einsum('bts,bsd->btd', p.astype(jnp.bfloat16), v_h,
                         preferred_element_type=jnp.float32)
        # Accumulate the output projection per head (no lane-axis concat).
        sa = sa + jnp.dot(o_h.reshape(BT, hs).astype(jnp.bfloat16),
                          wp[lo:lo + hs, :],
                          preferred_element_type=jnp.float32)
    x = x + sa + bp_ref[0]

    # ---- feed forward on LN2(x) ----
    h2 = _layer_norm(x, ln2g_ref[0], ln2b_ref[0]).astype(jnp.bfloat16)
    f = jnp.dot(h2, w1_ref[0], preferred_element_type=jnp.float32) + b1_ref[0]
    f = jnp.maximum(f, 0.0).astype(jnp.bfloat16)          # ReLU
    f = jnp.dot(f, w2_ref[0], preferred_element_type=jnp.float32) + b2_ref[0]
    x = x + f
    x_acc[...] = x

    # ---- final LayerNorm + LM head, fused into the last grid step ----
    @pl.when(layer == pl.num_programs(0) - 1)
    def _():
        hf = _layer_norm(x, lng_ref[...], lnb_ref[...]).astype(jnp.bfloat16)
        logits = jnp.dot(hf, wh_ref[...],
                         preferred_element_type=jnp.float32) + bh_ref[...]
        out_ref[...] = logits.astype(out_ref.dtype)        # lane-dense store


# ---------------------------------------------------------------------------
# Parameter init (mirrors GPT._init_weights: linear/embedding ~ N(0, 0.02),
# biases 0, LayerNorm gamma=1 / beta=0).  Per-layer weights are stacked on a
# leading layer axis; matmul weights stored in bf16, biases/LN params in f32.
# ---------------------------------------------------------------------------
def init_params(key, vocab_size, n_embed, n_head, n_layer, block_size):
    C = n_embed
    vpad = ((vocab_size + 127) // 128) * 128
    keys = jax.random.split(key, 7)

    def lin(k, *shape):
        return jax.random.normal(k, shape, jnp.float32) * 0.02

    params = {
        "embed": lin(keys[0], vocab_size, C),
        "pos_embed": lin(keys[1], block_size, C),
        # packed per-head q/k/v (bias=False): columns = [Wq | Wk | Wv]
        "wqkv": lin(keys[2], n_layer, C, 3 * C).astype(jnp.bfloat16),
        "wp":   lin(keys[3], n_layer, C, C).astype(jnp.bfloat16),
        "bp":   jnp.zeros((n_layer, 1, C), jnp.float32),
        "ln1g": jnp.ones((n_layer, 1, C), jnp.float32),
        "ln1b": jnp.zeros((n_layer, 1, C), jnp.float32),
        "ln2g": jnp.ones((n_layer, 1, C), jnp.float32),
        "ln2b": jnp.zeros((n_layer, 1, C), jnp.float32),
        "w1":   lin(keys[4], n_layer, C, 4 * C).astype(jnp.bfloat16),
        "b1":   jnp.zeros((n_layer, 1, 4 * C), jnp.float32),
        "w2":   lin(keys[5], n_layer, 4 * C, C).astype(jnp.bfloat16),
        "b2":   jnp.zeros((n_layer, 1, C), jnp.float32),
        "lng":  jnp.ones((1, C), jnp.float32),
        "lnb":  jnp.zeros((1, C), jnp.float32),
        # LM head padded to a multiple of 128 lanes; extra columns are zero
        # and sliced off in the wrapper (unmasked vst on the output path).
        "w_head": jnp.pad(lin(keys[6], C, vocab_size),
                          ((0, 0), (0, vpad - vocab_size))).astype(jnp.bfloat16),
        "b_head": jnp.zeros((1, vpad), jnp.float32),
    }
    return params


# ---------------------------------------------------------------------------
# Full forward (targets=None path -> logits only, loss is None)
# ---------------------------------------------------------------------------
def gpt_forward(idx, params, n_head, vocab_size):
    B, T = idx.shape
    C = params["embed"].shape[1]
    L = params["wqkv"].shape[0]
    vpad = params["w_head"].shape[1]

    tok_emb = params["embed"][idx]                 # (B, T, C) gather (glue)
    pos_emb = params["pos_embed"][:T]              # (T, C)
    x = (tok_emb + pos_emb[None, :, :]).reshape(B * T, C).astype(jnp.float32)

    stacked = [params["wqkv"], params["wp"], params["bp"],
               params["ln1g"], params["ln1b"], params["ln2g"], params["ln2b"],
               params["w1"], params["b1"], params["w2"], params["b2"]]
    final = [params["lng"], params["lnb"], params["w_head"], params["b_head"]]

    in_specs = [pl.BlockSpec((B * T, C), lambda l: (0, 0))]
    in_specs += [pl.BlockSpec((1,) + w.shape[1:], lambda l: (l, 0, 0))
                 for w in stacked]
    in_specs += [pl.BlockSpec(w.shape, lambda l: (0, 0)) for w in final]

    kernel = functools.partial(_gpt_kernel, n_head=n_head, batch=B, seq=T)
    logits_pad = pl.pallas_call(
        kernel,
        out_shape=jax.ShapeDtypeStruct((B * T, vpad), jnp.float32),
        grid=(L,),
        in_specs=in_specs,
        out_specs=pl.BlockSpec((B * T, vpad), lambda l: (0, 0)),
        scratch_shapes=[pltpu.VMEM((B * T, C), jnp.float32)],
        compiler_params=pltpu.CompilerParams(
            dimension_semantics=("arbitrary",)),
    )(x, *stacked, *final)

    logits = logits_pad[:, :vocab_size].reshape(B, T, vocab_size)
    # TODO(synk): cross-entropy loss branch (targets != None) and generate()
    # sampling are host-side control flow, not implemented in the kernel.
    return logits, None


# ---------------------------------------------------------------------------
# Pure-JAX reference (mirrors the kernel's math & dtype casts) for validation
# ---------------------------------------------------------------------------
def gpt_forward_ref(idx, params, n_head, vocab_size):
    B, T = idx.shape
    C = params["embed"].shape[1]
    L = params["wqkv"].shape[0]
    hs = C // n_head
    scale = hs ** -0.5

    def ln(z, g, b, eps=1e-5):
        m = jnp.mean(z, -1, keepdims=True)
        v = jnp.mean((z - m) ** 2, -1, keepdims=True)
        return (z - m) * lax.rsqrt(v + eps) * g + b

    tok = params["embed"][idx]
    pos = params["pos_embed"][:T]
    x = (tok + pos[None]).reshape(B * T, C).astype(jnp.float32)
    causal = jnp.tril(jnp.ones((T, T), bool))[None]

    for l in range(L):
        h = ln(x, params["ln1g"][l], params["ln1b"][l]).astype(jnp.bfloat16)
        qkv = jnp.dot(h, params["wqkv"][l], preferred_element_type=jnp.float32)
        sa = jnp.zeros((B * T, C), jnp.float32)
        for hi in range(n_head):
            lo = hi * hs
            q = (qkv[:, lo:lo + hs] * scale).astype(jnp.bfloat16).reshape(B, T, hs)
            k = qkv[:, C + lo:C + lo + hs].astype(jnp.bfloat16).reshape(B, T, hs)
            v = qkv[:, 2 * C + lo:2 * C + lo + hs].astype(jnp.bfloat16).reshape(B, T, hs)
            wei = jnp.einsum('btd,bsd->bts', q, k,
                             preferred_element_type=jnp.float32)
            wei = jnp.where(causal, wei, -jnp.inf)
            p = jax.nn.softmax(wei, axis=-1)
            o = jnp.einsum('bts,bsd->btd', p.astype(jnp.bfloat16), v,
                           preferred_element_type=jnp.float32)
            sa = sa + jnp.dot(o.reshape(B * T, hs).astype(jnp.bfloat16),
                              params["wp"][l][lo:lo + hs, :],
                              preferred_element_type=jnp.float32)
        x = x + sa + params["bp"][l]
        h2 = ln(x, params["ln2g"][l], params["ln2b"][l]).astype(jnp.bfloat16)
        f = jnp.dot(h2, params["w1"][l], preferred_element_type=jnp.float32) + params["b1"][l]
        f = jnp.maximum(f, 0.0).astype(jnp.bfloat16)
        f = jnp.dot(f, params["w2"][l], preferred_element_type=jnp.float32) + params["b2"][l]
        x = x + f

    hf = ln(x, params["lng"], params["lnb"]).astype(jnp.bfloat16)
    logits = jnp.dot(hf, params["w_head"],
                     preferred_element_type=jnp.float32) + params["b_head"]
    return logits[:, :vocab_size].reshape(B, T, vocab_size)


# ---------------------------------------------------------------------------
if __name__ == "__main__":
    # Small shapes consistent with the module structure.
    vocab_size = 65
    n_embed = 128
    n_head = 4
    n_layer = 2
    block_size = 128
    B, T = 2, 128

    key = jax.random.PRNGKey(0)
    pkey, ikey = jax.random.split(key)
    params = init_params(pkey, vocab_size, n_embed, n_head, n_layer, block_size)
    idx = jax.random.randint(ikey, (B, T), 0, vocab_size, dtype=jnp.int32)

    logits, loss = gpt_forward(idx, params, n_head, vocab_size)
    logits = jax.block_until_ready(logits)
    assert logits.shape == (B, T, vocab_size)
    assert loss is None
    assert bool(jnp.isfinite(logits).all())

    ref = jax.block_until_ready(gpt_forward_ref(idx, params, n_head, vocab_size))
    max_diff = float(jnp.max(jnp.abs(logits - ref)))
    assert max_diff < 2e-2, f"kernel/ref mismatch: max|diff| = {max_diff}"

    print("KERNEL_OK")
</pallas_src>

<mosaic_0001>
module attributes {stable_mosaic.version = 11 : i64} {
  func.func @_gpt_kernel(%arg0: i32, %arg1: memref<256x128xf32, #tpu.memory_space<vmem>>, %arg2: memref<1x128x384xbf16, #tpu.memory_space<vmem>>, %arg3: memref<1x128x128xbf16, #tpu.memory_space<vmem>>, %arg4: memref<1x1x128xf32, #tpu.memory_space<vmem>>, %arg5: memref<1x1x128xf32, #tpu.memory_space<vmem>>, %arg6: memref<1x1x128xf32, #tpu.memory_space<vmem>>, %arg7: memref<1x1x128xf32, #tpu.memory_space<vmem>>, %arg8: memref<1x1x128xf32, #tpu.memory_space<vmem>>, %arg9: memref<1x128x512xbf16, #tpu.memory_space<vmem>>, %arg10: memref<1x1x512xf32, #tpu.memory_space<vmem>>, %arg11: memref<1x512x128xbf16, #tpu.memory_space<vmem>>, %arg12: memref<1x1x128xf32, #tpu.memory_space<vmem>>, %arg13: memref<1x128xf32, #tpu.memory_space<vmem>>, %arg14: memref<1x128xf32, #tpu.memory_space<vmem>>, %arg15: memref<128x128xbf16, #tpu.memory_space<vmem>>, %arg16: memref<1x128xf32, #tpu.memory_space<vmem>>, %arg17: memref<256x128xf32, #tpu.memory_space<vmem>>, %arg18: memref<256x128xf32, #tpu.memory_space<vmem>>) attributes {dimension_semantics = [#tpu.dimension_semantics<arbitrary>], iteration_bounds = array<i64: 2>, scalar_prefetch = 0 : i64, scratch_operands = 1 : i64, tpu.core_type = #tpu.core_type<tc>, window_params = [{pipeline_mode = #tpu.pipeline_mode<synchronous>, transform_indices = @transform_0, window_bounds = array<i64: 256, 128>}, {transform_indices = @transform_1, window_bounds = array<i64: 1, 128, 384>}, {transform_indices = @transform_2, window_bounds = array<i64: 1, 128, 128>}, {transform_indices = @transform_3, window_bounds = array<i64: 1, 1, 128>}, {transform_indices = @transform_4, window_bounds = array<i64: 1, 1, 128>}, {transform_indices = @transform_5, window_bounds = array<i64: 1, 1, 128>}, {transform_indices = @transform_6, window_bounds = array<i64: 1, 1, 128>}, {transform_indices = @transform_7, window_bounds = array<i64: 1, 1, 128>}, {transform_indices = @transform_8, window_bounds = array<i64: 1, 128, 512>}, {transform_indices = @transform_9, window_bounds = array<i64: 1, 1, 512>}, {transform_indices = @transform_10, window_bounds = array<i64: 1, 512, 128>}, {transform_indices = @transform_11, window_bounds = array<i64: 1, 1, 128>}, {pipeline_mode = #tpu.pipeline_mode<synchronous>, transform_indices = @transform_12, window_bounds = array<i64: 1, 128>}, {pipeline_mode = #tpu.pipeline_mode<synchronous>, transform_indices = @transform_13, window_bounds = array<i64: 1, 128>}, {pipeline_mode = #tpu.pipeline_mode<synchronous>, transform_indices = @transform_14, window_bounds = array<i64: 128, 128>}, {pipeline_mode = #tpu.pipeline_mode<synchronous>, transform_indices = @transform_15, window_bounds = array<i64: 1, 128>}, {pipeline_mode = #tpu.pipeline_mode<synchronous>, transform_indices = @transform_16, window_bounds = array<i64: 256, 128>}]} {
    %c0_i32 = arith.constant 0 : i32
    %0 = arith.cmpi eq, %arg0, %c0_i32 : i32
    %1 = arith.extui %0 : i1 to i32
    %c0_i32_0 = arith.constant 0 : i32
    %2 = arith.cmpi ne, %1, %c0_i32_0 : i32
    scf.if %2 {
      %c0_78 = arith.constant 0 : index
      %c0_79 = arith.constant 0 : index
      %222 = vector.load %arg1[%c0_78, %c0_79] : memref<256x128xf32, #tpu.memory_space<vmem>>, vector<256x128xf32>
      %c0_80 = arith.constant 0 : index
      %c0_81 = arith.constant 0 : index
      %223 = vector.load %arg18[%c0_80, %c0_81] : memref<256x128xf32, #tpu.memory_space<vmem>>, vector<256x128xf32>
      tpu.vector_store %arg18[%c0_80, %c0_81], %222 {strides = array<i32>} : memref<256x128xf32, #tpu.memory_space<vmem>>, vector<256x128xf32>,
    } else {
    }
    %c0 = arith.constant 0 : index
    %c0_1 = arith.constant 0 : index
    %3 = vector.load %arg18[%c0, %c0_1] : memref<256x128xf32, #tpu.memory_space<vmem>>, vector<256x128xf32>
    %c0_2 = arith.constant 0 : index
    %c0_3 = arith.constant 0 : index
    %c0_4 = arith.constant 0 : index
    %4 = vector.load %arg5[%c0_2, %c0_3, %c0_4] : memref<1x1x128xf32, #tpu.memory_space<vmem>>, vector<1x1x128xf32>
    %5 = vector.shape_cast %4 : vector<1x1x128xf32> to vector<1x128xf32>
    %c0_5 = arith.constant 0 : index
    %c0_6 = arith.constant 0 : index
    %c0_7 = arith.constant 0 : index
    %6 = vector.load %arg6[%c0_5, %c0_6, %c0_7] : memref<1x1x128xf32, #tpu.memory_space<vmem>>, vector<1x1x128xf32>
    %7 = vector.shape_cast %6 : vector<1x1x128xf32> to vector<1x128xf32>
    %cst = arith.constant dense<0.000000e+00> : vector<256xf32>
    %8 = vector.multi_reduction <add>, %3, %cst [1] : vector<256x128xf32> to vector<256xf32>
    %9 = vector.shape_cast %8 : vector<256xf32> to vector<256x1xf32>
    %cst_8 = arith.constant 1.280000e+02 : f32
    %10 = vector.broadcast %cst_8 : f32 to vector<256x1xf32>
    %11 = arith.divf %9, %10 : vector<256x1xf32>
    %12 = vector.broadcast %11 : vector<256x1xf32> to vector<256x128xf32>
    %13 = arith.subf %3, %12 : vector<256x128xf32>
    %14 = arith.mulf %13, %13 : vector<256x128xf32>
    %cst_9 = arith.constant dense<0.000000e+00> : vector<256xf32>
    %15 = vector.multi_reduction <add>, %14, %cst_9 [1] : vector<256x128xf32> to vector<256xf32>
    %16 = vector.shape_cast %15 : vector<256xf32> to vector<256x1xf32>
    %cst_10 = arith.constant 1.280000e+02 : f32
    %17 = vector.broadcast %cst_10 : f32 to vector<256x1xf32>
    %18 = arith.divf %16, %17 : vector<256x1xf32>
    %19 = vector.broadcast %11 : vector<256x1xf32> to vector<256x128xf32>
    %20 = arith.subf %3, %19 : vector<256x128xf32>
    %cst_11 = arith.constant 9.99999974E-6 : f32
    %21 = vector.broadcast %cst_11 : f32 to vector<256x1xf32>
    %22 = arith.addf %18, %21 : vector<256x1xf32>
    %23 = math.rsqrt %22 : vector<256x1xf32>
    %24 = vector.broadcast %23 : vector<256x1xf32> to vector<256x128xf32>
    %25 = arith.mulf %20, %24 : vector<256x128xf32>
    %26 = vector.broadcast %5 : vector<1x128xf32> to vector<256x128xf32>
    %27 = arith.mulf %25, %26 : vector<256x128xf32>
    %28 = vector.broadcast %7 : vector<1x128xf32> to vector<256x128xf32>
    %29 = arith.addf %27, %28 : vector<256x128xf32>
    %30 = arith.truncf %29 : vector<256x128xf32> to vector<256x128xbf16>
    %c0_12 = arith.constant 0 : index
    %c0_13 = arith.constant 0 : index
    %c0_14 = arith.constant 0 : index
    %31 = vector.load %arg2[%c0_12, %c0_13, %c0_14] : memref<1x128x384xbf16, #tpu.memory_space<vmem>>, vector<1x128x384xbf16>
    %32 = vector.shape_cast %31 : vector<1x128x384xbf16> to vector<128x384xbf16>
    %cst_15 = arith.constant dense<0.000000e+00> : vector<256x384xf32>
    %33 = tpu.matmul %30, %32, %cst_15 {dimension_numbers = #tpu.dot_dimension_numbers<[1], [0], [0], [1], [0, 0, 1, 1], [], []>} : vector<256x128xbf16>, vector<128x384xbf16>, vector<256x384xf32> -> vector<256x384xf32>
    %34 = tpu.iota {dimensions = array<i32: 0>} : vector<128x128xi32>
    %35 = tpu.iota {dimensions = array<i32: 1>} : vector<128x128xi32>
    %36 = arith.cmpi sle, %35, %34 : vector<128x128xi32>
    %cst_16 = arith.constant 0.000000e+00 : f32
    %cst_17 = arith.constant -1.000000e+30 : f32
    %37 = vector.broadcast %cst_16 : f32 to vector<128x128xf32>
    %38 = vector.broadcast %cst_17 : f32 to vector<128x128xf32>
    %39 = arith.select %36, %37, %38 : vector<128x128xi1>, vector<128x128xf32>
    %40 = vector.shape_cast %39 : vector<128x128xf32> to vector<1x128x128xf32>
    %c0_18 = arith.constant 0 : index
    %c0_19 = arith.constant 0 : index
    %c0_20 = arith.constant 0 : index
    %41 = vector.load %arg3[%c0_18, %c0_19, %c0_20] : memref<1x128x128xbf16, #tpu.memory_space<vmem>>, vector<1x128x128xbf16>
    %42 = vector.shape_cast %41 : vector<1x128x128xbf16> to vector<128x128xbf16>
    %cst_21 = arith.constant 0.000000e+00 : f32
    %43 = vector.broadcast %cst_21 : f32 to vector<256x128xf32>
    %44 = vector.extract_strided_slice %33 {offsets = [0, 0], sizes = [256, 32], strides = [1, 1]} : vector<256x384xf32> to vector<256x32xf32>
    %cst_22 = arith.constant 0.176776692 : f32
    %45 = vector.broadcast %cst_22 : f32 to vector<256x32xf32>
    %46 = arith.mulf %44, %45 : vector<256x32xf32>
    %47 = arith.truncf %46 : vector<256x32xf32> to vector<256x32xbf16>
    %48 = vector.shape_cast %47 : vector<256x32xbf16> to vector<2x128x32xbf16>
    %49 = vector.extract_strided_slice %33 {offsets = [0, 128], sizes = [256, 32], strides = [1, 1]} : vector<256x384xf32> to vector<256x32xf32>
    %50 = arith.truncf %49 : vector<256x32xf32> to vector<256x32xbf16>
    %51 = vector.shape_cast %50 : vector<256x32xbf16> to vector<2x128x32xbf16>
    %52 = vector.extract_strided_slice %33 {offsets = [0, 256], sizes = [256, 32], strides = [1, 1]} : vector<256x384xf32> to vector<256x32xf32>
    %53 = arith.truncf %52 : vector<256x32xf32> to vector<256x32xbf16>
    %54 = vector.shape_cast %53 : vector<256x32xbf16> to vector<2x128x32xbf16>
    "tpu.trace_start"() <{level = 10 : i32, message = "btd,bsd->bts"}> : () -> ()
    %cst_23 = arith.constant dense<0.000000e+00> : vector<2x128x128xf32>
    %55 = tpu.matmul %48, %51, %cst_23 {dimension_numbers = #tpu.dot_dimension_numbers<[2], [2], [1], [1], [0, 0, 0, 1, 1, 1], [0], [0]>} : vector<2x128x32xbf16>, vector<2x128x32xbf16>, vector<2x128x128xf32> -> vector<2x128x128xf32>
    "tpu.trace_stop"() : () -> ()
    %56 = vector.broadcast %40 : vector<1x128x128xf32> to vector<2x128x128xf32>
    %57 = arith.addf %55, %56 : vector<2x128x128xf32>
    %cst_24 = arith.constant dense<0xFF800000> : vector<2x128xf32>
    %58 = vector.multi_reduction <maximumf>, %57, %cst_24 [2] : vector<2x128x128xf32> to vector<2x128xf32>
    %59 = vector.shape_cast %58 : vector<2x128xf32> to vector<2x128x1xf32>
    %60 = vector.broadcast %59 : vector<2x128x1xf32> to vector<2x128x128xf32>
    %61 = arith.subf %57, %60 : vector<2x128x128xf32>
    %62 = math.exp %61 : vector<2x128x128xf32>
    %cst_25 = arith.constant dense<0.000000e+00> : vector<2x128xf32>
    %63 = vector.multi_reduction <add>, %62, %cst_25 [2] : vector<2x128x128xf32> to vector<2x128xf32>
    %64 = vector.shape_cast %63 : vector<2x128xf32> to vector<2x128x1xf32>
    %65 = tpu.reciprocal %64 {approx = true} : vector<2x128x1xf32> -> vector<2x128x1xf32>
    %66 = vector.broadcast %65 : vector<2x128x1xf32> to vector<2x128x128xf32>
    %67 = arith.mulf %62, %66 : vector<2x128x128xf32>
    %68 = arith.truncf %67 : vector<2x128x128xf32> to vector<2x128x128xbf16>
    "tpu.trace_start"() <{level = 10 : i32, message = "bts,bsd->btd"}> : () -> ()
    %cst_26 = arith.constant dense<0.000000e+00> : vector<2x128x32xf32>
    %69 = tpu.matmul %68, %54, %cst_26 {dimension_numbers = #tpu.dot_dimension_numbers<[2], [1], [1], [2], [0, 0, 0, 1, 1, 2], [0], [0]>} : vector<2x128x128xbf16>, vector<2x128x32xbf16>, vector<2x128x32xf32> -> vector<2x128x32xf32>
    "tpu.trace_stop"() : () -> ()
    %70 = vector.shape_cast %69 : vector<2x128x32xf32> to vector<256x32xf32>
    %71 = arith.truncf %70 : vector<256x32xf32> to vector<256x32xbf16>
    %72 = vector.extract_strided_slice %42 {offsets = [0, 0], sizes = [32, 128], strides = [1, 1]} : vector<128x128xbf16> to vector<32x128xbf16>
    %cst_27 = arith.constant dense<0.000000e+00> : vector<256x128xf32>
    %73 = tpu.matmul %71, %72, %cst_27 {dimension_numbers = #tpu.dot_dimension_numbers<[1], [0], [0], [1], [0, 0, 1, 1], [], []>} : vector<256x32xbf16>, vector<32x128xbf16>, vector<256x128xf32> -> vector<256x128xf32>
    %74 = arith.addf %43, %73 : vector<256x128xf32>
    %75 = vector.extract_strided_slice %33 {offsets = [0, 32], sizes = [256, 32], strides = [1, 1]} : vector<256x384xf32> to vector<256x32xf32>
    %cst_28 = arith.constant 0.176776692 : f32
    %76 = vector.broadcast %cst_28 : f32 to vector<256x32xf32>
    %77 = arith.mulf %75, %76 : vector<256x32xf32>
    %78 = arith.truncf %77 : vector<256x32xf32> to vector<256x32xbf16>
    %79 = vector.shape_cast %78 : vector<256x32xbf16> to vector<2x128x32xbf16>
    %80 = vector.extract_strided_slice %33 {offsets = [0, 160], sizes = [256, 32], strides = [1, 1]} : vector<256x384xf32> to vector<256x32xf32>
    %81 = arith.truncf %80 : vector<256x32xf32> to vector<256x32xbf16>
    %82 = vector.shape_cast %81 : vector<256x32xbf16> to vector<2x128x32xbf16>
    %83 = vector.extract_strided_slice %33 {offsets = [0, 288], sizes = [256, 32], strides = [1, 1]} : vector<256x384xf32> to vector<256x32xf32>
    %84 = arith.truncf %83 : vector<256x32xf32> to vector<256x32xbf16>
    %85 = vector.shape_cast %84 : vector<256x32xbf16> to vector<2x128x32xbf16>
    "tpu.trace_start"() <{level = 10 : i32, message = "btd,bsd->bts"}> : () -> ()
    %cst_29 = arith.constant dense<0.000000e+00> : vector<2x128x128xf32>
    %86 = tpu.matmul %79, %82, %cst_29 {dimension_numbers = #tpu.dot_dimension_numbers<[2], [2], [1], [1], [0, 0, 0, 1, 1, 1], [0], [0]>} : vector<2x128x32xbf16>, vector<2x128x32xbf16>, vector<2x128x128xf32> -> vector<2x128x128xf32>
    "tpu.trace_stop"() : () -> ()
    %87 = vector.broadcast %40 : vector<1x128x128xf32> to vector<2x128x128xf32>
    %88 = arith.addf %86, %87 : vector<2x128x128xf32>
    %cst_30 = arith.constant dense<0xFF800000> : vector<2x128xf32>
    %89 = vector.multi_reduction <maximumf>, %88, %cst_30 [2] : vector<2x128x128xf32> to vector<2x128xf32>
    %90 = vector.shape_cast %89 : vector<2x128xf32> to vector<2x128x1xf32>
    %91 = vector.broadcast %90 : vector<2x128x1xf32> to vector<2x128x128xf32>
    %92 = arith.subf %88, %91 : vector<2x128x128xf32>
    %93 = math.exp %92 : vector<2x128x128xf32>
    %cst_31 = arith.constant dense<0.000000e+00> : vector<2x128xf32>
    %94 = vector.multi_reduction <add>, %93, %cst_31 [2] : vector<2x128x128xf32> to vector<2x128xf32>
    %95 = vector.shape_cast %94 : vector<2x128xf32> to vector<2x128x1xf32>
    %96 = tpu.reciprocal %95 {approx = true} : vector<2x128x1xf32> -> vector<2x128x1xf32>
    %97 = vector.broadcast %96 : vector<2x128x1xf32> to vector<2x128x128xf32>
    %98 = arith.mulf %93, %97 : vector<2x128x128xf32>
    %99 = arith.truncf %98 : vector<2x128x128xf32> to vector<2x128x128xbf16>
    "tpu.trace_start"() <{level = 10 : i32, message = "bts,bsd->btd"}> : () -> ()
    %cst_32 = arith.constant dense<0.000000e+00> : vector<2x128x32xf32>
    %100 = tpu.matmul %99, %85, %cst_32 {dimension_numbers = #tpu.dot_dimension_numbers<[2], [1], [1], [2], [0, 0, 0, 1, 1, 2], [0], [0]>} : vector<2x128x128xbf16>, vector<2x128x32xbf16>, vector<2x128x32xf32> -> vector<2x128x32xf32>
    "tpu.trace_stop"() : () -> ()
    %101 = vector.shape_cast %100 : vector<2x128x32xf32> to vector<256x32xf32>
    %102 = arith.truncf %101 : vector<256x32xf32> to vector<256x32xbf16>
    %103 = vector.extract_strided_slice %42 {offsets = [32, 0], sizes = [32, 128], strides = [1, 1]} : vector<128x128xbf16> to vector<32x128xbf16>
    %cst_33 = arith.constant dense<0.000000e+00> : vector<256x128xf32>
    %104 = tpu.matmul %102, %103, %cst_33 {dimension_numbers = #tpu.dot_dimension_numbers<[1], [0], [0], [1], [0, 0, 1, 1], [], []>} : vector<256x32xbf16>, vector<32x128xbf16>, vector<256x128xf32> -> vector<256x128xf32>
    %105 = arith.addf %74, %104 : vector<256x128xf32>
    %106 = vector.extract_strided_slice %33 {offsets = [0, 64], sizes = [256, 32], strides = [1, 1]} : vector<256x384xf32> to vector<256x32xf32>
    %cst_34 = arith.constant 0.176776692 : f32
    %107 = vector.broadcast %cst_34 : f32 to vector<256x32xf32>
    %108 = arith.mulf %106, %107 : vector<256x32xf32>
    %109 = arith.truncf %108 : vector<256x32xf32> to vector<256x32xbf16>
    %110 = vector.shape_cast %109 : vector<256x32xbf16> to vector<2x128x32xbf16>
    %111 = vector.extract_strided_slice %33 {offsets = [0, 192], sizes = [256, 32], strides = [1, 1]} : vector<256x384xf32> to vector<256x32xf32>
    %112 = arith.truncf %111 : vector<256x32xf32> to vector<256x32xbf16>
    %113 = vector.shape_cast %112 : vector<256x32xbf16> to vector<2x128x32xbf16>
    %114 = vector.extract_strided_slice %33 {offsets = [0, 320], sizes = [256, 32], strides = [1, 1]} : vector<256x384xf32> to vector<256x32xf32>
    %115 = arith.truncf %114 : vector<256x32xf32> to vector<256x32xbf16>
    %116 = vector.shape_cast %115 : vector<256x32xbf16> to vector<2x128x32xbf16>
    "tpu.trace_start"() <{level = 10 : i32, message = "btd,bsd->bts"}> : () -> ()
    %cst_35 = arith.constant dense<0.000000e+00> : vector<2x128x128xf32>
    %117 = tpu.matmul %110, %113, %cst_35 {dimension_numbers = #tpu.dot_dimension_numbers<[2], [2], [1], [1], [0, 0, 0, 1, 1, 1], [0], [0]>} : vector<2x128x32xbf16>, vector<2x128x32xbf16>, vector<2x128x128xf32> -> vector<2x128x128xf32>
    "tpu.trace_stop"() : () -> ()
    %118 = vector.broadcast %40 : vector<1x128x128xf32> to vector<2x128x128xf32>
    %119 = arith.addf %117, %118 : vector<2x128x128xf32>
    %cst_36 = arith.constant dense<0xFF800000> : vector<2x128xf32>
    %120 = vector.multi_reduction <maximumf>, %119, %cst_36 [2] : vector<2x128x128xf32> to vector<2x128xf32>
    %121 = vector.shape_cast %120 : vector<2x128xf32> to vector<2x128x1xf32>
    %122 = vector.broadcast %121 : vector<2x128x1xf32> to vector<2x128x128xf32>
    %123 = arith.subf %119, %122 : vector<2x128x128xf32>
    %124 = math.exp %123 : vector<2x128x128xf32>
    %cst_37 = arith.constant dense<0.000000e+00> : vector<2x128xf32>
    %125 = vector.multi_reduction <add>, %124, %cst_37 [2] : vector<2x128x128xf32> to vector<2x128xf32>
    %126 = vector.shape_cast %125 : vector<2x128xf32> to vector<2x128x1xf32>
    %127 = tpu.reciprocal %126 {approx = true} : vector<2x128x1xf32> -> vector<2x128x1xf32>
    %128 = vector.broadcast %127 : vector<2x128x1xf32> to vector<2x128x128xf32>
    %129 = arith.mulf %124, %128 : vector<2x128x128xf32>
    %130 = arith.truncf %129 : vector<2x128x128xf32> to vector<2x128x128xbf16>
    "tpu.trace_start"() <{level = 10 : i32, message = "bts,bsd->btd"}> : () -> ()
    %cst_38 = arith.constant dense<0.000000e+00> : vector<2x128x32xf32>
    %131 = tpu.matmul %130, %116, %cst_38 {dimension_numbers = #tpu.dot_dimension_numbers<[2], [1], [1], [2], [0, 0, 0, 1, 1, 2], [0], [0]>} : vector<2x128x128xbf16>, vector<2x128x32xbf16>, vector<2x128x32xf32> -> vector<2x128x32xf32>
    "tpu.trace_stop"() : () -> ()
    %132 = vector.shape_cast %131 : vector<2x128x32xf32> to vector<256x32xf32>
    %133 = arith.truncf %132 : vector<256x32xf32> to vector<256x32xbf16>
    %134 = vector.extract_strided_slice %42 {offsets = [64, 0], sizes = [32, 128], strides = [1, 1]} : vector<128x128xbf16> to vector<32x128xbf16>
    %cst_39 = arith.constant dense<0.000000e+00> : vector<256x128xf32>
    %135 = tpu.matmul %133, %134, %cst_39 {dimension_numbers = #tpu.dot_dimension_numbers<[1], [0], [0], [1], [0, 0, 1, 1], [], []>} : vector<256x32xbf16>, vector<32x128xbf16>, vector<256x128xf32> -> vector<256x128xf32>
    %136 = arith.addf %105, %135 : vector<256x128xf32>
    %137 = vector.extract_strided_slice %33 {offsets = [0, 96], sizes = [256, 32], strides = [1, 1]} : vector<256x384xf32> to vector<256x32xf32>
    %cst_40 = arith.constant 0.176776692 : f32
    %138 = vector.broadcast %cst_40 : f32 to vector<256x32xf32>
    %139 = arith.mulf %137, %138 : vector<256x32xf32>
    %140 = arith.truncf %139 : vector<256x32xf32> to vector<256x32xbf16>
    %141 = vector.shape_cast %140 : vector<256x32xbf16> to vector<2x128x32xbf16>
    %142 = vector.extract_strided_slice %33 {offsets = [0, 224], sizes = [256, 32], strides = [1, 1]} : vector<256x384xf32> to vector<256x32xf32>
    %143 = arith.truncf %142 : vector<256x32xf32> to vector<256x32xbf16>
    %144 = vector.shape_cast %143 : vector<256x32xbf16> to vector<2x128x32xbf16>
    %145 = vector.extract_strided_slice %33 {offsets = [0, 352], sizes = [256, 32], strides = [1, 1]} : vector<256x384xf32> to vector<256x32xf32>
    %146 = arith.truncf %145 : vector<256x32xf32> to vector<256x32xbf16>
    %147 = vector.shape_cast %146 : vector<256x32xbf16> to vector<2x128x32xbf16>
    "tpu.trace_start"() <{level = 10 : i32, message = "btd,bsd->bts"}> : () -> ()
    %cst_41 = arith.constant dense<0.000000e+00> : vector<2x128x128xf32>
    %148 = tpu.matmul %141, %144, %cst_41 {dimension_numbers = #tpu.dot_dimension_numbers<[2], [2], [1], [1], [0, 0, 0, 1, 1, 1], [0], [0]>} : vector<2x128x32xbf16>, vector<2x128x32xbf16>, vector<2x128x128xf32> -> vector<2x128x128xf32>
    "tpu.trace_stop"() : () -> ()
    %149 = vector.broadcast %40 : vector<1x128x128xf32> to vector<2x128x128xf32>
    %150 = arith.addf %148, %149 : vector<2x128x128xf32>
    %cst_42 = arith.constant dense<0xFF800000> : vector<2x128xf32>
    %151 = vector.multi_reduction <maximumf>, %150, %cst_42 [2] : vector<2x128x128xf32> to vector<2x128xf32>
    %152 = vector.shape_cast %151 : vector<2x128xf32> to vector<2x128x1xf32>
    %153 = vector.broadcast %152 : vector<2x128x1xf32> to vector<2x128x128xf32>
    %154 = arith.subf %150, %153 : vector<2x128x128xf32>
    %155 = math.exp %154 : vector<2x128x128xf32>
    %cst_43 = arith.constant dense<0.000000e+00> : vector<2x128xf32>
    %156 = vector.multi_reduction <add>, %155, %cst_43 [2] : vector<2x128x128xf32> to vector<2x128xf32>
    %157 = vector.shape_cast %156 : vector<2x128xf32> to vector<2x128x1xf32>
    %158 = tpu.reciprocal %157 {approx = true} : vector<2x128x1xf32> -> vector<2x128x1xf32>
    %159 = vector.broadcast %158 : vector<2x128x1xf32> to vector<2x128x128xf32>
    %160 = arith.mulf %155, %159 : vector<2x128x128xf32>
    %161 = arith.truncf %160 : vector<2x128x128xf32> to vector<2x128x128xbf16>
    "tpu.trace_start"() <{level = 10 : i32, message = "bts,bsd->btd"}> : () -> ()
    %cst_44 = arith.constant dense<0.000000e+00> : vector<2x128x32xf32>
    %162 = tpu.matmul %161, %147, %cst_44 {dimension_numbers = #tpu.dot_dimension_numbers<[2], [1], [1], [2], [0, 0, 0, 1, 1, 2], [0], [0]>} : vector<2x128x128xbf16>, vector<2x128x32xbf16>, vector<2x128x32xf32> -> vector<2x128x32xf32>
    "tpu.trace_stop"() : () -> ()
    %163 = vector.shape_cast %162 : vector<2x128x32xf32> to vector<256x32xf32>
    %164 = arith.truncf %163 : vector<256x32xf32> to vector<256x32xbf16>
    %165 = vector.extract_strided_slice %42 {offsets = [96, 0], sizes = [32, 128], strides = [1, 1]} : vector<128x128xbf16> to vector<32x128xbf16>
    %cst_45 = arith.constant dense<0.000000e+00> : vector<256x128xf32>
    %166 = tpu.matmul %164, %165, %cst_45 {dimension_numbers = #tpu.dot_dimension_numbers<[1], [0], [0], [1], [0, 0, 1, 1], [], []>} : vector<256x32xbf16>, vector<32x128xbf16>, vector<256x128xf32> -> vector<256x128xf32>
    %167 = arith.addf %136, %166 : vector<256x128xf32>
    %168 = arith.addf %3, %167 : vector<256x128xf32>
    %c0_46 = arith.constant 0 : index
    %c0_47 = arith.constant 0 : index
    %c0_48 = arith.constant 0 : index
    %169 = vector.load %arg4[%c0_46, %c0_47, %c0_48] : memref<1x1x128xf32, #tpu.memory_space<vmem>>, vector<1x1x128xf32>
    %170 = vector.shape_cast %169 : vector<1x1x128xf32> to vector<1x128xf32>
    %171 = vector.broadcast %170 : vector<1x128xf32> to vector<256x128xf32>
    %172 = arith.addf %168, %171 : vector<256x128xf32>
    %c0_49 = arith.constant 0 : index
    %c0_50 = arith.constant 0 : index
    %c0_51 = arith.constant 0 : index
    %173 = vector.load %arg7[%c0_49, %c0_50, %c0_51] : memref<1x1x128xf32, #tpu.memory_space<vmem>>, vector<1x1x128xf32>
    %174 = vector.shape_cast %173 : vector<1x1x128xf32> to vector<1x128xf32>
    %c0_52 = arith.constant 0 : index
    %c0_53 = arith.constant 0 : index
    %c0_54 = arith.constant 0 : index
    %175 = vector.load %arg8[%c0_52, %c0_53, %c0_54] : memref<1x1x128xf32, #tpu.memory_space<vmem>>, vector<1x1x128xf32>
    %176 = vector.shape_cast %175 : vector<1x1x128xf32> to vector<1x128xf32>
    %cst_55 = arith.constant dense<0.000000e+00> : vector<256xf32>
    %177 = vector.multi_reduction <add>, %172, %cst_55 [1] : vector<256x128xf32> to vector<256xf32>
    %178 = vector.shape_cast %177 : vector<256xf32> to vector<256x1xf32>
    %cst_56 = arith.constant 1.280000e+02 : f32
    %179 = vector.broadcast %cst_56 : f32 to vector<256x1xf32>
    %180 = arith.divf %178, %179 : vector<256x1xf32>
    %181 = vector.broadcast %180 : vector<256x1xf32> to vector<256x128xf32>
    %182 = arith.subf %172, %181 : vector<256x128xf32>
    %183 = arith.mulf %182, %182 : vector<256x128xf32>
    %cst_57 = arith.constant dense<0.000000e+00> : vector<256xf32>
    %184 = vector.multi_reduction <add>, %183, %cst_57 [1] : vector<256x128xf32> to vector<256xf32>
    %185 = vector.shape_cast %184 : vector<256xf32> to vector<256x1xf32>
    %cst_58 = arith.constant 1.280000e+02 : f32
    %186 = vector.broadcast %cst_58 : f32 to vector<256x1xf32>
    %187 = arith.divf %185, %186 : vector<256x1xf32>
    %188 = vector.broadcast %180 : vector<256x1xf32> to vector<256x128xf32>
    %189 = arith.subf %172, %188 : vector<256x128xf32>
    %cst_59 = arith.constant 9.99999974E-6 : f32
    %190 = vector.broadcast %cst_59 : f32 to vector<256x1xf32>
    %191 = arith.addf %187, %190 : vector<256x1xf32>
    %192 = math.rsqrt %191 : vector<256x1xf32>
    %193 = vector.broadcast %192 : vector<256x1xf32> to vector<256x128xf32>
    %194 = arith.mulf %189, %193 : vector<256x128xf32>
    %195 = vector.broadcast %174 : vector<1x128xf32> to vector<256x128xf32>
    %196 = arith.mulf %194, %195 : vector<256x128xf32>
    %197 = vector.broadcast %176 : vector<1x128xf32> to vector<256x128xf32>
    %198 = arith.addf %196, %197 : vector<256x128xf32>
    %199 = arith.truncf %198 : vector<256x128xf32> to vector<256x128xbf16>
    %c0_60 = arith.constant 0 : index
    %c0_61 = arith.constant 0 : index
    %c0_62 = arith.constant 0 : index
    %200 = vector.load %arg9[%c0_60, %c0_61, %c0_62] : memref<1x128x512xbf16, #tpu.memory_space<vmem>>, vector<1x128x512xbf16>
    %201 = vector.shape_cast %200 : vector<1x128x512xbf16> to vector<128x512xbf16>
    %cst_63 = arith.constant dense<0.000000e+00> : vector<256x512xf32>
    %202 = tpu.matmul %199, %201, %cst_63 {dimension_numbers = #tpu.dot_dimension_numbers<[1], [0], [0], [1], [0, 0, 1, 1], [], []>} : vector<256x128xbf16>, vector<128x512xbf16>, vector<256x512xf32> -> vector<256x512xf32>
    %c0_64 = arith.constant 0 : index
    %c0_65 = arith.constant 0 : index
    %c0_66 = arith.constant 0 : index
    %203 = vector.load %arg10[%c0_64, %c0_65, %c0_66] : memref<1x1x512xf32, #tpu.memory_space<vmem>>, vector<1x1x512xf32>
    %204 = vector.shape_cast %203 : vector<1x1x512xf32> to vector<1x512xf32>
    %205 = vector.broadcast %204 : vector<1x512xf32> to vector<256x512xf32>
    %206 = arith.addf %202, %205 : vector<256x512xf32>
    %cst_67 = arith.constant 0.000000e+00 : f32
    %207 = vector.broadcast %cst_67 : f32 to vector<256x512xf32>
    %208 = arith.maximumf %206, %207 : vector<256x512xf32>
    %209 = arith.truncf %208 : vector<256x512xf32> to vector<256x512xbf16>
    %c0_68 = arith.constant 0 : index
    %c0_69 = arith.constant 0 : index
    %c0_70 = arith.constant 0 : index
    %210 = vector.load %arg11[%c0_68, %c0_69, %c0_70] : memref<1x512x128xbf16, #tpu.memory_space<vmem>>, vector<1x512x128xbf16>
    %211 = vector.shape_cast %210 : vector<1x512x128xbf16> to vector<512x128xbf16>
    %cst_71 = arith.constant dense<0.000000e+00> : vector<256x128xf32>
    %212 = tpu.matmul %209, %211, %cst_71 {dimension_numbers = #tpu.dot_dimension_numbers<[1], [0], [0], [1], [0, 0, 1, 1], [], []>} : vector<256x512xbf16>, vector<512x128xbf16>, vector<256x128xf32> -> vector<256x128xf32>
    %c0_72 = arith.constant 0 : index
    %c0_73 = arith.constant 0 : index
    %c0_74 = arith.constant 0 : index
    %213 = vector.load %arg12[%c0_72, %c0_73, %c0_74] : memref<1x1x128xf32, #tpu.memory_space<vmem>>, vector<1x1x128xf32>
    %214 = vector.shape_cast %213 : vector<1x1x128xf32> to vector<1x128xf32>
    %215 = vector.broadcast %214 : vector<1x128xf32> to vector<256x128xf32>
    %216 = arith.addf %212, %215 : vector<256x128xf32>
    %217 = arith.addf %172, %216 : vector<256x128xf32>
    %c0_75 = arith.constant 0 : index
    %c0_76 = arith.constant 0 : index
    %218 = vector.load %arg18[%c0_75, %c0_76] : memref<256x128xf32, #tpu.memory_space<vmem>>, vector<256x128xf32>
    tpu.vector_store %arg18[%c0_75, %c0_76], %217 {strides = array<i32>} : memref<256x128xf32, #tpu.memory_space<vmem>>, vector<256x128xf32>,
    %c1_i32 = arith.constant 1 : i32
    %219 = arith.cmpi eq, %arg0, %c1_i32 : i32
    %220 = arith.extui %219 : i1 to i32
    %c0_i32_77 = arith.constant 0 : i32
    %221 = arith.cmpi ne, %220, %c0_i32_77 : i32
    scf.if %221 {
      %c0_78 = arith.constant 0 : index
      %c0_79 = arith.constant 0 : index
      %222 = vector.load %arg13[%c0_78, %c0_79] : memref<1x128xf32, #tpu.memory_space<vmem>>, vector<1x128xf32>
      %c0_80 = arith.constant 0 : index
      %c0_81 = arith.constant 0 : index
      %223 = vector.load %arg14[%c0_80, %c0_81] : memref<1x128xf32, #tpu.memory_space<vmem>>, vector<1x128xf32>
      %cst_82 = arith.constant dense<0.000000e+00> : vector<256xf32>
      %224 = vector.multi_reduction <add>, %217, %cst_82 [1] : vector<256x128xf32> to vector<256xf32>
      %225 = vector.shape_cast %224 : vector<256xf32> to vector<256x1xf32>
      %cst_83 = arith.constant 1.280000e+02 : f32
      %226 = vector.broadcast %cst_83 : f32 to vector<256x1xf32>
      %227 = arith.divf %225, %226 : vector<256x1xf32>
      %228 = vector.broadcast %227 : vector<256x1xf32> to vector<256x128xf32>
      %229 = arith.subf %217, %228 : vector<256x128xf32>
      %230 = arith.mulf %229, %229 : vector<256x128xf32>
      %cst_84 = arith.constant dense<0.000000e+00> : vector<256xf32>
      %231 = vector.multi_reduction <add>, %230, %cst_84 [1] : vector<256x128xf32> to vector<256xf32>
      %232 = vector.shape_cast %231 : vector<256xf32> to vector<256x1xf32>
      %cst_85 = arith.constant 1.280000e+02 : f32
      %233 = vector.broadcast %cst_85 : f32 to vector<256x1xf32>
      %234 = arith.divf %232, %233 : vector<256x1xf32>
      %235 = vector.broadcast %227 : vector<256x1xf32> to vector<256x128xf32>
      %236 = arith.subf %217, %235 : vector<256x128xf32>
      %cst_86 = arith.constant 9.99999974E-6 : f32
      %237 = vector.broadcast %cst_86 : f32 to vector<256x1xf32>
      %238 = arith.addf %234, %237 : vector<256x1xf32>
      %239 = math.rsqrt %238 : vector<256x1xf32>
      %240 = vector.broadcast %239 : vector<256x1xf32> to vector<256x128xf32>
      %241 = arith.mulf %236, %240 : vector<256x128xf32>
      %242 = vector.broadcast %222 : vector<1x128xf32> to vector<256x128xf32>
      %243 = arith.mulf %241, %242 : vector<256x128xf32>
      %244 = vector.broadcast %223 : vector<1x128xf32> to vector<256x128xf32>
      %245 = arith.addf %243, %244 : vector<256x128xf32>
      %246 = arith.truncf %245 : vector<256x128xf32> to vector<256x128xbf16>
      %c0_87 = arith.constant 0 : index
      %c0_88 = arith.constant 0 : index
      %247 = vector.load %arg15[%c0_87, %c0_88] : memref<128x128xbf16, #tpu.memory_space<vmem>>, vector<128x128xbf16>
      %cst_89 = arith.constant dense<0.000000e+00> : vector<256x128xf32>
      %248 = tpu.matmul %246, %247, %cst_89 {dimension_numbers = #tpu.dot_dimension_numbers<[1], [0], [0], [1], [0, 0, 1, 1], [], []>} : vector<256x128xbf16>, vector<128x128xbf16>, vector<256x128xf32> -> vector<256x128xf32>
      %c0_90 = arith.constant 0 : index
      %c0_91 = arith.constant 0 : index
      %249 = vector.load %arg16[%c0_90, %c0_91] : memref<1x128xf32, #tpu.memory_space<vmem>>, vector<1x128xf32>
      %250 = vector.broadcast %249 : vector<1x128xf32> to vector<256x128xf32>
      %251 = arith.addf %248, %250 : vector<256x128xf32>
      %c0_92 = arith.constant 0 : index
      %c0_93 = arith.constant 0 : index
      %252 = vector.load %arg17[%c0_92, %c0_93] : memref<256x128xf32, #tpu.memory_space<vmem>>, vector<256x128xf32>
      tpu.vector_store %arg17[%c0_92, %c0_93], %251 {strides = array<i32>} : memref<256x128xf32, #tpu.memory_space<vmem>>, vector<256x128xf32>,
    } else {
    }
    return
  }
  func.func @transform_0(%arg0: i32) -> (i32, i32) {
    %c0_i32 = arith.constant 0 : i32
    %c0_i32_0 = arith.constant 0 : i32
    %c0_i32_1 = arith.constant 0 : i32
    return %c0_i32, %c0_i32_0 : i32, i32
  }
  func.func @transform_1(%arg0: i32) -> (i32, i32, i32) {
    %c0_i32 = arith.constant 0 : i32
    %c0_i32_0 = arith.constant 0 : i32
    %c0_i32_1 = arith.constant 0 : i32
    return %arg0, %c0_i32, %c0_i32_0 : i32, i32, i32
  }
  func.func @transform_2(%arg0: i32) -> (i32, i32, i32) {
    %c0_i32 = arith.constant 0 : i32
    %c0_i32_0 = arith.constant 0 : i32
    %c0_i32_1 = arith.constant 0 : i32
    return %arg0, %c0_i32, %c0_i32_0 : i32, i32, i32
  }
  func.func @transform_3(%arg0: i32) -> (i32, i32, i32) {
    %c0_i32 = arith.constant 0 : i32
    %c0_i32_0 = arith.constant 0 : i32
    %c0_i32_1 = arith.constant 0 : i32
    return %arg0, %c0_i32, %c0_i32_0 : i32, i32, i32
  }
  func.func @transform_4(%arg0: i32) -> (i32, i32, i32) {
    %c0_i32 = arith.constant 0 : i32
    %c0_i32_0 = arith.constant 0 : i32
    %c0_i32_1 = arith.constant 0 : i32
    return %arg0, %c0_i32, %c0_i32_0 : i32, i32, i32
  }
  func.func @transform_5(%arg0: i32) -> (i32, i32, i32) {
    %c0_i32 = arith.constant 0 : i32
    %c0_i32_0 = arith.constant 0 : i32
    %c0_i32_1 = arith.constant 0 : i32
    return %arg0, %c0_i32, %c0_i32_0 : i32, i32, i32
  }
  func.func @transform_6(%arg0: i32) -> (i32, i32, i32) {
    %c0_i32 = arith.constant 0 : i32
    %c0_i32_0 = arith.constant 0 : i32
    %c0_i32_1 = arith.constant 0 : i32
    return %arg0, %c0_i32, %c0_i32_0 : i32, i32, i32
  }
  func.func @transform_7(%arg0: i32) -> (i32, i32, i32) {
    %c0_i32 = arith.constant 0 : i32
    %c0_i32_0 = arith.constant 0 : i32
    %c0_i32_1 = arith.constant 0 : i32
    return %arg0, %c0_i32, %c0_i32_0 : i32, i32, i32
  }
  func.func @transform_8(%arg0: i32) -> (i32, i32, i32) {
    %c0_i32 = arith.constant 0 : i32
    %c0_i32_0 = arith.constant 0 : i32
    %c0_i32_1 = arith.constant 0 : i32
    return %arg0, %c0_i32, %c0_i32_0 : i32, i32, i32
  }
  func.func @transform_9(%arg0: i32) -> (i32, i32, i32) {
    %c0_i32 = arith.constant 0 : i32
    %c0_i32_0 = arith.constant 0 : i32
    %c0_i32_1 = arith.constant 0 : i32
    return %arg0, %c0_i32, %c0_i32_0 : i32, i32, i32
  }
  func.func @transform_10(%arg0: i32) -> (i32, i32, i32) {
    %c0_i32 = arith.constant 0 : i32
    %c0_i32_0 = arith.constant 0 : i32
    %c0_i32_1 = arith.constant 0 : i32
    return %arg0, %c0_i32, %c0_i32_0 : i32, i32, i32
  }
  func.func @transform_11(%arg0: i32) -> (i32, i32, i32) {
    %c0_i32 = arith.constant 0 : i32
    %c0_i32_0 = arith.constant 0 : i32
    %c0_i32_1 = arith.constant 0 : i32
    return %arg0, %c0_i32, %c0_i32_0 : i32, i32, i32
  }
  func.func @transform_12(%arg0: i32) -> (i32, i32) {
    %c0_i32 = arith.constant 0 : i32
    %c0_i32_0 = arith.constant 0 : i32
    %c0_i32_1 = arith.constant 0 : i32
    return %c0_i32, %c0_i32_0 : i32, i32
  }
  func.func @transform_13(%arg0: i32) -> (i32, i32) {
    %c0_i32 = arith.constant 0 : i32
    %c0_i32_0 = arith.constant 0 : i32
    %c0_i32_1 = arith.constant 0 : i32
    return %c0_i32, %c0_i32_0 : i32, i32
  }
  func.func @transform_14(%arg0: i32) -> (i32, i32) {
    %c0_i32 = arith.constant 0 : i32
    %c0_i32_0 = arith.constant 0 : i32
    %c0_i32_1 = arith.constant 0 : i32
    return %c0_i32, %c0_i32_0 : i32, i32
  }
  func.func @transform_15(%arg0: i32) -> (i32, i32) {
    %c0_i32 = arith.constant 0 : i32
    %c0_i32_0 = arith.constant 0 : i32
    %c0_i32_1 = arith.constant 0 : i32
    return %c0_i32, %c0_i32_0 : i32, i32
  }
  func.func @transform_16(%arg0: i32) -> (i32, i32) {
    %c0_i32 = arith.constant 0 : i32
    %c0_i32_0 = arith.constant 0 : i32
    %c0_i32_1 = arith.constant 0 : i32
    return %c0_i32, %c0_i32_0 : i32, i32
  }
}

</mosaic_0001>

<llo_original>
// kernel: tpu_custom_call.1
$region0: #{tpu_custom_call.1}
  #allocation0 [shape = 'u32[]', space=smem, size = 0x4, offset = 0x4, fixed_abs, tag = 'smem constant byte address 0x4 - core index']
  #allocation1 [shape = 'u32[144,128]{1,0:T(1,128)}', space=vmem, size = 0x12000, scoped, tag = 'internal scratch']
  #allocation2 [shape = 'f32[256,128]{1,0:T(8,128)}', space=vmem, size = 0x20000, scoped, tag = 'scratch operand']
  %s0 = inlined_call_operand.hbm [shape: f32[256,128], index: 0, kind: input, shape index: {}]
  %s1 = inlined_call_operand.hbm [shape: bf16[2,128,384], index: 1, kind: input, shape index: {}]
  %s2 = inlined_call_operand.hbm [shape: bf16[2,128,128], index: 2, kind: input, shape index: {}]
  %s3 = inlined_call_operand.vmem [shape: f32[2,1,128], index: 3, kind: input, shape index: {}]
  %s4 = inlined_call_operand.vmem [shape: f32[2,1,128], index: 4, kind: input, shape index: {}]
  %s5 = inlined_call_operand.vmem [shape: f32[2,1,128], index: 5, kind: input, shape index: {}]
  %s6 = inlined_call_operand.vmem [shape: f32[2,1,128], index: 6, kind: input, shape index: {}]
  %s7 = inlined_call_operand.hbm [shape: f32[2,1,128], index: 7, kind: input, shape index: {}]
  %s8 = inlined_call_operand.hbm [shape: bf16[2,128,512], index: 8, kind: input, shape index: {}]
  %s9 = inlined_call_operand.vmem [shape: f32[2,1,512], index: 9, kind: input, shape index: {}]
  %s10 = inlined_call_operand.hbm [shape: bf16[2,512,128], index: 10, kind: input, shape index: {}]
  %s11 = inlined_call_operand.vmem [shape: f32[2,1,128], index: 11, kind: input, shape index: {}]
  %s12 = inlined_call_operand.vmem [shape: f32[1,128], index: 12, kind: input, shape index: {}]
  %s13 = inlined_call_operand.vmem [shape: f32[1,128], index: 13, kind: input, shape index: {}]
  %s14 = inlined_call_operand.hbm [shape: bf16[128,128], index: 14, kind: input, shape index: {}]
  %s15 = inlined_call_operand.vmem [shape: f32[1,128], index: 15, kind: input, shape index: {}]
  %s16 = inlined_call_operand.hbm [shape: f32[256,128], index: 16, kind: output, shape index: {}]
  %s17 = sld [smem:[#allocation0]]
  $region133: #{tpu_custom_call.1} parent=0
    _
  %s19 = ssub.s32 1, %s17
  %s20 = scalar_select 0, %s19, %s17
  $region1: #{tpu_custom_call.1} parent=0
    #allocation3 [shape = 'u8[131072]{0}', space=vmem, size = 0x20000, scoped, tag = 'input window, operand 0, single buffered']
    #allocation4 [shape = 's32[2]{0}', space=sflag, size = 0x8, scoped, tag = 'scoped memory for tpu_custom_call.1']
    #allocation5 [shape = 's32[2]{0}', space=sflag, size = 0x8, scoped, tag = 'scoped memory for tpu_custom_call.1']
    #allocation6 [shape = 'u8[196608]{0}', space=vmem, size = 0x30000, scoped, tag = 'input window, operand 1']
    #allocation7 [shape = 's32[2]{0}', space=sflag, size = 0x8, scoped, tag = 'scoped memory for tpu_custom_call.1']
    #allocation8 [shape = 'u8[65536]{0}', space=vmem, size = 0x10000, scoped, tag = 'input window, operand 2']
    #allocation9 [shape = 'u8[1024]{0}', space=vmem, size = 0x400, scoped, tag = 'input window, operand 7']
    #allocation10 [shape = 's32[2]{0}', space=sflag, size = 0x8, scoped, tag = 'scoped memory for tpu_custom_call.1']
    #allocation11 [shape = 'u8[262144]{0}', space=vmem, size = 0x40000, scoped, tag = 'input window, operand 8']
    #allocation12 [shape = 'u8[262144]{0}', space=vmem, size = 0x40000, scoped, tag = 'input window, operand 10']
    #allocation13 [shape = 's32[2]{0}', space=sflag, size = 0x8, scoped, tag = 'scoped memory for tpu_custom_call.1']
    #allocation14 [shape = 'u8[32768]{0}', space=vmem, size = 0x8000, scoped, tag = 'input window, operand 14, single buffered']
    #allocation15 [shape = 'u8[131072]{0}', space=vmem, size = 0x20000, scoped, tag = 'output window, operand 0, single buffered']
    %21 = vsyncpa [#allocation4], 0
    %22 = vsyncpa [#allocation7], 0
    %s23 = scalar_lea.sflag [#allocation7], 1
    %24 = vsyncpa %s23, 0
    %25 = vsyncpa [#allocation10], 0
    %s26 = scalar_lea.sflag [#allocation10], 1
    %27 = vsyncpa %s26, 0
    %28 = vsyncpa [#allocation13], 0
    %s29 = scalar_lea.sflag [#allocation13], 1
    %30 = vsyncpa %s29, 0
    %31 = vsyncpa [#allocation5], 0
    loop: start=0, step=1, limit=4
    $region2: #{tpu_custom_call.1} parent=1 // loop_pre_header
      _
    $region3: #{tpu_custom_call.1} parent=1 // loop_header
      %s33 = sphi 0, %s37
      %p34 = scmp.ge.s32.totalorder %s33, 4
      %s41 = sphi 0, %s41
      %s43 = sphi 0, %s41
      %s44 = sphi 0, %s43
      %s58 = sphi 0, %s44
      %s64 = sphi 0, %s66
      %s67 = sphi 0, %s64
      %s68 = sphi 0, %s67
      %s84 = sphi 0, %s68
      %s90 = sphi 0, %s92
      %s93 = sphi 0, %s90
      %s94 = sphi 0, %s93
      %s110 = sphi 0, %s94
      %s116 = sphi 0, %s118
      %s119 = sphi 0, %s116
      %s120 = sphi 0, %s119
      %s136 = sphi 0, %s120
      %s142 = sphi 0, %s144
      %s145 = sphi 0, %s142
      %s146 = sphi 0, %s145
      %s162 = sphi 0, %s146
      %s168 = sphi 0, %s170
      %s171 = sphi 0, %s168
      %s172 = sphi 0, %s171
      %s188 = sphi 0, %s172
      %s194 = sphi 0, %s196
      %s197 = sphi 0, %s194
      %s198 = sphi 0, %s197
      %s214 = sphi 0, %s198
      %s220 = sphi 0, %s222
      %s223 = sphi 0, %s220
      %s224 = sphi 0, %s223
      %s240 = sphi 0, %s224
      %s246 = sphi 0, %s248
      %s249 = sphi 0, %s246
      %s250 = sphi 0, %s249
      %s266 = sphi 0, %s250
      %s272 = sphi 0, %s274
      %s275 = sphi 0, %s272
      %s276 = sphi 0, %s275
      %s292 = sphi 0, %s276
      %s298 = sphi 0, %s300
      %s301 = sphi 0, %s298
      %s302 = sphi 0, %s301
      %s318 = sphi 0, %s302
      %s324 = sphi 0, %s326
      %s327 = sphi 0, %s324
      %s328 = sphi 0, %s327
      %s344 = sphi 0, %s328
      %s348 = sphi 0, %s348
      %s350 = sphi 0, %s348
      %s351 = sphi 0, %s350
      %s365 = sphi 0, %s351
      %s369 = sphi 0, %s369
      %s371 = sphi 0, %s369
      %s372 = sphi 0, %s371
      %s386 = sphi 0, %s372
      %s390 = sphi 0, %s390
      %s392 = sphi 0, %s390
      %s393 = sphi 0, %s392
      %s407 = sphi 0, %s393
      %s411 = sphi 0, %s411
      %s413 = sphi 0, %s411
      %s414 = sphi 0, %s413
      %s428 = sphi 0, %s414
      %s432 = sphi 0, %s432
      %s434 = sphi 0, %s432
      %s435 = sphi 0, %s434
      %s449 = sphi 0, %s435
    $region4: #{tpu_custom_call.1} parent=1 // loop_header_branch
      %36 = sbr.rel (%p34) target = $region8
    $region5: #{tpu_custom_call.1} parent=1 // loop_body
      %s38 = ssub.s32 %s33, 1
      %s39 = ssub.s32 %s33, 2
      %s40 = sadd.s32 %s33, 1
      %s42 = sadd.s32 %s41, 1
      %p45 = scmp.eq.s32.totalorder %s33, 1
      %p46 = scmp.ne.s32.totalorder %s41, %s43
      %p47 = scmp.eq.s32.totalorder %s33, 0
      %p48 = por %p46, %p47
      %p49 = scmp.ne.s32.totalorder %s41, %s43
      %p50 = scmp.eq.s32.totalorder %s38, 1
      %p51 = por %p49, %p50
      %p52 = scmp.ne.s32.totalorder %s43, %s44
      %p53 = scmp.eq.s32.totalorder %s38, 0
      %p54 = por %p52, %p53
      %p55 = scmp.ne.s32.totalorder %s43, %s44
      %p56 = scmp.eq.s32.totalorder %s39, 1
      %p57 = por %p55, %p56
      %p59 = scmp.ne.s32.totalorder %s44, %s58
      %p60 = scmp.eq.s32.totalorder %s39, 0
      %p61 = por %p59, %p60
      %s62 = ssub.s32 %s33, %s40
      %p63 = scmp.eq.s32.totalorder %s62, 0
      %s65 = sadd.s32 %s64, 1
      %s66 = scalar_select %p63, %s64, %s65
      %p69 = pneg %p63
      %p70 = scmp.eq.s32.totalorder %s33, 1
      %p71 = por %p69, %p70
      %p72 = scmp.ne.s32.totalorder %s64, %s67
      %p73 = scmp.eq.s32.totalorder %s33, 0
      %p74 = por %p72, %p73
      %p75 = scmp.ne.s32.totalorder %s64, %s67
      %p76 = scmp.eq.s32.totalorder %s38, 1
      %p77 = por %p75, %p76
      %p78 = scmp.ne.s32.totalorder %s67, %s68
      %p79 = scmp.eq.s32.totalorder %s38, 0
      %p80 = por %p78, %p79
      %p81 = scmp.ne.s32.totalorder %s67, %s68
      %p82 = scmp.eq.s32.totalorder %s39, 1
      %p83 = por %p81, %p82
      %p85 = scmp.ne.s32.totalorder %s68, %s84
      %p86 = scmp.eq.s32.totalorder %s39, 0
      %p87 = por %p85, %p86
      %s88 = ssub.s32 %s33, %s40
      %p89 = scmp.eq.s32.totalorder %s88, 0
      %s91 = sadd.s32 %s90, 1
      %s92 = scalar_select %p89, %s90, %s91
      %p95 = pneg %p89
      %p96 = scmp.eq.s32.totalorder %s33, 1
      %p97 = por %p95, %p96
      %p98 = scmp.ne.s32.totalorder %s90, %s93
      %p99 = scmp.eq.s32.totalorder %s33, 0
      %p100 = por %p98, %p99
      %p101 = scmp.ne.s32.totalorder %s90, %s93
      %p102 = scmp.eq.s32.totalorder %s38, 1
      %p103 = por %p101, %p102
      %p104 = scmp.ne.s32.totalorder %s93, %s94
      %p105 = scmp.eq.s32.totalorder %s38, 0
      %p106 = por %p104, %p105
      %p107 = scmp.ne.s32.totalorder %s93, %s94
      %p108 = scmp.eq.s32.totalorder %s39, 1
      %p109 = por %p107, %p108
      %p111 = scmp.ne.s32.totalorder %s94, %s110
      %p112 = scmp.eq.s32.totalorder %s39, 0
      %p113 = por %p111, %p112
      %s114 = ssub.s32 %s33, %s40
      %p115 = scmp.eq.s32.totalorder %s114, 0
      %s117 = sadd.s32 %s116, 1
      %s118 = scalar_select %p115, %s116, %s117
      %p121 = pneg %p115
      %p122 = scmp.eq.s32.totalorder %s33, 1
      %p123 = por %p121, %p122
      %p124 = scmp.ne.s32.totalorder %s116, %s119
      %p125 = scmp.eq.s32.totalorder %s33, 0
      %p126 = por %p124, %p125
      %p127 = scmp.ne.s32.totalorder %s116, %s119
      %p128 = scmp.eq.s32.totalorder %s38, 1
      %p129 = por %p127, %p128
      %p130 = scmp.ne.s32.totalorder %s119, %s120
      %p131 = scmp.eq.s32.totalorder %s38, 0
      %p132 = por %p130, %p131
      %p133 = scmp.ne.s32.totalorder %s119, %s120
      %p134 = scmp.eq.s32.totalorder %s39, 1
      %p135 = por %p133, %p134
      %p137 = scmp.ne.s32.totalorder %s120, %s136
      %p138 = scmp.eq.s32.totalorder %s39, 0
      %p139 = por %p137, %p138
      %s140 = ssub.s32 %s33, %s40
      %p141 = scmp.eq.s32.totalorder %s140, 0
      %s143 = sadd.s32 %s142, 1
      %s144 = scalar_select %p141, %s142, %s143
      %p147 = pneg %p141
      %p148 = scmp.eq.s32.totalorder %s33, 1
      %p149 = por %p147, %p148
      %p150 = scmp.ne.s32.totalorder %s142, %s145
      %p151 = scmp.eq.s32.totalorder %s33, 0
      %p152 = por %p150, %p151
      %p153 = scmp.ne.s32.totalorder %s142, %s145
      %p154 = scmp.eq.s32.totalorder %s38, 1
      %p155 = por %p153, %p154
      %p156 = scmp.ne.s32.totalorder %s145, %s146
      %p157 = scmp.eq.s32.totalorder %s38, 0
      %p158 = por %p156, %p157
      %p159 = scmp.ne.s32.totalorder %s145, %s146
      %p160 = scmp.eq.s32.totalorder %s39, 1
      %p161 = por %p159, %p160
      %p163 = scmp.ne.s32.totalorder %s146, %s162
      %p164 = scmp.eq.s32.totalorder %s39, 0
      %p165 = por %p163, %p164
      %s166 = ssub.s32 %s33, %s40
      %p167 = scmp.eq.s32.totalorder %s166, 0
      %s169 = sadd.s32 %s168, 1
      %s170 = scalar_select %p167, %s168, %s169
      %p173 = pneg %p167
      %p174 = scmp.eq.s32.totalorder %s33, 1
      %p175 = por %p173, %p174
      %p176 = scmp.ne.s32.totalorder %s168, %s171
      %p177 = scmp.eq.s32.totalorder %s33, 0
      %p178 = por %p176, %p177
      %p179 = scmp.ne.s32.totalorder %s168, %s171
      %p180 = scmp.eq.s32.totalorder %s38, 1
      %p181 = por %p179, %p180
      %p182 = scmp.ne.s32.totalorder %s171, %s172
      %p183 = scmp.eq.s32.totalorder %s38, 0
      %p184 = por %p182, %p183
      %p185 = scmp.ne.s32.totalorder %s171, %s172
      %p186 = scmp.eq.s32.totalorder %s39, 1
      %p187 = por %p185, %p186
      %p189 = scmp.ne.s32.totalorder %s172, %s188
      %p190 = scmp.eq.s32.totalorder %s39, 0
      %p191 = por %p189, %p190
      %s192 = ssub.s32 %s33, %s40
      %p193 = scmp.eq.s32.totalorder %s192, 0
      %s195 = sadd.s32 %s194, 1
      %s196 = scalar_select %p193, %s194, %s195
      %p199 = pneg %p193
      %p200 = scmp.eq.s32.totalorder %s33, 1
      %p201 = por %p199, %p200
      %p202 = scmp.ne.s32.totalorder %s194, %s197
      %p203 = scmp.eq.s32.totalorder %s33, 0
      %p204 = por %p202, %p203
      %p205 = scmp.ne.s32.totalorder %s194, %s197
      %p206 = scmp.eq.s32.totalorder %s38, 1
      %p207 = por %p205, %p206
      %p208 = scmp.ne.s32.totalorder %s197, %s198
      %p209 = scmp.eq.s32.totalorder %s38, 0
      %p210 = por %p208, %p209
      %p211 = scmp.ne.s32.totalorder %s197, %s198
      %p212 = scmp.eq.s32.totalorder %s39, 1
      %p213 = por %p211, %p212
      %p215 = scmp.ne.s32.totalorder %s198, %s214
      %p216 = scmp.eq.s32.totalorder %s39, 0
      %p217 = por %p215, %p216
      %s218 = ssub.s32 %s33, %s40
      %p219 = scmp.eq.s32.totalorder %s218, 0
      %s221 = sadd.s32 %s220, 1
      %s222 = scalar_select %p219, %s220, %s221
      %p225 = pneg %p219
      %p226 = scmp.eq.s32.totalorder %s33, 1
      %p227 = por %p225, %p226
      %p228 = scmp.ne.s32.totalorder %s220, %s223
      %p229 = scmp.eq.s32.totalorder %s33, 0
      %p230 = por %p228, %p229
      %p231 = scmp.ne.s32.totalorder %s220, %s223
      %p232 = scmp.eq.s32.totalorder %s38, 1
      %p233 = por %p231, %p232
      %p234 = scmp.ne.s32.totalorder %s223, %s224
      %p235 = scmp.eq.s32.totalorder %s38, 0
      %p236 = por %p234, %p235
      %p237 = scmp.ne.s32.totalorder %s223, %s224
      %p238 = scmp.eq.s32.totalorder %s39, 1
      %p239 = por %p237, %p238
      %p241 = scmp.ne.s32.totalorder %s224, %s240
      %p242 = scmp.eq.s32.totalorder %s39, 0
      %p243 = por %p241, %p242
      %s244 = ssub.s32 %s33, %s40
      %p245 = scmp.eq.s32.totalorder %s244, 0
      %s247 = sadd.s32 %s246, 1
      %s248 = scalar_select %p245, %s246, %s247
      %p251 = pneg %p245
      %p252 = scmp.eq.s32.totalorder %s33, 1
      %p253 = por %p251, %p252
      %p254 = scmp.ne.s32.totalorder %s246, %s249
      %p255 = scmp.eq.s32.totalorder %s33, 0
      %p256 = por %p254, %p255
      %p257 = scmp.ne.s32.totalorder %s246, %s249
      %p258 = scmp.eq.s32.totalorder %s38, 1
      %p259 = por %p257, %p258
      %p260 = scmp.ne.s32.totalorder %s249, %s250
      %p261 = scmp.eq.s32.totalorder %s38, 0
      %p262 = por %p260, %p261
      %p263 = scmp.ne.s32.totalorder %s249, %s250
      %p264 = scmp.eq.s32.totalorder %s39, 1
      %p265 = por %p263, %p264
      %p267 = scmp.ne.s32.totalorder %s250, %s266
      %p268 = scmp.eq.s32.totalorder %s39, 0
      %p269 = por %p267, %p268
      %s270 = ssub.s32 %s33, %s40
      %p271 = scmp.eq.s32.totalorder %s270, 0
      %s273 = sadd.s32 %s272, 1
      %s274 = scalar_select %p271, %s272, %s273
      %p277 = pneg %p271
      %p278 = scmp.eq.s32.totalorder %s33, 1
      %p279 = por %p277, %p278
      %p280 = scmp.ne.s32.totalorder %s272, %s275
      %p281 = scmp.eq.s32.totalorder %s33, 0
      %p282 = por %p280, %p281
      %p283 = scmp.ne.s32.totalorder %s272, %s275
      %p284 = scmp.eq.s32.totalorder %s38, 1
      %p285 = por %p283, %p284
      %p286 = scmp.ne.s32.totalorder %s275, %s276
      %p287 = scmp.eq.s32.totalorder %s38, 0
      %p288 = por %p286, %p287
      %p289 = scmp.ne.s32.totalorder %s275, %s276
      %p290 = scmp.eq.s32.totalorder %s39, 1
      %p291 = por %p289, %p290
      %p293 = scmp.ne.s32.totalorder %s276, %s292
      %p294 = scmp.eq.s32.totalorder %s39, 0
      %p295 = por %p293, %p294
      %s296 = ssub.s32 %s33, %s40
      %p297 = scmp.eq.s32.totalorder %s296, 0
      %s299 = sadd.s32 %s298, 1
      %s300 = scalar_select %p297, %s298, %s299
      %p303 = pneg %p297
      %p304 = scmp.eq.s32.totalorder %s33, 1
      %p305 = por %p303, %p304
      %p306 = scmp.ne.s32.totalorder %s298, %s301
      %p307 = scmp.eq.s32.totalorder %s33, 0
      %p308 = por %p306, %p307
      %p309 = scmp.ne.s32.totalorder %s298, %s301
      %p310 = scmp.eq.s32.totalorder %s38, 1
      %p311 = por %p309, %p310
      %p312 = scmp.ne.s32.totalorder %s301, %s302
      %p313 = scmp.eq.s32.totalorder %s38, 0
      %p314 = por %p312, %p313
      %p315 = scmp.ne.s32.totalorder %s301, %s302
      %p316 = scmp.eq.s32.totalorder %s39, 1
      %p317 = por %p315, %p316
      %p319 = scmp.ne.s32.totalorder %s302, %s318
      %p320 = scmp.eq.s32.totalorder %s39, 0
      %p321 = por %p319, %p320
      %s322 = ssub.s32 %s33, %s40
      %p323 = scmp.eq.s32.totalorder %s322, 0
      %s325 = sadd.s32 %s324, 1
      %s326 = scalar_select %p323, %s324, %s325
      %p329 = pneg %p323
      %p330 = scmp.eq.s32.totalorder %s33, 1
      %p331 = por %p329, %p330
      %p332 = scmp.ne.s32.totalorder %s324, %s327
      %p333 = scmp.eq.s32.totalorder %s33, 0
      %p334 = por %p332, %p333
      %p335 = scmp.ne.s32.totalorder %s324, %s327
      %p336 = scmp.eq.s32.totalorder %s38, 1
      %p337 = por %p335, %p336
      %p338 = scmp.ne.s32.totalorder %s327, %s328
      %p339 = scmp.eq.s32.totalorder %s38, 0
      %p340 = por %p338, %p339
      %p341 = scmp.ne.s32.totalorder %s327, %s328
      %p342 = scmp.eq.s32.totalorder %s39, 1
      %p343 = por %p341, %p342
      %p345 = scmp.ne.s32.totalorder %s328, %s344
      %p346 = scmp.eq.s32.totalorder %s39, 0
      %p347 = por %p345, %p346
      %s349 = sadd.s32 %s348, 1
      %p352 = scmp.eq.s32.totalorder %s33, 1
      %p353 = scmp.ne.s32.totalorder %s348, %s350
      %p354 = scmp.eq.s32.totalorder %s33, 0
      %p355 = por %p353, %p354
      %p356 = scmp.ne.s32.totalorder %s348, %s350
      %p357 = scmp.eq.s32.totalorder %s38, 1
      %p358 = por %p356, %p357
      %p359 = scmp.ne.s32.totalorder %s350, %s351
      %p360 = scmp.eq.s32.totalorder %s38, 0
      %p361 = por %p359, %p360
      %p362 = scmp.ne.s32.totalorder %s350, %s351
      %p363 = scmp.eq.s32.totalorder %s39, 1
      %p364 = por %p362, %p363
      %p366 = scmp.ne.s32.totalorder %s351, %s365
      %p367 = scmp.eq.s32.totalorder %s39, 0
      %p368 = por %p366, %p367
      %s370 = sadd.s32 %s369, 1
      %p373 = scmp.eq.s32.totalorder %s33, 1
      %p374 = scmp.ne.s32.totalorder %s369, %s371
      %p375 = scmp.eq.s32.totalorder %s33, 0
      %p376 = por %p374, %p375
      %p377 = scmp.ne.s32.totalorder %s369, %s371
      %p378 = scmp.eq.s32.totalorder %s38, 1
      %p379 = por %p377, %p378
      %p380 = scmp.ne.s32.totalorder %s371, %s372
      %p381 = scmp.eq.s32.totalorder %s38, 0
      %p382 = por %p380, %p381
      %p383 = scmp.ne.s32.totalorder %s371, %s372
      %p384 = scmp.eq.s32.totalorder %s39, 1
      %p385 = por %p383, %p384
      %p387 = scmp.ne.s32.totalorder %s372, %s386
      %p388 = scmp.eq.s32.totalorder %s39, 0
      %p389 = por %p387, %p388
      %s391 = sadd.s32 %s390, 1
      %p394 = scmp.eq.s32.totalorder %s33, 1
      %p395 = scmp.ne.s32.totalorder %s390, %s392
      %p396 = scmp.eq.s32.totalorder %s33, 0
      %p397 = por %p395, %p396
      %p398 = scmp.ne.s32.totalorder %s390, %s392
      %p399 = scmp.eq.s32.totalorder %s38, 1
      %p400 = por %p398, %p399
      %p401 = scmp.ne.s32.totalorder %s392, %s393
      %p402 = scmp.eq.s32.totalorder %s38, 0
      %p403 = por %p401, %p402
      %p404 = scmp.ne.s32.totalorder %s392, %s393
      %p405 = scmp.eq.s32.totalorder %s39, 1
      %p406 = por %p404, %p405
      %p408 = scmp.ne.s32.totalorder %s393, %s407
      %p409 = scmp.eq.s32.totalorder %s39, 0
      %p410 = por %p408, %p409
      %s412 = sadd.s32 %s411, 1
      %p415 = scmp.eq.s32.totalorder %s33, 1
      %p416 = scmp.ne.s32.totalorder %s411, %s413
      %p417 = scmp.eq.s32.totalorder %s33, 0
      %p418 = por %p416, %p417
      %p419 = scmp.ne.s32.totalorder %s411, %s413
      %p420 = scmp.eq.s32.totalorder %s38, 1
      %p421 = por %p419, %p420
      %p422 = scmp.ne.s32.totalorder %s413, %s414
      %p423 = scmp.eq.s32.totalorder %s38, 0
      %p424 = por %p422, %p423
      %p425 = scmp.ne.s32.totalorder %s413, %s414
      %p426 = scmp.eq.s32.totalorder %s39, 1
      %p427 = por %p425, %p426
      %p429 = scmp.ne.s32.totalorder %s414, %s428
      %p430 = scmp.eq.s32.totalorder %s39, 0
      %p431 = por %p429, %p430
      %s433 = sadd.s32 %s432, 1
      %p436 = scmp.eq.s32.totalorder %s33, 1
      %p437 = scmp.ne.s32.totalorder %s432, %s434
      %p438 = scmp.eq.s32.totalorder %s33, 0
      %p439 = por %p437, %p438
      %p440 = scmp.ne.s32.totalorder %s432, %s434
      %p441 = scmp.eq.s32.totalorder %s38, 1
      %p442 = por %p440, %p441
      %p443 = scmp.ne.s32.totalorder %s434, %s435
      %p444 = scmp.eq.s32.totalorder %s38, 0
      %p445 = por %p443, %p444
      %p446 = scmp.ne.s32.totalorder %s434, %s435
      %p447 = scmp.eq.s32.totalorder %s39, 1
      %p448 = por %p446, %p447
      %p450 = scmp.ne.s32.totalorder %s435, %s449
      %p451 = scmp.eq.s32.totalorder %s39, 0
      %p452 = por %p450, %p451
      %p453 = scmp.le.s32.totalorder 1, %s33
      %p454 = scmp.lt.s32.totalorder %s33, 3
      %p455 = pnand %p453, %p454
      %p456 = pneg %p455
      // Predicated region
      $region9: #{tpu_custom_call.1} parent=5 // pred_check
        _
      $region10: #{tpu_custom_call.1} parent=5 // pred_check_branch
        %458 = sbr.rel (%p455) target = $region12
      $region11: #{tpu_custom_call.1} parent=5 // pred_region
        %s459 = ssub.s32 %s33, 1
        // Predicated region
        $region13: #{tpu_custom_call.1} parent=11 // pred_check
          %p460 = pneg %p54
        $region14: #{tpu_custom_call.1} parent=11 // pred_check_branch
          %462 = sbr.rel (%p460) target = $region16
        $region15: #{tpu_custom_call.1} parent=11 // pred_region
          %s464 = ssub.s32 4096, 4096
          %465 = vsyncadd [#allocation4], %s464
          %s466 = sshll.u32 [#allocation3], 4
          %s467 = int_to_ptr.vmem [resolvable:$true] %s466
          %472 = dma.hbm_to_vmem [thread:$0]  %s0, 4096, %s467, [#allocation4], 128, 128, 8
        $region16: #{tpu_custom_call.1} parent=11 // pred_fallthru
          _
        // Predicated region
        $region17: #{tpu_custom_call.1} parent=11 // pred_check
          %p473 = pneg %p361
        $region18: #{tpu_custom_call.1} parent=11 // pred_check_branch
          %475 = sbr.rel (%p473) target = $region20
        $region19: #{tpu_custom_call.1} parent=11 // pred_region
          _
        $region20: #{tpu_custom_call.1} parent=11 // pred_fallthru
          _
        // Predicated region
        $region21: #{tpu_custom_call.1} parent=11 // pred_check
          %p476 = pneg %p382
        $region22: #{tpu_custom_call.1} parent=11 // pred_check_branch
          %478 = sbr.rel (%p476) target = $region24
        $region23: #{tpu_custom_call.1} parent=11 // pred_region
          _
        $region24: #{tpu_custom_call.1} parent=11 // pred_fallthru
          _
        // Predicated region
        $region25: #{tpu_custom_call.1} parent=11 // pred_check
          %p479 = pneg %p403
        $region26: #{tpu_custom_call.1} parent=11 // pred_check_branch
          %481 = sbr.rel (%p479) target = $region28
        $region27: #{tpu_custom_call.1} parent=11 // pred_region
          %s483 = ssub.s32 1024, 1024
          %484 = vsyncadd [#allocation13], %s483
          %s485 = sshll.u32 [#allocation14], 4
          %s486 = int_to_ptr.vmem [resolvable:$true] %s485
          %491 = dma.hbm_to_vmem [thread:$0]  %s14, 1024, %s486, [#allocation13], 64, 64, 4
        $region28: #{tpu_custom_call.1} parent=11 // pred_fallthru
          _
        // Predicated region
        $region29: #{tpu_custom_call.1} parent=11 // pred_check
          %p492 = pneg %p424
        $region30: #{tpu_custom_call.1} parent=11 // pred_check_branch
          %494 = sbr.rel (%p492) target = $region32
        $region31: #{tpu_custom_call.1} parent=11 // pred_region
          _
        $region32: #{tpu_custom_call.1} parent=11 // pred_fallthru
          _
      $region12: #{tpu_custom_call.1} parent=5 // pred_fallthru
        _
      %p495 = scmp.lt.s32.totalorder %s33, 2
      // Predicated region
      $region33: #{tpu_custom_call.1} parent=5 // pred_check
        %p496 = pneg %p495
      $region34: #{tpu_custom_call.1} parent=5 // pred_check_branch
        %498 = sbr.rel (%p496) target = $region36
      $region35: #{tpu_custom_call.1} parent=5 // pred_region
        // Predicated region
        $region37: #{tpu_custom_call.1} parent=35 // pred_check
          %p499 = pneg %p74
        $region38: #{tpu_custom_call.1} parent=35 // pred_check_branch
          %501 = sbr.rel (%p499) target = $region40
        $region39: #{tpu_custom_call.1} parent=35 // pred_region
          %s502 = sand.u32 %s33, 1
          %s503 = scalar_lea.sflag [#allocation7], %s502
          %s504 = sand.u32 %s64, 1
          %s505 = smul.addr %s504, 192
          %s506 = scalar_lea.vmem [#allocation6], %s505
          %s508 = ssub.s32 3072, 3072
          %509 = vsyncadd %s503, %s508
          %s510 = smul.addr %s33, 48
          %s511 = smul.addr %s510, 64
          %s512 = scalar_lea.hbm %s1, %s511
          %s513 = sshll.u32 %s506, 4
          %s514 = int_to_ptr.vmem [resolvable:$true] %s513
          %519 = dma.hbm_to_vmem [thread:$0]  %s512, 3072, %s514, %s503, 192, 192, 12
        $region40: #{tpu_custom_call.1} parent=35 // pred_fallthru
          _
        // Predicated region
        $region41: #{tpu_custom_call.1} parent=35 // pred_check
          %p520 = pneg %p100
        $region42: #{tpu_custom_call.1} parent=35 // pred_check_branch
          %522 = sbr.rel (%p520) target = $region44
        $region43: #{tpu_custom_call.1} parent=35 // pred_region
          %s523 = sand.u32 %s33, 1
          %s524 = scalar_lea.sflag [#allocation7], %s523
          %s525 = sand.u32 %s90, 1
          %s526 = smul.addr %s525, 64
          %s527 = scalar_lea.vmem [#allocation8], %s526
          %s529 = ssub.s32 1024, 1024
          %530 = vsyncadd %s524, %s529
          %s531 = smul.addr %s33, 16
          %s532 = smul.addr %s531, 64
          %s533 = scalar_lea.hbm %s2, %s532
          %s534 = sshll.u32 %s527, 4
          %s535 = int_to_ptr.vmem [resolvable:$true] %s534
          %540 = dma.hbm_to_vmem [thread:$0]  %s533, 1024, %s535, %s524, 64, 64, 4
        $region44: #{tpu_custom_call.1} parent=35 // pred_fallthru
          _
        // Predicated region
        $region45: #{tpu_custom_call.1} parent=35 // pred_check
          %p541 = pneg %p126
        $region46: #{tpu_custom_call.1} parent=35 // pred_check_branch
          %543 = sbr.rel (%p541) target = $region48
        $region47: #{tpu_custom_call.1} parent=35 // pred_region
          %p544 = scmp.lt.s32.totalorder %s33, 1
          %s545 = scalar_select %p544, %s33, 1
          %s546 = scalar_lea.vmem %s3, %s545
        $region48: #{tpu_custom_call.1} parent=35 // pred_fallthru
          _
        // Predicated region
        $region49: #{tpu_custom_call.1} parent=35 // pred_check
          %p547 = pneg %p152
        $region50: #{tpu_custom_call.1} parent=35 // pred_check_branch
          %549 = sbr.rel (%p547) target = $region52
        $region51: #{tpu_custom_call.1} parent=35 // pred_region
          %p550 = scmp.lt.s32.totalorder %s33, 1
          %s551 = scalar_select %p550, %s33, 1
          %s552 = scalar_lea.vmem %s4, %s551
        $region52: #{tpu_custom_call.1} parent=35 // pred_fallthru
          _
        // Predicated region
        $region53: #{tpu_custom_call.1} parent=35 // pred_check
          %p553 = pneg %p178
        $region54: #{tpu_custom_call.1} parent=35 // pred_check_branch
          %555 = sbr.rel (%p553) target = $region56
        $region55: #{tpu_custom_call.1} parent=35 // pred_region
          %p556 = scmp.lt.s32.totalorder %s33, 1
          %s557 = scalar_select %p556, %s33, 1
          %s558 = scalar_lea.vmem %s5, %s557
        $region56: #{tpu_custom_call.1} parent=35 // pred_fallthru
          _
        // Predicated region
        $region57: #{tpu_custom_call.1} parent=35 // pred_check
          %p559 = pneg %p204
        $region58: #{tpu_custom_call.1} parent=35 // pred_check_branch
          %561 = sbr.rel (%p559) target = $region60
        $region59: #{tpu_custom_call.1} parent=35 // pred_region
          %p562 = scmp.lt.s32.totalorder %s33, 1
          %s563 = scalar_select %p562, %s33, 1
          %s564 = scalar_lea.vmem %s6, %s563
        $region60: #{tpu_custom_call.1} parent=35 // pred_fallthru
          _
        // Predicated region
        $region61: #{tpu_custom_call.1} parent=35 // pred_check
          %p565 = pneg %p230
        $region62: #{tpu_custom_call.1} parent=35 // pred_check_branch
          %567 = sbr.rel (%p565) target = $region64
        $region63: #{tpu_custom_call.1} parent=35 // pred_region
          %s568 = sand.u32 %s33, 1
          %s569 = scalar_lea.sflag [#allocation10], %s568
          %s570 = sand.u32 %s220, 1
          %s571 = scalar_lea.vmem [#allocation9], %s570
          %s573 = ssub.s32 16, 16
          %574 = vsyncadd %s569, %s573
          %s575 = smul.addr %s33, 16
          %s576 = scalar_lea.hbm %s7, %s575
          %s578 = sshll.u32 %s571, 4
          %s579 = int_to_ptr.vmem [resolvable:$true] %s578
          %581 = dma.hbm_to_vmem [thread:$0]  %s576, 16, %s579, %s569
        $region64: #{tpu_custom_call.1} parent=35 // pred_fallthru
          _
        // Predicated region
        $region65: #{tpu_custom_call.1} parent=35 // pred_check
          %p582 = pneg %p256
        $region66: #{tpu_custom_call.1} parent=35 // pred_check_branch
          %584 = sbr.rel (%p582) target = $region68
        $region67: #{tpu_custom_call.1} parent=35 // pred_region
          %s585 = sand.u32 %s33, 1
          %s586 = scalar_lea.sflag [#allocation10], %s585
          %s587 = sand.u32 %s246, 1
          %s588 = smul.addr %s587, 256
          %s589 = scalar_lea.vmem [#allocation11], %s588
          %s591 = ssub.s32 4096, 4096
          %592 = vsyncadd %s586, %s591
          %s593 = smul.addr %s33, 64
          %s594 = smul.addr %s593, 64
          %s595 = scalar_lea.hbm %s8, %s594
          %s596 = sshll.u32 %s589, 4
          %s597 = int_to_ptr.vmem [resolvable:$true] %s596
          %602 = dma.hbm_to_vmem [thread:$0]  %s595, 4096, %s597, %s586, 256, 256, 16
        $region68: #{tpu_custom_call.1} parent=35 // pred_fallthru
          _
        // Predicated region
        $region69: #{tpu_custom_call.1} parent=35 // pred_check
          %p603 = pneg %p282
        $region70: #{tpu_custom_call.1} parent=35 // pred_check_branch
          %605 = sbr.rel (%p603) target = $region72
        $region71: #{tpu_custom_call.1} parent=35 // pred_region
          %p606 = scmp.lt.s32.totalorder %s33, 1
          %s607 = scalar_select %p606, %s33, 1
          %s608 = smul.addr %s607, 4
          %s609 = scalar_lea.vmem %s9, %s608
        $region72: #{tpu_custom_call.1} parent=35 // pred_fallthru
          _
        // Predicated region
        $region73: #{tpu_custom_call.1} parent=35 // pred_check
          %p610 = pneg %p308
        $region74: #{tpu_custom_call.1} parent=35 // pred_check_branch
          %612 = sbr.rel (%p610) target = $region76
        $region75: #{tpu_custom_call.1} parent=35 // pred_region
          %s613 = sand.u32 %s33, 1
          %s614 = scalar_lea.sflag [#allocation13], %s613
          %s615 = sand.u32 %s298, 1
          %s616 = smul.addr %s615, 256
          %s617 = scalar_lea.vmem [#allocation12], %s616
          %s619 = ssub.s32 4096, 4096
          %620 = vsyncadd %s614, %s619
          %s621 = smul.addr %s33, 64
          %s622 = smul.addr %s621, 64
          %s623 = scalar_lea.hbm %s10, %s622
          %s624 = sshll.u32 %s617, 4
          %s625 = int_to_ptr.vmem [resolvable:$true] %s624
          %630 = dma.hbm_to_vmem [thread:$0]  %s623, 4096, %s625, %s614, 64, 64, 4
        $region76: #{tpu_custom_call.1} parent=35 // pred_fallthru
          _
        // Predicated region
        $region77: #{tpu_custom_call.1} parent=35 // pred_check
          %p631 = pneg %p334
        $region78: #{tpu_custom_call.1} parent=35 // pred_check_branch
          %633 = sbr.rel (%p631) target = $region80
        $region79: #{tpu_custom_call.1} parent=35 // pred_region
          %p634 = scmp.lt.s32.totalorder %s33, 1
          %s635 = scalar_select %p634, %s33, 1
          %s636 = scalar_lea.vmem %s11, %s635
        $region80: #{tpu_custom_call.1} parent=35 // pred_fallthru
          _
      $region36: #{tpu_custom_call.1} parent=5 // pred_fallthru
        _
      %p637 = scmp.le.s32.totalorder 1, %s33
      %p638 = scmp.lt.s32.totalorder %s33, 3
      %p639 = pnand %p637, %p638
      %p640 = pneg %p639
      // Predicated region
      $region81: #{tpu_custom_call.1} parent=5 // pred_check
        _
      $region82: #{tpu_custom_call.1} parent=5 // pred_check_branch
        %642 = sbr.rel (%p639) target = $region84
      $region83: #{tpu_custom_call.1} parent=5 // pred_region
        %s643 = ssub.s32 %s33, 1
        // Predicated region
        $region85: #{tpu_custom_call.1} parent=83 // pred_check
          %p644 = pneg %p54
        $region86: #{tpu_custom_call.1} parent=83 // pred_check_branch
          %646 = sbr.rel (%p644) target = $region88
        $region87: #{tpu_custom_call.1} parent=83 // pred_region
          %647 = dma.done [#allocation4], 4096
        $region88: #{tpu_custom_call.1} parent=83 // pred_fallthru
          _
        %s648 = sand.u32 %s38, 1
        %s649 = scalar_lea.sflag [#allocation7], %s648
        %s650 = sand.u32 %s67, 1
        %s651 = smul.addr %s650, 192
        %s652 = scalar_lea.vmem [#allocation6], %s651
        // Predicated region
        $region89: #{tpu_custom_call.1} parent=83 // pred_check
          %p653 = pneg %p80
        $region90: #{tpu_custom_call.1} parent=83 // pred_check_branch
          %655 = sbr.rel (%p653) target = $region92
        $region91: #{tpu_custom_call.1} parent=83 // pred_region
          %656 = dma.done %s649, 3072
        $region92: #{tpu_custom_call.1} parent=83 // pred_fallthru
          _
        %s657 = sand.u32 %s38, 1
        %s658 = scalar_lea.sflag [#allocation7], %s657
        %s659 = sand.u32 %s93, 1
        %s660 = smul.addr %s659, 64
        %s661 = scalar_lea.vmem [#allocation8], %s660
        // Predicated region
        $region93: #{tpu_custom_call.1} parent=83 // pred_check
          %p662 = pneg %p106
        $region94: #{tpu_custom_call.1} parent=83 // pred_check_branch
          %664 = sbr.rel (%p662) target = $region96
        $region95: #{tpu_custom_call.1} parent=83 // pred_region
          %665 = dma.done %s658, 1024
        $region96: #{tpu_custom_call.1} parent=83 // pred_fallthru
          _
        %s666 = sand.u32 %s38, 1
        %s667 = scalar_lea.sflag [#allocation10], %s666
        %s668 = sand.u32 %s223, 1
        %s669 = scalar_lea.vmem [#allocation9], %s668
        // Predicated region
        $region97: #{tpu_custom_call.1} parent=83 // pred_check
          %p670 = pneg %p236
        $region98: #{tpu_custom_call.1} parent=83 // pred_check_branch
          %672 = sbr.rel (%p670) target = $region100
        $region99: #{tpu_custom_call.1} parent=83 // pred_region
          %673 = dma.done %s667, 16
        $region100: #{tpu_custom_call.1} parent=83 // pred_fallthru
          _
        %s674 = sand.u32 %s38, 1
        %s675 = scalar_lea.sflag [#allocation10], %s674
        %s676 = sand.u32 %s249, 1
        %s677 = smul.addr %s676, 256
        %s678 = scalar_lea.vmem [#allocation11], %s677
        // Predicated region
        $region101: #{tpu_custom_call.1} parent=83 // pred_check
          %p679 = pneg %p262
        $region102: #{tpu_custom_call.1} parent=83 // pred_check_branch
          %681 = sbr.rel (%p679) target = $region104
        $region103: #{tpu_custom_call.1} parent=83 // pred_region
          %682 = dma.done %s675, 4096
        $region104: #{tpu_custom_call.1} parent=83 // pred_fallthru
          _
        %s683 = sand.u32 %s38, 1
        %s684 = scalar_lea.sflag [#allocation13], %s683
        %s685 = sand.u32 %s301, 1
        %s686 = smul.addr %s685, 256
        %s687 = scalar_lea.vmem [#allocation12], %s686
        // Predicated region
        $region105: #{tpu_custom_call.1} parent=83 // pred_check
          %p688 = pneg %p314
        $region106: #{tpu_custom_call.1} parent=83 // pred_check_branch
          %690 = sbr.rel (%p688) target = $region108
        $region107: #{tpu_custom_call.1} parent=83 // pred_region
          %691 = dma.done %s684, 4096
        $region108: #{tpu_custom_call.1} parent=83 // pred_fallthru
          _
        // Predicated region
        $region109: #{tpu_custom_call.1} parent=83 // pred_check
          %p692 = pneg %p403
        $region110: #{tpu_custom_call.1} parent=83 // pred_check_branch
          %694 = sbr.rel (%p692) target = $region112
        $region111: #{tpu_custom_call.1} parent=83 // pred_region
          %695 = dma.done [#allocation13], 1024
        $region112: #{tpu_custom_call.1} parent=83 // pred_fallthru
          _
        %p696 = pneg %p54
        %p697 = pneg %p51
        %s698 = sand.u32 %s38, 1
        %s699 = scalar_lea.sflag [#allocation7], %s698
        %s700 = sand.u32 %s67, 1
        %s701 = smul.addr %s700, 192
        %s702 = scalar_lea.vmem [#allocation6], %s701
        %p703 = pneg %p80
        %p704 = pneg %p77
        %s705 = sand.u32 %s38, 1
        %s706 = scalar_lea.sflag [#allocation7], %s705
        %s707 = sand.u32 %s93, 1
        %s708 = smul.addr %s707, 64
        %s709 = scalar_lea.vmem [#allocation8], %s708
        %p710 = pneg %p106
        %p711 = pneg %p103
        %p712 = scmp.lt.s32.totalorder %s38, 1
        %s713 = scalar_select %p712, %s38, 1
        %s714 = scalar_lea.vmem %s3, %s713
        %p715 = pneg %p132
        %p716 = pneg %p129
        %p717 = scmp.lt.s32.totalorder %s38, 1
        %s718 = scalar_select %p717, %s38, 1
        %s719 = scalar_lea.vmem %s4, %s718
        %p720 = pneg %p158
        %p721 = pneg %p155
        %p722 = scmp.lt.s32.totalorder %s38, 1
        %s723 = scalar_select %p722, %s38, 1
        %s724 = scalar_lea.vmem %s5, %s723
        %p725 = pneg %p184
        %p726 = pneg %p181
        %p727 = scmp.lt.s32.totalorder %s38, 1
        %s728 = scalar_select %p727, %s38, 1
        %s729 = scalar_lea.vmem %s6, %s728
        %p730 = pneg %p210
        %p731 = pneg %p207
        %s732 = sand.u32 %s38, 1
        %s733 = scalar_lea.sflag [#allocation10], %s732
        %s734 = sand.u32 %s223, 1
        %s735 = scalar_lea.vmem [#allocation9], %s734
        %p736 = pneg %p236
        %p737 = pneg %p233
        %s738 = sand.u32 %s38, 1
        %s739 = scalar_lea.sflag [#allocation10], %s738
        %s740 = sand.u32 %s249, 1
        %s741 = smul.addr %s740, 256
        %s742 = scalar_lea.vmem [#allocation11], %s741
        %p743 = pneg %p262
        %p744 = pneg %p259
        %p745 = scmp.lt.s32.totalorder %s38, 1
        %s746 = scalar_select %p745, %s38, 1
        %s747 = smul.addr %s746, 4
        %s748 = scalar_lea.vmem %s9, %s747
        %p749 = pneg %p288
        %p750 = pneg %p285
        %s751 = sand.u32 %s38, 1
        %s752 = scalar_lea.sflag [#allocation13], %s751
        %s753 = sand.u32 %s301, 1
        %s754 = smul.addr %s753, 256
        %s755 = scalar_lea.vmem [#allocation12], %s754
        %p756 = pneg %p314
        %p757 = pneg %p311
        %p758 = scmp.lt.s32.totalorder %s38, 1
        %s759 = scalar_select %p758, %s38, 1
        %s760 = scalar_lea.vmem %s11, %s759
        %p761 = pneg %p340
        %p762 = pneg %p337
        %p763 = pneg %p361
        %p764 = pneg %p358
        %p765 = pneg %p382
        %p766 = pneg %p379
        %p767 = pneg %p403
        %p768 = pneg %p400
        %p769 = pneg %p424
        %p770 = pneg %p421
        %p771 = pneg %p445
        %p772 = pneg %p442
        %p773 = scmp.lt.s32.totalorder %s38, 1
        %s774 = scalar_select %p773, %s38, 1
        %s775 = scalar_lea.vmem %s3, %s774
        %p776 = scmp.lt.s32.totalorder %s38, 1
        %s777 = scalar_select %p776, %s38, 1
        %s778 = scalar_lea.vmem %s4, %s777
        %p779 = scmp.lt.s32.totalorder %s38, 1
        %s780 = scalar_select %p779, %s38, 1
        %s781 = scalar_lea.vmem %s5, %s780
        %p782 = scmp.lt.s32.totalorder %s38, 1
        %s783 = scalar_select %p782, %s38, 1
        %s784 = scalar_lea.vmem %s6, %s783
        %p785 = scmp.lt.s32.totalorder %s38, 1
        %s786 = scalar_select %p785, %s38, 1
        %s787 = smul.addr %s786, 4
        %s788 = scalar_lea.vmem %s9, %s787
        %p789 = scmp.lt.s32.totalorder %s38, 1
        %s790 = scalar_select %p789, %s38, 1
        %s791 = scalar_lea.vmem %s11, %s790
        %p793 = scmp.eq.s32.totalorder %s38, 0
        // Predicated region
        $region113: #{tpu_custom_call.1} parent=83 // pred_check
          %p794 = pneg %p793
        $region114: #{tpu_custom_call.1} parent=83 // pred_check_branch
          %796 = sbr.rel (%p794) target = $region116
        $region115: #{tpu_custom_call.1} parent=83 // pred_region
          %v797 = vld [vmem:[#allocation3] sm:$0xff]
          %v798 = vld [vmem:[#allocation3 + $0x8] sm:$0xff]
          %v799 = vld [vmem:[#allocation3 + $0x10] sm:$0xff]
          %v800 = vld [vmem:[#allocation3 + $0x18] sm:$0xff]
          %v801 = vld [vmem:[#allocation3 + $0x20] sm:$0xff]
          %v802 = vld [vmem:[#allocation3 + $0x28] sm:$0xff]
          %v803 = vld [vmem:[#allocation3 + $0x30] sm:$0xff]
          %v804 = vld [vmem:[#allocation3 + $0x38] sm:$0xff]
          %v805 = vld [vmem:[#allocation3 + $0x40] sm:$0xff]
          %v806 = vld [vmem:[#allocation3 + $0x48] sm:$0xff]
          %v807 = vld [vmem:[#allocation3 + $0x50] sm:$0xff]
          %v808 = vld [vmem:[#allocation3 + $0x58] sm:$0xff]
          %v809 = vld [vmem:[#allocation3 + $0x60] sm:$0xff]
          %v810 = vld [vmem:[#allocation3 + $0x68] sm:$0xff]
          %v811 = vld [vmem:[#allocation3 + $0x70] sm:$0xff]
          %v812 = vld [vmem:[#allocation3 + $0x78] sm:$0xff]
          %v813 = vld [vmem:[#allocation3 + $0x80] sm:$0xff]
          %v814 = vld [vmem:[#allocation3 + $0x88] sm:$0xff]
          %v815 = vld [vmem:[#allocation3 + $0x90] sm:$0xff]
          %v816 = vld [vmem:[#allocation3 + $0x98] sm:$0xff]
          %v817 = vld [vmem:[#allocation3 + $0xa0] sm:$0xff]
          %v818 = vld [vmem:[#allocation3 + $0xa8] sm:$0xff]
          %v819 = vld [vmem:[#allocation3 + $0xb0] sm:$0xff]
          %v820 = vld [vmem:[#allocation3 + $0xb8] sm:$0xff]
          %v821 = vld [vmem:[#allocation3 + $0xc0] sm:$0xff]
          %v822 = vld [vmem:[#allocation3 + $0xc8] sm:$0xff]
          %v823 = vld [vmem:[#allocation3 + $0xd0] sm:$0xff]
          %v824 = vld [vmem:[#allocation3 + $0xd8] sm:$0xff]
          %v825 = vld [vmem:[#allocation3 + $0xe0] sm:$0xff]
          %v826 = vld [vmem:[#allocation3 + $0xe8] sm:$0xff]
          %v827 = vld [vmem:[#allocation3 + $0xf0] sm:$0xff]
          %v828 = vld [vmem:[#allocation3 + $0xf8] sm:$0xff]
          %829 = vst [vmem:[#allocation2] sm:$0xff] %v797
          %830 = vst [vmem:[#allocation2 + $0x8] sm:$0xff] %v798
          %831 = vst [vmem:[#allocation2 + $0x10] sm:$0xff] %v799
          %832 = vst [vmem:[#allocation2 + $0x18] sm:$0xff] %v800
          %833 = vst [vmem:[#allocation2 + $0x20] sm:$0xff] %v801
          %834 = vst [vmem:[#allocation2 + $0x28] sm:$0xff] %v802
          %835 = vst [vmem:[#allocation2 + $0x30] sm:$0xff] %v803
          %836 = vst [vmem:[#allocation2 + $0x38] sm:$0xff] %v804
          %837 = vst [vmem:[#allocation2 + $0x40] sm:$0xff] %v805
          %838 = vst [vmem:[#allocation2 + $0x48] sm:$0xff] %v806
          %839 = vst [vmem:[#allocation2 + $0x50] sm:$0xff] %v807
          %840 = vst [vmem:[#allocation2 + $0x58] sm:$0xff] %v808
          %841 = vst [vmem:[#allocation2 + $0x60] sm:$0xff] %v809
          %842 = vst [vmem:[#allocation2 + $0x68] sm:$0xff] %v810
          %843 = vst [vmem:[#allocation2 + $0x70] sm:$0xff] %v811
          %844 = vst [vmem:[#allocation2 + $0x78] sm:$0xff] %v812
          %845 = vst [vmem:[#allocation2 + $0x80] sm:$0xff] %v813
          %846 = vst [vmem:[#allocation2 + $0x88] sm:$0xff] %v814
          %847 = vst [vmem:[#allocation2 + $0x90] sm:$0xff] %v815
          %848 = vst [vmem:[#allocation2 + $0x98] sm:$0xff] %v816
          %849 = vst [vmem:[#allocation2 + $0xa0] sm:$0xff] %v817
          %850 = vst [vmem:[#allocation2 + $0xa8] sm:$0xff] %v818
          %851 = vst [vmem:[#allocation2 + $0xb0] sm:$0xff] %v819
          %852 = vst [vmem:[#allocation2 + $0xb8] sm:$0xff] %v820
          %853 = vst [vmem:[#allocation2 + $0xc0] sm:$0xff] %v821
          %854 = vst [vmem:[#allocation2 + $0xc8] sm:$0xff] %v822
          %855 = vst [vmem:[#allocation2 + $0xd0] sm:$0xff] %v823
          %856 = vst [vmem:[#allocation2 + $0xd8] sm:$0xff] %v824
          %857 = vst [vmem:[#allocation2 + $0xe0] sm:$0xff] %v825
          %858 = vst [vmem:[#allocation2 + $0xe8] sm:$0xff] %v826
          %859 = vst [vmem:[#allocation2 + $0xf0] sm:$0xff] %v827
          %860 = vst [vmem:[#allocation2 + $0xf8] sm:$0xff] %v828
        $region116: #{tpu_custom_call.1} parent=83 // pred_fallthru
          _
        %v861 = vld [vmem:[#allocation2] sm:$0xff]
        %v862 = vld [vmem:[#allocation2 + $0x8] sm:$0xff]
        %v863 = vld [vmem:[#allocation2 + $0x10] sm:$0xff]
        %v864 = vld [vmem:[#allocation2 + $0x18] sm:$0xff]
        %v865 = vld [vmem:[#allocation2 + $0x20] sm:$0xff]
        %v866 = vld [vmem:[#allocation2 + $0x28] sm:$0xff]
        %v867 = vld [vmem:[#allocation2 + $0x30] sm:$0xff]
        %v868 = vld [vmem:[#allocation2 + $0x38] sm:$0xff]
        %v869 = vld [vmem:[#allocation2 + $0x40] sm:$0xff]
        %v870 = vld [vmem:[#allocation2 + $0x48] sm:$0xff]
        %v871 = vld [vmem:[#allocation2 + $0x50] sm:$0xff]
        %v872 = vld [vmem:[#allocation2 + $0x58] sm:$0xff]
        %v873 = vld [vmem:[#allocation2 + $0x60] sm:$0xff]
        %v874 = vld [vmem:[#allocation2 + $0x68] sm:$0xff]
        %v875 = vld [vmem:[#allocation2 + $0x70] sm:$0xff]
        %v876 = vld [vmem:[#allocation2 + $0x78] sm:$0xff]
        %v877 = vld [vmem:[#allocation2 + $0x80] sm:$0xff]
        %v878 = vld [vmem:[#allocation2 + $0x88] sm:$0xff]
        %v879 = vld [vmem:[#allocation2 + $0x90] sm:$0xff]
        %v880 = vld [vmem:[#allocation2 + $0x98] sm:$0xff]
        %v881 = vld [vmem:[#allocation2 + $0xa0] sm:$0xff]
        %v882 = vld [vmem:[#allocation2 + $0xa8] sm:$0xff]
        %v883 = vld [vmem:[#allocation2 + $0xb0] sm:$0xff]
        %v884 = vld [vmem:[#allocation2 + $0xb8] sm:$0xff]
        %v885 = vld [vmem:[#allocation2 + $0xc0] sm:$0xff]
        %v886 = vld [vmem:[#allocation2 + $0xc8] sm:$0xff]
        %v887 = vld [vmem:[#allocation2 + $0xd0] sm:$0xff]
        %v888 = vld [vmem:[#allocation2 + $0xd8] sm:$0xff]
        %v889 = vld [vmem:[#allocation2 + $0xe0] sm:$0xff]
        %v890 = vld [vmem:[#allocation2 + $0xe8] sm:$0xff]
        %v891 = vld [vmem:[#allocation2 + $0xf0] sm:$0xff]
        %v892 = vld [vmem:[#allocation2 + $0xf8] sm:$0xff]
        %v893 = vld [vmem:[%s778] sm:$0x1]
        %v894 = vld [vmem:[%s781] sm:$0x1]
        %895 = vadd.xlane.f32.xlu0 %v861
        %v896 = vpop.xlane.xlu0 %895
        %897 = vadd.xlane.f32.xlu0 %v862
        %v898 = vpop.xlane.xlu0 %897
        %899 = vadd.xlane.f32.xlu0 %v863
        %v900 = vpop.xlane.xlu0 %899
        %901 = vadd.xlane.f32.xlu0 %v864
        %v902 = vpop.xlane.xlu0 %901
        %903 = vadd.xlane.f32.xlu0 %v865
        %v904 = vpop.xlane.xlu0 %903
        %905 = vadd.xlane.f32.xlu0 %v866
        %v906 = vpop.xlane.xlu0 %905
        %907 = vadd.xlane.f32.xlu0 %v867
        %v908 = vpop.xlane.xlu0 %907
        %909 = vadd.xlane.f32.xlu0 %v868
        %v910 = vpop.xlane.xlu0 %909
        %911 = vadd.xlane.f32.xlu0 %v869
        %v912 = vpop.xlane.xlu0 %911
        %913 = vadd.xlane.f32.xlu0 %v870
        %v914 = vpop.xlane.xlu0 %913
        %915 = vadd.xlane.f32.xlu0 %v871
        %v916 = vpop.xlane.xlu0 %915
        %917 = vadd.xlane.f32.xlu0 %v872
        %v918 = vpop.xlane.xlu0 %917
        %919 = vadd.xlane.f32.xlu0 %v873
        %v920 = vpop.xlane.xlu0 %919
        %921 = vadd.xlane.f32.xlu0 %v874
        %v922 = vpop.xlane.xlu0 %921
        %923 = vadd.xlane.f32.xlu0 %v875
        %v924 = vpop.xlane.xlu0 %923
        %925 = vadd.xlane.f32.xlu0 %v876
        %v926 = vpop.xlane.xlu0 %925
        %927 = vadd.xlane.f32.xlu0 %v877
        %v928 = vpop.xlane.xlu0 %927
        %929 = vadd.xlane.f32.xlu0 %v878
        %v930 = vpop.xlane.xlu0 %929
        %931 = vadd.xlane.f32.xlu0 %v879
        %v932 = vpop.xlane.xlu0 %931
        %933 = vadd.xlane.f32.xlu0 %v880
        %v934 = vpop.xlane.xlu0 %933
        %935 = vadd.xlane.f32.xlu0 %v881
        %v936 = vpop.xlane.xlu0 %935
        %937 = vadd.xlane.f32.xlu0 %v882
        %v938 = vpop.xlane.xlu0 %937
        %939 = vadd.xlane.f32.xlu0 %v883
        %v940 = vpop.xlane.xlu0 %939
        %941 = vadd.xlane.f32.xlu0 %v884
        %v942 = vpop.xlane.xlu0 %941
        %943 = vadd.xlane.f32.xlu0 %v885
        %v944 = vpop.xlane.xlu0 %943
        %945 = vadd.xlane.f32.xlu0 %v886
        %v946 = vpop.xlane.xlu0 %945
        %947 = vadd.xlane.f32.xlu0 %v887
        %v948 = vpop.xlane.xlu0 %947
        %949 = vadd.xlane.f32.xlu0 %v888
        %v950 = vpop.xlane.xlu0 %949
        %951 = vadd.xlane.f32.xlu0 %v889
        %v952 = vpop.xlane.xlu0 %951
        %953 = vadd.xlane.f32.xlu0 %v890
        %v954 = vpop.xlane.xlu0 %953
        %955 = vadd.xlane.f32.xlu0 %v891
        %v956 = vpop.xlane.xlu0 %955
        %957 = vadd.xlane.f32.xlu0 %v892
        %v958 = vpop.xlane.xlu0 %957
        %v959 = vrcp.pop 128.0
        %v960 = vmul.f32 %v896, %v959
        %v961 = vmul.f32 %v898, %v959
        %v962 = vmul.f32 %v900, %v959
        %v963 = vmul.f32 %v902, %v959
        %v964 = vmul.f32 %v904, %v959
        %v965 = vmul.f32 %v906, %v959
        %v966 = vmul.f32 %v908, %v959
        %v967 = vmul.f32 %v910, %v959
        %v968 = vmul.f32 %v912, %v959
        %v969 = vmul.f32 %v914, %v959
        %v970 = vmul.f32 %v916, %v959
        %v971 = vmul.f32 %v918, %v959
        %v972 = vmul.f32 %v920, %v959
        %v973 = vmul.f32 %v922, %v959
        %v974 = vmul.f32 %v924, %v959
        %v975 = vmul.f32 %v926, %v959
        %v976 = vmul.f32 %v928, %v959
        %v977 = vmul.f32 %v930, %v959
        %v978 = vmul.f32 %v932, %v959
        %v979 = vmul.f32 %v934, %v959
        %v980 = vmul.f32 %v936, %v959
        %v981 = vmul.f32 %v938, %v959
        %v982 = vmul.f32 %v940, %v959
        %v983 = vmul.f32 %v942, %v959
        %v984 = vmul.f32 %v944, %v959
        %v985 = vmul.f32 %v946, %v959
        %v986 = vmul.f32 %v948, %v959
        %v987 = vmul.f32 %v950, %v959
        %v988 = vmul.f32 %v952, %v959
        %v989 = vmul.f32 %v954, %v959
        %v990 = vmul.f32 %v956, %v959
        %v991 = vmul.f32 %v958, %v959
        %v992 = vsub.f32 %v861, %v960
        %v993 = vsub.f32 %v862, %v961
        %v994 = vsub.f32 %v863, %v962
        %v995 = vsub.f32 %v864, %v963
        %v996 = vsub.f32 %v865, %v964
        %v997 = vsub.f32 %v866, %v965
        %v998 = vsub.f32 %v867, %v966
        %v999 = vsub.f32 %v868, %v967
        %v1000 = vsub.f32 %v869, %v968
        %v1001 = vsub.f32 %v870, %v969
        %v1002 = vsub.f32 %v871, %v970
        %v1003 = vsub.f32 %v872, %v971
        %v1004 = vsub.f32 %v873, %v972
        %v1005 = vsub.f32 %v874, %v973
        %v1006 = vsub.f32 %v875, %v974
        %v1007 = vsub.f32 %v876, %v975
        %v1008 = vsub.f32 %v877, %v976
        %v1009 = vsub.f32 %v878, %v977
        %v1010 = vsub.f32 %v879, %v978
        %v1011 = vsub.f32 %v880, %v979
        %v1012 = vsub.f32 %v881, %v980
        %v1013 = vsub.f32 %v882, %v981
        %v1014 = vsub.f32 %v883, %v982
        %v1015 = vsub.f32 %v884, %v983
        %v1016 = vsub.f32 %v885, %v984
        %v1017 = vsub.f32 %v886, %v985
        %v1018 = vsub.f32 %v887, %v986
        %v1019 = vsub.f32 %v888, %v987
        %v1020 = vsub.f32 %v889, %v988
        %v1021 = vsub.f32 %v890, %v989
        %v1022 = vsub.f32 %v891, %v990
        %v1023 = vsub.f32 %v892, %v991
        %v1024 = vmul.f32 %v992, %v992
        %v1025 = vmul.f32 %v993, %v993
        %v1026 = vmul.f32 %v994, %v994
        %v1027 = vmul.f32 %v995, %v995
        %v1028 = vmul.f32 %v996, %v996
        %v1029 = vmul.f32 %v997, %v997
        %v1030 = vmul.f32 %v998, %v998
        %v1031 = vmul.f32 %v999, %v999
        %v1032 = vmul.f32 %v1000, %v1000
        %v1033 = vmul.f32 %v1001, %v1001
        %v1034 = vmul.f32 %v1002, %v1002
        %v1035 = vmul.f32 %v1003, %v1003
        %v1036 = vmul.f32 %v1004, %v1004
        %v1037 = vmul.f32 %v1005, %v1005
        %v1038 = vmul.f32 %v1006, %v1006
        %v1039 = vmul.f32 %v1007, %v1007
        %v1040 = vmul.f32 %v1008, %v1008
        %v1041 = vmul.f32 %v1009, %v1009
        %v1042 = vmul.f32 %v1010, %v1010
        %v1043 = vmul.f32 %v1011, %v1011
        %v1044 = vmul.f32 %v1012, %v1012
        %v1045 = vmul.f32 %v1013, %v1013
        %v1046 = vmul.f32 %v1014, %v1014
        %v1047 = vmul.f32 %v1015, %v1015
        %v1048 = vmul.f32 %v1016, %v1016
        %v1049 = vmul.f32 %v1017, %v1017
        %v1050 = vmul.f32 %v1018, %v1018
        %v1051 = vmul.f32 %v1019, %v1019
        %v1052 = vmul.f32 %v1020, %v1020
        %v1053 = vmul.f32 %v1021, %v1021
        %v1054 = vmul.f32 %v1022, %v1022
        %v1055 = vmul.f32 %v1023, %v1023
        %1056 = vadd.xlane.f32.xlu0 %v1024
        %v1057 = vpop.xlane.xlu0 %1056
        %1058 = vadd.xlane.f32.xlu0 %v1025
        %v1059 = vpop.xlane.xlu0 %1058
        %1060 = vadd.xlane.f32.xlu0 %v1026
        %v1061 = vpop.xlane.xlu0 %1060
        %1062 = vadd.xlane.f32.xlu0 %v1027
        %v1063 = vpop.xlane.xlu0 %1062
        %1064 = vadd.xlane.f32.xlu0 %v1028
        %v1065 = vpop.xlane.xlu0 %1064
        %1066 = vadd.xlane.f32.xlu0 %v1029
        %v1067 = vpop.xlane.xlu0 %1066
        %1068 = vadd.xlane.f32.xlu0 %v1030
        %v1069 = vpop.xlane.xlu0 %1068
        %1070 = vadd.xlane.f32.xlu0 %v1031
        %v1071 = vpop.xlane.xlu0 %1070
        %1072 = vadd.xlane.f32.xlu0 %v1032
        %v1073 = vpop.xlane.xlu0 %1072
        %1074 = vadd.xlane.f32.xlu0 %v1033
        %v1075 = vpop.xlane.xlu0 %1074
        %1076 = vadd.xlane.f32.xlu0 %v1034
        %v1077 = vpop.xlane.xlu0 %1076
        %1078 = vadd.xlane.f32.xlu0 %v1035
        %v1079 = vpop.xlane.xlu0 %1078
        %1080 = vadd.xlane.f32.xlu0 %v1036
        %v1081 = vpop.xlane.xlu0 %1080
        %1082 = vadd.xlane.f32.xlu0 %v1037
        %v1083 = vpop.xlane.xlu0 %1082
        %1084 = vadd.xlane.f32.xlu0 %v1038
        %v1085 = vpop.xlane.xlu0 %1084
        %1086 = vadd.xlane.f32.xlu0 %v1039
        %v1087 = vpop.xlane.xlu0 %1086
        %1088 = vadd.xlane.f32.xlu0 %v1040
        %v1089 = vpop.xlane.xlu0 %1088
        %1090 = vadd.xlane.f32.xlu0 %v1041
        %v1091 = vpop.xlane.xlu0 %1090
        %1092 = vadd.xlane.f32.xlu0 %v1042
        %v1093 = vpop.xlane.xlu0 %1092
        %1094 = vadd.xlane.f32.xlu0 %v1043
        %v1095 = vpop.xlane.xlu0 %1094
        %1096 = vadd.xlane.f32.xlu0 %v1044
        %v1097 = vpop.xlane.xlu0 %1096
        %1098 = vadd.xlane.f32.xlu0 %v1045
        %v1099 = vpop.xlane.xlu0 %1098
        %1100 = vadd.xlane.f32.xlu0 %v1046
        %v1101 = vpop.xlane.xlu0 %1100
        %1102 = vadd.xlane.f32.xlu0 %v1047
        %v1103 = vpop.xlane.xlu0 %1102
        %1104 = vadd.xlane.f32.xlu0 %v1048
        %v1105 = vpop.xlane.xlu0 %1104
        %1106 = vadd.xlane.f32.xlu0 %v1049
        %v1107 = vpop.xlane.xlu0 %1106
        %1108 = vadd.xlane.f32.xlu0 %v1050
        %v1109 = vpop.xlane.xlu0 %1108
        %1110 = vadd.xlane.f32.xlu0 %v1051
        %v1111 = vpop.xlane.xlu0 %1110
        %1112 = vadd.xlane.f32.xlu0 %v1052
        %v1113 = vpop.xlane.xlu0 %1112
        %1114 = vadd.xlane.f32.xlu0 %v1053
        %v1115 = vpop.xlane.xlu0 %1114
        %1116 = vadd.xlane.f32.xlu0 %v1054
        %v1117 = vpop.xlane.xlu0 %1116
        %1118 = vadd.xlane.f32.xlu0 %v1055
        %v1119 = vpop.xlane.xlu0 %1118
        %v1120 = vmul.f32 %v1057, %v959
        %v1121 = vmul.f32 %v1059, %v959
        %v1122 = vmul.f32 %v1061, %v959
        %v1123 = vmul.f32 %v1063, %v959
        %v1124 = vmul.f32 %v1065, %v959
        %v1125 = vmul.f32 %v1067, %v959
        %v1126 = vmul.f32 %v1069, %v959
        %v1127 = vmul.f32 %v1071, %v959
        %v1128 = vmul.f32 %v1073, %v959
        %v1129 = vmul.f32 %v1075, %v959
        %v1130 = vmul.f32 %v1077, %v959
        %v1131 = vmul.f32 %v1079, %v959
        %v1132 = vmul.f32 %v1081, %v959
        %v1133 = vmul.f32 %v1083, %v959
        %v1134 = vmul.f32 %v1085, %v959
        %v1135 = vmul.f32 %v1087, %v959
        %v1136 = vmul.f32 %v1089, %v959
        %v1137 = vmul.f32 %v1091, %v959
        %v1138 = vmul.f32 %v1093, %v959
        %v1139 = vmul.f32 %v1095, %v959
        %v1140 = vmul.f32 %v1097, %v959
        %v1141 = vmul.f32 %v1099, %v959
        %v1142 = vmul.f32 %v1101, %v959
        %v1143 = vmul.f32 %v1103, %v959
        %v1144 = vmul.f32 %v1105, %v959
        %v1145 = vmul.f32 %v1107, %v959
        %v1146 = vmul.f32 %v1109, %v959
        %v1147 = vmul.f32 %v1111, %v959
        %v1148 = vmul.f32 %v1113, %v959
        %v1149 = vmul.f32 %v1115, %v959
        %v1150 = vmul.f32 %v1117, %v959
        %v1151 = vmul.f32 %v1119, %v959
        %v1152 = vadd.f32 %v1120, 1e-05
        %v1153 = vadd.f32 %v1121, 1e-05
        %v1154 = vadd.f32 %v1122, 1e-05
        %v1155 = vadd.f32 %v1123, 1e-05
        %v1156 = vadd.f32 %v1124, 1e-05
        %v1157 = vadd.f32 %v1125, 1e-05
        %v1158 = vadd.f32 %v1126, 1e-05
        %v1159 = vadd.f32 %v1127, 1e-05
        %v1160 = vadd.f32 %v1128, 1e-05
        %v1161 = vadd.f32 %v1129, 1e-05
        %v1162 = vadd.f32 %v1130, 1e-05
        %v1163 = vadd.f32 %v1131, 1e-05
        %v1164 = vadd.f32 %v1132, 1e-05
        %v1165 = vadd.f32 %v1133, 1e-05
        %v1166 = vadd.f32 %v1134, 1e-05
        %v1167 = vadd.f32 %v1135, 1e-05
        %v1168 = vadd.f32 %v1136, 1e-05
        %v1169 = vadd.f32 %v1137, 1e-05
        %v1170 = vadd.f32 %v1138, 1e-05
        %v1171 = vadd.f32 %v1139, 1e-05
        %v1172 = vadd.f32 %v1140, 1e-05
        %v1173 = vadd.f32 %v1141, 1e-05
        %v1174 = vadd.f32 %v1142, 1e-05
        %v1175 = vadd.f32 %v1143, 1e-05
        %v1176 = vadd.f32 %v1144, 1e-05
        %v1177 = vadd.f32 %v1145, 1e-05
        %v1178 = vadd.f32 %v1146, 1e-05
        %v1179 = vadd.f32 %v1147, 1e-05
        %v1180 = vadd.f32 %v1148, 1e-05
        %v1181 = vadd.f32 %v1149, 1e-05
        %v1182 = vadd.f32 %v1150, 1e-05
        %v1183 = vadd.f32 %v1151, 1e-05
        %v1184 = vrsqrt.pop %v1152
        %v1185 = vrsqrt.pop %v1153
        %v1186 = vrsqrt.pop %v1154
        %v1187 = vrsqrt.pop %v1155
        %v1188 = vrsqrt.pop %v1156
        %v1189 = vrsqrt.pop %v1157
        %v1190 = vrsqrt.pop %v1158
        %v1191 = vrsqrt.pop %v1159
        %v1192 = vrsqrt.pop %v1160
        %v1193 = vrsqrt.pop %v1161
        %v1194 = vrsqrt.pop %v1162
        %v1195 = vrsqrt.pop %v1163
        %v1196 = vrsqrt.pop %v1164
        %v1197 = vrsqrt.pop %v1165
        %v1198 = vrsqrt.pop %v1166
        %v1199 = vrsqrt.pop %v1167
        %v1200 = vrsqrt.pop %v1168
        %v1201 = vrsqrt.pop %v1169
        %v1202 = vrsqrt.pop %v1170
        %v1203 = vrsqrt.pop %v1171
        %v1204 = vrsqrt.pop %v1172
        %v1205 = vrsqrt.pop %v1173
        %v1206 = vrsqrt.pop %v1174
        %v1207 = vrsqrt.pop %v1175
        %v1208 = vrsqrt.pop %v1176
        %v1209 = vrsqrt.pop %v1177
        %v1210 = vrsqrt.pop %v1178
        %v1211 = vrsqrt.pop %v1179
        %v1212 = vrsqrt.pop %v1180
        %v1213 = vrsqrt.pop %v1181
        %v1214 = vrsqrt.pop %v1182
        %v1215 = vrsqrt.pop %v1183
        %v1216 = vmul.f32 %v992, %v1184
        %v1217 = vmul.f32 %v993, %v1185
        %v1218 = vmul.f32 %v994, %v1186
        %v1219 = vmul.f32 %v995, %v1187
        %v1220 = vmul.f32 %v996, %v1188
        %v1221 = vmul.f32 %v997, %v1189
        %v1222 = vmul.f32 %v998, %v1190
        %v1223 = vmul.f32 %v999, %v1191
        %v1224 = vmul.f32 %v1000, %v1192
        %v1225 = vmul.f32 %v1001, %v1193
        %v1226 = vmul.f32 %v1002, %v1194
        %v1227 = vmul.f32 %v1003, %v1195
        %v1228 = vmul.f32 %v1004, %v1196
        %v1229 = vmul.f32 %v1005, %v1197
        %v1230 = vmul.f32 %v1006, %v1198
        %v1231 = vmul.f32 %v1007, %v1199
        %v1232 = vmul.f32 %v1008, %v1200
        %v1233 = vmul.f32 %v1009, %v1201
        %v1234 = vmul.f32 %v1010, %v1202
        %v1235 = vmul.f32 %v1011, %v1203
        %v1236 = vmul.f32 %v1012, %v1204
        %v1237 = vmul.f32 %v1013, %v1205
        %v1238 = vmul.f32 %v1014, %v1206
        %v1239 = vmul.f32 %v1015, %v1207
        %v1240 = vmul.f32 %v1016, %v1208
        %v1241 = vmul.f32 %v1017, %v1209
        %v1242 = vmul.f32 %v1018, %v1210
        %v1243 = vmul.f32 %v1019, %v1211
        %v1244 = vmul.f32 %v1020, %v1212
        %v1245 = vmul.f32 %v1021, %v1213
        %v1246 = vmul.f32 %v1022, %v1214
        %v1247 = vmul.f32 %v1023, %v1215
        %v1249 = vlaneseq
        %v1250 = vshrl.u32 %v1249, 7
        %v1251 = vsub.s32 0, %v1250
        %v1252 = vrot.slane %v893, %v1251
        %v1254 = vmul.f32 %v1216, %v1252
        %v1255 = vmul.f32 %v1217, %v1252
        %v1256 = vmul.f32 %v1218, %v1252
        %v1257 = vmul.f32 %v1219, %v1252
        %v1258 = vmul.f32 %v1220, %v1252
        %v1259 = vmul.f32 %v1221, %v1252
        %v1260 = vmul.f32 %v1222, %v1252
        %v1261 = vmul.f32 %v1223, %v1252
        %v1262 = vmul.f32 %v1224, %v1252
        %v1263 = vmul.f32 %v1225, %v1252
        %v1264 = vmul.f32 %v1226, %v1252
        %v1265 = vmul.f32 %v1227, %v1252
        %v1266 = vmul.f32 %v1228, %v1252
        %v1267 = vmul.f32 %v1229, %v1252
        %v1268 = vmul.f32 %v1230, %v1252
        %v1269 = vmul.f32 %v1231, %v1252
        %v1270 = vmul.f32 %v1232, %v1252
        %v1271 = vmul.f32 %v1233, %v1252
        %v1272 = vmul.f32 %v1234, %v1252
        %v1273 = vmul.f32 %v1235, %v1252
        %v1274 = vmul.f32 %v1236, %v1252
        %v1275 = vmul.f32 %v1237, %v1252
        %v1276 = vmul.f32 %v1238, %v1252
        %v1277 = vmul.f32 %v1239, %v1252
        %v1278 = vmul.f32 %v1240, %v1252
        %v1279 = vmul.f32 %v1241, %v1252
        %v1280 = vmul.f32 %v1242, %v1252
        %v1281 = vmul.f32 %v1243, %v1252
        %v1282 = vmul.f32 %v1244, %v1252
        %v1283 = vmul.f32 %v1245, %v1252
        %v1284 = vmul.f32 %v1246, %v1252
        %v1285 = vmul.f32 %v1247, %v1252
        %v1287 = vlaneseq
        %v1288 = vshrl.u32 %v1287, 7
        %v1289 = vsub.s32 0, %v1288
        %v1290 = vrot.slane %v894, %v1289
        %v1292 = vadd.f32 %v1254, %v1290
        %v1293 = vadd.f32 %v1255, %v1290
        %v1294 = vadd.f32 %v1256, %v1290
        %v1295 = vadd.f32 %v1257, %v1290
        %v1296 = vadd.f32 %v1258, %v1290
        %v1297 = vadd.f32 %v1259, %v1290
        %v1298 = vadd.f32 %v1260, %v1290
        %v1299 = vadd.f32 %v1261, %v1290
        %v1300 = vadd.f32 %v1262, %v1290
        %v1301 = vadd.f32 %v1263, %v1290
        %v1302 = vadd.f32 %v1264, %v1290
        %v1303 = vadd.f32 %v1265, %v1290
        %v1304 = vadd.f32 %v1266, %v1290
        %v1305 = vadd.f32 %v1267, %v1290
        %v1306 = vadd.f32 %v1268, %v1290
        %v1307 = vadd.f32 %v1269, %v1290
        %v1308 = vadd.f32 %v1270, %v1290
        %v1309 = vadd.f32 %v1271, %v1290
        %v1310 = vadd.f32 %v1272, %v1290
        %v1311 = vadd.f32 %v1273, %v1290
        %v1312 = vadd.f32 %v1274, %v1290
        %v1313 = vadd.f32 %v1275, %v1290
        %v1314 = vadd.f32 %v1276, %v1290
        %v1315 = vadd.f32 %v1277, %v1290
        %v1316 = vadd.f32 %v1278, %v1290
        %v1317 = vadd.f32 %v1279, %v1290
        %v1318 = vadd.f32 %v1280, %v1290
        %v1319 = vadd.f32 %v1281, %v1290
        %v1320 = vadd.f32 %v1282, %v1290
        %v1321 = vadd.f32 %v1283, %v1290
        %v1322 = vadd.f32 %v1284, %v1290
        %v1323 = vadd.f32 %v1285, %v1290
        %v1324 = vpack.c.bf16 %v1293, %v1292
        %v1325 = vpack.c.bf16 %v1295, %v1294
        %v1326 = vpack.c.bf16 %v1297, %v1296
        %v1327 = vpack.c.bf16 %v1299, %v1298
        %v1328 = vpack.c.bf16 %v1301, %v1300
        %v1329 = vpack.c.bf16 %v1303, %v1302
        %v1330 = vpack.c.bf16 %v1305, %v1304
        %v1331 = vpack.c.bf16 %v1307, %v1306
        %v1332 = vpack.c.bf16 %v1309, %v1308
        %v1333 = vpack.c.bf16 %v1311, %v1310
        %v1334 = vpack.c.bf16 %v1313, %v1312
        %v1335 = vpack.c.bf16 %v1315, %v1314
        %v1336 = vpack.c.bf16 %v1317, %v1316
        %v1337 = vpack.c.bf16 %v1319, %v1318
        %v1338 = vpack.c.bf16 %v1321, %v1320
        %v1339 = vpack.c.bf16 %v1323, %v1322
        %v1340 = vld [vmem:[%s652] sm:$0xff]
        %v1341 = vld [vmem:[%s652 + $0x8] sm:$0xf]
        %v1342 = vld [vmem:[%s652 + $0xc] sm:$0xff]
        %v1343 = vld [vmem:[%s652 + $0x14] sm:$0xf]
        %v1344 = vld [vmem:[%s652 + $0x18] sm:$0xff]
        %v1345 = vld [vmem:[%s652 + $0x20] sm:$0xf]
        %v1346 = vld [vmem:[%s652 + $0x24] sm:$0xff]
        %v1347 = vld [vmem:[%s652 + $0x2c] sm:$0xf]
        %v1348 = vld [vmem:[%s652 + $0x30] sm:$0xff]
        %v1349 = vld [vmem:[%s652 + $0x38] sm:$0xf]
        %v1350 = vld [vmem:[%s652 + $0x3c] sm:$0xff]
        %v1351 = vld [vmem:[%s652 + $0x44] sm:$0xf]
        %v1352 = vld [vmem:[%s652 + $0x48] sm:$0xff]
        %v1353 = vld [vmem:[%s652 + $0x50] sm:$0xf]
        %v1354 = vld [vmem:[%s652 + $0x54] sm:$0xff]
        %v1355 = vld [vmem:[%s652 + $0x5c] sm:$0xf]
        %v1356 = vld [vmem:[%s652 + $0x60] sm:$0xff]
        %v1357 = vld [vmem:[%s652 + $0x68] sm:$0xf]
        %v1358 = vld [vmem:[%s652 + $0x6c] sm:$0xff]
        %v1359 = vld [vmem:[%s652 + $0x74] sm:$0xf]
        %v1360 = vld [vmem:[%s652 + $0x78] sm:$0xff]
        %v1361 = vld [vmem:[%s652 + $0x80] sm:$0xf]
        %v1362 = vld [vmem:[%s652 + $0x84] sm:$0xff]
        %v1363 = vld [vmem:[%s652 + $0x8c] sm:$0xf]
        %v1364 = vld [vmem:[%s652 + $0x90] sm:$0xff]
        %v1365 = vld [vmem:[%s652 + $0x98] sm:$0xf]
        %v1366 = vld [vmem:[%s652 + $0x9c] sm:$0xff]
        %v1367 = vld [vmem:[%s652 + $0xa4] sm:$0xf]
        %v1368 = vld [vmem:[%s652 + $0xa8] sm:$0xff]
        %v1369 = vld [vmem:[%s652 + $0xb0] sm:$0xf]
        %v1370 = vld [vmem:[%s652 + $0xb4] sm:$0xff]
        %v1371 = vld [vmem:[%s652 + $0xbc] sm:$0xf]
        %v1404 = vunpack.c.l.b16 %v1340
        %v1405 = vunpack.c.h.b16 %v1340
        %v1406 = vunpack.c.l.b16 %v1341
        %v1407 = vunpack.c.l.b16 %v1342
        %v1408 = vunpack.c.h.b16 %v1342
        %v1409 = vunpack.c.l.b16 %v1343
        %v1410 = vunpack.c.l.b16 %v1344
        %v1411 = vunpack.c.h.b16 %v1344
        %v1412 = vunpack.c.l.b16 %v1345
        %v1413 = vunpack.c.l.b16 %v1346
        %v1414 = vunpack.c.h.b16 %v1346
        %v1415 = vunpack.c.l.b16 %v1347
        %v1416 = vunpack.c.l.b16 %v1348
        %v1417 = vunpack.c.h.b16 %v1348
        %v1418 = vunpack.c.l.b16 %v1349
        %v1419 = vunpack.c.l.b16 %v1350
        %v1420 = vunpack.c.h.b16 %v1350
        %v1421 = vunpack.c.l.b16 %v1351
        %v1422 = vunpack.c.l.b16 %v1352
        %v1423 = vunpack.c.h.b16 %v1352
        %v1424 = vunpack.c.l.b16 %v1353
        %v1425 = vunpack.c.l.b16 %v1354
        %v1426 = vunpack.c.h.b16 %v1354
        %v1427 = vunpack.c.l.b16 %v1355
        %v1428 = vunpack.c.l.b16 %v1356
        %v1429 = vunpack.c.h.b16 %v1356
        %v1430 = vunpack.c.l.b16 %v1357
        %v1431 = vunpack.c.l.b16 %v1358
        %v1432 = vunpack.c.h.b16 %v1358
        %v1433 = vunpack.c.l.b16 %v1359
        %v1434 = vunpack.c.l.b16 %v1360
        %v1435 = vunpack.c.h.b16 %v1360
        %v1436 = vunpack.c.l.b16 %v1361
        %v1437 = vunpack.c.l.b16 %v1362
        %v1438 = vunpack.c.h.b16 %v1362
        %v1439 = vunpack.c.l.b16 %v1363
        %v1440 = vunpack.c.l.b16 %v1364
        %v1441 = vunpack.c.h.b16 %v1364
        %v1442 = vunpack.c.l.b16 %v1365
        %v1443 = vunpack.c.l.b16 %v1366
        %v1444 = vunpack.c.h.b16 %v1366
        %v1445 = vunpack.c.l.b16 %v1367
        %v1446 = vunpack.c.l.b16 %v1368
        %v1447 = vunpack.c.h.b16 %v1368
        %v1448 = vunpack.c.l.b16 %v1369
        %v1449 = vunpack.c.l.b16 %v1370
        %v1450 = vunpack.c.h.b16 %v1370
        %v1451 = vunpack.c.l.b16 %v1371
        %v1452 = vpack.c.b16 %v1407, %v1404
        %v1453 = vpack.c.b16 %v1408, %v1405
        %v1454 = vpack.c.b16 %v1409, %v1406
        %v1455 = vpack.c.b16 %v1413, %v1410
        %v1456 = vpack.c.b16 %v1414, %v1411
        %v1457 = vpack.c.b16 %v1415, %v1412
        %v1458 = vpack.c.b16 %v1419, %v1416
        %v1459 = vpack.c.b16 %v1420, %v1417
        %v1460 = vpack.c.b16 %v1421, %v1418
        %v1461 = vpack.c.b16 %v1425, %v1422
        %v1462 = vpack.c.b16 %v1426, %v1423
        %v1463 = vpack.c.b16 %v1427, %v1424
        %v1464 = vpack.c.b16 %v1431, %v1428
        %v1465 = vpack.c.b16 %v1432, %v1429
        %v1466 = vpack.c.b16 %v1433, %v1430
        %v1467 = vpack.c.b16 %v1437, %v1434
        %v1468 = vpack.c.b16 %v1438, %v1435
        %v1469 = vpack.c.b16 %v1439, %v1436
        %v1470 = vpack.c.b16 %v1443, %v1440
        %v1471 = vpack.c.b16 %v1444, %v1441
        %v1472 = vpack.c.b16 %v1445, %v1442
        %v1473 = vpack.c.b16 %v1449, %v1446
        %v1474 = vpack.c.b16 %v1450, %v1447
        %v1475 = vpack.c.b16 %v1451, %v1448
        %1500 = vmatprep.subr.bf16.mxu0 %v1474
        %1501 = vmatpush1.bf16.msra.mxu0 %v1473
        %1502 = vmatprep.subr.bf16.mxu0 %v1471
        %1503 = vmatpush1.bf16.msra.mxu0 %v1470
        %1504 = vmatprep.subr.bf16.mxu0 %v1468
        %1505 = vmatpush1.bf16.msra.mxu0 %v1467
        %1506 = vmatprep.subr.bf16.mxu0 %v1465
        %1507 = vmatpush1.bf16.msra.mxu0 %v1464
        %1508 = vmatprep.subr.bf16.mxu0 %v1462
        %1509 = vmatpush1.bf16.msra.mxu0 %v1461
        %1510 = vmatprep.subr.bf16.mxu0 %v1459
        %1511 = vmatpush1.bf16.msra.mxu0 %v1458
        %1512 = vmatprep.subr.bf16.mxu0 %v1456
        %1513 = vmatpush1.bf16.msra.mxu0 %v1455
        %1514 = vmatprep.subr.bf16.mxu0 %v1453
        %1515 = vmatpush1.bf16.msra.mxu0 %v1452
        %1516 = vmatprep.subr.bf16.mxu0 0
        %1517 = vmatpush2.bf16.msra.mxu0 0
        %1518 = vmatprep.subr.bf16.mxu0 0
        %1519 = vmatpush2.bf16.msra.mxu0 0
        %1520 = vmatprep.subr.bf16.mxu0 0
        %1521 = vmatpush2.bf16.msra.mxu0 0
        %1522 = vmatprep.subr.bf16.mxu0 0
        %1523 = vmatpush2.bf16.msra.mxu0 0
        %1524 = vmatprep.subr.bf16.mxu0 0
        %1525 = vmatpush2.bf16.msra.mxu0 0
        %1526 = vmatprep.subr.bf16.mxu0 0
        %1527 = vmatpush2.bf16.msra.mxu0 0
        %1528 = vmatprep.subr.bf16.mxu0 0
        %1529 = vmatpush2.bf16.msra.mxu0 0
        %1530 = vmatprep.subr.bf16.mxu0 0
        %1531 = vmatpush2.bf16.msra.mxu0 0
        %1532 = vmatprep.mubr.bf16.mxu0 0
        %1533 = vmatmul.mubr.bf16.gmra.mxu0 %v1324
        %v1534 = vpop.f32.mrf.mxu0
        %v1535 = vadd.f32 0.0, %v1534
        %v1536 = vpop.f32.mrf.mxu0
        %v1537 = vadd.f32 0.0, %v1536
        %v1538 = vpop.f32.mrf.mxu0
        %v1539 = vadd.f32 0.0, %v1538
        %v1540 = vpop.f32.mrf.mxu0
        %v1541 = vadd.f32 0.0, %v1540
        %1542 = vmatprep.mubr.bf16.mxu0 0
        %1543 = vmatmul.mubr.bf16.gmra.mxu0 %v1325
        %v1544 = vpop.f32.mrf.mxu0
        %v1545 = vadd.f32 0.0, %v1544
        %v1546 = vpop.f32.mrf.mxu0
        %v1547 = vadd.f32 0.0, %v1546
        %v1548 = vpop.f32.mrf.mxu0
        %v1549 = vadd.f32 0.0, %v1548
        %v1550 = vpop.f32.mrf.mxu0
        %v1551 = vadd.f32 0.0, %v1550
        %1552 = vmatprep.mubr.bf16.mxu0 0
        %1553 = vmatmul.mubr.bf16.gmra.mxu0 %v1326
        %v1554 = vpop.f32.mrf.mxu0
        %v1555 = vadd.f32 0.0, %v1554
        %v1556 = vpop.f32.mrf.mxu0
        %v1557 = vadd.f32 0.0, %v1556
        %v1558 = vpop.f32.mrf.mxu0
        %v1559 = vadd.f32 0.0, %v1558
        %v1560 = vpop.f32.mrf.mxu0
        %v1561 = vadd.f32 0.0, %v1560
        %1562 = vmatprep.mubr.bf16.mxu0 0
        %1563 = vmatmul.mubr.bf16.gmra.mxu0 %v1327
        %v1564 = vpop.f32.mrf.mxu0
        %v1565 = vadd.f32 0.0, %v1564
        %v1566 = vpop.f32.mrf.mxu0
        %v1567 = vadd.f32 0.0, %v1566
        %v1568 = vpop.f32.mrf.mxu0
        %v1569 = vadd.f32 0.0, %v1568
        %v1570 = vpop.f32.mrf.mxu0
        %v1571 = vadd.f32 0.0, %v1570
        %1572 = vmatprep.mubr.bf16.mxu0 0
        %1573 = vmatmul.mubr.bf16.gmra.mxu0 %v1328
        %v1574 = vpop.f32.mrf.mxu0
        %v1575 = vadd.f32 0.0, %v1574
        %v1576 = vpop.f32.mrf.mxu0
        %v1577 = vadd.f32 0.0, %v1576
        %v1578 = vpop.f32.mrf.mxu0
        %v1579 = vadd.f32 0.0, %v1578
        %v1580 = vpop.f32.mrf.mxu0
        %v1581 = vadd.f32 0.0, %v1580
        %1582 = vmatprep.mubr.bf16.mxu0 0
        %1583 = vmatmul.mubr.bf16.gmra.mxu0 %v1329
        %v1584 = vpop.f32.mrf.mxu0
        %v1585 = vadd.f32 0.0, %v1584
        %v1586 = vpop.f32.mrf.mxu0
        %v1587 = vadd.f32 0.0, %v1586
        %v1588 = vpop.f32.mrf.mxu0
        %v1589 = vadd.f32 0.0, %v1588
        %v1590 = vpop.f32.mrf.mxu0
        %v1591 = vadd.f32 0.0, %v1590
        %1592 = vmatprep.mubr.bf16.mxu0 0
        %1593 = vmatmul.mubr.bf16.gmra.mxu0 %v1330
        %v1594 = vpop.f32.mrf.mxu0
        %v1595 = vadd.f32 0.0, %v1594
        %v1596 = vpop.f32.mrf.mxu0
        %v1597 = vadd.f32 0.0, %v1596
        %v1598 = vpop.f32.mrf.mxu0
        %v1599 = vadd.f32 0.0, %v1598
        %v1600 = vpop.f32.mrf.mxu0
        %v1601 = vadd.f32 0.0, %v1600
        %1602 = vmatprep.mubr.bf16.mxu0 0
        %1603 = vmatmul.mubr.bf16.gmra.mxu0 %v1331
        %v1604 = vpop.f32.mrf.mxu0
        %v1605 = vadd.f32 0.0, %v1604
        %v1606 = vpop.f32.mrf.mxu0
        %v1607 = vadd.f32 0.0, %v1606
        %v1608 = vpop.f32.mrf.mxu0
        %v1609 = vadd.f32 0.0, %v1608
        %v1610 = vpop.f32.mrf.mxu0
        %v1611 = vadd.f32 0.0, %v1610
        %1612 = vmatprep.mubr.bf16.mxu0 0
        %1613 = vmatmul.mubr.bf16.gmra.mxu0 %v1332
        %v1614 = vpop.f32.mrf.mxu0
        %v1615 = vadd.f32 0.0, %v1614
        %v1616 = vpop.f32.mrf.mxu0
        %v1617 = vadd.f32 0.0, %v1616
        %v1618 = vpop.f32.mrf.mxu0
        %v1619 = vadd.f32 0.0, %v1618
        %v1620 = vpop.f32.mrf.mxu0
        %v1621 = vadd.f32 0.0, %v1620
        %1622 = vmatprep.mubr.bf16.mxu0 0
        %1623 = vmatmul.mubr.bf16.gmra.mxu0 %v1333
        %v1624 = vpop.f32.mrf.mxu0
        %v1625 = vadd.f32 0.0, %v1624
        %v1626 = vpop.f32.mrf.mxu0
        %v1627 = vadd.f32 0.0, %v1626
        %v1628 = vpop.f32.mrf.mxu0
        %v1629 = vadd.f32 0.0, %v1628
        %v1630 = vpop.f32.mrf.mxu0
        %v1631 = vadd.f32 0.0, %v1630
        %1632 = vmatprep.mubr.bf16.mxu0 0
        %1633 = vmatmul.mubr.bf16.gmra.mxu0 %v1334
        %v1634 = vpop.f32.mrf.mxu0
        %v1635 = vadd.f32 0.0, %v1634
        %v1636 = vpop.f32.mrf.mxu0
        %v1637 = vadd.f32 0.0, %v1636
        %v1638 = vpop.f32.mrf.mxu0
        %v1639 = vadd.f32 0.0, %v1638
        %v1640 = vpop.f32.mrf.mxu0
        %v1641 = vadd.f32 0.0, %v1640
        %1642 = vmatprep.mubr.bf16.mxu0 0
        %1643 = vmatmul.mubr.bf16.gmra.mxu0 %v1335
        %v1644 = vpop.f32.mrf.mxu0
        %v1645 = vadd.f32 0.0, %v1644
        %v1646 = vpop.f32.mrf.mxu0
        %v1647 = vadd.f32 0.0, %v1646
        %v1648 = vpop.f32.mrf.mxu0
        %v1649 = vadd.f32 0.0, %v1648
        %v1650 = vpop.f32.mrf.mxu0
        %v1651 = vadd.f32 0.0, %v1650
        %1652 = vmatprep.mubr.bf16.mxu0 0
        %1653 = vmatmul.mubr.bf16.gmra.mxu0 %v1336
        %v1654 = vpop.f32.mrf.mxu0
        %v1655 = vadd.f32 0.0, %v1654
        %v1656 = vpop.f32.mrf.mxu0
        %v1657 = vadd.f32 0.0, %v1656
        %v1658 = vpop.f32.mrf.mxu0
        %v1659 = vadd.f32 0.0, %v1658
        %v1660 = vpop.f32.mrf.mxu0
        %v1661 = vadd.f32 0.0, %v1660
        %1662 = vmatprep.mubr.bf16.mxu0 0
        %1663 = vmatmul.mubr.bf16.gmra.mxu0 %v1337
        %v1664 = vpop.f32.mrf.mxu0
        %v1665 = vadd.f32 0.0, %v1664
        %v1666 = vpop.f32.mrf.mxu0
        %v1667 = vadd.f32 0.0, %v1666
        %v1668 = vpop.f32.mrf.mxu0
        %v1669 = vadd.f32 0.0, %v1668
        %v1670 = vpop.f32.mrf.mxu0
        %v1671 = vadd.f32 0.0, %v1670
        %1672 = vmatprep.mubr.bf16.mxu0 0
        %1673 = vmatmul.mubr.bf16.gmra.mxu0 %v1338
        %v1674 = vpop.f32.mrf.mxu0
        %v1675 = vadd.f32 0.0, %v1674
        %v1676 = vpop.f32.mrf.mxu0
        %v1677 = vadd.f32 0.0, %v1676
        %v1678 = vpop.f32.mrf.mxu0
        %v1679 = vadd.f32 0.0, %v1678
        %v1680 = vpop.f32.mrf.mxu0
        %v1681 = vadd.f32 0.0, %v1680
        %1682 = vmatprep.mubr.bf16.mxu0 0
        %1683 = vmatmul.mubr.bf16.gmra.mxu0 %v1339
        %v1684 = vpop.f32.mrf.mxu0
        %v1685 = vadd.f32 0.0, %v1684
        %v1686 = vpop.f32.mrf.mxu0
        %v1687 = vadd.f32 0.0, %v1686
        %v1688 = vpop.f32.mrf.mxu0
        %v1689 = vadd.f32 0.0, %v1688
        %v1690 = vpop.f32.mrf.mxu0
        %v1691 = vadd.f32 0.0, %v1690
        %1692 = vdwg.mxu0
        %1693 = vmatprep.subr.bf16.mxu0 0
        %1694 = vmatpush1.bf16.msra.mxu0 %v1475
        %1695 = vmatprep.subr.bf16.mxu0 0
        %1696 = vmatpush1.bf16.msra.mxu0 %v1472
        %1697 = vmatprep.subr.bf16.mxu0 0
        %1698 = vmatpush1.bf16.msra.mxu0 %v1469
        %1699 = vmatprep.subr.bf16.mxu0 0
        %1700 = vmatpush1.bf16.msra.mxu0 %v1466
        %1701 = vmatprep.subr.bf16.mxu0 0
        %1702 = vmatpush1.bf16.msra.mxu0 %v1463
        %1703 = vmatprep.subr.bf16.mxu0 0
        %1704 = vmatpush1.bf16.msra.mxu0 %v1460
        %1705 = vmatprep.subr.bf16.mxu0 0
        %1706 = vmatpush1.bf16.msra.mxu0 %v1457
        %1707 = vmatprep.subr.bf16.mxu0 0
        %1708 = vmatpush1.bf16.msra.mxu0 %v1454
        %1709 = vmatprep.subr.bf16.mxu0 0
        %1710 = vmatpush2.bf16.msra.mxu0 0
        %1711 = vmatprep.subr.bf16.mxu0 0
        %1712 = vmatpush2.bf16.msra.mxu0 0
        %1713 = vmatprep.subr.bf16.mxu0 0
        %1714 = vmatpush2.bf16.msra.mxu0 0
        %1715 = vmatprep.subr.bf16.mxu0 0
        %1716 = vmatpush2.bf16.msra.mxu0 0
        %1717 = vmatprep.subr.bf16.mxu0 0
        %1718 = vmatpush2.bf16.msra.mxu0 0
        %1719 = vmatprep.subr.bf16.mxu0 0
        %1720 = vmatpush2.bf16.msra.mxu0 0
        %1721 = vmatprep.subr.bf16.mxu0 0
        %1722 = vmatpush2.bf16.msra.mxu0 0
        %1723 = vmatprep.subr.bf16.mxu0 0
        %1724 = vmatpush2.bf16.msra.mxu0 0
        %1725 = vmatprep.mubr.bf16.mxu0 0
        %1726 = vmatmul.mubr.bf16.gmra.mxu0 %v1324
        %v1727 = vpop.f32.mrf.mxu0
        %v1728 = vadd.f32 0.0, %v1727
        %v1729 = vpop.f32.mrf.mxu0
        %v1730 = vpop.f32.mrf.mxu0
        %v1731 = vadd.f32 0.0, %v1730
        %v1732 = vpop.f32.mrf.mxu0
        %1733 = vmatprep.mubr.bf16.mxu0 0
        %1734 = vmatmul.mubr.bf16.gmra.mxu0 %v1325
        %v1735 = vpop.f32.mrf.mxu0
        %v1736 = vadd.f32 0.0, %v1735
        %v1737 = vpop.f32.mrf.mxu0
        %v1738 = vpop.f32.mrf.mxu0
        %v1739 = vadd.f32 0.0, %v1738
        %v1740 = vpop.f32.mrf.mxu0
        %1741 = vmatprep.mubr.bf16.mxu0 0
        %1742 = vmatmul.mubr.bf16.gmra.mxu0 %v1326
        %v1743 = vpop.f32.mrf.mxu0
        %v1744 = vadd.f32 0.0, %v1743
        %v1745 = vpop.f32.mrf.mxu0
        %v1746 = vpop.f32.mrf.mxu0
        %v1747 = vadd.f32 0.0, %v1746
        %v1748 = vpop.f32.mrf.mxu0
        %1749 = vmatprep.mubr.bf16.mxu0 0
        %1750 = vmatmul.mubr.bf16.gmra.mxu0 %v1327
        %v1751 = vpop.f32.mrf.mxu0
        %v1752 = vadd.f32 0.0, %v1751
        %v1753 = vpop.f32.mrf.mxu0
        %v1754 = vpop.f32.mrf.mxu0
        %v1755 = vadd.f32 0.0, %v1754
        %v1756 = vpop.f32.mrf.mxu0
        %1757 = vmatprep.mubr.bf16.mxu0 0
        %1758 = vmatmul.mubr.bf16.gmra.mxu0 %v1328
        %v1759 = vpop.f32.mrf.mxu0
        %v1760 = vadd.f32 0.0, %v1759
        %v1761 = vpop.f32.mrf.mxu0
        %v1762 = vpop.f32.mrf.mxu0
        %v1763 = vadd.f32 0.0, %v1762
        %v1764 = vpop.f32.mrf.mxu0
        %1765 = vmatprep.mubr.bf16.mxu0 0
        %1766 = vmatmul.mubr.bf16.gmra.mxu0 %v1329
        %v1767 = vpop.f32.mrf.mxu0
        %v1768 = vadd.f32 0.0, %v1767
        %v1769 = vpop.f32.mrf.mxu0
        %v1770 = vpop.f32.mrf.mxu0
        %v1771 = vadd.f32 0.0, %v1770
        %v1772 = vpop.f32.mrf.mxu0
        %1773 = vmatprep.mubr.bf16.mxu0 0
        %1774 = vmatmul.mubr.bf16.gmra.mxu0 %v1330
        %v1775 = vpop.f32.mrf.mxu0
        %v1776 = vadd.f32 0.0, %v1775
        %v1777 = vpop.f32.mrf.mxu0
        %v1778 = vpop.f32.mrf.mxu0
        %v1779 = vadd.f32 0.0, %v1778
        %v1780 = vpop.f32.mrf.mxu0
        %1781 = vmatprep.mubr.bf16.mxu0 0
        %1782 = vmatmul.mubr.bf16.gmra.mxu0 %v1331
        %v1783 = vpop.f32.mrf.mxu0
        %v1784 = vadd.f32 0.0, %v1783
        %v1785 = vpop.f32.mrf.mxu0
        %v1786 = vpop.f32.mrf.mxu0
        %v1787 = vadd.f32 0.0, %v1786
        %v1788 = vpop.f32.mrf.mxu0
        %1789 = vmatprep.mubr.bf16.mxu0 0
        %1790 = vmatmul.mubr.bf16.gmra.mxu0 %v1332
        %v1791 = vpop.f32.mrf.mxu0
        %v1792 = vadd.f32 0.0, %v1791
        %v1793 = vpop.f32.mrf.mxu0
        %v1794 = vpop.f32.mrf.mxu0
        %v1795 = vadd.f32 0.0, %v1794
        %v1796 = vpop.f32.mrf.mxu0
        %1797 = vmatprep.mubr.bf16.mxu0 0
        %1798 = vmatmul.mubr.bf16.gmra.mxu0 %v1333
        %v1799 = vpop.f32.mrf.mxu0
        %v1800 = vadd.f32 0.0, %v1799
        %v1801 = vpop.f32.mrf.mxu0
        %v1802 = vpop.f32.mrf.mxu0
        %v1803 = vadd.f32 0.0, %v1802
        %v1804 = vpop.f32.mrf.mxu0
        %1805 = vmatprep.mubr.bf16.mxu0 0
        %1806 = vmatmul.mubr.bf16.gmra.mxu0 %v1334
        %v1807 = vpop.f32.mrf.mxu0
        %v1808 = vadd.f32 0.0, %v1807
        %v1809 = vpop.f32.mrf.mxu0
        %v1810 = vpop.f32.mrf.mxu0
        %v1811 = vadd.f32 0.0, %v1810
        %v1812 = vpop.f32.mrf.mxu0
        %1813 = vmatprep.mubr.bf16.mxu0 0
        %1814 = vmatmul.mubr.bf16.gmra.mxu0 %v1335
        %v1815 = vpop.f32.mrf.mxu0
        %v1816 = vadd.f32 0.0, %v1815
        %v1817 = vpop.f32.mrf.mxu0
        %v1818 = vpop.f32.mrf.mxu0
        %v1819 = vadd.f32 0.0, %v1818
        %v1820 = vpop.f32.mrf.mxu0
        %1821 = vmatprep.mubr.bf16.mxu0 0
        %1822 = vmatmul.mubr.bf16.gmra.mxu0 %v1336
        %v1823 = vpop.f32.mrf.mxu0
        %v1824 = vadd.f32 0.0, %v1823
        %v1825 = vpop.f32.mrf.mxu0
        %v1826 = vpop.f32.mrf.mxu0
        %v1827 = vadd.f32 0.0, %v1826
        %v1828 = vpop.f32.mrf.mxu0
        %1829 = vmatprep.mubr.bf16.mxu0 0
        %1830 = vmatmul.mubr.bf16.gmra.mxu0 %v1337
        %v1831 = vpop.f32.mrf.mxu0
        %v1832 = vadd.f32 0.0, %v1831
        %v1833 = vpop.f32.mrf.mxu0
        %v1834 = vpop.f32.mrf.mxu0
        %v1835 = vadd.f32 0.0, %v1834
        %v1836 = vpop.f32.mrf.mxu0
        %1837 = vmatprep.mubr.bf16.mxu0 0
        %1838 = vmatmul.mubr.bf16.gmra.mxu0 %v1338
        %v1839 = vpop.f32.mrf.mxu0
        %v1840 = vadd.f32 0.0, %v1839
        %v1841 = vpop.f32.mrf.mxu0
        %v1842 = vpop.f32.mrf.mxu0
        %v1843 = vadd.f32 0.0, %v1842
        %v1844 = vpop.f32.mrf.mxu0
        %1845 = vmatprep.mubr.bf16.mxu0 0
        %1846 = vmatmul.mubr.bf16.gmra.mxu0 %v1339
        %v1847 = vpop.f32.mrf.mxu0
        %v1848 = vadd.f32 0.0, %v1847
        %v1849 = vpop.f32.mrf.mxu0
        %v1850 = vpop.f32.mrf.mxu0
        %v1851 = vadd.f32 0.0, %v1850
        %v1852 = vpop.f32.mrf.mxu0
        %1853 = vdwg.mxu0
        %v1854 = vlaneseq
        %v1855 = vshrl.u32 %v1854, 7
        %v1856 = vadd.s32 %v1855, 8
        %v1857 = vadd.s32 %v1855, 16
        %v1858 = vadd.s32 %v1855, 24
        %v1859 = vadd.s32 %v1855, 32
        %v1860 = vadd.s32 %v1855, 40
        %v1861 = vadd.s32 %v1855, 48
        %v1862 = vadd.s32 %v1855, 56
        %v1863 = vadd.s32 %v1855, 64
        %v1864 = vadd.s32 %v1855, 72
        %v1865 = vadd.s32 %v1855, 80
        %v1866 = vadd.s32 %v1855, 88
        %v1867 = vadd.s32 %v1855, 96
        %v1868 = vadd.s32 %v1855, 104
        %v1869 = vadd.s32 %v1855, 112
        %v1870 = vadd.s32 %v1855, 120
        %v1871 = vlaneseq
        %v1872 = vand.u32 %v1871, 127
        %vm1873 = vcmp.le.s32.totalorder %v1872, %v1855
        %vm1874 = vcmp.le.s32.totalorder %v1872, %v1856
        %vm1875 = vcmp.le.s32.totalorder %v1872, %v1857
        %vm1876 = vcmp.le.s32.totalorder %v1872, %v1858
        %vm1877 = vcmp.le.s32.totalorder %v1872, %v1859
        %vm1878 = vcmp.le.s32.totalorder %v1872, %v1860
        %vm1879 = vcmp.le.s32.totalorder %v1872, %v1861
        %vm1880 = vcmp.le.s32.totalorder %v1872, %v1862
        %vm1881 = vcmp.le.s32.totalorder %v1872, %v1863
        %vm1882 = vcmp.le.s32.totalorder %v1872, %v1864
        %vm1883 = vcmp.le.s32.totalorder %v1872, %v1865
        %vm1884 = vcmp.le.s32.totalorder %v1872, %v1866
        %vm1885 = vcmp.le.s32.totalorder %v1872, %v1867
        %vm1886 = vcmp.le.s32.totalorder %v1872, %v1868
        %vm1887 = vcmp.le.s32.totalorder %v1872, %v1869
        %vm1888 = vcmp.le.s32.totalorder %v1872, %v1870
        %v1889 = vsel %vm1873, 0.0, -1e+30
        %v1890 = vsel %vm1874, 0.0, -1e+30
        %v1891 = vsel %vm1875, 0.0, -1e+30
        %v1892 = vsel %vm1876, 0.0, -1e+30
        %v1893 = vsel %vm1877, 0.0, -1e+30
        %v1894 = vsel %vm1878, 0.0, -1e+30
        %v1895 = vsel %vm1879, 0.0, -1e+30
        %v1896 = vsel %vm1880, 0.0, -1e+30
        %v1897 = vsel %vm1881, 0.0, -1e+30
        %v1898 = vsel %vm1882, 0.0, -1e+30
        %v1899 = vsel %vm1883, 0.0, -1e+30
        %v1900 = vsel %vm1884, 0.0, -1e+30
        %v1901 = vsel %vm1885, 0.0, -1e+30
        %v1902 = vsel %vm1886, 0.0, -1e+30
        %v1903 = vsel %vm1887, 0.0, -1e+30
        %v1904 = vsel %vm1888, 0.0, -1e+30
        %v1905 = vld [vmem:[%s661] sm:$0xf]
        %v1906 = vld [vmem:[%s661 + $0x4] sm:$0xf]
        %v1907 = vld [vmem:[%s661 + $0x8] sm:$0xf]
        %v1908 = vld [vmem:[%s661 + $0xc] sm:$0xf]
        %v1909 = vld [vmem:[%s661 + $0x10] sm:$0xf]
        %v1910 = vld [vmem:[%s661 + $0x14] sm:$0xf]
        %v1911 = vld [vmem:[%s661 + $0x18] sm:$0xf]
        %v1912 = vld [vmem:[%s661 + $0x1c] sm:$0xf]
        %v1913 = vld [vmem:[%s661 + $0x20] sm:$0xf]
        %v1914 = vld [vmem:[%s661 + $0x24] sm:$0xf]
        %v1915 = vld [vmem:[%s661 + $0x28] sm:$0xf]
        %v1916 = vld [vmem:[%s661 + $0x2c] sm:$0xf]
        %v1917 = vld [vmem:[%s661 + $0x30] sm:$0xf]
        %v1918 = vld [vmem:[%s661 + $0x34] sm:$0xf]
        %v1919 = vld [vmem:[%s661 + $0x38] sm:$0xf]
        %v1920 = vld [vmem:[%s661 + $0x3c] sm:$0xf]
        %v1921 = vmul.f32 %v1535, 0.17677669
        %v1922 = vmul.f32 %v1539, 0.17677669
        %v1923 = vmul.f32 %v1545, 0.17677669
        %v1924 = vmul.f32 %v1549, 0.17677669
        %v1925 = vmul.f32 %v1555, 0.17677669
        %v1926 = vmul.f32 %v1559, 0.17677669
        %v1927 = vmul.f32 %v1565, 0.17677669
        %v1928 = vmul.f32 %v1569, 0.17677669
        %v1929 = vmul.f32 %v1575, 0.17677669
        %v1930 = vmul.f32 %v1579, 0.17677669
        %v1931 = vmul.f32 %v1585, 0.17677669
        %v1932 = vmul.f32 %v1589, 0.17677669
        %v1933 = vmul.f32 %v1595, 0.17677669
        %v1934 = vmul.f32 %v1599, 0.17677669
        %v1935 = vmul.f32 %v1605, 0.17677669
        %v1936 = vmul.f32 %v1609, 0.17677669
        %v1937 = vmul.f32 %v1615, 0.17677669
        %v1938 = vmul.f32 %v1619, 0.17677669
        %v1939 = vmul.f32 %v1625, 0.17677669
        %v1940 = vmul.f32 %v1629, 0.17677669
        %v1941 = vmul.f32 %v1635, 0.17677669
        %v1942 = vmul.f32 %v1639, 0.17677669
        %v1943 = vmul.f32 %v1645, 0.17677669
        %v1944 = vmul.f32 %v1649, 0.17677669
        %v1945 = vmul.f32 %v1655, 0.17677669
        %v1946 = vmul.f32 %v1659, 0.17677669
        %v1947 = vmul.f32 %v1665, 0.17677669
        %v1948 = vmul.f32 %v1669, 0.17677669
        %v1949 = vmul.f32 %v1675, 0.17677669
        %v1950 = vmul.f32 %v1679, 0.17677669
        %v1951 = vmul.f32 %v1685, 0.17677669
        %v1952 = vmul.f32 %v1689, 0.17677669
        %v1953 = vpack.c.bf16 %v1922, %v1921
        %v1954 = vpack.c.bf16 %v1924, %v1923
        %v1955 = vpack.c.bf16 %v1926, %v1925
        %v1956 = vpack.c.bf16 %v1928, %v1927
        %v1957 = vpack.c.bf16 %v1930, %v1929
        %v1958 = vpack.c.bf16 %v1932, %v1931
        %v1959 = vpack.c.bf16 %v1934, %v1933
        %v1960 = vpack.c.bf16 %v1936, %v1935
        %v1961 = vpack.c.bf16 %v1938, %v1937
        %v1962 = vpack.c.bf16 %v1940, %v1939
        %v1963 = vpack.c.bf16 %v1942, %v1941
        %v1964 = vpack.c.bf16 %v1944, %v1943
        %v1965 = vpack.c.bf16 %v1946, %v1945
        %v1966 = vpack.c.bf16 %v1948, %v1947
        %v1967 = vpack.c.bf16 %v1950, %v1949
        %v1968 = vpack.c.bf16 %v1952, %v1951
        %v1969 = vpack.c.bf16 %v1541, %v1537
        %v1970 = vpack.c.bf16 %v1551, %v1547
        %v1971 = vpack.c.bf16 %v1561, %v1557
        %v1972 = vpack.c.bf16 %v1571, %v1567
        %v1973 = vpack.c.bf16 %v1581, %v1577
        %v1974 = vpack.c.bf16 %v1591, %v1587
        %v1975 = vpack.c.bf16 %v1601, %v1597
        %v1976 = vpack.c.bf16 %v1611, %v1607
        %v1977 = vpack.c.bf16 %v1621, %v1617
        %v1978 = vpack.c.bf16 %v1631, %v1627
        %v1979 = vpack.c.bf16 %v1641, %v1637
        %v1980 = vpack.c.bf16 %v1651, %v1647
        %v1981 = vpack.c.bf16 %v1661, %v1657
        %v1982 = vpack.c.bf16 %v1671, %v1667
        %v1983 = vpack.c.bf16 %v1681, %v1677
        %v1984 = vpack.c.bf16 %v1691, %v1687
        %v1985 = vpack.c.bf16 %v1731, %v1728
        %v1986 = vpack.c.bf16 %v1739, %v1736
        %v1987 = vpack.c.bf16 %v1747, %v1744
        %v1988 = vpack.c.bf16 %v1755, %v1752
        %v1989 = vpack.c.bf16 %v1763, %v1760
        %v1990 = vpack.c.bf16 %v1771, %v1768
        %v1991 = vpack.c.bf16 %v1779, %v1776
        %v1992 = vpack.c.bf16 %v1787, %v1784
        %v1993 = vpack.c.bf16 %v1795, %v1792
        %v1994 = vpack.c.bf16 %v1803, %v1800
        %v1995 = vpack.c.bf16 %v1811, %v1808
        %v1996 = vpack.c.bf16 %v1819, %v1816
        %v1997 = vpack.c.bf16 %v1827, %v1824
        %v1998 = vpack.c.bf16 %v1835, %v1832
        %v1999 = vpack.c.bf16 %v1843, %v1840
        %v2000 = vpack.c.bf16 %v1851, %v1848
        %vm2001 = vcmask 261120
        %v2003 = vsel %vm2001, %v1953, 0
        %v2006 = vsel %vm2001, %v1954, 0
        %v2009 = vsel %vm2001, %v1955, 0
        %v2012 = vsel %vm2001, %v1956, 0
        %v2015 = vsel %vm2001, %v1957, 0
        %v2018 = vsel %vm2001, %v1958, 0
        %v2021 = vsel %vm2001, %v1959, 0
        %v2024 = vsel %vm2001, %v1960, 0
        %v2027 = vsel %vm2001, %v1969, 0
        %v2030 = vsel %vm2001, %v1970, 0
        %v2033 = vsel %vm2001, %v1971, 0
        %v2036 = vsel %vm2001, %v1972, 0
        %v2039 = vsel %vm2001, %v1973, 0
        %v2042 = vsel %vm2001, %v1974, 0
        %v2045 = vsel %vm2001, %v1975, 0
        %v2048 = vsel %vm2001, %v1976, 0
        %2050 = vmatprep.subr.bf16.mxu0 0
        %2051 = vmatpush1.bf16.xpose.msra.mxu0 %v2048
        %2052 = vmatprep.subr.bf16.mxu0 0
        %2053 = vmatpush1.bf16.xpose.msra.mxu0 %v2045
        %2054 = vmatprep.subr.bf16.mxu0 0
        %2055 = vmatpush1.bf16.xpose.msra.mxu0 %v2042
        %2056 = vmatprep.subr.bf16.mxu0 0
        %2057 = vmatpush1.bf16.xpose.msra.mxu0 %v2039
        %2058 = vmatprep.subr.bf16.mxu0 0
        %2059 = vmatpush1.bf16.xpose.msra.mxu0 %v2036
        %2060 = vmatprep.subr.bf16.mxu0 0
        %2061 = vmatpush1.bf16.xpose.msra.mxu0 %v2033
        %2062 = vmatprep.subr.bf16.mxu0 0
        %2063 = vmatpush1.bf16.xpose.msra.mxu0 %v2030
        %2064 = vmatprep.subr.bf16.mxu0 0
        %2065 = vmatpush1.bf16.xpose.msra.mxu0 %v2027
        %2066 = vmatprep.subr.bf16.mxu0 0
        %2067 = vmatpush2.bf16.xpose.msra.mxu0 0
        %2068 = vmatprep.subr.bf16.mxu0 0
        %2069 = vmatpush2.bf16.xpose.msra.mxu0 0
        %2070 = vmatprep.subr.bf16.mxu0 0
        %2071 = vmatpush2.bf16.xpose.msra.mxu0 0
        %2072 = vmatprep.subr.bf16.mxu0 0
        %2073 = vmatpush2.bf16.xpose.msra.mxu0 0
        %2074 = vmatprep.subr.bf16.mxu0 0
        %2075 = vmatpush2.bf16.xpose.msra.mxu0 0
        %2076 = vmatprep.subr.bf16.mxu0 0
        %2077 = vmatpush2.bf16.xpose.msra.mxu0 0
        %2078 = vmatprep.subr.bf16.mxu0 0
        %2079 = vmatpush2.bf16.xpose.msra.mxu0 0
        %2080 = vmatprep.subr.bf16.mxu0 0
        %2081 = vmatpush2.bf16.xpose.msra.mxu0 0
        %2082 = vmatprep.mubr.bf16.mxu0 0
        %2083 = vmatmul.mubr.bf16.gmra.mxu0 %v2003
        %v2084 = vpop.f32.mrf.mxu0
        %v2085 = vadd.f32 %v1889, %v2084
        %v2086 = vpop.f32.mrf.mxu0
        %v2087 = vpop.f32.mrf.mxu0
        %v2088 = vadd.f32 %v1890, %v2087
        %v2089 = vpop.f32.mrf.mxu0
        %2090 = vmatprep.mubr.bf16.mxu0 0
        %2091 = vmatmul.mubr.bf16.gmra.mxu0 %v2006
        %v2092 = vpop.f32.mrf.mxu0
        %v2093 = vadd.f32 %v1891, %v2092
        %v2094 = vpop.f32.mrf.mxu0
        %v2095 = vpop.f32.mrf.mxu0
        %v2096 = vadd.f32 %v1892, %v2095
        %v2097 = vpop.f32.mrf.mxu0
        %2098 = vmatprep.mubr.bf16.mxu0 0
        %2099 = vmatmul.mubr.bf16.gmra.mxu0 %v2009
        %v2100 = vpop.f32.mrf.mxu0
        %v2101 = vadd.f32 %v1893, %v2100
        %v2102 = vpop.f32.mrf.mxu0
        %v2103 = vpop.f32.mrf.mxu0
        %v2104 = vadd.f32 %v1894, %v2103
        %v2105 = vpop.f32.mrf.mxu0
        %2106 = vmatprep.mubr.bf16.mxu0 0
        %2107 = vmatmul.mubr.bf16.gmra.mxu0 %v2012
        %v2108 = vpop.f32.mrf.mxu0
        %v2109 = vadd.f32 %v1895, %v2108
        %v2110 = vpop.f32.mrf.mxu0
        %v2111 = vpop.f32.mrf.mxu0
        %v2112 = vadd.f32 %v1896, %v2111
        %v2113 = vpop.f32.mrf.mxu0
        %2114 = vmatprep.mubr.bf16.mxu0 0
        %2115 = vmatmul.mubr.bf16.gmra.mxu0 %v2015
        %v2116 = vpop.f32.mrf.mxu0
        %v2117 = vadd.f32 %v1897, %v2116
        %v2118 = vpop.f32.mrf.mxu0
        %v2119 = vpop.f32.mrf.mxu0
        %v2120 = vadd.f32 %v1898, %v2119
        %v2121 = vpop.f32.mrf.mxu0
        %2122 = vmatprep.mubr.bf16.mxu0 0
        %2123 = vmatmul.mubr.bf16.gmra.mxu0 %v2018
        %v2124 = vpop.f32.mrf.mxu0
        %v2125 = vadd.f32 %v1899, %v2124
        %v2126 = vpop.f32.mrf.mxu0
        %v2127 = vpop.f32.mrf.mxu0
        %v2128 = vadd.f32 %v1900, %v2127
        %v2129 = vpop.f32.mrf.mxu0
        %2130 = vmatprep.mubr.bf16.mxu0 0
        %2131 = vmatmul.mubr.bf16.gmra.mxu0 %v2021
        %v2132 = vpop.f32.mrf.mxu0
        %v2133 = vadd.f32 %v1901, %v2132
        %v2134 = vpop.f32.mrf.mxu0
        %v2135 = vpop.f32.mrf.mxu0
        %v2136 = vadd.f32 %v1902, %v2135
        %v2137 = vpop.f32.mrf.mxu0
        %2138 = vmatprep.mubr.bf16.mxu0 0
        %2139 = vmatmul.mubr.bf16.gmra.mxu0 %v2024
        %v2140 = vpop.f32.mrf.mxu0
        %v2141 = vadd.f32 %v1903, %v2140
        %v2142 = vpop.f32.mrf.mxu0
        %v2143 = vpop.f32.mrf.mxu0
        %v2144 = vadd.f32 %v1904, %v2143
        %v2145 = vpop.f32.mrf.mxu0
        %2146 = vdwg.mxu0
        %v2148 = vsel %vm2001, %v1961, 0
        %v2151 = vsel %vm2001, %v1962, 0
        %v2154 = vsel %vm2001, %v1963, 0
        %v2157 = vsel %vm2001, %v1964, 0
        %v2160 = vsel %vm2001, %v1965, 0
        %v2163 = vsel %vm2001, %v1966, 0
        %v2166 = vsel %vm2001, %v1967, 0
        %v2169 = vsel %vm2001, %v1968, 0
        %v2172 = vsel %vm2001, %v1977, 0
        %v2175 = vsel %vm2001, %v1978, 0
        %v2178 = vsel %vm2001, %v1979, 0
        %v2181 = vsel %vm2001, %v1980, 0
        %v2184 = vsel %vm2001, %v1981, 0
        %v2187 = vsel %vm2001, %v1982, 0
        %v2190 = vsel %vm2001, %v1983, 0
        %v2193 = vsel %vm2001, %v1984, 0
        %2195 = vmatprep.subr.bf16.mxu0 0
        %2196 = vmatpush1.bf16.xpose.msra.mxu0 %v2193
        %2197 = vmatprep.subr.bf16.mxu0 0
        %2198 = vmatpush1.bf16.xpose.msra.mxu0 %v2190
        %2199 = vmatprep.subr.bf16.mxu0 0
        %2200 = vmatpush1.bf16.xpose.msra.mxu0 %v2187
        %2201 = vmatprep.subr.bf16.mxu0 0
        %2202 = vmatpush1.bf16.xpose.msra.mxu0 %v2184
        %2203 = vmatprep.subr.bf16.mxu0 0
        %2204 = vmatpush1.bf16.xpose.msra.mxu0 %v2181
        %2205 = vmatprep.subr.bf16.mxu0 0
        %2206 = vmatpush1.bf16.xpose.msra.mxu0 %v2178
        %2207 = vmatprep.subr.bf16.mxu0 0
        %2208 = vmatpush1.bf16.xpose.msra.mxu0 %v2175
        %2209 = vmatprep.subr.bf16.mxu0 0
        %2210 = vmatpush1.bf16.xpose.msra.mxu0 %v2172
        %2211 = vmatprep.subr.bf16.mxu0 0
        %2212 = vmatpush2.bf16.xpose.msra.mxu0 0
        %2213 = vmatprep.subr.bf16.mxu0 0
        %2214 = vmatpush2.bf16.xpose.msra.mxu0 0
        %2215 = vmatprep.subr.bf16.mxu0 0
        %2216 = vmatpush2.bf16.xpose.msra.mxu0 0
        %2217 = vmatprep.subr.bf16.mxu0 0
        %2218 = vmatpush2.bf16.xpose.msra.mxu0 0
        %2219 = vmatprep.subr.bf16.mxu0 0
        %2220 = vmatpush2.bf16.xpose.msra.mxu0 0
        %2221 = vmatprep.subr.bf16.mxu0 0
        %2222 = vmatpush2.bf16.xpose.msra.mxu0 0
        %2223 = vmatprep.subr.bf16.mxu0 0
        %2224 = vmatpush2.bf16.xpose.msra.mxu0 0
        %2225 = vmatprep.subr.bf16.mxu0 0
        %2226 = vmatpush2.bf16.xpose.msra.mxu0 0
        %2227 = vmatprep.mubr.bf16.mxu0 0
        %2228 = vmatmul.mubr.bf16.gmra.mxu0 %v2148
        %v2229 = vpop.f32.mrf.mxu0
        %v2230 = vadd.f32 %v1889, %v2229
        %v2231 = vpop.f32.mrf.mxu0
        %v2232 = vpop.f32.mrf.mxu0
        %v2233 = vadd.f32 %v1890, %v2232
        %v2234 = vpop.f32.mrf.mxu0
        %2235 = vmatprep.mubr.bf16.mxu0 0
        %2236 = vmatmul.mubr.bf16.gmra.mxu0 %v2151
        %v2237 = vpop.f32.mrf.mxu0
        %v2238 = vadd.f32 %v1891, %v2237
        %v2239 = vpop.f32.mrf.mxu0
        %v2240 = vpop.f32.mrf.mxu0
        %v2241 = vadd.f32 %v1892, %v2240
        %v2242 = vpop.f32.mrf.mxu0
        %2243 = vmatprep.mubr.bf16.mxu0 0
        %2244 = vmatmul.mubr.bf16.gmra.mxu0 %v2154
        %v2245 = vpop.f32.mrf.mxu0
        %v2246 = vadd.f32 %v1893, %v2245
        %v2247 = vpop.f32.mrf.mxu0
        %v2248 = vpop.f32.mrf.mxu0
        %v2249 = vadd.f32 %v1894, %v2248
        %v2250 = vpop.f32.mrf.mxu0
        %2251 = vmatprep.mubr.bf16.mxu0 0
        %2252 = vmatmul.mubr.bf16.gmra.mxu0 %v2157
        %v2253 = vpop.f32.mrf.mxu0
        %v2254 = vadd.f32 %v1895, %v2253
        %v2255 = vpop.f32.mrf.mxu0
        %v2256 = vpop.f32.mrf.mxu0
        %v2257 = vadd.f32 %v1896, %v2256
        %v2258 = vpop.f32.mrf.mxu0
        %2259 = vmatprep.mubr.bf16.mxu0 0
        %2260 = vmatmul.mubr.bf16.gmra.mxu0 %v2160
        %v2261 = vpop.f32.mrf.mxu0
        %v2262 = vadd.f32 %v1897, %v2261
        %v2263 = vpop.f32.mrf.mxu0
        %v2264 = vpop.f32.mrf.mxu0
        %v2265 = vadd.f32 %v1898, %v2264
        %v2266 = vpop.f32.mrf.mxu0
        %2267 = vmatprep.mubr.bf16.mxu0 0
        %2268 = vmatmul.mubr.bf16.gmra.mxu0 %v2163
        %v2269 = vpop.f32.mrf.mxu0
        %v2270 = vadd.f32 %v1899, %v2269
        %v2271 = vpop.f32.mrf.mxu0
        %v2272 = vpop.f32.mrf.mxu0
        %v2273 = vadd.f32 %v1900, %v2272
        %v2274 = vpop.f32.mrf.mxu0
        %2275 = vmatprep.mubr.bf16.mxu0 0
        %2276 = vmatmul.mubr.bf16.gmra.mxu0 %v2166
        %v2277 = vpop.f32.mrf.mxu0
        %v2278 = vadd.f32 %v1901, %v2277
        %v2279 = vpop.f32.mrf.mxu0
        %v2280 = vpop.f32.mrf.mxu0
        %v2281 = vadd.f32 %v1902, %v2280
        %v2282 = vpop.f32.mrf.mxu0
        %2283 = vmatprep.mubr.bf16.mxu0 0
        %2284 = vmatmul.mubr.bf16.gmra.mxu0 %v2169
        %v2285 = vpop.f32.mrf.mxu0
        %v2286 = vadd.f32 %v1903, %v2285
        %v2287 = vpop.f32.mrf.mxu0
        %v2288 = vpop.f32.mrf.mxu0
        %v2289 = vadd.f32 %v1904, %v2288
        %v2290 = vpop.f32.mrf.mxu0
        %2291 = vdwg.mxu0
        %2292 = vmax.xlane.f32.xlu0 %v2085
        %v2293 = vpop.xlane.xlu0 %2292
        %2294 = vmax.xlane.f32.xlu0 %v2088
        %v2295 = vpop.xlane.xlu0 %2294
        %2296 = vmax.xlane.f32.xlu0 %v2093
        %v2297 = vpop.xlane.xlu0 %2296
        %2298 = vmax.xlane.f32.xlu0 %v2096
        %v2299 = vpop.xlane.xlu0 %2298
        %2300 = vmax.xlane.f32.xlu0 %v2101
        %v2301 = vpop.xlane.xlu0 %2300
        %2302 = vmax.xlane.f32.xlu0 %v2104
        %v2303 = vpop.xlane.xlu0 %2302
        %2304 = vmax.xlane.f32.xlu0 %v2109
        %v2305 = vpop.xlane.xlu0 %2304
        %2306 = vmax.xlane.f32.xlu0 %v2112
        %v2307 = vpop.xlane.xlu0 %2306
        %2308 = vmax.xlane.f32.xlu0 %v2117
        %v2309 = vpop.xlane.xlu0 %2308
        %2310 = vmax.xlane.f32.xlu0 %v2120
        %v2311 = vpop.xlane.xlu0 %2310
        %2312 = vmax.xlane.f32.xlu0 %v2125
        %v2313 = vpop.xlane.xlu0 %2312
        %2314 = vmax.xlane.f32.xlu0 %v2128
        %v2315 = vpop.xlane.xlu0 %2314
        %2316 = vmax.xlane.f32.xlu0 %v2133
        %v2317 = vpop.xlane.xlu0 %2316
        %2318 = vmax.xlane.f32.xlu0 %v2136
        %v2319 = vpop.xlane.xlu0 %2318
        %2320 = vmax.xlane.f32.xlu0 %v2141
        %v2321 = vpop.xlane.xlu0 %2320
        %2322 = vmax.xlane.f32.xlu0 %v2144
        %v2323 = vpop.xlane.xlu0 %2322
        %2324 = vmax.xlane.f32.xlu0 %v2230
        %v2325 = vpop.xlane.xlu0 %2324
        %2326 = vmax.xlane.f32.xlu0 %v2233
        %v2327 = vpop.xlane.xlu0 %2326
        %2328 = vmax.xlane.f32.xlu0 %v2238
        %v2329 = vpop.xlane.xlu0 %2328
        %2330 = vmax.xlane.f32.xlu0 %v2241
        %v2331 = vpop.xlane.xlu0 %2330
        %2332 = vmax.xlane.f32.xlu0 %v2246
        %v2333 = vpop.xlane.xlu0 %2332
        %2334 = vmax.xlane.f32.xlu0 %v2249
        %v2335 = vpop.xlane.xlu0 %2334
        %2336 = vmax.xlane.f32.xlu0 %v2254
        %v2337 = vpop.xlane.xlu0 %2336
        %2338 = vmax.xlane.f32.xlu0 %v2257
        %v2339 = vpop.xlane.xlu0 %2338
        %2340 = vmax.xlane.f32.xlu0 %v2262
        %v2341 = vpop.xlane.xlu0 %2340
        %2342 = vmax.xlane.f32.xlu0 %v2265
        %v2343 = vpop.xlane.xlu0 %2342
        %2344 = vmax.xlane.f32.xlu0 %v2270
        %v2345 = vpop.xlane.xlu0 %2344
        %2346 = vmax.xlane.f32.xlu0 %v2273
        %v2347 = vpop.xlane.xlu0 %2346
        %2348 = vmax.xlane.f32.xlu0 %v2278
        %v2349 = vpop.xlane.xlu0 %2348
        %2350 = vmax.xlane.f32.xlu0 %v2281
        %v2351 = vpop.xlane.xlu0 %2350
        %2352 = vmax.xlane.f32.xlu0 %v2286
        %v2353 = vpop.xlane.xlu0 %2352
        %2354 = vmax.xlane.f32.xlu0 %v2289
        %v2355 = vpop.xlane.xlu0 %2354
        %v2356 = vsub.f32 %v2085, %v2293
        %v2357 = vsub.f32 %v2088, %v2295
        %v2358 = vsub.f32 %v2093, %v2297
        %v2359 = vsub.f32 %v2096, %v2299
        %v2360 = vsub.f32 %v2101, %v2301
        %v2361 = vsub.f32 %v2104, %v2303
        %v2362 = vsub.f32 %v2109, %v2305
        %v2363 = vsub.f32 %v2112, %v2307
        %v2364 = vsub.f32 %v2117, %v2309
        %v2365 = vsub.f32 %v2120, %v2311
        %v2366 = vsub.f32 %v2125, %v2313
        %v2367 = vsub.f32 %v2128, %v2315
        %v2368 = vsub.f32 %v2133, %v2317
        %v2369 = vsub.f32 %v2136, %v2319
        %v2370 = vsub.f32 %v2141, %v2321
        %v2371 = vsub.f32 %v2144, %v2323
        %v2372 = vsub.f32 %v2230, %v2325
        %v2373 = vsub.f32 %v2233, %v2327
        %v2374 = vsub.f32 %v2238, %v2329
        %v2375 = vsub.f32 %v2241, %v2331
        %v2376 = vsub.f32 %v2246, %v2333
        %v2377 = vsub.f32 %v2249, %v2335
        %v2378 = vsub.f32 %v2254, %v2337
        %v2379 = vsub.f32 %v2257, %v2339
        %v2380 = vsub.f32 %v2262, %v2341
        %v2381 = vsub.f32 %v2265, %v2343
        %v2382 = vsub.f32 %v2270, %v2345
        %v2383 = vsub.f32 %v2273, %v2347
        %v2384 = vsub.f32 %v2278, %v2349
        %v2385 = vsub.f32 %v2281, %v2351
        %v2386 = vsub.f32 %v2286, %v2353
        %v2387 = vsub.f32 %v2289, %v2355
        %v2388 = vmul.f32 %v2356, 1.442695
        %v2389 = vpow.pop %v2388
        %v2390 = vmul.f32 %v2357, 1.442695
        %v2391 = vpow.pop %v2390
        %v2392 = vmul.f32 %v2358, 1.442695
        %v2393 = vpow.pop %v2392
        %v2394 = vmul.f32 %v2359, 1.442695
        %v2395 = vpow.pop %v2394
        %v2396 = vmul.f32 %v2360, 1.442695
        %v2397 = vpow.pop %v2396
        %v2398 = vmul.f32 %v2361, 1.442695
        %v2399 = vpow.pop %v2398
        %v2400 = vmul.f32 %v2362, 1.442695
        %v2401 = vpow.pop %v2400
        %v2402 = vmul.f32 %v2363, 1.442695
        %v2403 = vpow.pop %v2402
        %v2404 = vmul.f32 %v2364, 1.442695
        %v2405 = vpow.pop %v2404
        %v2406 = vmul.f32 %v2365, 1.442695
        %v2407 = vpow.pop %v2406
        %v2408 = vmul.f32 %v2366, 1.442695
        %v2409 = vpow.pop %v2408
        %v2410 = vmul.f32 %v2367, 1.442695
        %v2411 = vpow.pop %v2410
        %v2412 = vmul.f32 %v2368, 1.442695
        %v2413 = vpow.pop %v2412
        %v2414 = vmul.f32 %v2369, 1.442695
        %v2415 = vpow.pop %v2414
        %v2416 = vmul.f32 %v2370, 1.442695
        %v2417 = vpow.pop %v2416
        %v2418 = vmul.f32 %v2371, 1.442695
        %v2419 = vpow.pop %v2418
        %v2420 = vmul.f32 %v2372, 1.442695
        %v2421 = vpow.pop %v2420
        %v2422 = vmul.f32 %v2373, 1.442695
        %v2423 = vpow.pop %v2422
        %v2424 = vmul.f32 %v2374, 1.442695
        %v2425 = vpow.pop %v2424
        %v2426 = vmul.f32 %v2375, 1.442695
        %v2427 = vpow.pop %v2426
        %v2428 = vmul.f32 %v2376, 1.442695
        %v2429 = vpow.pop %v2428
        %v2430 = vmul.f32 %v2377, 1.442695
        %v2431 = vpow.pop %v2430
        %v2432 = vmul.f32 %v2378, 1.442695
        %v2433 = vpow.pop %v2432
        %v2434 = vmul.f32 %v2379, 1.442695
        %v2435 = vpow.pop %v2434
        %v2436 = vmul.f32 %v2380, 1.442695
        %v2437 = vpow.pop %v2436
        %v2438 = vmul.f32 %v2381, 1.442695
        %v2439 = vpow.pop %v2438
        %v2440 = vmul.f32 %v2382, 1.442695
        %v2441 = vpow.pop %v2440
        %v2442 = vmul.f32 %v2383, 1.442695
        %v2443 = vpow.pop %v2442
        %v2444 = vmul.f32 %v2384, 1.442695
        %v2445 = vpow.pop %v2444
        %v2446 = vmul.f32 %v2385, 1.442695
        %v2447 = vpow.pop %v2446
        %v2448 = vmul.f32 %v2386, 1.442695
        %v2449 = vpow.pop %v2448
        %v2450 = vmul.f32 %v2387, 1.442695
        %v2451 = vpow.pop %v2450
        %2452 = vadd.xlane.f32.xlu0 %v2389
        %v2453 = vpop.xlane.xlu0 %2452
        %2454 = vadd.xlane.f32.xlu0 %v2391
        %v2455 = vpop.xlane.xlu0 %2454
        %2456 = vadd.xlane.f32.xlu0 %v2393
        %v2457 = vpop.xlane.xlu0 %2456
        %2458 = vadd.xlane.f32.xlu0 %v2395
        %v2459 = vpop.xlane.xlu0 %2458
        %2460 = vadd.xlane.f32.xlu0 %v2397
        %v2461 = vpop.xlane.xlu0 %2460
        %2462 = vadd.xlane.f32.xlu0 %v2399
        %v2463 = vpop.xlane.xlu0 %2462
        %2464 = vadd.xlane.f32.xlu0 %v2401
        %v2465 = vpop.xlane.xlu0 %2464
        %2466 = vadd.xlane.f32.xlu0 %v2403
        %v2467 = vpop.xlane.xlu0 %2466
        %2468 = vadd.xlane.f32.xlu0 %v2405
        %v2469 = vpop.xlane.xlu0 %2468
        %2470 = vadd.xlane.f32.xlu0 %v2407
        %v2471 = vpop.xlane.xlu0 %2470
        %2472 = vadd.xlane.f32.xlu0 %v2409
        %v2473 = vpop.xlane.xlu0 %2472
        %2474 = vadd.xlane.f32.xlu0 %v2411
        %v2475 = vpop.xlane.xlu0 %2474
        %2476 = vadd.xlane.f32.xlu0 %v2413
        %v2477 = vpop.xlane.xlu0 %2476
        %2478 = vadd.xlane.f32.xlu0 %v2415
        %v2479 = vpop.xlane.xlu0 %2478
        %2480 = vadd.xlane.f32.xlu0 %v2417
        %v2481 = vpop.xlane.xlu0 %2480
        %2482 = vadd.xlane.f32.xlu0 %v2419
        %v2483 = vpop.xlane.xlu0 %2482
        %2484 = vadd.xlane.f32.xlu0 %v2421
        %v2485 = vpop.xlane.xlu0 %2484
        %2486 = vadd.xlane.f32.xlu0 %v2423
        %v2487 = vpop.xlane.xlu0 %2486
        %2488 = vadd.xlane.f32.xlu0 %v2425
        %v2489 = vpop.xlane.xlu0 %2488
        %2490 = vadd.xlane.f32.xlu0 %v2427
        %v2491 = vpop.xlane.xlu0 %2490
        %2492 = vadd.xlane.f32.xlu0 %v2429
        %v2493 = vpop.xlane.xlu0 %2492
        %2494 = vadd.xlane.f32.xlu0 %v2431
        %v2495 = vpop.xlane.xlu0 %2494
        %2496 = vadd.xlane.f32.xlu0 %v2433
        %v2497 = vpop.xlane.xlu0 %2496
        %2498 = vadd.xlane.f32.xlu0 %v2435
        %v2499 = vpop.xlane.xlu0 %2498
        %2500 = vadd.xlane.f32.xlu0 %v2437
        %v2501 = vpop.xlane.xlu0 %2500
        %2502 = vadd.xlane.f32.xlu0 %v2439
        %v2503 = vpop.xlane.xlu0 %2502
        %2504 = vadd.xlane.f32.xlu0 %v2441
        %v2505 = vpop.xlane.xlu0 %2504
        %2506 = vadd.xlane.f32.xlu0 %v2443
        %v2507 = vpop.xlane.xlu0 %2506
        %2508 = vadd.xlane.f32.xlu0 %v2445
        %v2509 = vpop.xlane.xlu0 %2508
        %2510 = vadd.xlane.f32.xlu0 %v2447
        %v2511 = vpop.xlane.xlu0 %2510
        %2512 = vadd.xlane.f32.xlu0 %v2449
        %v2513 = vpop.xlane.xlu0 %2512
        %2514 = vadd.xlane.f32.xlu0 %v2451
        %v2515 = vpop.xlane.xlu0 %2514
        %v2516 = vrcp.pop %v2453
        %v2517 = vrcp.pop %v2455
        %v2518 = vrcp.pop %v2457
        %v2519 = vrcp.pop %v2459
        %v2520 = vrcp.pop %v2461
        %v2521 = vrcp.pop %v2463
        %v2522 = vrcp.pop %v2465
        %v2523 = vrcp.pop %v2467
        %v2524 = vrcp.pop %v2469
        %v2525 = vrcp.pop %v2471
        %v2526 = vrcp.pop %v2473
        %v2527 = vrcp.pop %v2475
        %v2528 = vrcp.pop %v2477
        %v2529 = vrcp.pop %v2479
        %v2530 = vrcp.pop %v2481
        %v2531 = vrcp.pop %v2483
        %v2532 = vrcp.pop %v2485
        %v2533 = vrcp.pop %v2487
        %v2534 = vrcp.pop %v2489
        %v2535 = vrcp.pop %v2491
        %v2536 = vrcp.pop %v2493
        %v2537 = vrcp.pop %v2495
        %v2538 = vrcp.pop %v2497
        %v2539 = vrcp.pop %v2499
        %v2540 = vrcp.pop %v2501
        %v2541 = vrcp.pop %v2503
        %v2542 = vrcp.pop %v2505
        %v2543 = vrcp.pop %v2507
        %v2544 = vrcp.pop %v2509
        %v2545 = vrcp.pop %v2511
        %v2546 = vrcp.pop %v2513
        %v2547 = vrcp.pop %v2515
        %v2548 = vmul.f32 %v2389, %v2516
        %v2549 = vmul.f32 %v2391, %v2517
        %v2550 = vmul.f32 %v2393, %v2518
        %v2551 = vmul.f32 %v2395, %v2519
        %v2552 = vmul.f32 %v2397, %v2520
        %v2553 = vmul.f32 %v2399, %v2521
        %v2554 = vmul.f32 %v2401, %v2522
        %v2555 = vmul.f32 %v2403, %v2523
        %v2556 = vmul.f32 %v2405, %v2524
        %v2557 = vmul.f32 %v2407, %v2525
        %v2558 = vmul.f32 %v2409, %v2526
        %v2559 = vmul.f32 %v2411, %v2527
        %v2560 = vmul.f32 %v2413, %v2528
        %v2561 = vmul.f32 %v2415, %v2529
        %v2562 = vmul.f32 %v2417, %v2530
        %v2563 = vmul.f32 %v2419, %v2531
        %v2564 = vmul.f32 %v2421, %v2532
        %v2565 = vmul.f32 %v2423, %v2533
        %v2566 = vmul.f32 %v2425, %v2534
        %v2567 = vmul.f32 %v2427, %v2535
        %v2568 = vmul.f32 %v2429, %v2536
        %v2569 = vmul.f32 %v2431, %v2537
        %v2570 = vmul.f32 %v2433, %v2538
        %v2571 = vmul.f32 %v2435, %v2539
        %v2572 = vmul.f32 %v2437, %v2540
        %v2573 = vmul.f32 %v2439, %v2541
        %v2574 = vmul.f32 %v2441, %v2542
        %v2575 = vmul.f32 %v2443, %v2543
        %v2576 = vmul.f32 %v2445, %v2544
        %v2577 = vmul.f32 %v2447, %v2545
        %v2578 = vmul.f32 %v2449, %v2546
        %v2579 = vmul.f32 %v2451, %v2547
        %v2580 = vpack.c.bf16 %v2549, %v2548
        %v2581 = vpack.c.bf16 %v2551, %v2550
        %v2582 = vpack.c.bf16 %v2553, %v2552
        %v2583 = vpack.c.bf16 %v2555, %v2554
        %v2584 = vpack.c.bf16 %v2557, %v2556
        %v2585 = vpack.c.bf16 %v2559, %v2558
        %v2586 = vpack.c.bf16 %v2561, %v2560
        %v2587 = vpack.c.bf16 %v2563, %v2562
        %v2588 = vpack.c.bf16 %v2565, %v2564
        %v2589 = vpack.c.bf16 %v2567, %v2566
        %v2590 = vpack.c.bf16 %v2569, %v2568
        %v2591 = vpack.c.bf16 %v2571, %v2570
        %v2592 = vpack.c.bf16 %v2573, %v2572
        %v2593 = vpack.c.bf16 %v2575, %v2574
        %v2594 = vpack.c.bf16 %v2577, %v2576
        %v2595 = vpack.c.bf16 %v2579, %v2578
        %2596 = vmatprep.subr.bf16.mxu0 0
        %2597 = vmatpush1.bf16.msra.mxu0 %v1992
        %2598 = vmatprep.subr.bf16.mxu0 0
        %2599 = vmatpush1.bf16.msra.mxu0 %v1991
        %2600 = vmatprep.subr.bf16.mxu0 0
        %2601 = vmatpush1.bf16.msra.mxu0 %v1990
        %2602 = vmatprep.subr.bf16.mxu0 0
        %2603 = vmatpush1.bf16.msra.mxu0 %v1989
        %2604 = vmatprep.subr.bf16.mxu0 0
        %2605 = vmatpush1.bf16.msra.mxu0 %v1988
        %2606 = vmatprep.subr.bf16.mxu0 0
        %2607 = vmatpush1.bf16.msra.mxu0 %v1987
        %2608 = vmatprep.subr.bf16.mxu0 0
        %2609 = vmatpush1.bf16.msra.mxu0 %v1986
        %2610 = vmatprep.subr.bf16.mxu0 0
        %2611 = vmatpush1.bf16.msra.mxu0 %v1985
        %2612 = vmatprep.subr.bf16.mxu0 0
        %2613 = vmatpush2.bf16.msra.mxu0 0
        %2614 = vmatprep.subr.bf16.mxu0 0
        %2615 = vmatpush2.bf16.msra.mxu0 0
        %2616 = vmatprep.subr.bf16.mxu0 0
        %2617 = vmatpush2.bf16.msra.mxu0 0
        %2618 = vmatprep.subr.bf16.mxu0 0
        %2619 = vmatpush2.bf16.msra.mxu0 0
        %2620 = vmatprep.subr.bf16.mxu0 0
        %2621 = vmatpush2.bf16.msra.mxu0 0
        %2622 = vmatprep.subr.bf16.mxu0 0
        %2623 = vmatpush2.bf16.msra.mxu0 0
        %2624 = vmatprep.subr.bf16.mxu0 0
        %2625 = vmatpush2.bf16.msra.mxu0 0
        %2626 = vmatprep.subr.bf16.mxu0 0
        %2627 = vmatpush2.bf16.msra.mxu0 0
        %2628 = vmatprep.mubr.bf16.mxu0 0
        %2629 = vmatmul.mubr.bf16.gmra.mxu0 %v2580
        %v2630 = vpop.f32.mrf.mxu0
        %v2631 = vadd.f32 0.0, %v2630
        %v2632 = vpop.f32.mrf.mxu0
        %v2633 = vpop.f32.mrf.mxu0
        %v2634 = vadd.f32 0.0, %v2633
        %v2635 = vpop.f32.mrf.mxu0
        %2636 = vmatprep.mubr.bf16.mxu0 0
        %2637 = vmatmul.mubr.bf16.gmra.mxu0 %v2581
        %v2638 = vpop.f32.mrf.mxu0
        %v2639 = vadd.f32 0.0, %v2638
        %v2640 = vpop.f32.mrf.mxu0
        %v2641 = vpop.f32.mrf.mxu0
        %v2642 = vadd.f32 0.0, %v2641
        %v2643 = vpop.f32.mrf.mxu0
        %2644 = vmatprep.mubr.bf16.mxu0 0
        %2645 = vmatmul.mubr.bf16.gmra.mxu0 %v2582
        %v2646 = vpop.f32.mrf.mxu0
        %v2647 = vadd.f32 0.0, %v2646
        %v2648 = vpop.f32.mrf.mxu0
        %v2649 = vpop.f32.mrf.mxu0
        %v2650 = vadd.f32 0.0, %v2649
        %v2651 = vpop.f32.mrf.mxu0
        %2652 = vmatprep.mubr.bf16.mxu0 0
        %2653 = vmatmul.mubr.bf16.gmra.mxu0 %v2583
        %v2654 = vpop.f32.mrf.mxu0
        %v2655 = vadd.f32 0.0, %v2654
        %v2656 = vpop.f32.mrf.mxu0
        %v2657 = vpop.f32.mrf.mxu0
        %v2658 = vadd.f32 0.0, %v2657
        %v2659 = vpop.f32.mrf.mxu0
        %2660 = vmatprep.mubr.bf16.mxu0 0
        %2661 = vmatmul.mubr.bf16.gmra.mxu0 %v2584
        %v2662 = vpop.f32.mrf.mxu0
        %v2663 = vadd.f32 0.0, %v2662
        %v2664 = vpop.f32.mrf.mxu0
        %v2665 = vpop.f32.mrf.mxu0
        %v2666 = vadd.f32 0.0, %v2665
        %v2667 = vpop.f32.mrf.mxu0
        %2668 = vmatprep.mubr.bf16.mxu0 0
        %2669 = vmatmul.mubr.bf16.gmra.mxu0 %v2585
        %v2670 = vpop.f32.mrf.mxu0
        %v2671 = vadd.f32 0.0, %v2670
        %v2672 = vpop.f32.mrf.mxu0
        %v2673 = vpop.f32.mrf.mxu0
        %v2674 = vadd.f32 0.0, %v2673
        %v2675 = vpop.f32.mrf.mxu0
        %2676 = vmatprep.mubr.bf16.mxu0 0
        %2677 = vmatmul.mubr.bf16.gmra.mxu0 %v2586
        %v2678 = vpop.f32.mrf.mxu0
        %v2679 = vadd.f32 0.0, %v2678
        %v2680 = vpop.f32.mrf.mxu0
        %v2681 = vpop.f32.mrf.mxu0
        %v2682 = vadd.f32 0.0, %v2681
        %v2683 = vpop.f32.mrf.mxu0
        %2684 = vmatprep.mubr.bf16.mxu0 0
        %2685 = vmatmul.mubr.bf16.gmra.mxu0 %v2587
        %v2686 = vpop.f32.mrf.mxu0
        %v2687 = vadd.f32 0.0, %v2686
        %v2688 = vpop.f32.mrf.mxu0
        %v2689 = vpop.f32.mrf.mxu0
        %v2690 = vadd.f32 0.0, %v2689
        %v2691 = vpop.f32.mrf.mxu0
        %2692 = vdwg.mxu0
        %2693 = vmatprep.subr.bf16.mxu0 0
        %2694 = vmatpush1.bf16.msra.mxu0 %v2000
        %2695 = vmatprep.subr.bf16.mxu0 0
        %2696 = vmatpush1.bf16.msra.mxu0 %v1999
        %2697 = vmatprep.subr.bf16.mxu0 0
        %2698 = vmatpush1.bf16.msra.mxu0 %v1998
        %2699 = vmatprep.subr.bf16.mxu0 0
        %2700 = vmatpush1.bf16.msra.mxu0 %v1997
        %2701 = vmatprep.subr.bf16.mxu0 0
        %2702 = vmatpush1.bf16.msra.mxu0 %v1996
        %2703 = vmatprep.subr.bf16.mxu0 0
        %2704 = vmatpush1.bf16.msra.mxu0 %v1995
        %2705 = vmatprep.subr.bf16.mxu0 0
        %2706 = vmatpush1.bf16.msra.mxu0 %v1994
        %2707 = vmatprep.subr.bf16.mxu0 0
        %2708 = vmatpush1.bf16.msra.mxu0 %v1993
        %2709 = vmatprep.subr.bf16.mxu0 0
        %2710 = vmatpush2.bf16.msra.mxu0 0
        %2711 = vmatprep.subr.bf16.mxu0 0
        %2712 = vmatpush2.bf16.msra.mxu0 0
        %2713 = vmatprep.subr.bf16.mxu0 0
        %2714 = vmatpush2.bf16.msra.mxu0 0
        %2715 = vmatprep.subr.bf16.mxu0 0
        %2716 = vmatpush2.bf16.msra.mxu0 0
        %2717 = vmatprep.subr.bf16.mxu0 0
        %2718 = vmatpush2.bf16.msra.mxu0 0
        %2719 = vmatprep.subr.bf16.mxu0 0
        %2720 = vmatpush2.bf16.msra.mxu0 0
        %2721 = vmatprep.subr.bf16.mxu0 0
        %2722 = vmatpush2.bf16.msra.mxu0 0
        %2723 = vmatprep.subr.bf16.mxu0 0
        %2724 = vmatpush2.bf16.msra.mxu0 0
        %2725 = vmatprep.mubr.bf16.mxu0 0
        %2726 = vmatmul.mubr.bf16.gmra.mxu0 %v2588
        %v2727 = vpop.f32.mrf.mxu0
        %v2728 = vadd.f32 0.0, %v2727
        %v2729 = vpop.f32.mrf.mxu0
        %v2730 = vpop.f32.mrf.mxu0
        %v2731 = vadd.f32 0.0, %v2730
        %v2732 = vpop.f32.mrf.mxu0
        %2733 = vmatprep.mubr.bf16.mxu0 0
        %2734 = vmatmul.mubr.bf16.gmra.mxu0 %v2589
        %v2735 = vpop.f32.mrf.mxu0
        %v2736 = vadd.f32 0.0, %v2735
        %v2737 = vpop.f32.mrf.mxu0
        %v2738 = vpop.f32.mrf.mxu0
        %v2739 = vadd.f32 0.0, %v2738
        %v2740 = vpop.f32.mrf.mxu0
        %2741 = vmatprep.mubr.bf16.mxu0 0
        %2742 = vmatmul.mubr.bf16.gmra.mxu0 %v2590
        %v2743 = vpop.f32.mrf.mxu0
        %v2744 = vadd.f32 0.0, %v2743
        %v2745 = vpop.f32.mrf.mxu0
        %v2746 = vpop.f32.mrf.mxu0
        %v2747 = vadd.f32 0.0, %v2746
        %v2748 = vpop.f32.mrf.mxu0
        %2749 = vmatprep.mubr.bf16.mxu0 0
        %2750 = vmatmul.mubr.bf16.gmra.mxu0 %v2591
        %v2751 = vpop.f32.mrf.mxu0
        %v2752 = vadd.f32 0.0, %v2751
        %v2753 = vpop.f32.mrf.mxu0
        %v2754 = vpop.f32.mrf.mxu0
        %v2755 = vadd.f32 0.0, %v2754
        %v2756 = vpop.f32.mrf.mxu0
        %2757 = vmatprep.mubr.bf16.mxu0 0
        %2758 = vmatmul.mubr.bf16.gmra.mxu0 %v2592
        %v2759 = vpop.f32.mrf.mxu0
        %v2760 = vadd.f32 0.0, %v2759
        %v2761 = vpop.f32.mrf.mxu0
        %v2762 = vpop.f32.mrf.mxu0
        %v2763 = vadd.f32 0.0, %v2762
        %v2764 = vpop.f32.mrf.mxu0
        %2765 = vmatprep.mubr.bf16.mxu0 0
        %2766 = vmatmul.mubr.bf16.gmra.mxu0 %v2593
        %v2767 = vpop.f32.mrf.mxu0
        %v2768 = vadd.f32 0.0, %v2767
        %v2769 = vpop.f32.mrf.mxu0
        %v2770 = vpop.f32.mrf.mxu0
        %v2771 = vadd.f32 0.0, %v2770
        %v2772 = vpop.f32.mrf.mxu0
        %2773 = vmatprep.mubr.bf16.mxu0 0
        %2774 = vmatmul.mubr.bf16.gmra.mxu0 %v2594
        %v2775 = vpop.f32.mrf.mxu0
        %v2776 = vadd.f32 0.0, %v2775
        %v2777 = vpop.f32.mrf.mxu0
        %v2778 = vpop.f32.mrf.mxu0
        %v2779 = vadd.f32 0.0, %v2778
        %v2780 = vpop.f32.mrf.mxu0
        %2781 = vmatprep.mubr.bf16.mxu0 0
        %2782 = vmatmul.mubr.bf16.gmra.mxu0 %v2595
        %v2783 = vpop.f32.mrf.mxu0
        %v2784 = vadd.f32 0.0, %v2783
        %v2785 = vpop.f32.mrf.mxu0
        %v2786 = vpop.f32.mrf.mxu0
        %v2787 = vadd.f32 0.0, %v2786
        %v2788 = vpop.f32.mrf.mxu0
        %2789 = vdwg.mxu0
        %v2790 = vpack.c.bf16 %v2634, %v2631
        %v2791 = vpack.c.bf16 %v2642, %v2639
        %v2792 = vpack.c.bf16 %v2650, %v2647
        %v2793 = vpack.c.bf16 %v2658, %v2655
        %v2794 = vpack.c.bf16 %v2666, %v2663
        %v2795 = vpack.c.bf16 %v2674, %v2671
        %v2796 = vpack.c.bf16 %v2682, %v2679
        %v2797 = vpack.c.bf16 %v2690, %v2687
        %v2798 = vpack.c.bf16 %v2731, %v2728
        %v2799 = vpack.c.bf16 %v2739, %v2736
        %v2800 = vpack.c.bf16 %v2747, %v2744
        %v2801 = vpack.c.bf16 %v2755, %v2752
        %v2802 = vpack.c.bf16 %v2763, %v2760
        %v2803 = vpack.c.bf16 %v2771, %v2768
        %v2804 = vpack.c.bf16 %v2779, %v2776
        %v2805 = vpack.c.bf16 %v2787, %v2784
        %2814 = vrot.lane.b32.xlu0 %v1953, 96
        %v2815 = vpop.permute.xlu0 %2814
        %2816 = vrot.lane.b32.xlu0 %v1954, 96
        %v2817 = vpop.permute.xlu0 %2816
        %2818 = vrot.lane.b32.xlu0 %v1955, 96
        %v2819 = vpop.permute.xlu0 %2818
        %2820 = vrot.lane.b32.xlu0 %v1956, 96
        %v2821 = vpop.permute.xlu0 %2820
        %2822 = vrot.lane.b32.xlu0 %v1957, 96
        %v2823 = vpop.permute.xlu0 %2822
        %2824 = vrot.lane.b32.xlu0 %v1958, 96
        %v2825 = vpop.permute.xlu0 %2824
        %2826 = vrot.lane.b32.xlu0 %v1959, 96
        %v2827 = vpop.permute.xlu0 %2826
        %2828 = vrot.lane.b32.xlu0 %v1960, 96
        %v2829 = vpop.permute.xlu0 %2828
        %2838 = vrot.lane.b32.xlu0 %v1969, 96
        %v2839 = vpop.permute.xlu0 %2838
        %2840 = vrot.lane.b32.xlu0 %v1970, 96
        %v2841 = vpop.permute.xlu0 %2840
        %2842 = vrot.lane.b32.xlu0 %v1971, 96
        %v2843 = vpop.permute.xlu0 %2842
        %2844 = vrot.lane.b32.xlu0 %v1972, 96
        %v2845 = vpop.permute.xlu0 %2844
        %2846 = vrot.lane.b32.xlu0 %v1973, 96
        %v2847 = vpop.permute.xlu0 %2846
        %2848 = vrot.lane.b32.xlu0 %v1974, 96
        %v2849 = vpop.permute.xlu0 %2848
        %2850 = vrot.lane.b32.xlu0 %v1975, 96
        %v2851 = vpop.permute.xlu0 %2850
        %2852 = vrot.lane.b32.xlu0 %v1976, 96
        %v2853 = vpop.permute.xlu0 %2852
        %v2855 = vsel %vm2001, %v2815, 0
        %v2858 = vsel %vm2001, %v2817, 0
        %v2861 = vsel %vm2001, %v2819, 0
        %v2864 = vsel %vm2001, %v2821, 0
        %v2867 = vsel %vm2001, %v2823, 0
        %v2870 = vsel %vm2001, %v2825, 0
        %v2873 = vsel %vm2001, %v2827, 0
        %v2876 = vsel %vm2001, %v2829, 0
        %v2879 = vsel %vm2001, %v2839, 0
        %v2882 = vsel %vm2001, %v2841, 0
        %v2885 = vsel %vm2001, %v2843, 0
        %v2888 = vsel %vm2001, %v2845, 0
        %v2891 = vsel %vm2001, %v2847, 0
        %v2894 = vsel %vm2001, %v2849, 0
        %v2897 = vsel %vm2001, %v2851, 0
        %v2900 = vsel %vm2001, %v2853, 0
        %2902 = vmatprep.subr.bf16.mxu0 0
        %2903 = vmatpush1.bf16.xpose.msra.mxu0 %v2900
        %2904 = vmatprep.subr.bf16.mxu0 0
        %2905 = vmatpush1.bf16.xpose.msra.mxu0 %v2897
        %2906 = vmatprep.subr.bf16.mxu0 0
        %2907 = vmatpush1.bf16.xpose.msra.mxu0 %v2894
        %2908 = vmatprep.subr.bf16.mxu0 0
        %2909 = vmatpush1.bf16.xpose.msra.mxu0 %v2891
        %2910 = vmatprep.subr.bf16.mxu0 0
        %2911 = vmatpush1.bf16.xpose.msra.mxu0 %v2888
        %2912 = vmatprep.subr.bf16.mxu0 0
        %2913 = vmatpush1.bf16.xpose.msra.mxu0 %v2885
        %2914 = vmatprep.subr.bf16.mxu0 0
        %2915 = vmatpush1.bf16.xpose.msra.mxu0 %v2882
        %2916 = vmatprep.subr.bf16.mxu0 0
        %2917 = vmatpush1.bf16.xpose.msra.mxu0 %v2879
        %2918 = vmatprep.subr.bf16.mxu0 0
        %2919 = vmatpush2.bf16.xpose.msra.mxu0 0
        %2920 = vmatprep.subr.bf16.mxu0 0
        %2921 = vmatpush2.bf16.xpose.msra.mxu0 0
        %2922 = vmatprep.subr.bf16.mxu0 0
        %2923 = vmatpush2.bf16.xpose.msra.mxu0 0
        %2924 = vmatprep.subr.bf16.mxu0 0
        %2925 = vmatpush2.bf16.xpose.msra.mxu0 0
        %2926 = vmatprep.subr.bf16.mxu0 0
        %2927 = vmatpush2.bf16.xpose.msra.mxu0 0
        %2928 = vmatprep.subr.bf16.mxu0 0
        %2929 = vmatpush2.bf16.xpose.msra.mxu0 0
        %2930 = vmatprep.subr.bf16.mxu0 0
        %2931 = vmatpush2.bf16.xpose.msra.mxu0 0
        %2932 = vmatprep.subr.bf16.mxu0 0
        %2933 = vmatpush2.bf16.xpose.msra.mxu0 0
        %2934 = vmatprep.mubr.bf16.mxu0 0
        %2935 = vmatmul.mubr.bf16.gmra.mxu0 %v2855
        %v2936 = vpop.f32.mrf.mxu0
        %v2937 = vadd.f32 %v1889, %v2936
        %v2938 = vpop.f32.mrf.mxu0
        %v2939 = vpop.f32.mrf.mxu0
        %v2940 = vadd.f32 %v1890, %v2939
        %v2941 = vpop.f32.mrf.mxu0
        %2942 = vmatprep.mubr.bf16.mxu0 0
        %2943 = vmatmul.mubr.bf16.gmra.mxu0 %v2858
        %v2944 = vpop.f32.mrf.mxu0
        %v2945 = vadd.f32 %v1891, %v2944
        %v2946 = vpop.f32.mrf.mxu0
        %v2947 = vpop.f32.mrf.mxu0
        %v2948 = vadd.f32 %v1892, %v2947
        %v2949 = vpop.f32.mrf.mxu0
        %2950 = vmatprep.mubr.bf16.mxu0 0
        %2951 = vmatmul.mubr.bf16.gmra.mxu0 %v2861
        %v2952 = vpop.f32.mrf.mxu0
        %v2953 = vadd.f32 %v1893, %v2952
        %v2954 = vpop.f32.mrf.mxu0
        %v2955 = vpop.f32.mrf.mxu0
        %v2956 = vadd.f32 %v1894, %v2955
        %v2957 = vpop.f32.mrf.mxu0
        %2958 = vmatprep.mubr.bf16.mxu0 0
        %2959 = vmatmul.mubr.bf16.gmra.mxu0 %v2864
        %v2960 = vpop.f32.mrf.mxu0
        %v2961 = vadd.f32 %v1895, %v2960
        %v2962 = vpop.f32.mrf.mxu0
        %v2963 = vpop.f32.mrf.mxu0
        %v2964 = vadd.f32 %v1896, %v2963
        %v2965 = vpop.f32.mrf.mxu0
        %2966 = vmatprep.mubr.bf16.mxu0 0
        %2967 = vmatmul.mubr.bf16.gmra.mxu0 %v2867
        %v2968 = vpop.f32.mrf.mxu0
        %v2969 = vadd.f32 %v1897, %v2968
        %v2970 = vpop.f32.mrf.mxu0
        %v2971 = vpop.f32.mrf.mxu0
        %v2972 = vadd.f32 %v1898, %v2971
        %v2973 = vpop.f32.mrf.mxu0
        %2974 = vmatprep.mubr.bf16.mxu0 0
        %2975 = vmatmul.mubr.bf16.gmra.mxu0 %v2870
        %v2976 = vpop.f32.mrf.mxu0
        %v2977 = vadd.f32 %v1899, %v2976
        %v2978 = vpop.f32.mrf.mxu0
        %v2979 = vpop.f32.mrf.mxu0
        %v2980 = vadd.f32 %v1900, %v2979
        %v2981 = vpop.f32.mrf.mxu0
        %2982 = vmatprep.mubr.bf16.mxu0 0
        %2983 = vmatmul.mubr.bf16.gmra.mxu0 %v2873
        %v2984 = vpop.f32.mrf.mxu0
        %v2985 = vadd.f32 %v1901, %v2984
        %v2986 = vpop.f32.mrf.mxu0
        %v2987 = vpop.f32.mrf.mxu0
        %v2988 = vadd.f32 %v1902, %v2987
        %v2989 = vpop.f32.mrf.mxu0
        %2990 = vmatprep.mubr.bf16.mxu0 0
        %2991 = vmatmul.mubr.bf16.gmra.mxu0 %v2876
        %v2992 = vpop.f32.mrf.mxu0
        %v2993 = vadd.f32 %v1903, %v2992
        %v2994 = vpop.f32.mrf.mxu0
        %v2995 = vpop.f32.mrf.mxu0
        %v2996 = vadd.f32 %v1904, %v2995
        %v2997 = vpop.f32.mrf.mxu0
        %2998 = vdwg.mxu0
        %3007 = vrot.lane.b32.xlu0 %v1961, 96
        %v3008 = vpop.permute.xlu0 %3007
        %3009 = vrot.lane.b32.xlu0 %v1962, 96
        %v3010 = vpop.permute.xlu0 %3009
        %3011 = vrot.lane.b32.xlu0 %v1963, 96
        %v3012 = vpop.permute.xlu0 %3011
        %3013 = vrot.lane.b32.xlu0 %v1964, 96
        %v3014 = vpop.permute.xlu0 %3013
        %3015 = vrot.lane.b32.xlu0 %v1965, 96
        %v3016 = vpop.permute.xlu0 %3015
        %3017 = vrot.lane.b32.xlu0 %v1966, 96
        %v3018 = vpop.permute.xlu0 %3017
        %3019 = vrot.lane.b32.xlu0 %v1967, 96
        %v3020 = vpop.permute.xlu0 %3019
        %3021 = vrot.lane.b32.xlu0 %v1968, 96
        %v3022 = vpop.permute.xlu0 %3021
        %3031 = vrot.lane.b32.xlu0 %v1977, 96
        %v3032 = vpop.permute.xlu0 %3031
        %3033 = vrot.lane.b32.xlu0 %v1978, 96
        %v3034 = vpop.permute.xlu0 %3033
        %3035 = vrot.lane.b32.xlu0 %v1979, 96
        %v3036 = vpop.permute.xlu0 %3035
        %3037 = vrot.lane.b32.xlu0 %v1980, 96
        %v3038 = vpop.permute.xlu0 %3037
        %3039 = vrot.lane.b32.xlu0 %v1981, 96
        %v3040 = vpop.permute.xlu0 %3039
        %3041 = vrot.lane.b32.xlu0 %v1982, 96
        %v3042 = vpop.permute.xlu0 %3041
        %3043 = vrot.lane.b32.xlu0 %v1983, 96
        %v3044 = vpop.permute.xlu0 %3043
        %3045 = vrot.lane.b32.xlu0 %v1984, 96
        %v3046 = vpop.permute.xlu0 %3045
        %v3048 = vsel %vm2001, %v3008, 0
        %v3051 = vsel %vm2001, %v3010, 0
        %v3054 = vsel %vm2001, %v3012, 0
        %v3057 = vsel %vm2001, %v3014, 0
        %v3060 = vsel %vm2001, %v3016, 0
        %v3063 = vsel %vm2001, %v3018, 0
        %v3066 = vsel %vm2001, %v3020, 0
        %v3069 = vsel %vm2001, %v3022, 0
        %v3072 = vsel %vm2001, %v3032, 0
        %v3075 = vsel %vm2001, %v3034, 0
        %v3078 = vsel %vm2001, %v3036, 0
        %v3081 = vsel %vm2001, %v3038, 0
        %v3084 = vsel %vm2001, %v3040, 0
        %v3087 = vsel %vm2001, %v3042, 0
        %v3090 = vsel %vm2001, %v3044, 0
        %v3093 = vsel %vm2001, %v3046, 0
        %3095 = vmatprep.subr.bf16.mxu0 0
        %3096 = vmatpush1.bf16.xpose.msra.mxu0 %v3093
        %3097 = vmatprep.subr.bf16.mxu0 0
        %3098 = vmatpush1.bf16.xpose.msra.mxu0 %v3090
        %3099 = vmatprep.subr.bf16.mxu0 0
        %3100 = vmatpush1.bf16.xpose.msra.mxu0 %v3087
        %3101 = vmatprep.subr.bf16.mxu0 0
        %3102 = vmatpush1.bf16.xpose.msra.mxu0 %v3084
        %3103 = vmatprep.subr.bf16.mxu0 0
        %3104 = vmatpush1.bf16.xpose.msra.mxu0 %v3081
        %3105 = vmatprep.subr.bf16.mxu0 0
        %3106 = vmatpush1.bf16.xpose.msra.mxu0 %v3078
        %3107 = vmatprep.subr.bf16.mxu0 0
        %3108 = vmatpush1.bf16.xpose.msra.mxu0 %v3075
        %3109 = vmatprep.subr.bf16.mxu0 0
        %3110 = vmatpush1.bf16.xpose.msra.mxu0 %v3072
        %3111 = vmatprep.subr.bf16.mxu0 0
        %3112 = vmatpush2.bf16.xpose.msra.mxu0 0
        %3113 = vmatprep.subr.bf16.mxu0 0
        %3114 = vmatpush2.bf16.xpose.msra.mxu0 0
        %3115 = vmatprep.subr.bf16.mxu0 0
        %3116 = vmatpush2.bf16.xpose.msra.mxu0 0
        %3117 = vmatprep.subr.bf16.mxu0 0
        %3118 = vmatpush2.bf16.xpose.msra.mxu0 0
        %3119 = vmatprep.subr.bf16.mxu0 0
        %3120 = vmatpush2.bf16.xpose.msra.mxu0 0
        %3121 = vmatprep.subr.bf16.mxu0 0
        %3122 = vmatpush2.bf16.xpose.msra.mxu0 0
        %3123 = vmatprep.subr.bf16.mxu0 0
        %3124 = vmatpush2.bf16.xpose.msra.mxu0 0
        %3125 = vmatprep.subr.bf16.mxu0 0
        %3126 = vmatpush2.bf16.xpose.msra.mxu0 0
        %3127 = vmatprep.mubr.bf16.mxu0 0
        %3128 = vmatmul.mubr.bf16.gmra.mxu0 %v3048
        %v3129 = vpop.f32.mrf.mxu0
        %v3130 = vadd.f32 %v1889, %v3129
        %v3131 = vpop.f32.mrf.mxu0
        %v3132 = vpop.f32.mrf.mxu0
        %v3133 = vadd.f32 %v1890, %v3132
        %v3134 = vpop.f32.mrf.mxu0
        %3135 = vmatprep.mubr.bf16.mxu0 0
        %3136 = vmatmul.mubr.bf16.gmra.mxu0 %v3051
        %v3137 = vpop.f32.mrf.mxu0
        %v3138 = vadd.f32 %v1891, %v3137
        %v3139 = vpop.f32.mrf.mxu0
        %v3140 = vpop.f32.mrf.mxu0
        %v3141 = vadd.f32 %v1892, %v3140
        %v3142 = vpop.f32.mrf.mxu0
        %3143 = vmatprep.mubr.bf16.mxu0 0
        %3144 = vmatmul.mubr.bf16.gmra.mxu0 %v3054
        %v3145 = vpop.f32.mrf.mxu0
        %v3146 = vadd.f32 %v1893, %v3145
        %v3147 = vpop.f32.mrf.mxu0
        %v3148 = vpop.f32.mrf.mxu0
        %v3149 = vadd.f32 %v1894, %v3148
        %v3150 = vpop.f32.mrf.mxu0
        %3151 = vmatprep.mubr.bf16.mxu0 0
        %3152 = vmatmul.mubr.bf16.gmra.mxu0 %v3057
        %v3153 = vpop.f32.mrf.mxu0
        %v3154 = vadd.f32 %v1895, %v3153
        %v3155 = vpop.f32.mrf.mxu0
        %v3156 = vpop.f32.mrf.mxu0
        %v3157 = vadd.f32 %v1896, %v3156
        %v3158 = vpop.f32.mrf.mxu0
        %3159 = vmatprep.mubr.bf16.mxu0 0
        %3160 = vmatmul.mubr.bf16.gmra.mxu0 %v3060
        %v3161 = vpop.f32.mrf.mxu0
        %v3162 = vadd.f32 %v1897, %v3161
        %v3163 = vpop.f32.mrf.mxu0
        %v3164 = vpop.f32.mrf.mxu0
        %v3165 = vadd.f32 %v1898, %v3164
        %v3166 = vpop.f32.mrf.mxu0
        %3167 = vmatprep.mubr.bf16.mxu0 0
        %3168 = vmatmul.mubr.bf16.gmra.mxu0 %v3063
        %v3169 = vpop.f32.mrf.mxu0
        %v3170 = vadd.f32 %v1899, %v3169
        %v3171 = vpop.f32.mrf.mxu0
        %v3172 = vpop.f32.mrf.mxu0
        %v3173 = vadd.f32 %v1900, %v3172
        %v3174 = vpop.f32.mrf.mxu0
        %3175 = vmatprep.mubr.bf16.mxu0 0
        %3176 = vmatmul.mubr.bf16.gmra.mxu0 %v3066
        %v3177 = vpop.f32.mrf.mxu0
        %v3178 = vadd.f32 %v1901, %v3177
        %v3179 = vpop.f32.mrf.mxu0
        %v3180 = vpop.f32.mrf.mxu0
        %v3181 = vadd.f32 %v1902, %v3180
        %v3182 = vpop.f32.mrf.mxu0
        %3183 = vmatprep.mubr.bf16.mxu0 0
        %3184 = vmatmul.mubr.bf16.gmra.mxu0 %v3069
        %v3185 = vpop.f32.mrf.mxu0
        %v3186 = vadd.f32 %v1903, %v3185
        %v3187 = vpop.f32.mrf.mxu0
        %v3188 = vpop.f32.mrf.mxu0
        %v3189 = vadd.f32 %v1904, %v3188
        %v3190 = vpop.f32.mrf.mxu0
        %3191 = vdwg.mxu0
        %3192 = vmax.xlane.f32.xlu0 %v2937
        %v3193 = vpop.xlane.xlu0 %3192
        %3194 = vmax.xlane.f32.xlu0 %v2940
        %v3195 = vpop.xlane.xlu0 %3194
        %3196 = vmax.xlane.f32.xlu0 %v2945
        %v3197 = vpop.xlane.xlu0 %3196
        %3198 = vmax.xlane.f32.xlu0 %v2948
        %v3199 = vpop.xlane.xlu0 %3198
        %3200 = vmax.xlane.f32.xlu0 %v2953
        %v3201 = vpop.xlane.xlu0 %3200
        %3202 = vmax.xlane.f32.xlu0 %v2956
        %v3203 = vpop.xlane.xlu0 %3202
        %3204 = vmax.xlane.f32.xlu0 %v2961
        %v3205 = vpop.xlane.xlu0 %3204
        %3206 = vmax.xlane.f32.xlu0 %v2964
        %v3207 = vpop.xlane.xlu0 %3206
        %3208 = vmax.xlane.f32.xlu0 %v2969
        %v3209 = vpop.xlane.xlu0 %3208
        %3210 = vmax.xlane.f32.xlu0 %v2972
        %v3211 = vpop.xlane.xlu0 %3210
        %3212 = vmax.xlane.f32.xlu0 %v2977
        %v3213 = vpop.xlane.xlu0 %3212
        %3214 = vmax.xlane.f32.xlu0 %v2980
        %v3215 = vpop.xlane.xlu0 %3214
        %3216 = vmax.xlane.f32.xlu0 %v2985
        %v3217 = vpop.xlane.xlu0 %3216
        %3218 = vmax.xlane.f32.xlu0 %v2988
        %v3219 = vpop.xlane.xlu0 %3218
        %3220 = vmax.xlane.f32.xlu0 %v2993
        %v3221 = vpop.xlane.xlu0 %3220
        %3222 = vmax.xlane.f32.xlu0 %v2996
        %v3223 = vpop.xlane.xlu0 %3222
        %3224 = vmax.xlane.f32.xlu0 %v3130
        %v3225 = vpop.xlane.xlu0 %3224
        %3226 = vmax.xlane.f32.xlu0 %v3133
        %v3227 = vpop.xlane.xlu0 %3226
        %3228 = vmax.xlane.f32.xlu0 %v3138
        %v3229 = vpop.xlane.xlu0 %3228
        %3230 = vmax.xlane.f32.xlu0 %v3141
        %v3231 = vpop.xlane.xlu0 %3230
        %3232 = vmax.xlane.f32.xlu0 %v3146
        %v3233 = vpop.xlane.xlu0 %3232
        %3234 = vmax.xlane.f32.xlu0 %v3149
        %v3235 = vpop.xlane.xlu0 %3234
        %3236 = vmax.xlane.f32.xlu0 %v3154
        %v3237 = vpop.xlane.xlu0 %3236
        %3238 = vmax.xlane.f32.xlu0 %v3157
        %v3239 = vpop.xlane.xlu0 %3238
        %3240 = vmax.xlane.f32.xlu0 %v3162
        %v3241 = vpop.xlane.xlu0 %3240
        %3242 = vmax.xlane.f32.xlu0 %v3165
        %v3243 = vpop.xlane.xlu0 %3242
        %3244 = vmax.xlane.f32.xlu0 %v3170
        %v3245 = vpop.xlane.xlu0 %3244
        %3246 = vmax.xlane.f32.xlu0 %v3173
        %v3247 = vpop.xlane.xlu0 %3246
        %3248 = vmax.xlane.f32.xlu0 %v3178
        %v3249 = vpop.xlane.xlu0 %3248
        %3250 = vmax.xlane.f32.xlu0 %v3181
        %v3251 = vpop.xlane.xlu0 %3250
        %3252 = vmax.xlane.f32.xlu0 %v3186
        %v3253 = vpop.xlane.xlu0 %3252
        %3254 = vmax.xlane.f32.xlu0 %v3189
        %v3255 = vpop.xlane.xlu0 %3254
        %v3256 = vsub.f32 %v2937, %v3193
        %v3257 = vsub.f32 %v2940, %v3195
        %v3258 = vsub.f32 %v2945, %v3197
        %v3259 = vsub.f32 %v2948, %v3199
        %v3260 = vsub.f32 %v2953, %v3201
        %v3261 = vsub.f32 %v2956, %v3203
        %v3262 = vsub.f32 %v2961, %v3205
        %v3263 = vsub.f32 %v2964, %v3207
        %v3264 = vsub.f32 %v2969, %v3209
        %v3265 = vsub.f32 %v2972, %v3211
        %v3266 = vsub.f32 %v2977, %v3213
        %v3267 = vsub.f32 %v2980, %v3215
        %v3268 = vsub.f32 %v2985, %v3217
        %v3269 = vsub.f32 %v2988, %v3219
        %v3270 = vsub.f32 %v2993, %v3221
        %v3271 = vsub.f32 %v2996, %v3223
        %v3272 = vsub.f32 %v3130, %v3225
        %v3273 = vsub.f32 %v3133, %v3227
        %v3274 = vsub.f32 %v3138, %v3229
        %v3275 = vsub.f32 %v3141, %v3231
        %v3276 = vsub.f32 %v3146, %v3233
        %v3277 = vsub.f32 %v3149, %v3235
        %v3278 = vsub.f32 %v3154, %v3237
        %v3279 = vsub.f32 %v3157, %v3239
        %v3280 = vsub.f32 %v3162, %v3241
        %v3281 = vsub.f32 %v3165, %v3243
        %v3282 = vsub.f32 %v3170, %v3245
        %v3283 = vsub.f32 %v3173, %v3247
        %v3284 = vsub.f32 %v3178, %v3249
        %v3285 = vsub.f32 %v3181, %v3251
        %v3286 = vsub.f32 %v3186, %v3253
        %v3287 = vsub.f32 %v3189, %v3255
        %v3288 = vmul.f32 %v3256, 1.442695
        %v3289 = vpow.pop %v3288
        %v3290 = vmul.f32 %v3257, 1.442695
        %v3291 = vpow.pop %v3290
        %v3292 = vmul.f32 %v3258, 1.442695
        %v3293 = vpow.pop %v3292
        %v3294 = vmul.f32 %v3259, 1.442695
        %v3295 = vpow.pop %v3294
        %v3296 = vmul.f32 %v3260, 1.442695
        %v3297 = vpow.pop %v3296
        %v3298 = vmul.f32 %v3261, 1.442695
        %v3299 = vpow.pop %v3298
        %v3300 = vmul.f32 %v3262, 1.442695
        %v3301 = vpow.pop %v3300
        %v3302 = vmul.f32 %v3263, 1.442695
        %v3303 = vpow.pop %v3302
        %v3304 = vmul.f32 %v3264, 1.442695
        %v3305 = vpow.pop %v3304
        %v3306 = vmul.f32 %v3265, 1.442695
        %v3307 = vpow.pop %v3306
        %v3308 = vmul.f32 %v3266, 1.442695
        %v3309 = vpow.pop %v3308
        %v3310 = vmul.f32 %v3267, 1.442695
        %v3311 = vpow.pop %v3310
        %v3312 = vmul.f32 %v3268, 1.442695
        %v3313 = vpow.pop %v3312
        %v3314 = vmul.f32 %v3269, 1.442695
        %v3315 = vpow.pop %v3314
        %v3316 = vmul.f32 %v3270, 1.442695
        %v3317 = vpow.pop %v3316
        %v3318 = vmul.f32 %v3271, 1.442695
        %v3319 = vpow.pop %v3318
        %v3320 = vmul.f32 %v3272, 1.442695
        %v3321 = vpow.pop %v3320
        %v3322 = vmul.f32 %v3273, 1.442695
        %v3323 = vpow.pop %v3322
        %v3324 = vmul.f32 %v3274, 1.442695
        %v3325 = vpow.pop %v3324
        %v3326 = vmul.f32 %v3275, 1.442695
        %v3327 = vpow.pop %v3326
        %v3328 = vmul.f32 %v3276, 1.442695
        %v3329 = vpow.pop %v3328
        %v3330 = vmul.f32 %v3277, 1.442695
        %v3331 = vpow.pop %v3330
        %v3332 = vmul.f32 %v3278, 1.442695
        %v3333 = vpow.pop %v3332
        %v3334 = vmul.f32 %v3279, 1.442695
        %v3335 = vpow.pop %v3334
        %v3336 = vmul.f32 %v3280, 1.442695
        %v3337 = vpow.pop %v3336
        %v3338 = vmul.f32 %v3281, 1.442695
        %v3339 = vpow.pop %v3338
        %v3340 = vmul.f32 %v3282, 1.442695
        %v3341 = vpow.pop %v3340
        %v3342 = vmul.f32 %v3283, 1.442695
        %v3343 = vpow.pop %v3342
        %v3344 = vmul.f32 %v3284, 1.442695
        %v3345 = vpow.pop %v3344
        %v3346 = vmul.f32 %v3285, 1.442695
        %v3347 = vpow.pop %v3346
        %v3348 = vmul.f32 %v3286, 1.442695
        %v3349 = vpow.pop %v3348
        %v3350 = vmul.f32 %v3287, 1.442695
        %v3351 = vpow.pop %v3350
        %3352 = vadd.xlane.f32.xlu0 %v3289
        %v3353 = vpop.xlane.xlu0 %3352
        %3354 = vadd.xlane.f32.xlu0 %v3291
        %v3355 = vpop.xlane.xlu0 %3354
        %3356 = vadd.xlane.f32.xlu0 %v3293
        %v3357 = vpop.xlane.xlu0 %3356
        %3358 = vadd.xlane.f32.xlu0 %v3295
        %v3359 = vpop.xlane.xlu0 %3358
        %3360 = vadd.xlane.f32.xlu0 %v3297
        %v3361 = vpop.xlane.xlu0 %3360
        %3362 = vadd.xlane.f32.xlu0 %v3299
        %v3363 = vpop.xlane.xlu0 %3362
        %3364 = vadd.xlane.f32.xlu0 %v3301
        %v3365 = vpop.xlane.xlu0 %3364
        %3366 = vadd.xlane.f32.xlu0 %v3303
        %v3367 = vpop.xlane.xlu0 %3366
        %3368 = vadd.xlane.f32.xlu0 %v3305
        %v3369 = vpop.xlane.xlu0 %3368
        %3370 = vadd.xlane.f32.xlu0 %v3307
        %v3371 = vpop.xlane.xlu0 %3370
        %3372 = vadd.xlane.f32.xlu0 %v3309
        %v3373 = vpop.xlane.xlu0 %3372
        %3374 = vadd.xlane.f32.xlu0 %v3311
        %v3375 = vpop.xlane.xlu0 %3374
        %3376 = vadd.xlane.f32.xlu0 %v3313
        %v3377 = vpop.xlane.xlu0 %3376
        %3378 = vadd.xlane.f32.xlu0 %v3315
        %v3379 = vpop.xlane.xlu0 %3378
        %3380 = vadd.xlane.f32.xlu0 %v3317
        %v3381 = vpop.xlane.xlu0 %3380
        %3382 = vadd.xlane.f32.xlu0 %v3319
        %v3383 = vpop.xlane.xlu0 %3382
        %3384 = vadd.xlane.f32.xlu0 %v3321
        %v3385 = vpop.xlane.xlu0 %3384
        %3386 = vadd.xlane.f32.xlu0 %v3323
        %v3387 = vpop.xlane.xlu0 %3386
        %3388 = vadd.xlane.f32.xlu0 %v3325
        %v3389 = vpop.xlane.xlu0 %3388
        %3390 = vadd.xlane.f32.xlu0 %v3327
        %v3391 = vpop.xlane.xlu0 %3390
        %3392 = vadd.xlane.f32.xlu0 %v3329
        %v3393 = vpop.xlane.xlu0 %3392
        %3394 = vadd.xlane.f32.xlu0 %v3331
        %v3395 = vpop.xlane.xlu0 %3394
        %3396 = vadd.xlane.f32.xlu0 %v3333
        %v3397 = vpop.xlane.xlu0 %3396
        %3398 = vadd.xlane.f32.xlu0 %v3335
        %v3399 = vpop.xlane.xlu0 %3398
        %3400 = vadd.xlane.f32.xlu0 %v3337
        %v3401 = vpop.xlane.xlu0 %3400
        %3402 = vadd.xlane.f32.xlu0 %v3339
        %v3403 = vpop.xlane.xlu0 %3402
        %3404 = vadd.xlane.f32.xlu0 %v3341
        %v3405 = vpop.xlane.xlu0 %3404
        %3406 = vadd.xlane.f32.xlu0 %v3343
        %v3407 = vpop.xlane.xlu0 %3406
        %3408 = vadd.xlane.f32.xlu0 %v3345
        %v3409 = vpop.xlane.xlu0 %3408
        %3410 = vadd.xlane.f32.xlu0 %v3347
        %v3411 = vpop.xlane.xlu0 %3410
        %3412 = vadd.xlane.f32.xlu0 %v3349
        %v3413 = vpop.xlane.xlu0 %3412
        %3414 = vadd.xlane.f32.xlu0 %v3351
        %v3415 = vpop.xlane.xlu0 %3414
        %v3416 = vrcp.pop %v3353
        %v3417 = vrcp.pop %v3355
        %v3418 = vrcp.pop %v3357
        %v3419 = vrcp.pop %v3359
        %v3420 = vrcp.pop %v3361
        %v3421 = vrcp.pop %v3363
        %v3422 = vrcp.pop %v3365
        %v3423 = vrcp.pop %v3367
        %v3424 = vrcp.pop %v3369
        %v3425 = vrcp.pop %v3371
        %v3426 = vrcp.pop %v3373
        %v3427 = vrcp.pop %v3375
        %v3428 = vrcp.pop %v3377
        %v3429 = vrcp.pop %v3379
        %v3430 = vrcp.pop %v3381
        %v3431 = vrcp.pop %v3383
        %v3432 = vrcp.pop %v3385
        %v3433 = vrcp.pop %v3387
        %v3434 = vrcp.pop %v3389
        %v3435 = vrcp.pop %v3391
        %v3436 = vrcp.pop %v3393
        %v3437 = vrcp.pop %v3395
        %v3438 = vrcp.pop %v3397
        %v3439 = vrcp.pop %v3399
        %v3440 = vrcp.pop %v3401
        %v3441 = vrcp.pop %v3403
        %v3442 = vrcp.pop %v3405
        %v3443 = vrcp.pop %v3407
        %v3444 = vrcp.pop %v3409
        %v3445 = vrcp.pop %v3411
        %v3446 = vrcp.pop %v3413
        %v3447 = vrcp.pop %v3415
        %v3448 = vmul.f32 %v3289, %v3416
        %v3449 = vmul.f32 %v3291, %v3417
        %v3450 = vmul.f32 %v3293, %v3418
        %v3451 = vmul.f32 %v3295, %v3419
        %v3452 = vmul.f32 %v3297, %v3420
        %v3453 = vmul.f32 %v3299, %v3421
        %v3454 = vmul.f32 %v3301, %v3422
        %v3455 = vmul.f32 %v3303, %v3423
        %v3456 = vmul.f32 %v3305, %v3424
        %v3457 = vmul.f32 %v3307, %v3425
        %v3458 = vmul.f32 %v3309, %v3426
        %v3459 = vmul.f32 %v3311, %v3427
        %v3460 = vmul.f32 %v3313, %v3428
        %v3461 = vmul.f32 %v3315, %v3429
        %v3462 = vmul.f32 %v3317, %v3430
        %v3463 = vmul.f32 %v3319, %v3431
        %v3464 = vmul.f32 %v3321, %v3432
        %v3465 = vmul.f32 %v3323, %v3433
        %v3466 = vmul.f32 %v3325, %v3434
        %v3467 = vmul.f32 %v3327, %v3435
        %v3468 = vmul.f32 %v3329, %v3436
        %v3469 = vmul.f32 %v3331, %v3437
        %v3470 = vmul.f32 %v3333, %v3438
        %v3471 = vmul.f32 %v3335, %v3439
        %v3472 = vmul.f32 %v3337, %v3440
        %v3473 = vmul.f32 %v3339, %v3441
        %v3474 = vmul.f32 %v3341, %v3442
        %v3475 = vmul.f32 %v3343, %v3443
        %v3476 = vmul.f32 %v3345, %v3444
        %v3477 = vmul.f32 %v3347, %v3445
        %v3478 = vmul.f32 %v3349, %v3446
        %v3479 = vmul.f32 %v3351, %v3447
        %v3480 = vpack.c.bf16 %v3449, %v3448
        %v3481 = vpack.c.bf16 %v3451, %v3450
        %v3482 = vpack.c.bf16 %v3453, %v3452
        %v3483 = vpack.c.bf16 %v3455, %v3454
        %v3484 = vpack.c.bf16 %v3457, %v3456
        %v3485 = vpack.c.bf16 %v3459, %v3458
        %v3486 = vpack.c.bf16 %v3461, %v3460
        %v3487 = vpack.c.bf16 %v3463, %v3462
        %v3488 = vpack.c.bf16 %v3465, %v3464
        %v3489 = vpack.c.bf16 %v3467, %v3466
        %v3490 = vpack.c.bf16 %v3469, %v3468
        %v3491 = vpack.c.bf16 %v3471, %v3470
        %v3492 = vpack.c.bf16 %v3473, %v3472
        %v3493 = vpack.c.bf16 %v3475, %v3474
        %v3494 = vpack.c.bf16 %v3477, %v3476
        %v3495 = vpack.c.bf16 %v3479, %v3478
        %3504 = vrot.lane.b32.xlu0 %v1985, 96
        %v3505 = vpop.permute.xlu0 %3504
        %3506 = vrot.lane.b32.xlu0 %v1986, 96
        %v3507 = vpop.permute.xlu0 %3506
        %3508 = vrot.lane.b32.xlu0 %v1987, 96
        %v3509 = vpop.permute.xlu0 %3508
        %3510 = vrot.lane.b32.xlu0 %v1988, 96
        %v3511 = vpop.permute.xlu0 %3510
        %3512 = vrot.lane.b32.xlu0 %v1989, 96
        %v3513 = vpop.permute.xlu0 %3512
        %3514 = vrot.lane.b32.xlu0 %v1990, 96
        %v3515 = vpop.permute.xlu0 %3514
        %3516 = vrot.lane.b32.xlu0 %v1991, 96
        %v3517 = vpop.permute.xlu0 %3516
        %3518 = vrot.lane.b32.xlu0 %v1992, 96
        %v3519 = vpop.permute.xlu0 %3518
        %3528 = vmatprep.subr.bf16.mxu0 0
        %3529 = vmatpush1.bf16.msra.mxu0 %v3519
        %3530 = vmatprep.subr.bf16.mxu0 0
        %3531 = vmatpush1.bf16.msra.mxu0 %v3517
        %3532 = vmatprep.subr.bf16.mxu0 0
        %3533 = vmatpush1.bf16.msra.mxu0 %v3515
        %3534 = vmatprep.subr.bf16.mxu0 0
        %3535 = vmatpush1.bf16.msra.mxu0 %v3513
        %3536 = vmatprep.subr.bf16.mxu0 0
        %3537 = vmatpush1.bf16.msra.mxu0 %v3511
        %3538 = vmatprep.subr.bf16.mxu0 0
        %3539 = vmatpush1.bf16.msra.mxu0 %v3509
        %3540 = vmatprep.subr.bf16.mxu0 0
        %3541 = vmatpush1.bf16.msra.mxu0 %v3507
        %3542 = vmatprep.subr.bf16.mxu0 0
        %3543 = vmatpush1.bf16.msra.mxu0 %v3505
        %3544 = vmatprep.subr.bf16.mxu0 0
        %3545 = vmatpush2.bf16.msra.mxu0 0
        %3546 = vmatprep.subr.bf16.mxu0 0
        %3547 = vmatpush2.bf16.msra.mxu0 0
        %3548 = vmatprep.subr.bf16.mxu0 0
        %3549 = vmatpush2.bf16.msra.mxu0 0
        %3550 = vmatprep.subr.bf16.mxu0 0
        %3551 = vmatpush2.bf16.msra.mxu0 0
        %3552 = vmatprep.subr.bf16.mxu0 0
        %3553 = vmatpush2.bf16.msra.mxu0 0
        %3554 = vmatprep.subr.bf16.mxu0 0
        %3555 = vmatpush2.bf16.msra.mxu0 0
        %3556 = vmatprep.subr.bf16.mxu0 0
        %3557 = vmatpush2.bf16.msra.mxu0 0
        %3558 = vmatprep.subr.bf16.mxu0 0
        %3559 = vmatpush2.bf16.msra.mxu0 0
        %3560 = vmatprep.mubr.bf16.mxu0 0
        %3561 = vmatmul.mubr.bf16.gmra.mxu0 %v3480
        %v3562 = vpop.f32.mrf.mxu0
        %v3563 = vadd.f32 0.0, %v3562
        %v3564 = vpop.f32.mrf.mxu0
        %v3565 = vpop.f32.mrf.mxu0
        %v3566 = vadd.f32 0.0, %v3565
        %v3567 = vpop.f32.mrf.mxu0
        %3568 = vmatprep.mubr.bf16.mxu0 0
        %3569 = vmatmul.mubr.bf16.gmra.mxu0 %v3481
        %v3570 = vpop.f32.mrf.mxu0
        %v3571 = vadd.f32 0.0, %v3570
        %v3572 = vpop.f32.mrf.mxu0
        %v3573 = vpop.f32.mrf.mxu0
        %v3574 = vadd.f32 0.0, %v3573
        %v3575 = vpop.f32.mrf.mxu0
        %3576 = vmatprep.mubr.bf16.mxu0 0
        %3577 = vmatmul.mubr.bf16.gmra.mxu0 %v3482
        %v3578 = vpop.f32.mrf.mxu0
        %v3579 = vadd.f32 0.0, %v3578
        %v3580 = vpop.f32.mrf.mxu0
        %v3581 = vpop.f32.mrf.mxu0
        %v3582 = vadd.f32 0.0, %v3581
        %v3583 = vpop.f32.mrf.mxu0
        %3584 = vmatprep.mubr.bf16.mxu0 0
        %3585 = vmatmul.mubr.bf16.gmra.mxu0 %v3483
        %v3586 = vpop.f32.mrf.mxu0
        %v3587 = vadd.f32 0.0, %v3586
        %v3588 = vpop.f32.mrf.mxu0
        %v3589 = vpop.f32.mrf.mxu0
        %v3590 = vadd.f32 0.0, %v3589
        %v3591 = vpop.f32.mrf.mxu0
        %3592 = vmatprep.mubr.bf16.mxu0 0
        %3593 = vmatmul.mubr.bf16.gmra.mxu0 %v3484
        %v3594 = vpop.f32.mrf.mxu0
        %v3595 = vadd.f32 0.0, %v3594
        %v3596 = vpop.f32.mrf.mxu0
        %v3597 = vpop.f32.mrf.mxu0
        %v3598 = vadd.f32 0.0, %v3597
        %v3599 = vpop.f32.mrf.mxu0
        %3600 = vmatprep.mubr.bf16.mxu0 0
        %3601 = vmatmul.mubr.bf16.gmra.mxu0 %v3485
        %v3602 = vpop.f32.mrf.mxu0
        %v3603 = vadd.f32 0.0, %v3602
        %v3604 = vpop.f32.mrf.mxu0
        %v3605 = vpop.f32.mrf.mxu0
        %v3606 = vadd.f32 0.0, %v3605
        %v3607 = vpop.f32.mrf.mxu0
        %3608 = vmatprep.mubr.bf16.mxu0 0
        %3609 = vmatmul.mubr.bf16.gmra.mxu0 %v3486
        %v3610 = vpop.f32.mrf.mxu0
        %v3611 = vadd.f32 0.0, %v3610
        %v3612 = vpop.f32.mrf.mxu0
        %v3613 = vpop.f32.mrf.mxu0
        %v3614 = vadd.f32 0.0, %v3613
        %v3615 = vpop.f32.mrf.mxu0
        %3616 = vmatprep.mubr.bf16.mxu0 0
        %3617 = vmatmul.mubr.bf16.gmra.mxu0 %v3487
        %v3618 = vpop.f32.mrf.mxu0
        %v3619 = vadd.f32 0.0, %v3618
        %v3620 = vpop.f32.mrf.mxu0
        %v3621 = vpop.f32.mrf.mxu0
        %v3622 = vadd.f32 0.0, %v3621
        %v3623 = vpop.f32.mrf.mxu0
        %3624 = vdwg.mxu0
        %3633 = vrot.lane.b32.xlu0 %v1993, 96
        %v3634 = vpop.permute.xlu0 %3633
        %3635 = vrot.lane.b32.xlu0 %v1994, 96
        %v3636 = vpop.permute.xlu0 %3635
        %3637 = vrot.lane.b32.xlu0 %v1995, 96
        %v3638 = vpop.permute.xlu0 %3637
        %3639 = vrot.lane.b32.xlu0 %v1996, 96
        %v3640 = vpop.permute.xlu0 %3639
        %3641 = vrot.lane.b32.xlu0 %v1997, 96
        %v3642 = vpop.permute.xlu0 %3641
        %3643 = vrot.lane.b32.xlu0 %v1998, 96
        %v3644 = vpop.permute.xlu0 %3643
        %3645 = vrot.lane.b32.xlu0 %v1999, 96
        %v3646 = vpop.permute.xlu0 %3645
        %3647 = vrot.lane.b32.xlu0 %v2000, 96
        %v3648 = vpop.permute.xlu0 %3647
        %3657 = vmatprep.subr.bf16.mxu0 0
        %3658 = vmatpush1.bf16.msra.mxu0 %v3648
        %3659 = vmatprep.subr.bf16.mxu0 0
        %3660 = vmatpush1.bf16.msra.mxu0 %v3646
        %3661 = vmatprep.subr.bf16.mxu0 0
        %3662 = vmatpush1.bf16.msra.mxu0 %v3644
        %3663 = vmatprep.subr.bf16.mxu0 0
        %3664 = vmatpush1.bf16.msra.mxu0 %v3642
        %3665 = vmatprep.subr.bf16.mxu0 0
        %3666 = vmatpush1.bf16.msra.mxu0 %v3640
        %3667 = vmatprep.subr.bf16.mxu0 0
        %3668 = vmatpush1.bf16.msra.mxu0 %v3638
        %3669 = vmatprep.subr.bf16.mxu0 0
        %3670 = vmatpush1.bf16.msra.mxu0 %v3636
        %3671 = vmatprep.subr.bf16.mxu0 0
        %3672 = vmatpush1.bf16.msra.mxu0 %v3634
        %3673 = vmatprep.subr.bf16.mxu0 0
        %3674 = vmatpush2.bf16.msra.mxu0 0
        %3675 = vmatprep.subr.bf16.mxu0 0
        %3676 = vmatpush2.bf16.msra.mxu0 0
        %3677 = vmatprep.subr.bf16.mxu0 0
        %3678 = vmatpush2.bf16.msra.mxu0 0
        %3679 = vmatprep.subr.bf16.mxu0 0
        %3680 = vmatpush2.bf16.msra.mxu0 0
        %3681 = vmatprep.subr.bf16.mxu0 0
        %3682 = vmatpush2.bf16.msra.mxu0 0
        %3683 = vmatprep.subr.bf16.mxu0 0
        %3684 = vmatpush2.bf16.msra.mxu0 0
        %3685 = vmatprep.subr.bf16.mxu0 0
        %3686 = vmatpush2.bf16.msra.mxu0 0
        %3687 = vmatprep.subr.bf16.mxu0 0
        %3688 = vmatpush2.bf16.msra.mxu0 0
        %3689 = vmatprep.mubr.bf16.mxu0 0
        %3690 = vmatmul.mubr.bf16.gmra.mxu0 %v3488
        %v3691 = vpop.f32.mrf.mxu0
        %v3692 = vadd.f32 0.0, %v3691
        %v3693 = vpop.f32.mrf.mxu0
        %v3694 = vpop.f32.mrf.mxu0
        %v3695 = vadd.f32 0.0, %v3694
        %v3696 = vpop.f32.mrf.mxu0
        %3697 = vmatprep.mubr.bf16.mxu0 0
        %3698 = vmatmul.mubr.bf16.gmra.mxu0 %v3489
        %v3699 = vpop.f32.mrf.mxu0
        %v3700 = vadd.f32 0.0, %v3699
        %v3701 = vpop.f32.mrf.mxu0
        %v3702 = vpop.f32.mrf.mxu0
        %v3703 = vadd.f32 0.0, %v3702
        %v3704 = vpop.f32.mrf.mxu0
        %3705 = vmatprep.mubr.bf16.mxu0 0
        %3706 = vmatmul.mubr.bf16.gmra.mxu0 %v3490
        %v3707 = vpop.f32.mrf.mxu0
        %v3708 = vadd.f32 0.0, %v3707
        %v3709 = vpop.f32.mrf.mxu0
        %v3710 = vpop.f32.mrf.mxu0
        %v3711 = vadd.f32 0.0, %v3710
        %v3712 = vpop.f32.mrf.mxu0
        %3713 = vmatprep.mubr.bf16.mxu0 0
        %3714 = vmatmul.mubr.bf16.gmra.mxu0 %v3491
        %v3715 = vpop.f32.mrf.mxu0
        %v3716 = vadd.f32 0.0, %v3715
        %v3717 = vpop.f32.mrf.mxu0
        %v3718 = vpop.f32.mrf.mxu0
        %v3719 = vadd.f32 0.0, %v3718
        %v3720 = vpop.f32.mrf.mxu0
        %3721 = vmatprep.mubr.bf16.mxu0 0
        %3722 = vmatmul.mubr.bf16.gmra.mxu0 %v3492
        %v3723 = vpop.f32.mrf.mxu0
        %v3724 = vadd.f32 0.0, %v3723
        %v3725 = vpop.f32.mrf.mxu0
        %v3726 = vpop.f32.mrf.mxu0
        %v3727 = vadd.f32 0.0, %v3726
        %v3728 = vpop.f32.mrf.mxu0
        %3729 = vmatprep.mubr.bf16.mxu0 0
        %3730 = vmatmul.mubr.bf16.gmra.mxu0 %v3493
        %v3731 = vpop.f32.mrf.mxu0
        %v3732 = vadd.f32 0.0, %v3731
        %v3733 = vpop.f32.mrf.mxu0
        %v3734 = vpop.f32.mrf.mxu0
        %v3735 = vadd.f32 0.0, %v3734
        %v3736 = vpop.f32.mrf.mxu0
        %3737 = vmatprep.mubr.bf16.mxu0 0
        %3738 = vmatmul.mubr.bf16.gmra.mxu0 %v3494
        %v3739 = vpop.f32.mrf.mxu0
        %v3740 = vadd.f32 0.0, %v3739
        %v3741 = vpop.f32.mrf.mxu0
        %v3742 = vpop.f32.mrf.mxu0
        %v3743 = vadd.f32 0.0, %v3742
        %v3744 = vpop.f32.mrf.mxu0
        %3745 = vmatprep.mubr.bf16.mxu0 0
        %3746 = vmatmul.mubr.bf16.gmra.mxu0 %v3495
        %v3747 = vpop.f32.mrf.mxu0
        %v3748 = vadd.f32 0.0, %v3747
        %v3749 = vpop.f32.mrf.mxu0
        %v3750 = vpop.f32.mrf.mxu0
        %v3751 = vadd.f32 0.0, %v3750
        %v3752 = vpop.f32.mrf.mxu0
        %3753 = vdwg.mxu0
        %v3754 = vpack.c.bf16 %v3566, %v3563
        %v3755 = vpack.c.bf16 %v3574, %v3571
        %v3756 = vpack.c.bf16 %v3582, %v3579
        %v3757 = vpack.c.bf16 %v3590, %v3587
        %v3758 = vpack.c.bf16 %v3598, %v3595
        %v3759 = vpack.c.bf16 %v3606, %v3603
        %v3760 = vpack.c.bf16 %v3614, %v3611
        %v3761 = vpack.c.bf16 %v3622, %v3619
        %v3762 = vpack.c.bf16 %v3695, %v3692
        %v3763 = vpack.c.bf16 %v3703, %v3700
        %v3764 = vpack.c.bf16 %v3711, %v3708
        %v3765 = vpack.c.bf16 %v3719, %v3716
        %v3766 = vpack.c.bf16 %v3727, %v3724
        %v3767 = vpack.c.bf16 %v3735, %v3732
        %v3768 = vpack.c.bf16 %v3743, %v3740
        %v3769 = vpack.c.bf16 %v3751, %v3748
        %v3774 = vunpack.c.l.b16 %v1909
        %v3775 = vunpack.c.l.b16 %v1910
        %v3776 = vunpack.c.l.b16 %v1911
        %v3777 = vunpack.c.l.b16 %v1912
        %v3778 = vpack.c.b16 %v3775, %v3774
        %v3779 = vpack.c.b16 %v3777, %v3776
        %v3783 = vsel %vm2001, %v3754, 0
        %v3786 = vsel %vm2001, %v3755, 0
        %v3789 = vsel %vm2001, %v3756, 0
        %v3792 = vsel %vm2001, %v3757, 0
        %v3795 = vsel %vm2001, %v3758, 0
        %v3798 = vsel %vm2001, %v3759, 0
        %v3801 = vsel %vm2001, %v3760, 0
        %v3804 = vsel %vm2001, %v3761, 0
        %v3807 = vsel %vm2001, %v3762, 0
        %v3810 = vsel %vm2001, %v3763, 0
        %v3813 = vsel %vm2001, %v3764, 0
        %v3816 = vsel %vm2001, %v3765, 0
        %v3819 = vsel %vm2001, %v3766, 0
        %v3822 = vsel %vm2001, %v3767, 0
        %v3825 = vsel %vm2001, %v3768, 0
        %v3828 = vsel %vm2001, %v3769, 0
        %3830 = vmatprep.subr.bf16.mxu0 0
        %3831 = vmatpush1.bf16.msra.mxu0 0
        %3832 = vmatprep.subr.bf16.mxu0 0
        %3833 = vmatpush1.bf16.msra.mxu0 0
        %3834 = vmatprep.subr.bf16.mxu0 0
        %3835 = vmatpush1.bf16.msra.mxu0 0
        %3836 = vmatprep.subr.bf16.mxu0 0
        %3837 = vmatpush1.bf16.msra.mxu0 0
        %3838 = vmatprep.subr.bf16.mxu0 0
        %3839 = vmatpush1.bf16.msra.mxu0 0
        %3840 = vmatprep.subr.bf16.mxu0 0
        %3841 = vmatpush1.bf16.msra.mxu0 0
        %3842 = vmatprep.subr.bf16.mxu0 0
        %3843 = vmatpush1.bf16.msra.mxu0 %v3779
        %3844 = vmatprep.subr.bf16.mxu0 0
        %3845 = vmatpush1.bf16.msra.mxu0 %v3778
        %3846 = vmatprep.subr.bf16.mxu0 0
        %3847 = vmatpush2.bf16.msra.mxu0 0
        %3848 = vmatprep.subr.bf16.mxu0 0
        %3849 = vmatpush2.bf16.msra.mxu0 0
        %3850 = vmatprep.subr.bf16.mxu0 0
        %3851 = vmatpush2.bf16.msra.mxu0 0
        %3852 = vmatprep.subr.bf16.mxu0 0
        %3853 = vmatpush2.bf16.msra.mxu0 0
        %3854 = vmatprep.subr.bf16.mxu0 0
        %3855 = vmatpush2.bf16.msra.mxu0 0
        %3856 = vmatprep.subr.bf16.mxu0 0
        %3857 = vmatpush2.bf16.msra.mxu0 0
        %3858 = vmatprep.subr.bf16.mxu0 0
        %3859 = vmatpush2.bf16.msra.mxu0 0
        %3860 = vmatprep.subr.bf16.mxu0 0
        %3861 = vmatpush2.bf16.msra.mxu0 0
        %3862 = vmatprep.mubr.bf16.mxu0 0
        %3863 = vmatmul.mubr.bf16.gmra.mxu0 %v3783
        %v3864 = vpop.f32.mrf.mxu0
        %v3865 = vadd.f32 0.0, %v3864
        %v3866 = vpop.f32.mrf.mxu0
        %v3867 = vpop.f32.mrf.mxu0
        %v3868 = vadd.f32 0.0, %v3867
        %v3869 = vpop.f32.mrf.mxu0
        %3870 = vmatprep.mubr.bf16.mxu0 0
        %3871 = vmatmul.mubr.bf16.gmra.mxu0 %v3786
        %v3872 = vpop.f32.mrf.mxu0
        %v3873 = vadd.f32 0.0, %v3872
        %v3874 = vpop.f32.mrf.mxu0
        %v3875 = vpop.f32.mrf.mxu0
        %v3876 = vadd.f32 0.0, %v3875
        %v3877 = vpop.f32.mrf.mxu0
        %3878 = vmatprep.mubr.bf16.mxu0 0
        %3879 = vmatmul.mubr.bf16.gmra.mxu0 %v3789
        %v3880 = vpop.f32.mrf.mxu0
        %v3881 = vadd.f32 0.0, %v3880
        %v3882 = vpop.f32.mrf.mxu0
        %v3883 = vpop.f32.mrf.mxu0
        %v3884 = vadd.f32 0.0, %v3883
        %v3885 = vpop.f32.mrf.mxu0
        %3886 = vmatprep.mubr.bf16.mxu0 0
        %3887 = vmatmul.mubr.bf16.gmra.mxu0 %v3792
        %v3888 = vpop.f32.mrf.mxu0
        %v3889 = vadd.f32 0.0, %v3888
        %v3890 = vpop.f32.mrf.mxu0
        %v3891 = vpop.f32.mrf.mxu0
        %v3892 = vadd.f32 0.0, %v3891
        %v3893 = vpop.f32.mrf.mxu0
        %3894 = vmatprep.mubr.bf16.mxu0 0
        %3895 = vmatmul.mubr.bf16.gmra.mxu0 %v3795
        %v3896 = vpop.f32.mrf.mxu0
        %v3897 = vadd.f32 0.0, %v3896
        %v3898 = vpop.f32.mrf.mxu0
        %v3899 = vpop.f32.mrf.mxu0
        %v3900 = vadd.f32 0.0, %v3899
        %v3901 = vpop.f32.mrf.mxu0
        %3902 = vmatprep.mubr.bf16.mxu0 0
        %3903 = vmatmul.mubr.bf16.gmra.mxu0 %v3798
        %v3904 = vpop.f32.mrf.mxu0
        %v3905 = vadd.f32 0.0, %v3904
        %v3906 = vpop.f32.mrf.mxu0
        %v3907 = vpop.f32.mrf.mxu0
        %v3908 = vadd.f32 0.0, %v3907
        %v3909 = vpop.f32.mrf.mxu0
        %3910 = vmatprep.mubr.bf16.mxu0 0
        %3911 = vmatmul.mubr.bf16.gmra.mxu0 %v3801
        %v3912 = vpop.f32.mrf.mxu0
        %v3913 = vadd.f32 0.0, %v3912
        %v3914 = vpop.f32.mrf.mxu0
        %v3915 = vpop.f32.mrf.mxu0
        %v3916 = vadd.f32 0.0, %v3915
        %v3917 = vpop.f32.mrf.mxu0
        %3918 = vmatprep.mubr.bf16.mxu0 0
        %3919 = vmatmul.mubr.bf16.gmra.mxu0 %v3804
        %v3920 = vpop.f32.mrf.mxu0
        %v3921 = vadd.f32 0.0, %v3920
        %v3922 = vpop.f32.mrf.mxu0
        %v3923 = vpop.f32.mrf.mxu0
        %v3924 = vadd.f32 0.0, %v3923
        %v3925 = vpop.f32.mrf.mxu0
        %3926 = vmatprep.mubr.bf16.mxu0 0
        %3927 = vmatmul.mubr.bf16.gmra.mxu0 %v3807
        %v3928 = vpop.f32.mrf.mxu0
        %v3929 = vadd.f32 0.0, %v3928
        %v3930 = vpop.f32.mrf.mxu0
        %v3931 = vpop.f32.mrf.mxu0
        %v3932 = vadd.f32 0.0, %v3931
        %v3933 = vpop.f32.mrf.mxu0
        %3934 = vmatprep.mubr.bf16.mxu0 0
        %3935 = vmatmul.mubr.bf16.gmra.mxu0 %v3810
        %v3936 = vpop.f32.mrf.mxu0
        %v3937 = vadd.f32 0.0, %v3936
        %v3938 = vpop.f32.mrf.mxu0
        %v3939 = vpop.f32.mrf.mxu0
        %v3940 = vadd.f32 0.0, %v3939
        %v3941 = vpop.f32.mrf.mxu0
        %3942 = vmatprep.mubr.bf16.mxu0 0
        %3943 = vmatmul.mubr.bf16.gmra.mxu0 %v3813
        %v3944 = vpop.f32.mrf.mxu0
        %v3945 = vadd.f32 0.0, %v3944
        %v3946 = vpop.f32.mrf.mxu0
        %v3947 = vpop.f32.mrf.mxu0
        %v3948 = vadd.f32 0.0, %v3947
        %v3949 = vpop.f32.mrf.mxu0
        %3950 = vmatprep.mubr.bf16.mxu0 0
        %3951 = vmatmul.mubr.bf16.gmra.mxu0 %v3816
        %v3952 = vpop.f32.mrf.mxu0
        %v3953 = vadd.f32 0.0, %v3952
        %v3954 = vpop.f32.mrf.mxu0
        %v3955 = vpop.f32.mrf.mxu0
        %v3956 = vadd.f32 0.0, %v3955
        %v3957 = vpop.f32.mrf.mxu0
        %3958 = vmatprep.mubr.bf16.mxu0 0
        %3959 = vmatmul.mubr.bf16.gmra.mxu0 %v3819
        %v3960 = vpop.f32.mrf.mxu0
        %v3961 = vadd.f32 0.0, %v3960
        %v3962 = vpop.f32.mrf.mxu0
        %v3963 = vpop.f32.mrf.mxu0
        %v3964 = vadd.f32 0.0, %v3963
        %v3965 = vpop.f32.mrf.mxu0
        %3966 = vmatprep.mubr.bf16.mxu0 0
        %3967 = vmatmul.mubr.bf16.gmra.mxu0 %v3822
        %v3968 = vpop.f32.mrf.mxu0
        %v3969 = vadd.f32 0.0, %v3968
        %v3970 = vpop.f32.mrf.mxu0
        %v3971 = vpop.f32.mrf.mxu0
        %v3972 = vadd.f32 0.0, %v3971
        %v3973 = vpop.f32.mrf.mxu0
        %3974 = vmatprep.mubr.bf16.mxu0 0
        %3975 = vmatmul.mubr.bf16.gmra.mxu0 %v3825
        %v3976 = vpop.f32.mrf.mxu0
        %v3977 = vadd.f32 0.0, %v3976
        %v3978 = vpop.f32.mrf.mxu0
        %v3979 = vpop.f32.mrf.mxu0
        %v3980 = vadd.f32 0.0, %v3979
        %v3981 = vpop.f32.mrf.mxu0
        %3982 = vmatprep.mubr.bf16.mxu0 0
        %3983 = vmatmul.mubr.bf16.gmra.mxu0 %v3828
        %v3984 = vpop.f32.mrf.mxu0
        %v3985 = vadd.f32 0.0, %v3984
        %v3986 = vpop.f32.mrf.mxu0
        %v3987 = vpop.f32.mrf.mxu0
        %v3988 = vadd.f32 0.0, %v3987
        %v3989 = vpop.f32.mrf.mxu0
        %3990 = vdwg.mxu0
        %v3995 = vunpack.c.l.b16 %v1905
        %v3996 = vunpack.c.l.b16 %v1906
        %v3997 = vunpack.c.l.b16 %v1907
        %v3998 = vunpack.c.l.b16 %v1908
        %v3999 = vpack.c.b16 %v3996, %v3995
        %v4000 = vpack.c.b16 %v3998, %v3997
        %v4004 = vsel %vm2001, %v2790, 0
        %v4007 = vsel %vm2001, %v2791, 0
        %v4010 = vsel %vm2001, %v2792, 0
        %v4013 = vsel %vm2001, %v2793, 0
        %v4016 = vsel %vm2001, %v2794, 0
        %v4019 = vsel %vm2001, %v2795, 0
        %v4022 = vsel %vm2001, %v2796, 0
        %v4025 = vsel %vm2001, %v2797, 0
        %v4028 = vsel %vm2001, %v2798, 0
        %v4031 = vsel %vm2001, %v2799, 0
        %v4034 = vsel %vm2001, %v2800, 0
        %v4037 = vsel %vm2001, %v2801, 0
        %v4040 = vsel %vm2001, %v2802, 0
        %v4043 = vsel %vm2001, %v2803, 0
        %v4046 = vsel %vm2001, %v2804, 0
        %v4049 = vsel %vm2001, %v2805, 0
        %4051 = vmatprep.subr.bf16.mxu0 0
        %4052 = vmatpush1.bf16.msra.mxu0 0
        %4053 = vmatprep.subr.bf16.mxu0 0
        %4054 = vmatpush1.bf16.msra.mxu0 0
        %4055 = vmatprep.subr.bf16.mxu0 0
        %4056 = vmatpush1.bf16.msra.mxu0 0
        %4057 = vmatprep.subr.bf16.mxu0 0
        %4058 = vmatpush1.bf16.msra.mxu0 0
        %4059 = vmatprep.subr.bf16.mxu0 0
        %4060 = vmatpush1.bf16.msra.mxu0 0
        %4061 = vmatprep.subr.bf16.mxu0 0
        %4062 = vmatpush1.bf16.msra.mxu0 0
        %4063 = vmatprep.subr.bf16.mxu0 0
        %4064 = vmatpush1.bf16.msra.mxu0 %v4000
        %4065 = vmatprep.subr.bf16.mxu0 0
        %4066 = vmatpush1.bf16.msra.mxu0 %v3999
        %4067 = vmatprep.subr.bf16.mxu0 0
        %4068 = vmatpush2.bf16.msra.mxu0 0
        %4069 = vmatprep.subr.bf16.mxu0 0
        %4070 = vmatpush2.bf16.msra.mxu0 0
        %4071 = vmatprep.subr.bf16.mxu0 0
        %4072 = vmatpush2.bf16.msra.mxu0 0
        %4073 = vmatprep.subr.bf16.mxu0 0
        %4074 = vmatpush2.bf16.msra.mxu0 0
        %4075 = vmatprep.subr.bf16.mxu0 0
        %4076 = vmatpush2.bf16.msra.mxu0 0
        %4077 = vmatprep.subr.bf16.mxu0 0
        %4078 = vmatpush2.bf16.msra.mxu0 0
        %4079 = vmatprep.subr.bf16.mxu0 0
        %4080 = vmatpush2.bf16.msra.mxu0 0
        %4081 = vmatprep.subr.bf16.mxu0 0
        %4082 = vmatpush2.bf16.msra.mxu0 0
        %4083 = vmatprep.mubr.bf16.mxu0 0
        %4084 = vmatmul.mubr.bf16.gmra.mxu0 %v4004
        %v4085 = vpop.f32.mrf.mxu0
        %v4086 = vadd.f32 %v3865, %v4085
        %v4087 = vpop.f32.mrf.mxu0
        %v4088 = vpop.f32.mrf.mxu0
        %v4089 = vadd.f32 %v3868, %v4088
        %v4090 = vpop.f32.mrf.mxu0
        %4091 = vmatprep.mubr.bf16.mxu0 0
        %4092 = vmatmul.mubr.bf16.gmra.mxu0 %v4007
        %v4093 = vpop.f32.mrf.mxu0
        %v4094 = vadd.f32 %v3873, %v4093
        %v4095 = vpop.f32.mrf.mxu0
        %v4096 = vpop.f32.mrf.mxu0
        %v4097 = vadd.f32 %v3876, %v4096
        %v4098 = vpop.f32.mrf.mxu0
        %4099 = vmatprep.mubr.bf16.mxu0 0
        %4100 = vmatmul.mubr.bf16.gmra.mxu0 %v4010
        %v4101 = vpop.f32.mrf.mxu0
        %v4102 = vadd.f32 %v3881, %v4101
        %v4103 = vpop.f32.mrf.mxu0
        %v4104 = vpop.f32.mrf.mxu0
        %v4105 = vadd.f32 %v3884, %v4104
        %v4106 = vpop.f32.mrf.mxu0
        %4107 = vmatprep.mubr.bf16.mxu0 0
        %4108 = vmatmul.mubr.bf16.gmra.mxu0 %v4013
        %v4109 = vpop.f32.mrf.mxu0
        %v4110 = vadd.f32 %v3889, %v4109
        %v4111 = vpop.f32.mrf.mxu0
        %v4112 = vpop.f32.mrf.mxu0
        %v4113 = vadd.f32 %v3892, %v4112
        %v4114 = vpop.f32.mrf.mxu0
        %4115 = vmatprep.mubr.bf16.mxu0 0
        %4116 = vmatmul.mubr.bf16.gmra.mxu0 %v4016
        %v4117 = vpop.f32.mrf.mxu0
        %v4118 = vadd.f32 %v3897, %v4117
        %v4119 = vpop.f32.mrf.mxu0
        %v4120 = vpop.f32.mrf.mxu0
        %v4121 = vadd.f32 %v3900, %v4120
        %v4122 = vpop.f32.mrf.mxu0
        %4123 = vmatprep.mubr.bf16.mxu0 0
        %4124 = vmatmul.mubr.bf16.gmra.mxu0 %v4019
        %v4125 = vpop.f32.mrf.mxu0
        %v4126 = vadd.f32 %v3905, %v4125
        %v4127 = vpop.f32.mrf.mxu0
        %v4128 = vpop.f32.mrf.mxu0
        %v4129 = vadd.f32 %v3908, %v4128
        %v4130 = vpop.f32.mrf.mxu0
        %4131 = vmatprep.mubr.bf16.mxu0 0
        %4132 = vmatmul.mubr.bf16.gmra.mxu0 %v4022
        %v4133 = vpop.f32.mrf.mxu0
        %v4134 = vadd.f32 %v3913, %v4133
        %v4135 = vpop.f32.mrf.mxu0
        %v4136 = vpop.f32.mrf.mxu0
        %v4137 = vadd.f32 %v3916, %v4136
        %v4138 = vpop.f32.mrf.mxu0
        %4139 = vmatprep.mubr.bf16.mxu0 0
        %4140 = vmatmul.mubr.bf16.gmra.mxu0 %v4025
        %v4141 = vpop.f32.mrf.mxu0
        %v4142 = vadd.f32 %v3921, %v4141
        %v4143 = vpop.f32.mrf.mxu0
        %v4144 = vpop.f32.mrf.mxu0
        %v4145 = vadd.f32 %v3924, %v4144
        %v4146 = vpop.f32.mrf.mxu0
        %4147 = vmatprep.mubr.bf16.mxu0 0
        %4148 = vmatmul.mubr.bf16.gmra.mxu0 %v4028
        %v4149 = vpop.f32.mrf.mxu0
        %v4150 = vadd.f32 %v3929, %v4149
        %v4151 = vpop.f32.mrf.mxu0
        %v4152 = vpop.f32.mrf.mxu0
        %v4153 = vadd.f32 %v3932, %v4152
        %v4154 = vpop.f32.mrf.mxu0
        %4155 = vmatprep.mubr.bf16.mxu0 0
        %4156 = vmatmul.mubr.bf16.gmra.mxu0 %v4031
        %v4157 = vpop.f32.mrf.mxu0
        %v4158 = vadd.f32 %v3937, %v4157
        %v4159 = vpop.f32.mrf.mxu0
        %v4160 = vpop.f32.mrf.mxu0
        %v4161 = vadd.f32 %v3940, %v4160
        %v4162 = vpop.f32.mrf.mxu0
        %4163 = vmatprep.mubr.bf16.mxu0 0
        %4164 = vmatmul.mubr.bf16.gmra.mxu0 %v4034
        %v4165 = vpop.f32.mrf.mxu0
        %v4166 = vadd.f32 %v3945, %v4165
        %v4167 = vpop.f32.mrf.mxu0
        %v4168 = vpop.f32.mrf.mxu0
        %v4169 = vadd.f32 %v3948, %v4168
        %v4170 = vpop.f32.mrf.mxu0
        %4171 = vmatprep.mubr.bf16.mxu0 0
        %4172 = vmatmul.mubr.bf16.gmra.mxu0 %v4037
        %v4173 = vpop.f32.mrf.mxu0
        %v4174 = vadd.f32 %v3953, %v4173
        %v4175 = vpop.f32.mrf.mxu0
        %v4176 = vpop.f32.mrf.mxu0
        %v4177 = vadd.f32 %v3956, %v4176
        %v4178 = vpop.f32.mrf.mxu0
        %4179 = vmatprep.mubr.bf16.mxu0 0
        %4180 = vmatmul.mubr.bf16.gmra.mxu0 %v4040
        %v4181 = vpop.f32.mrf.mxu0
        %v4182 = vadd.f32 %v3961, %v4181
        %v4183 = vpop.f32.mrf.mxu0
        %v4184 = vpop.f32.mrf.mxu0
        %v4185 = vadd.f32 %v3964, %v4184
        %v4186 = vpop.f32.mrf.mxu0
        %4187 = vmatprep.mubr.bf16.mxu0 0
        %4188 = vmatmul.mubr.bf16.gmra.mxu0 %v4043
        %v4189 = vpop.f32.mrf.mxu0
        %v4190 = vadd.f32 %v3969, %v4189
        %v4191 = vpop.f32.mrf.mxu0
        %v4192 = vpop.f32.mrf.mxu0
        %v4193 = vadd.f32 %v3972, %v4192
        %v4194 = vpop.f32.mrf.mxu0
        %4195 = vmatprep.mubr.bf16.mxu0 0
        %4196 = vmatmul.mubr.bf16.gmra.mxu0 %v4046
        %v4197 = vpop.f32.mrf.mxu0
        %v4198 = vadd.f32 %v3977, %v4197
        %v4199 = vpop.f32.mrf.mxu0
        %v4200 = vpop.f32.mrf.mxu0
        %v4201 = vadd.f32 %v3980, %v4200
        %v4202 = vpop.f32.mrf.mxu0
        %4203 = vmatprep.mubr.bf16.mxu0 0
        %4204 = vmatmul.mubr.bf16.gmra.mxu0 %v4049
        %v4205 = vpop.f32.mrf.mxu0
        %v4206 = vadd.f32 %v3985, %v4205
        %v4207 = vpop.f32.mrf.mxu0
        %v4208 = vpop.f32.mrf.mxu0
        %v4209 = vadd.f32 %v3988, %v4208
        %v4210 = vpop.f32.mrf.mxu0
        %4211 = vdwg.mxu0
        %4212 = vrot.lane.b32.xlu0 %v1953, 64
        %v4213 = vpop.permute.xlu0 %4212
        %4214 = vrot.lane.b32.xlu0 %v1954, 64
        %v4215 = vpop.permute.xlu0 %4214
        %4216 = vrot.lane.b32.xlu0 %v1955, 64
        %v4217 = vpop.permute.xlu0 %4216
        %4218 = vrot.lane.b32.xlu0 %v1956, 64
        %v4219 = vpop.permute.xlu0 %4218
        %4220 = vrot.lane.b32.xlu0 %v1957, 64
        %v4221 = vpop.permute.xlu0 %4220
        %4222 = vrot.lane.b32.xlu0 %v1958, 64
        %v4223 = vpop.permute.xlu0 %4222
        %4224 = vrot.lane.b32.xlu0 %v1959, 64
        %v4225 = vpop.permute.xlu0 %4224
        %4226 = vrot.lane.b32.xlu0 %v1960, 64
        %v4227 = vpop.permute.xlu0 %4226
        %4228 = vrot.lane.b32.xlu0 %v1969, 64
        %v4229 = vpop.permute.xlu0 %4228
        %4230 = vrot.lane.b32.xlu0 %v1970, 64
        %v4231 = vpop.permute.xlu0 %4230
        %4232 = vrot.lane.b32.xlu0 %v1971, 64
        %v4233 = vpop.permute.xlu0 %4232
        %4234 = vrot.lane.b32.xlu0 %v1972, 64
        %v4235 = vpop.permute.xlu0 %4234
        %4236 = vrot.lane.b32.xlu0 %v1973, 64
        %v4237 = vpop.permute.xlu0 %4236
        %4238 = vrot.lane.b32.xlu0 %v1974, 64
        %v4239 = vpop.permute.xlu0 %4238
        %4240 = vrot.lane.b32.xlu0 %v1975, 64
        %v4241 = vpop.permute.xlu0 %4240
        %4242 = vrot.lane.b32.xlu0 %v1976, 64
        %v4243 = vpop.permute.xlu0 %4242
        %v4245 = vsel %vm2001, %v4213, 0
        %v4248 = vsel %vm2001, %v4215, 0
        %v4251 = vsel %vm2001, %v4217, 0
        %v4254 = vsel %vm2001, %v4219, 0
        %v4257 = vsel %vm2001, %v4221, 0
        %v4260 = vsel %vm2001, %v4223, 0
        %v4263 = vsel %vm2001, %v4225, 0
        %v4266 = vsel %vm2001, %v4227, 0
        %v4269 = vsel %vm2001, %v4229, 0
        %v4272 = vsel %vm2001, %v4231, 0
        %v4275 = vsel %vm2001, %v4233, 0
        %v4278 = vsel %vm2001, %v4235, 0
        %v4281 = vsel %vm2001, %v4237, 0
        %v4284 = vsel %vm2001, %v4239, 0
        %v4287 = vsel %vm2001, %v4241, 0
        %v4290 = vsel %vm2001, %v4243, 0
        %4292 = vmatprep.subr.bf16.mxu0 0
        %4293 = vmatpush1.bf16.xpose.msra.mxu0 %v4290
        %4294 = vmatprep.subr.bf16.mxu0 0
        %4295 = vmatpush1.bf16.xpose.msra.mxu0 %v4287
        %4296 = vmatprep.subr.bf16.mxu0 0
        %4297 = vmatpush1.bf16.xpose.msra.mxu0 %v4284
        %4298 = vmatprep.subr.bf16.mxu0 0
        %4299 = vmatpush1.bf16.xpose.msra.mxu0 %v4281
        %4300 = vmatprep.subr.bf16.mxu0 0
        %4301 = vmatpush1.bf16.xpose.msra.mxu0 %v4278
        %4302 = vmatprep.subr.bf16.mxu0 0
        %4303 = vmatpush1.bf16.xpose.msra.mxu0 %v4275
        %4304 = vmatprep.subr.bf16.mxu0 0
        %4305 = vmatpush1.bf16.xpose.msra.mxu0 %v4272
        %4306 = vmatprep.subr.bf16.mxu0 0
        %4307 = vmatpush1.bf16.xpose.msra.mxu0 %v4269
        %4308 = vmatprep.subr.bf16.mxu0 0
        %4309 = vmatpush2.bf16.xpose.msra.mxu0 0
        %4310 = vmatprep.subr.bf16.mxu0 0
        %4311 = vmatpush2.bf16.xpose.msra.mxu0 0
        %4312 = vmatprep.subr.bf16.mxu0 0
        %4313 = vmatpush2.bf16.xpose.msra.mxu0 0
        %4314 = vmatprep.subr.bf16.mxu0 0
        %4315 = vmatpush2.bf16.xpose.msra.mxu0 0
        %4316 = vmatprep.subr.bf16.mxu0 0
        %4317 = vmatpush2.bf16.xpose.msra.mxu0 0
        %4318 = vmatprep.subr.bf16.mxu0 0
        %4319 = vmatpush2.bf16.xpose.msra.mxu0 0
        %4320 = vmatprep.subr.bf16.mxu0 0
        %4321 = vmatpush2.bf16.xpose.msra.mxu0 0
        %4322 = vmatprep.subr.bf16.mxu0 0
        %4323 = vmatpush2.bf16.xpose.msra.mxu0 0
        %4324 = vmatprep.mubr.bf16.mxu0 0
        %4325 = vmatmul.mubr.bf16.gmra.mxu0 %v4245
        %v4326 = vpop.f32.mrf.mxu0
        %v4327 = vadd.f32 %v1889, %v4326
        %v4328 = vpop.f32.mrf.mxu0
        %v4329 = vpop.f32.mrf.mxu0
        %v4330 = vadd.f32 %v1890, %v4329
        %v4331 = vpop.f32.mrf.mxu0
        %4332 = vmatprep.mubr.bf16.mxu0 0
        %4333 = vmatmul.mubr.bf16.gmra.mxu0 %v4248
        %v4334 = vpop.f32.mrf.mxu0
        %v4335 = vadd.f32 %v1891, %v4334
        %v4336 = vpop.f32.mrf.mxu0
        %v4337 = vpop.f32.mrf.mxu0
        %v4338 = vadd.f32 %v1892, %v4337
        %v4339 = vpop.f32.mrf.mxu0
        %4340 = vmatprep.mubr.bf16.mxu0 0
        %4341 = vmatmul.mubr.bf16.gmra.mxu0 %v4251
        %v4342 = vpop.f32.mrf.mxu0
        %v4343 = vadd.f32 %v1893, %v4342
        %v4344 = vpop.f32.mrf.mxu0
        %v4345 = vpop.f32.mrf.mxu0
        %v4346 = vadd.f32 %v1894, %v4345
        %v4347 = vpop.f32.mrf.mxu0
        %4348 = vmatprep.mubr.bf16.mxu0 0
        %4349 = vmatmul.mubr.bf16.gmra.mxu0 %v4254
        %v4350 = vpop.f32.mrf.mxu0
        %v4351 = vadd.f32 %v1895, %v4350
        %v4352 = vpop.f32.mrf.mxu0
        %v4353 = vpop.f32.mrf.mxu0
        %v4354 = vadd.f32 %v1896, %v4353
        %v4355 = vpop.f32.mrf.mxu0
        %4356 = vmatprep.mubr.bf16.mxu0 0
        %4357 = vmatmul.mubr.bf16.gmra.mxu0 %v4257
        %v4358 = vpop.f32.mrf.mxu0
        %v4359 = vadd.f32 %v1897, %v4358
        %v4360 = vpop.f32.mrf.mxu0
        %v4361 = vpop.f32.mrf.mxu0
        %v4362 = vadd.f32 %v1898, %v4361
        %v4363 = vpop.f32.mrf.mxu0
        %4364 = vmatprep.mubr.bf16.mxu0 0
        %4365 = vmatmul.mubr.bf16.gmra.mxu0 %v4260
        %v4366 = vpop.f32.mrf.mxu0
        %v4367 = vadd.f32 %v1899, %v4366
        %v4368 = vpop.f32.mrf.mxu0
        %v4369 = vpop.f32.mrf.mxu0
        %v4370 = vadd.f32 %v1900, %v4369
        %v4371 = vpop.f32.mrf.mxu0
        %4372 = vmatprep.mubr.bf16.mxu0 0
        %4373 = vmatmul.mubr.bf16.gmra.mxu0 %v4263
        %v4374 = vpop.f32.mrf.mxu0
        %v4375 = vadd.f32 %v1901, %v4374
        %v4376 = vpop.f32.mrf.mxu0
        %v4377 = vpop.f32.mrf.mxu0
        %v4378 = vadd.f32 %v1902, %v4377
        %v4379 = vpop.f32.mrf.mxu0
        %4380 = vmatprep.mubr.bf16.mxu0 0
        %4381 = vmatmul.mubr.bf16.gmra.mxu0 %v4266
        %v4382 = vpop.f32.mrf.mxu0
        %v4383 = vadd.f32 %v1903, %v4382
        %v4384 = vpop.f32.mrf.mxu0
        %v4385 = vpop.f32.mrf.mxu0
        %v4386 = vadd.f32 %v1904, %v4385
        %v4387 = vpop.f32.mrf.mxu0
        %4388 = vdwg.mxu0
        %4389 = vrot.lane.b32.xlu0 %v1961, 64
        %v4390 = vpop.permute.xlu0 %4389
        %4391 = vrot.lane.b32.xlu0 %v1962, 64
        %v4392 = vpop.permute.xlu0 %4391
        %4393 = vrot.lane.b32.xlu0 %v1963, 64
        %v4394 = vpop.permute.xlu0 %4393
        %4395 = vrot.lane.b32.xlu0 %v1964, 64
        %v4396 = vpop.permute.xlu0 %4395
        %4397 = vrot.lane.b32.xlu0 %v1965, 64
        %v4398 = vpop.permute.xlu0 %4397
        %4399 = vrot.lane.b32.xlu0 %v1966, 64
        %v4400 = vpop.permute.xlu0 %4399
        %4401 = vrot.lane.b32.xlu0 %v1967, 64
        %v4402 = vpop.permute.xlu0 %4401
        %4403 = vrot.lane.b32.xlu0 %v1968, 64
        %v4404 = vpop.permute.xlu0 %4403
        %4405 = vrot.lane.b32.xlu0 %v1977, 64
        %v4406 = vpop.permute.xlu0 %4405
        %4407 = vrot.lane.b32.xlu0 %v1978, 64
        %v4408 = vpop.permute.xlu0 %4407
        %4409 = vrot.lane.b32.xlu0 %v1979, 64
        %v4410 = vpop.permute.xlu0 %4409
        %4411 = vrot.lane.b32.xlu0 %v1980, 64
        %v4412 = vpop.permute.xlu0 %4411
        %4413 = vrot.lane.b32.xlu0 %v1981, 64
        %v4414 = vpop.permute.xlu0 %4413
        %4415 = vrot.lane.b32.xlu0 %v1982, 64
        %v4416 = vpop.permute.xlu0 %4415
        %4417 = vrot.lane.b32.xlu0 %v1983, 64
        %v4418 = vpop.permute.xlu0 %4417
        %4419 = vrot.lane.b32.xlu0 %v1984, 64
        %v4420 = vpop.permute.xlu0 %4419
        %v4422 = vsel %vm2001, %v4390, 0
        %v4425 = vsel %vm2001, %v4392, 0
        %v4428 = vsel %vm2001, %v4394, 0
        %v4431 = vsel %vm2001, %v4396, 0
        %v4434 = vsel %vm2001, %v4398, 0
        %v4437 = vsel %vm2001, %v4400, 0
        %v4440 = vsel %vm2001, %v4402, 0
        %v4443 = vsel %vm2001, %v4404, 0
        %v4446 = vsel %vm2001, %v4406, 0
        %v4449 = vsel %vm2001, %v4408, 0
        %v4452 = vsel %vm2001, %v4410, 0
        %v4455 = vsel %vm2001, %v4412, 0
        %v4458 = vsel %vm2001, %v4414, 0
        %v4461 = vsel %vm2001, %v4416, 0
        %v4464 = vsel %vm2001, %v4418, 0
        %v4467 = vsel %vm2001, %v4420, 0
        %4469 = vmatprep.subr.bf16.mxu0 0
        %4470 = vmatpush1.bf16.xpose.msra.mxu0 %v4467
        %4471 = vmatprep.subr.bf16.mxu0 0
        %4472 = vmatpush1.bf16.xpose.msra.mxu0 %v4464
        %4473 = vmatprep.subr.bf16.mxu0 0
        %4474 = vmatpush1.bf16.xpose.msra.mxu0 %v4461
        %4475 = vmatprep.subr.bf16.mxu0 0
        %4476 = vmatpush1.bf16.xpose.msra.mxu0 %v4458
        %4477 = vmatprep.subr.bf16.mxu0 0
        %4478 = vmatpush1.bf16.xpose.msra.mxu0 %v4455
        %4479 = vmatprep.subr.bf16.mxu0 0
        %4480 = vmatpush1.bf16.xpose.msra.mxu0 %v4452
        %4481 = vmatprep.subr.bf16.mxu0 0
        %4482 = vmatpush1.bf16.xpose.msra.mxu0 %v4449
        %4483 = vmatprep.subr.bf16.mxu0 0
        %4484 = vmatpush1.bf16.xpose.msra.mxu0 %v4446
        %4485 = vmatprep.subr.bf16.mxu0 0
        %4486 = vmatpush2.bf16.xpose.msra.mxu0 0
        %4487 = vmatprep.subr.bf16.mxu0 0
        %4488 = vmatpush2.bf16.xpose.msra.mxu0 0
        %4489 = vmatprep.subr.bf16.mxu0 0
        %4490 = vmatpush2.bf16.xpose.msra.mxu0 0
        %4491 = vmatprep.subr.bf16.mxu0 0
        %4492 = vmatpush2.bf16.xpose.msra.mxu0 0
        %4493 = vmatprep.subr.bf16.mxu0 0
        %4494 = vmatpush2.bf16.xpose.msra.mxu0 0
        %4495 = vmatprep.subr.bf16.mxu0 0
        %4496 = vmatpush2.bf16.xpose.msra.mxu0 0
        %4497 = vmatprep.subr.bf16.mxu0 0
        %4498 = vmatpush2.bf16.xpose.msra.mxu0 0
        %4499 = vmatprep.subr.bf16.mxu0 0
        %4500 = vmatpush2.bf16.xpose.msra.mxu0 0
        %4501 = vmatprep.mubr.bf16.mxu0 0
        %4502 = vmatmul.mubr.bf16.gmra.mxu0 %v4422
        %v4503 = vpop.f32.mrf.mxu0
        %v4504 = vadd.f32 %v1889, %v4503
        %v4505 = vpop.f32.mrf.mxu0
        %v4506 = vpop.f32.mrf.mxu0
        %v4507 = vadd.f32 %v1890, %v4506
        %v4508 = vpop.f32.mrf.mxu0
        %4509 = vmatprep.mubr.bf16.mxu0 0
        %4510 = vmatmul.mubr.bf16.gmra.mxu0 %v4425
        %v4511 = vpop.f32.mrf.mxu0
        %v4512 = vadd.f32 %v1891, %v4511
        %v4513 = vpop.f32.mrf.mxu0
        %v4514 = vpop.f32.mrf.mxu0
        %v4515 = vadd.f32 %v1892, %v4514
        %v4516 = vpop.f32.mrf.mxu0
        %4517 = vmatprep.mubr.bf16.mxu0 0
        %4518 = vmatmul.mubr.bf16.gmra.mxu0 %v4428
        %v4519 = vpop.f32.mrf.mxu0
        %v4520 = vadd.f32 %v1893, %v4519
        %v4521 = vpop.f32.mrf.mxu0
        %v4522 = vpop.f32.mrf.mxu0
        %v4523 = vadd.f32 %v1894, %v4522
        %v4524 = vpop.f32.mrf.mxu0
        %4525 = vmatprep.mubr.bf16.mxu0 0
        %4526 = vmatmul.mubr.bf16.gmra.mxu0 %v4431
        %v4527 = vpop.f32.mrf.mxu0
        %v4528 = vadd.f32 %v1895, %v4527
        %v4529 = vpop.f32.mrf.mxu0
        %v4530 = vpop.f32.mrf.mxu0
        %v4531 = vadd.f32 %v1896, %v4530
        %v4532 = vpop.f32.mrf.mxu0
        %4533 = vmatprep.mubr.bf16.mxu0 0
        %4534 = vmatmul.mubr.bf16.gmra.mxu0 %v4434
        %v4535 = vpop.f32.mrf.mxu0
        %v4536 = vadd.f32 %v1897, %v4535
        %v4537 = vpop.f32.mrf.mxu0
        %v4538 = vpop.f32.mrf.mxu0
        %v4539 = vadd.f32 %v1898, %v4538
        %v4540 = vpop.f32.mrf.mxu0
        %4541 = vmatprep.mubr.bf16.mxu0 0
        %4542 = vmatmul.mubr.bf16.gmra.mxu0 %v4437
        %v4543 = vpop.f32.mrf.mxu0
        %v4544 = vadd.f32 %v1899, %v4543
        %v4545 = vpop.f32.mrf.mxu0
        %v4546 = vpop.f32.mrf.mxu0
        %v4547 = vadd.f32 %v1900, %v4546
        %v4548 = vpop.f32.mrf.mxu0
        %4549 = vmatprep.mubr.bf16.mxu0 0
        %4550 = vmatmul.mubr.bf16.gmra.mxu0 %v4440
        %v4551 = vpop.f32.mrf.mxu0
        %v4552 = vadd.f32 %v1901, %v4551
        %v4553 = vpop.f32.mrf.mxu0
        %v4554 = vpop.f32.mrf.mxu0
        %v4555 = vadd.f32 %v1902, %v4554
        %v4556 = vpop.f32.mrf.mxu0
        %4557 = vmatprep.mubr.bf16.mxu0 0
        %4558 = vmatmul.mubr.bf16.gmra.mxu0 %v4443
        %v4559 = vpop.f32.mrf.mxu0
        %v4560 = vadd.f32 %v1903, %v4559
        %v4561 = vpop.f32.mrf.mxu0
        %v4562 = vpop.f32.mrf.mxu0
        %v4563 = vadd.f32 %v1904, %v4562
        %v4564 = vpop.f32.mrf.mxu0
        %4565 = vdwg.mxu0
        %4566 = vmax.xlane.f32.xlu0 %v4327
        %v4567 = vpop.xlane.xlu0 %4566
        %4568 = vmax.xlane.f32.xlu0 %v4330
        %v4569 = vpop.xlane.xlu0 %4568
        %4570 = vmax.xlane.f32.xlu0 %v4335
        %v4571 = vpop.xlane.xlu0 %4570
        %4572 = vmax.xlane.f32.xlu0 %v4338
        %v4573 = vpop.xlane.xlu0 %4572
        %4574 = vmax.xlane.f32.xlu0 %v4343
        %v4575 = vpop.xlane.xlu0 %4574
        %4576 = vmax.xlane.f32.xlu0 %v4346
        %v4577 = vpop.xlane.xlu0 %4576
        %4578 = vmax.xlane.f32.xlu0 %v4351
        %v4579 = vpop.xlane.xlu0 %4578
        %4580 = vmax.xlane.f32.xlu0 %v4354
        %v4581 = vpop.xlane.xlu0 %4580
        %4582 = vmax.xlane.f32.xlu0 %v4359
        %v4583 = vpop.xlane.xlu0 %4582
        %4584 = vmax.xlane.f32.xlu0 %v4362
        %v4585 = vpop.xlane.xlu0 %4584
        %4586 = vmax.xlane.f32.xlu0 %v4367
        %v4587 = vpop.xlane.xlu0 %4586
        %4588 = vmax.xlane.f32.xlu0 %v4370
        %v4589 = vpop.xlane.xlu0 %4588
        %4590 = vmax.xlane.f32.xlu0 %v4375
        %v4591 = vpop.xlane.xlu0 %4590
        %4592 = vmax.xlane.f32.xlu0 %v4378
        %v4593 = vpop.xlane.xlu0 %4592
        %4594 = vmax.xlane.f32.xlu0 %v4383
        %v4595 = vpop.xlane.xlu0 %4594
        %4596 = vmax.xlane.f32.xlu0 %v4386
        %v4597 = vpop.xlane.xlu0 %4596
        %4598 = vmax.xlane.f32.xlu0 %v4504
        %v4599 = vpop.xlane.xlu0 %4598
        %4600 = vmax.xlane.f32.xlu0 %v4507
        %v4601 = vpop.xlane.xlu0 %4600
        %4602 = vmax.xlane.f32.xlu0 %v4512
        %v4603 = vpop.xlane.xlu0 %4602
        %4604 = vmax.xlane.f32.xlu0 %v4515
        %v4605 = vpop.xlane.xlu0 %4604
        %4606 = vmax.xlane.f32.xlu0 %v4520
        %v4607 = vpop.xlane.xlu0 %4606
        %4608 = vmax.xlane.f32.xlu0 %v4523
        %v4609 = vpop.xlane.xlu0 %4608
        %4610 = vmax.xlane.f32.xlu0 %v4528
        %v4611 = vpop.xlane.xlu0 %4610
        %4612 = vmax.xlane.f32.xlu0 %v4531
        %v4613 = vpop.xlane.xlu0 %4612
        %4614 = vmax.xlane.f32.xlu0 %v4536
        %v4615 = vpop.xlane.xlu0 %4614
        %4616 = vmax.xlane.f32.xlu0 %v4539
        %v4617 = vpop.xlane.xlu0 %4616
        %4618 = vmax.xlane.f32.xlu0 %v4544
        %v4619 = vpop.xlane.xlu0 %4618
        %4620 = vmax.xlane.f32.xlu0 %v4547
        %v4621 = vpop.xlane.xlu0 %4620
        %4622 = vmax.xlane.f32.xlu0 %v4552
        %v4623 = vpop.xlane.xlu0 %4622
        %4624 = vmax.xlane.f32.xlu0 %v4555
        %v4625 = vpop.xlane.xlu0 %4624
        %4626 = vmax.xlane.f32.xlu0 %v4560
        %v4627 = vpop.xlane.xlu0 %4626
        %4628 = vmax.xlane.f32.xlu0 %v4563
        %v4629 = vpop.xlane.xlu0 %4628
        %v4630 = vsub.f32 %v4327, %v4567
        %v4631 = vsub.f32 %v4330, %v4569
        %v4632 = vsub.f32 %v4335, %v4571
        %v4633 = vsub.f32 %v4338, %v4573
        %v4634 = vsub.f32 %v4343, %v4575
        %v4635 = vsub.f32 %v4346, %v4577
        %v4636 = vsub.f32 %v4351, %v4579
        %v4637 = vsub.f32 %v4354, %v4581
        %v4638 = vsub.f32 %v4359, %v4583
        %v4639 = vsub.f32 %v4362, %v4585
        %v4640 = vsub.f32 %v4367, %v4587
        %v4641 = vsub.f32 %v4370, %v4589
        %v4642 = vsub.f32 %v4375, %v4591
        %v4643 = vsub.f32 %v4378, %v4593
        %v4644 = vsub.f32 %v4383, %v4595
        %v4645 = vsub.f32 %v4386, %v4597
        %v4646 = vsub.f32 %v4504, %v4599
        %v4647 = vsub.f32 %v4507, %v4601
        %v4648 = vsub.f32 %v4512, %v4603
        %v4649 = vsub.f32 %v4515, %v4605
        %v4650 = vsub.f32 %v4520, %v4607
        %v4651 = vsub.f32 %v4523, %v4609
        %v4652 = vsub.f32 %v4528, %v4611
        %v4653 = vsub.f32 %v4531, %v4613
        %v4654 = vsub.f32 %v4536, %v4615
        %v4655 = vsub.f32 %v4539, %v4617
        %v4656 = vsub.f32 %v4544, %v4619
        %v4657 = vsub.f32 %v4547, %v4621
        %v4658 = vsub.f32 %v4552, %v4623
        %v4659 = vsub.f32 %v4555, %v4625
        %v4660 = vsub.f32 %v4560, %v4627
        %v4661 = vsub.f32 %v4563, %v4629
        %v4662 = vmul.f32 %v4630, 1.442695
        %v4663 = vpow.pop %v4662
        %v4664 = vmul.f32 %v4631, 1.442695
        %v4665 = vpow.pop %v4664
        %v4666 = vmul.f32 %v4632, 1.442695
        %v4667 = vpow.pop %v4666
        %v4668 = vmul.f32 %v4633, 1.442695
        %v4669 = vpow.pop %v4668
        %v4670 = vmul.f32 %v4634, 1.442695
        %v4671 = vpow.pop %v4670
        %v4672 = vmul.f32 %v4635, 1.442695
        %v4673 = vpow.pop %v4672
        %v4674 = vmul.f32 %v4636, 1.442695
        %v4675 = vpow.pop %v4674
        %v4676 = vmul.f32 %v4637, 1.442695
        %v4677 = vpow.pop %v4676
        %v4678 = vmul.f32 %v4638, 1.442695
        %v4679 = vpow.pop %v4678
        %v4680 = vmul.f32 %v4639, 1.442695
        %v4681 = vpow.pop %v4680
        %v4682 = vmul.f32 %v4640, 1.442695
        %v4683 = vpow.pop %v4682
        %v4684 = vmul.f32 %v4641, 1.442695
        %v4685 = vpow.pop %v4684
        %v4686 = vmul.f32 %v4642, 1.442695
        %v4687 = vpow.pop %v4686
        %v4688 = vmul.f32 %v4643, 1.442695
        %v4689 = vpow.pop %v4688
        %v4690 = vmul.f32 %v4644, 1.442695
        %v4691 = vpow.pop %v4690
        %v4692 = vmul.f32 %v4645, 1.442695
        %v4693 = vpow.pop %v4692
        %v4694 = vmul.f32 %v4646, 1.442695
        %v4695 = vpow.pop %v4694
        %v4696 = vmul.f32 %v4647, 1.442695
        %v4697 = vpow.pop %v4696
        %v4698 = vmul.f32 %v4648, 1.442695
        %v4699 = vpow.pop %v4698
        %v4700 = vmul.f32 %v4649, 1.442695
        %v4701 = vpow.pop %v4700
        %v4702 = vmul.f32 %v4650, 1.442695
        %v4703 = vpow.pop %v4702
        %v4704 = vmul.f32 %v4651, 1.442695
        %v4705 = vpow.pop %v4704
        %v4706 = vmul.f32 %v4652, 1.442695
        %v4707 = vpow.pop %v4706
        %v4708 = vmul.f32 %v4653, 1.442695
        %v4709 = vpow.pop %v4708
        %v4710 = vmul.f32 %v4654, 1.442695
        %v4711 = vpow.pop %v4710
        %v4712 = vmul.f32 %v4655, 1.442695
        %v4713 = vpow.pop %v4712
        %v4714 = vmul.f32 %v4656, 1.442695
        %v4715 = vpow.pop %v4714
        %v4716 = vmul.f32 %v4657, 1.442695
        %v4717 = vpow.pop %v4716
        %v4718 = vmul.f32 %v4658, 1.442695
        %v4719 = vpow.pop %v4718
        %v4720 = vmul.f32 %v4659, 1.442695
        %v4721 = vpow.pop %v4720
        %v4722 = vmul.f32 %v4660, 1.442695
        %v4723 = vpow.pop %v4722
        %v4724 = vmul.f32 %v4661, 1.442695
        %v4725 = vpow.pop %v4724
        %4726 = vadd.xlane.f32.xlu0 %v4663
        %v4727 = vpop.xlane.xlu0 %4726
        %4728 = vadd.xlane.f32.xlu0 %v4665
        %v4729 = vpop.xlane.xlu0 %4728
        %4730 = vadd.xlane.f32.xlu0 %v4667
        %v4731 = vpop.xlane.xlu0 %4730
        %4732 = vadd.xlane.f32.xlu0 %v4669
        %v4733 = vpop.xlane.xlu0 %4732
        %4734 = vadd.xlane.f32.xlu0 %v4671
        %v4735 = vpop.xlane.xlu0 %4734
        %4736 = vadd.xlane.f32.xlu0 %v4673
        %v4737 = vpop.xlane.xlu0 %4736
        %4738 = vadd.xlane.f32.xlu0 %v4675
        %v4739 = vpop.xlane.xlu0 %4738
        %4740 = vadd.xlane.f32.xlu0 %v4677
        %v4741 = vpop.xlane.xlu0 %4740
        %4742 = vadd.xlane.f32.xlu0 %v4679
        %v4743 = vpop.xlane.xlu0 %4742
        %4744 = vadd.xlane.f32.xlu0 %v4681
        %v4745 = vpop.xlane.xlu0 %4744
        %4746 = vadd.xlane.f32.xlu0 %v4683
        %v4747 = vpop.xlane.xlu0 %4746
        %4748 = vadd.xlane.f32.xlu0 %v4685
        %v4749 = vpop.xlane.xlu0 %4748
        %4750 = vadd.xlane.f32.xlu0 %v4687
        %v4751 = vpop.xlane.xlu0 %4750
        %4752 = vadd.xlane.f32.xlu0 %v4689
        %v4753 = vpop.xlane.xlu0 %4752
        %4754 = vadd.xlane.f32.xlu0 %v4691
        %v4755 = vpop.xlane.xlu0 %4754
        %4756 = vadd.xlane.f32.xlu0 %v4693
        %v4757 = vpop.xlane.xlu0 %4756
        %4758 = vadd.xlane.f32.xlu0 %v4695
        %v4759 = vpop.xlane.xlu0 %4758
        %4760 = vadd.xlane.f32.xlu0 %v4697
        %v4761 = vpop.xlane.xlu0 %4760
        %4762 = vadd.xlane.f32.xlu0 %v4699
        %v4763 = vpop.xlane.xlu0 %4762
        %4764 = vadd.xlane.f32.xlu0 %v4701
        %v4765 = vpop.xlane.xlu0 %4764
        %4766 = vadd.xlane.f32.xlu0 %v4703
        %v4767 = vpop.xlane.xlu0 %4766
        %4768 = vadd.xlane.f32.xlu0 %v4705
        %v4769 = vpop.xlane.xlu0 %4768
        %4770 = vadd.xlane.f32.xlu0 %v4707
        %v4771 = vpop.xlane.xlu0 %4770
        %4772 = vadd.xlane.f32.xlu0 %v4709
        %v4773 = vpop.xlane.xlu0 %4772
        %4774 = vadd.xlane.f32.xlu0 %v4711
        %v4775 = vpop.xlane.xlu0 %4774
        %4776 = vadd.xlane.f32.xlu0 %v4713
        %v4777 = vpop.xlane.xlu0 %4776
        %4778 = vadd.xlane.f32.xlu0 %v4715
        %v4779 = vpop.xlane.xlu0 %4778
        %4780 = vadd.xlane.f32.xlu0 %v4717
        %v4781 = vpop.xlane.xlu0 %4780
        %4782 = vadd.xlane.f32.xlu0 %v4719
        %v4783 = vpop.xlane.xlu0 %4782
        %4784 = vadd.xlane.f32.xlu0 %v4721
        %v4785 = vpop.xlane.xlu0 %4784
        %4786 = vadd.xlane.f32.xlu0 %v4723
        %v4787 = vpop.xlane.xlu0 %4786
        %4788 = vadd.xlane.f32.xlu0 %v4725
        %v4789 = vpop.xlane.xlu0 %4788
        %v4790 = vrcp.pop %v4727
        %v4791 = vrcp.pop %v4729
        %v4792 = vrcp.pop %v4731
        %v4793 = vrcp.pop %v4733
        %v4794 = vrcp.pop %v4735
        %v4795 = vrcp.pop %v4737
        %v4796 = vrcp.pop %v4739
        %v4797 = vrcp.pop %v4741
        %v4798 = vrcp.pop %v4743
        %v4799 = vrcp.pop %v4745
        %v4800 = vrcp.pop %v4747
        %v4801 = vrcp.pop %v4749
        %v4802 = vrcp.pop %v4751
        %v4803 = vrcp.pop %v4753
        %v4804 = vrcp.pop %v4755
        %v4805 = vrcp.pop %v4757
        %v4806 = vrcp.pop %v4759
        %v4807 = vrcp.pop %v4761
        %v4808 = vrcp.pop %v4763
        %v4809 = vrcp.pop %v4765
        %v4810 = vrcp.pop %v4767
        %v4811 = vrcp.pop %v4769
        %v4812 = vrcp.pop %v4771
        %v4813 = vrcp.pop %v4773
        %v4814 = vrcp.pop %v4775
        %v4815 = vrcp.pop %v4777
        %v4816 = vrcp.pop %v4779
        %v4817 = vrcp.pop %v4781
        %v4818 = vrcp.pop %v4783
        %v4819 = vrcp.pop %v4785
        %v4820 = vrcp.pop %v4787
        %v4821 = vrcp.pop %v4789
        %v4822 = vmul.f32 %v4663, %v4790
        %v4823 = vmul.f32 %v4665, %v4791
        %v4824 = vmul.f32 %v4667, %v4792
        %v4825 = vmul.f32 %v4669, %v4793
        %v4826 = vmul.f32 %v4671, %v4794
        %v4827 = vmul.f32 %v4673, %v4795
        %v4828 = vmul.f32 %v4675, %v4796
        %v4829 = vmul.f32 %v4677, %v4797
        %v4830 = vmul.f32 %v4679, %v4798
        %v4831 = vmul.f32 %v4681, %v4799
        %v4832 = vmul.f32 %v4683, %v4800
        %v4833 = vmul.f32 %v4685, %v4801
        %v4834 = vmul.f32 %v4687, %v4802
        %v4835 = vmul.f32 %v4689, %v4803
        %v4836 = vmul.f32 %v4691, %v4804
        %v4837 = vmul.f32 %v4693, %v4805
        %v4838 = vmul.f32 %v4695, %v4806
        %v4839 = vmul.f32 %v4697, %v4807
        %v4840 = vmul.f32 %v4699, %v4808
        %v4841 = vmul.f32 %v4701, %v4809
        %v4842 = vmul.f32 %v4703, %v4810
        %v4843 = vmul.f32 %v4705, %v4811
        %v4844 = vmul.f32 %v4707, %v4812
        %v4845 = vmul.f32 %v4709, %v4813
        %v4846 = vmul.f32 %v4711, %v4814
        %v4847 = vmul.f32 %v4713, %v4815
        %v4848 = vmul.f32 %v4715, %v4816
        %v4849 = vmul.f32 %v4717, %v4817
        %v4850 = vmul.f32 %v4719, %v4818
        %v4851 = vmul.f32 %v4721, %v4819
        %v4852 = vmul.f32 %v4723, %v4820
        %v4853 = vmul.f32 %v4725, %v4821
        %v4854 = vpack.c.bf16 %v4823, %v4822
        %v4855 = vpack.c.bf16 %v4825, %v4824
        %v4856 = vpack.c.bf16 %v4827, %v4826
        %v4857 = vpack.c.bf16 %v4829, %v4828
        %v4858 = vpack.c.bf16 %v4831, %v4830
        %v4859 = vpack.c.bf16 %v4833, %v4832
        %v4860 = vpack.c.bf16 %v4835, %v4834
        %v4861 = vpack.c.bf16 %v4837, %v4836
        %v4862 = vpack.c.bf16 %v4839, %v4838
        %v4863 = vpack.c.bf16 %v4841, %v4840
        %v4864 = vpack.c.bf16 %v4843, %v4842
        %v4865 = vpack.c.bf16 %v4845, %v4844
        %v4866 = vpack.c.bf16 %v4847, %v4846
        %v4867 = vpack.c.bf16 %v4849, %v4848
        %v4868 = vpack.c.bf16 %v4851, %v4850
        %v4869 = vpack.c.bf16 %v4853, %v4852
        %4870 = vrot.lane.b32.xlu0 %v1985, 64
        %v4871 = vpop.permute.xlu0 %4870
        %4872 = vrot.lane.b32.xlu0 %v1986, 64
        %v4873 = vpop.permute.xlu0 %4872
        %4874 = vrot.lane.b32.xlu0 %v1987, 64
        %v4875 = vpop.permute.xlu0 %4874
        %4876 = vrot.lane.b32.xlu0 %v1988, 64
        %v4877 = vpop.permute.xlu0 %4876
        %4878 = vrot.lane.b32.xlu0 %v1989, 64
        %v4879 = vpop.permute.xlu0 %4878
        %4880 = vrot.lane.b32.xlu0 %v1990, 64
        %v4881 = vpop.permute.xlu0 %4880
        %4882 = vrot.lane.b32.xlu0 %v1991, 64
        %v4883 = vpop.permute.xlu0 %4882
        %4884 = vrot.lane.b32.xlu0 %v1992, 64
        %v4885 = vpop.permute.xlu0 %4884
        %4894 = vmatprep.subr.bf16.mxu0 0
        %4895 = vmatpush1.bf16.msra.mxu0 %v4885
        %4896 = vmatprep.subr.bf16.mxu0 0
        %4897 = vmatpush1.bf16.msra.mxu0 %v4883
        %4898 = vmatprep.subr.bf16.mxu0 0
        %4899 = vmatpush1.bf16.msra.mxu0 %v4881
        %4900 = vmatprep.subr.bf16.mxu0 0
        %4901 = vmatpush1.bf16.msra.mxu0 %v4879
        %4902 = vmatprep.subr.bf16.mxu0 0
        %4903 = vmatpush1.bf16.msra.mxu0 %v4877
        %4904 = vmatprep.subr.bf16.mxu0 0
        %4905 = vmatpush1.bf16.msra.mxu0 %v4875
        %4906 = vmatprep.subr.bf16.mxu0 0
        %4907 = vmatpush1.bf16.msra.mxu0 %v4873
        %4908 = vmatprep.subr.bf16.mxu0 0
        %4909 = vmatpush1.bf16.msra.mxu0 %v4871
        %4910 = vmatprep.subr.bf16.mxu0 0
        %4911 = vmatpush2.bf16.msra.mxu0 0
        %4912 = vmatprep.subr.bf16.mxu0 0
        %4913 = vmatpush2.bf16.msra.mxu0 0
        %4914 = vmatprep.subr.bf16.mxu0 0
        %4915 = vmatpush2.bf16.msra.mxu0 0
        %4916 = vmatprep.subr.bf16.mxu0 0
        %4917 = vmatpush2.bf16.msra.mxu0 0
        %4918 = vmatprep.subr.bf16.mxu0 0
        %4919 = vmatpush2.bf16.msra.mxu0 0
        %4920 = vmatprep.subr.bf16.mxu0 0
        %4921 = vmatpush2.bf16.msra.mxu0 0
        %4922 = vmatprep.subr.bf16.mxu0 0
        %4923 = vmatpush2.bf16.msra.mxu0 0
        %4924 = vmatprep.subr.bf16.mxu0 0
        %4925 = vmatpush2.bf16.msra.mxu0 0
        %4926 = vmatprep.mubr.bf16.mxu0 0
        %4927 = vmatmul.mubr.bf16.gmra.mxu0 %v4854
        %v4928 = vpop.f32.mrf.mxu0
        %v4929 = vadd.f32 0.0, %v4928
        %v4930 = vpop.f32.mrf.mxu0
        %v4931 = vpop.f32.mrf.mxu0
        %v4932 = vadd.f32 0.0, %v4931
        %v4933 = vpop.f32.mrf.mxu0
        %4934 = vmatprep.mubr.bf16.mxu0 0
        %4935 = vmatmul.mubr.bf16.gmra.mxu0 %v4855
        %v4936 = vpop.f32.mrf.mxu0
        %v4937 = vadd.f32 0.0, %v4936
        %v4938 = vpop.f32.mrf.mxu0
        %v4939 = vpop.f32.mrf.mxu0
        %v4940 = vadd.f32 0.0, %v4939
        %v4941 = vpop.f32.mrf.mxu0
        %4942 = vmatprep.mubr.bf16.mxu0 0
        %4943 = vmatmul.mubr.bf16.gmra.mxu0 %v4856
        %v4944 = vpop.f32.mrf.mxu0
        %v4945 = vadd.f32 0.0, %v4944
        %v4946 = vpop.f32.mrf.mxu0
        %v4947 = vpop.f32.mrf.mxu0
        %v4948 = vadd.f32 0.0, %v4947
        %v4949 = vpop.f32.mrf.mxu0
        %4950 = vmatprep.mubr.bf16.mxu0 0
        %4951 = vmatmul.mubr.bf16.gmra.mxu0 %v4857
        %v4952 = vpop.f32.mrf.mxu0
        %v4953 = vadd.f32 0.0, %v4952
        %v4954 = vpop.f32.mrf.mxu0
        %v4955 = vpop.f32.mrf.mxu0
        %v4956 = vadd.f32 0.0, %v4955
        %v4957 = vpop.f32.mrf.mxu0
        %4958 = vmatprep.mubr.bf16.mxu0 0
        %4959 = vmatmul.mubr.bf16.gmra.mxu0 %v4858
        %v4960 = vpop.f32.mrf.mxu0
        %v4961 = vadd.f32 0.0, %v4960
        %v4962 = vpop.f32.mrf.mxu0
        %v4963 = vpop.f32.mrf.mxu0
        %v4964 = vadd.f32 0.0, %v4963
        %v4965 = vpop.f32.mrf.mxu0
        %4966 = vmatprep.mubr.bf16.mxu0 0
        %4967 = vmatmul.mubr.bf16.gmra.mxu0 %v4859
        %v4968 = vpop.f32.mrf.mxu0
        %v4969 = vadd.f32 0.0, %v4968
        %v4970 = vpop.f32.mrf.mxu0
        %v4971 = vpop.f32.mrf.mxu0
        %v4972 = vadd.f32 0.0, %v4971
        %v4973 = vpop.f32.mrf.mxu0
        %4974 = vmatprep.mubr.bf16.mxu0 0
        %4975 = vmatmul.mubr.bf16.gmra.mxu0 %v4860
        %v4976 = vpop.f32.mrf.mxu0
        %v4977 = vadd.f32 0.0, %v4976
        %v4978 = vpop.f32.mrf.mxu0
        %v4979 = vpop.f32.mrf.mxu0
        %v4980 = vadd.f32 0.0, %v4979
        %v4981 = vpop.f32.mrf.mxu0
        %4982 = vmatprep.mubr.bf16.mxu0 0
        %4983 = vmatmul.mubr.bf16.gmra.mxu0 %v4861
        %v4984 = vpop.f32.mrf.mxu0
        %v4985 = vadd.f32 0.0, %v4984
        %v4986 = vpop.f32.mrf.mxu0
        %v4987 = vpop.f32.mrf.mxu0
        %v4988 = vadd.f32 0.0, %v4987
        %v4989 = vpop.f32.mrf.mxu0
        %4990 = vdwg.mxu0
        %4991 = vrot.lane.b32.xlu0 %v1993, 64
        %v4992 = vpop.permute.xlu0 %4991
        %4993 = vrot.lane.b32.xlu0 %v1994, 64
        %v4994 = vpop.permute.xlu0 %4993
        %4995 = vrot.lane.b32.xlu0 %v1995, 64
        %v4996 = vpop.permute.xlu0 %4995
        %4997 = vrot.lane.b32.xlu0 %v1996, 64
        %v4998 = vpop.permute.xlu0 %4997
        %4999 = vrot.lane.b32.xlu0 %v1997, 64
        %v5000 = vpop.permute.xlu0 %4999
        %5001 = vrot.lane.b32.xlu0 %v1998, 64
        %v5002 = vpop.permute.xlu0 %5001
        %5003 = vrot.lane.b32.xlu0 %v1999, 64
        %v5004 = vpop.permute.xlu0 %5003
        %5005 = vrot.lane.b32.xlu0 %v2000, 64
        %v5006 = vpop.permute.xlu0 %5005
        %5015 = vmatprep.subr.bf16.mxu0 0
        %5016 = vmatpush1.bf16.msra.mxu0 %v5006
        %5017 = vmatprep.subr.bf16.mxu0 0
        %5018 = vmatpush1.bf16.msra.mxu0 %v5004
        %5019 = vmatprep.subr.bf16.mxu0 0
        %5020 = vmatpush1.bf16.msra.mxu0 %v5002
        %5021 = vmatprep.subr.bf16.mxu0 0
        %5022 = vmatpush1.bf16.msra.mxu0 %v5000
        %5023 = vmatprep.subr.bf16.mxu0 0
        %5024 = vmatpush1.bf16.msra.mxu0 %v4998
        %5025 = vmatprep.subr.bf16.mxu0 0
        %5026 = vmatpush1.bf16.msra.mxu0 %v4996
        %5027 = vmatprep.subr.bf16.mxu0 0
        %5028 = vmatpush1.bf16.msra.mxu0 %v4994
        %5029 = vmatprep.subr.bf16.mxu0 0
        %5030 = vmatpush1.bf16.msra.mxu0 %v4992
        %5031 = vmatprep.subr.bf16.mxu0 0
        %5032 = vmatpush2.bf16.msra.mxu0 0
        %5033 = vmatprep.subr.bf16.mxu0 0
        %5034 = vmatpush2.bf16.msra.mxu0 0
        %5035 = vmatprep.subr.bf16.mxu0 0
        %5036 = vmatpush2.bf16.msra.mxu0 0
        %5037 = vmatprep.subr.bf16.mxu0 0
        %5038 = vmatpush2.bf16.msra.mxu0 0
        %5039 = vmatprep.subr.bf16.mxu0 0
        %5040 = vmatpush2.bf16.msra.mxu0 0
        %5041 = vmatprep.subr.bf16.mxu0 0
        %5042 = vmatpush2.bf16.msra.mxu0 0
        %5043 = vmatprep.subr.bf16.mxu0 0
        %5044 = vmatpush2.bf16.msra.mxu0 0
        %5045 = vmatprep.subr.bf16.mxu0 0
        %5046 = vmatpush2.bf16.msra.mxu0 0
        %5047 = vmatprep.mubr.bf16.mxu0 0
        %5048 = vmatmul.mubr.bf16.gmra.mxu0 %v4862
        %v5049 = vpop.f32.mrf.mxu0
        %v5050 = vadd.f32 0.0, %v5049
        %v5051 = vpop.f32.mrf.mxu0
        %v5052 = vpop.f32.mrf.mxu0
        %v5053 = vadd.f32 0.0, %v5052
        %v5054 = vpop.f32.mrf.mxu0
        %5055 = vmatprep.mubr.bf16.mxu0 0
        %5056 = vmatmul.mubr.bf16.gmra.mxu0 %v4863
        %v5057 = vpop.f32.mrf.mxu0
        %v5058 = vadd.f32 0.0, %v5057
        %v5059 = vpop.f32.mrf.mxu0
        %v5060 = vpop.f32.mrf.mxu0
        %v5061 = vadd.f32 0.0, %v5060
        %v5062 = vpop.f32.mrf.mxu0
        %5063 = vmatprep.mubr.bf16.mxu0 0
        %5064 = vmatmul.mubr.bf16.gmra.mxu0 %v4864
        %v5065 = vpop.f32.mrf.mxu0
        %v5066 = vadd.f32 0.0, %v5065
        %v5067 = vpop.f32.mrf.mxu0
        %v5068 = vpop.f32.mrf.mxu0
        %v5069 = vadd.f32 0.0, %v5068
        %v5070 = vpop.f32.mrf.mxu0
        %5071 = vmatprep.mubr.bf16.mxu0 0
        %5072 = vmatmul.mubr.bf16.gmra.mxu0 %v4865
        %v5073 = vpop.f32.mrf.mxu0
        %v5074 = vadd.f32 0.0, %v5073
        %v5075 = vpop.f32.mrf.mxu0
        %v5076 = vpop.f32.mrf.mxu0
        %v5077 = vadd.f32 0.0, %v5076
        %v5078 = vpop.f32.mrf.mxu0
        %5079 = vmatprep.mubr.bf16.mxu0 0
        %5080 = vmatmul.mubr.bf16.gmra.mxu0 %v4866
        %v5081 = vpop.f32.mrf.mxu0
        %v5082 = vadd.f32 0.0, %v5081
        %v5083 = vpop.f32.mrf.mxu0
        %v5084 = vpop.f32.mrf.mxu0
        %v5085 = vadd.f32 0.0, %v5084
        %v5086 = vpop.f32.mrf.mxu0
        %5087 = vmatprep.mubr.bf16.mxu0 0
        %5088 = vmatmul.mubr.bf16.gmra.mxu0 %v4867
        %v5089 = vpop.f32.mrf.mxu0
        %v5090 = vadd.f32 0.0, %v5089
        %v5091 = vpop.f32.mrf.mxu0
        %v5092 = vpop.f32.mrf.mxu0
        %v5093 = vadd.f32 0.0, %v5092
        %v5094 = vpop.f32.mrf.mxu0
        %5095 = vmatprep.mubr.bf16.mxu0 0
        %5096 = vmatmul.mubr.bf16.gmra.mxu0 %v4868
        %v5097 = vpop.f32.mrf.mxu0
        %v5098 = vadd.f32 0.0, %v5097
        %v5099 = vpop.f32.mrf.mxu0
        %v5100 = vpop.f32.mrf.mxu0
        %v5101 = vadd.f32 0.0, %v5100
        %v5102 = vpop.f32.mrf.mxu0
        %5103 = vmatprep.mubr.bf16.mxu0 0
        %5104 = vmatmul.mubr.bf16.gmra.mxu0 %v4869
        %v5105 = vpop.f32.mrf.mxu0
        %v5106 = vadd.f32 0.0, %v5105
        %v5107 = vpop.f32.mrf.mxu0
        %v5108 = vpop.f32.mrf.mxu0
        %v5109 = vadd.f32 0.0, %v5108
        %v5110 = vpop.f32.mrf.mxu0
        %5111 = vdwg.mxu0
        %v5112 = vpack.c.bf16 %v4932, %v4929
        %v5113 = vpack.c.bf16 %v4940, %v4937
        %v5114 = vpack.c.bf16 %v4948, %v4945
        %v5115 = vpack.c.bf16 %v4956, %v4953
        %v5116 = vpack.c.bf16 %v4964, %v4961
        %v5117 = vpack.c.bf16 %v4972, %v4969
        %v5118 = vpack.c.bf16 %v4980, %v4977
        %v5119 = vpack.c.bf16 %v4988, %v4985
        %v5120 = vpack.c.bf16 %v5053, %v5050
        %v5121 = vpack.c.bf16 %v5061, %v5058
        %v5122 = vpack.c.bf16 %v5069, %v5066
        %v5123 = vpack.c.bf16 %v5077, %v5074
        %v5124 = vpack.c.bf16 %v5085, %v5082
        %v5125 = vpack.c.bf16 %v5093, %v5090
        %v5126 = vpack.c.bf16 %v5101, %v5098
        %v5127 = vpack.c.bf16 %v5109, %v5106
        %v5132 = vunpack.c.l.b16 %v1913
        %v5133 = vunpack.c.l.b16 %v1914
        %v5134 = vunpack.c.l.b16 %v1915
        %v5135 = vunpack.c.l.b16 %v1916
        %v5136 = vpack.c.b16 %v5133, %v5132
        %v5137 = vpack.c.b16 %v5135, %v5134
        %v5141 = vsel %vm2001, %v5112, 0
        %v5144 = vsel %vm2001, %v5113, 0
        %v5147 = vsel %vm2001, %v5114, 0
        %v5150 = vsel %vm2001, %v5115, 0
        %v5153 = vsel %vm2001, %v5116, 0
        %v5156 = vsel %vm2001, %v5117, 0
        %v5159 = vsel %vm2001, %v5118, 0
        %v5162 = vsel %vm2001, %v5119, 0
        %v5165 = vsel %vm2001, %v5120, 0
        %v5168 = vsel %vm2001, %v5121, 0
        %v5171 = vsel %vm2001, %v5122, 0
        %v5174 = vsel %vm2001, %v5123, 0
        %v5177 = vsel %vm2001, %v5124, 0
        %v5180 = vsel %vm2001, %v5125, 0
        %v5183 = vsel %vm2001, %v5126, 0
        %v5186 = vsel %vm2001, %v5127, 0
        %5188 = vmatprep.subr.bf16.mxu0 0
        %5189 = vmatpush1.bf16.msra.mxu0 0
        %5190 = vmatprep.subr.bf16.mxu0 0
        %5191 = vmatpush1.bf16.msra.mxu0 0
        %5192 = vmatprep.subr.bf16.mxu0 0
        %5193 = vmatpush1.bf16.msra.mxu0 0
        %5194 = vmatprep.subr.bf16.mxu0 0
        %5195 = vmatpush1.bf16.msra.mxu0 0
        %5196 = vmatprep.subr.bf16.mxu0 0
        %5197 = vmatpush1.bf16.msra.mxu0 0
        %5198 = vmatprep.subr.bf16.mxu0 0
        %5199 = vmatpush1.bf16.msra.mxu0 0
        %5200 = vmatprep.subr.bf16.mxu0 0
        %5201 = vmatpush1.bf16.msra.mxu0 %v5137
        %5202 = vmatprep.subr.bf16.mxu0 0
        %5203 = vmatpush1.bf16.msra.mxu0 %v5136
        %5204 = vmatprep.subr.bf16.mxu0 0
        %5205 = vmatpush2.bf16.msra.mxu0 0
        %5206 = vmatprep.subr.bf16.mxu0 0
        %5207 = vmatpush2.bf16.msra.mxu0 0
        %5208 = vmatprep.subr.bf16.mxu0 0
        %5209 = vmatpush2.bf16.msra.mxu0 0
        %5210 = vmatprep.subr.bf16.mxu0 0
        %5211 = vmatpush2.bf16.msra.mxu0 0
        %5212 = vmatprep.subr.bf16.mxu0 0
        %5213 = vmatpush2.bf16.msra.mxu0 0
        %5214 = vmatprep.subr.bf16.mxu0 0
        %5215 = vmatpush2.bf16.msra.mxu0 0
        %5216 = vmatprep.subr.bf16.mxu0 0
        %5217 = vmatpush2.bf16.msra.mxu0 0
        %5218 = vmatprep.subr.bf16.mxu0 0
        %5219 = vmatpush2.bf16.msra.mxu0 0
        %5220 = vmatprep.mubr.bf16.mxu0 0
        %5221 = vmatmul.mubr.bf16.gmra.mxu0 %v5141
        %v5222 = vpop.f32.mrf.mxu0
        %v5223 = vadd.f32 0.0, %v5222
        %v5224 = vpop.f32.mrf.mxu0
        %v5225 = vpop.f32.mrf.mxu0
        %v5226 = vadd.f32 0.0, %v5225
        %v5227 = vpop.f32.mrf.mxu0
        %5228 = vmatprep.mubr.bf16.mxu0 0
        %5229 = vmatmul.mubr.bf16.gmra.mxu0 %v5144
        %v5230 = vpop.f32.mrf.mxu0
        %v5231 = vadd.f32 0.0, %v5230
        %v5232 = vpop.f32.mrf.mxu0
        %v5233 = vpop.f32.mrf.mxu0
        %v5234 = vadd.f32 0.0, %v5233
        %v5235 = vpop.f32.mrf.mxu0
        %5236 = vmatprep.mubr.bf16.mxu0 0
        %5237 = vmatmul.mubr.bf16.gmra.mxu0 %v5147
        %v5238 = vpop.f32.mrf.mxu0
        %v5239 = vadd.f32 0.0, %v5238
        %v5240 = vpop.f32.mrf.mxu0
        %v5241 = vpop.f32.mrf.mxu0
        %v5242 = vadd.f32 0.0, %v5241
        %v5243 = vpop.f32.mrf.mxu0
        %5244 = vmatprep.mubr.bf16.mxu0 0
        %5245 = vmatmul.mubr.bf16.gmra.mxu0 %v5150
        %v5246 = vpop.f32.mrf.mxu0
        %v5247 = vadd.f32 0.0, %v5246
        %v5248 = vpop.f32.mrf.mxu0
        %v5249 = vpop.f32.mrf.mxu0
        %v5250 = vadd.f32 0.0, %v5249
        %v5251 = vpop.f32.mrf.mxu0
        %5252 = vmatprep.mubr.bf16.mxu0 0
        %5253 = vmatmul.mubr.bf16.gmra.mxu0 %v5153
        %v5254 = vpop.f32.mrf.mxu0
        %v5255 = vadd.f32 0.0, %v5254
        %v5256 = vpop.f32.mrf.mxu0
        %v5257 = vpop.f32.mrf.mxu0
        %v5258 = vadd.f32 0.0, %v5257
        %v5259 = vpop.f32.mrf.mxu0
        %5260 = vmatprep.mubr.bf16.mxu0 0
        %5261 = vmatmul.mubr.bf16.gmra.mxu0 %v5156
        %v5262 = vpop.f32.mrf.mxu0
        %v5263 = vadd.f32 0.0, %v5262
        %v5264 = vpop.f32.mrf.mxu0
        %v5265 = vpop.f32.mrf.mxu0
        %v5266 = vadd.f32 0.0, %v5265
        %v5267 = vpop.f32.mrf.mxu0
        %5268 = vmatprep.mubr.bf16.mxu0 0
        %5269 = vmatmul.mubr.bf16.gmra.mxu0 %v5159
        %v5270 = vpop.f32.mrf.mxu0
        %v5271 = vadd.f32 0.0, %v5270
        %v5272 = vpop.f32.mrf.mxu0
        %v5273 = vpop.f32.mrf.mxu0
        %v5274 = vadd.f32 0.0, %v5273
        %v5275 = vpop.f32.mrf.mxu0
        %5276 = vmatprep.mubr.bf16.mxu0 0
        %5277 = vmatmul.mubr.bf16.gmra.mxu0 %v5162
        %v5278 = vpop.f32.mrf.mxu0
        %v5279 = vadd.f32 0.0, %v5278
        %v5280 = vpop.f32.mrf.mxu0
        %v5281 = vpop.f32.mrf.mxu0
        %v5282 = vadd.f32 0.0, %v5281
        %v5283 = vpop.f32.mrf.mxu0
        %5284 = vmatprep.mubr.bf16.mxu0 0
        %5285 = vmatmul.mubr.bf16.gmra.mxu0 %v5165
        %v5286 = vpop.f32.mrf.mxu0
        %v5287 = vadd.f32 0.0, %v5286
        %v5288 = vpop.f32.mrf.mxu0
        %v5289 = vpop.f32.mrf.mxu0
        %v5290 = vadd.f32 0.0, %v5289
        %v5291 = vpop.f32.mrf.mxu0
        %5292 = vmatprep.mubr.bf16.mxu0 0
        %5293 = vmatmul.mubr.bf16.gmra.mxu0 %v5168
        %v5294 = vpop.f32.mrf.mxu0
        %v5295 = vadd.f32 0.0, %v5294
        %v5296 = vpop.f32.mrf.mxu0
        %v5297 = vpop.f32.mrf.mxu0
        %v5298 = vadd.f32 0.0, %v5297
        %v5299 = vpop.f32.mrf.mxu0
        %5300 = vmatprep.mubr.bf16.mxu0 0
        %5301 = vmatmul.mubr.bf16.gmra.mxu0 %v5171
        %v5302 = vpop.f32.mrf.mxu0
        %v5303 = vadd.f32 0.0, %v5302
        %v5304 = vpop.f32.mrf.mxu0
        %v5305 = vpop.f32.mrf.mxu0
        %v5306 = vadd.f32 0.0, %v5305
        %v5307 = vpop.f32.mrf.mxu0
        %5308 = vmatprep.mubr.bf16.mxu0 0
        %5309 = vmatmul.mubr.bf16.gmra.mxu0 %v5174
        %v5310 = vpop.f32.mrf.mxu0
        %v5311 = vadd.f32 0.0, %v5310
        %v5312 = vpop.f32.mrf.mxu0
        %v5313 = vpop.f32.mrf.mxu0
        %v5314 = vadd.f32 0.0, %v5313
        %v5315 = vpop.f32.mrf.mxu0
        %5316 = vmatprep.mubr.bf16.mxu0 0
        %5317 = vmatmul.mubr.bf16.gmra.mxu0 %v5177
        %v5318 = vpop.f32.mrf.mxu0
        %v5319 = vadd.f32 0.0, %v5318
        %v5320 = vpop.f32.mrf.mxu0
        %v5321 = vpop.f32.mrf.mxu0
        %v5322 = vadd.f32 0.0, %v5321
        %v5323 = vpop.f32.mrf.mxu0
        %5324 = vmatprep.mubr.bf16.mxu0 0
        %5325 = vmatmul.mubr.bf16.gmra.mxu0 %v5180
        %v5326 = vpop.f32.mrf.mxu0
        %v5327 = vadd.f32 0.0, %v5326
        %v5328 = vpop.f32.mrf.mxu0
        %v5329 = vpop.f32.mrf.mxu0
        %v5330 = vadd.f32 0.0, %v5329
        %v5331 = vpop.f32.mrf.mxu0
        %5332 = vmatprep.mubr.bf16.mxu0 0
        %5333 = vmatmul.mubr.bf16.gmra.mxu0 %v5183
        %v5334 = vpop.f32.mrf.mxu0
        %v5335 = vadd.f32 0.0, %v5334
        %v5336 = vpop.f32.mrf.mxu0
        %v5337 = vpop.f32.mrf.mxu0
        %v5338 = vadd.f32 0.0, %v5337
        %v5339 = vpop.f32.mrf.mxu0
        %5340 = vmatprep.mubr.bf16.mxu0 0
        %5341 = vmatmul.mubr.bf16.gmra.mxu0 %v5186
        %v5342 = vpop.f32.mrf.mxu0
        %v5343 = vadd.f32 0.0, %v5342
        %v5344 = vpop.f32.mrf.mxu0
        %v5345 = vpop.f32.mrf.mxu0
        %v5346 = vadd.f32 0.0, %v5345
        %v5347 = vpop.f32.mrf.mxu0
        %5348 = vdwg.mxu0
        %v5349 = vadd.f32 %v4086, %v5223
        %v5350 = vadd.f32 %v4089, %v5226
        %v5351 = vadd.f32 %v4094, %v5231
        %v5352 = vadd.f32 %v4097, %v5234
        %v5353 = vadd.f32 %v4102, %v5239
        %v5354 = vadd.f32 %v4105, %v5242
        %v5355 = vadd.f32 %v4110, %v5247
        %v5356 = vadd.f32 %v4113, %v5250
        %v5357 = vadd.f32 %v4118, %v5255
        %v5358 = vadd.f32 %v4121, %v5258
        %v5359 = vadd.f32 %v4126, %v5263
        %v5360 = vadd.f32 %v4129, %v5266
        %v5361 = vadd.f32 %v4134, %v5271
        %v5362 = vadd.f32 %v4137, %v5274
        %v5363 = vadd.f32 %v4142, %v5279
        %v5364 = vadd.f32 %v4145, %v5282
        %v5365 = vadd.f32 %v4150, %v5287
        %v5366 = vadd.f32 %v4153, %v5290
        %v5367 = vadd.f32 %v4158, %v5295
        %v5368 = vadd.f32 %v4161, %v5298
        %v5369 = vadd.f32 %v4166, %v5303
        %v5370 = vadd.f32 %v4169, %v5306
        %v5371 = vadd.f32 %v4174, %v5311
        %v5372 = vadd.f32 %v4177, %v5314
        %v5373 = vadd.f32 %v4182, %v5319
        %v5374 = vadd.f32 %v4185, %v5322
        %v5375 = vadd.f32 %v4190, %v5327
        %v5376 = vadd.f32 %v4193, %v5330
        %v5377 = vadd.f32 %v4198, %v5335
        %v5378 = vadd.f32 %v4201, %v5338
        %v5379 = vadd.f32 %v4206, %v5343
        %v5380 = vadd.f32 %v4209, %v5346
        %5381 = vrot.lane.b32.xlu0 %v1953, 32
        %v5382 = vpop.permute.xlu0 %5381
        %5383 = vrot.lane.b32.xlu0 %v1954, 32
        %v5384 = vpop.permute.xlu0 %5383
        %5385 = vrot.lane.b32.xlu0 %v1955, 32
        %v5386 = vpop.permute.xlu0 %5385
        %5387 = vrot.lane.b32.xlu0 %v1956, 32
        %v5388 = vpop.permute.xlu0 %5387
        %5389 = vrot.lane.b32.xlu0 %v1957, 32
        %v5390 = vpop.permute.xlu0 %5389
        %5391 = vrot.lane.b32.xlu0 %v1958, 32
        %v5392 = vpop.permute.xlu0 %5391
        %5393 = vrot.lane.b32.xlu0 %v1959, 32
        %v5394 = vpop.permute.xlu0 %5393
        %5395 = vrot.lane.b32.xlu0 %v1960, 32
        %v5396 = vpop.permute.xlu0 %5395
        %5397 = vrot.lane.b32.xlu0 %v1969, 32
        %v5398 = vpop.permute.xlu0 %5397
        %5399 = vrot.lane.b32.xlu0 %v1970, 32
        %v5400 = vpop.permute.xlu0 %5399
        %5401 = vrot.lane.b32.xlu0 %v1971, 32
        %v5402 = vpop.permute.xlu0 %5401
        %5403 = vrot.lane.b32.xlu0 %v1972, 32
        %v5404 = vpop.permute.xlu0 %5403
        %5405 = vrot.lane.b32.xlu0 %v1973, 32
        %v5406 = vpop.permute.xlu0 %5405
        %5407 = vrot.lane.b32.xlu0 %v1974, 32
        %v5408 = vpop.permute.xlu0 %5407
        %5409 = vrot.lane.b32.xlu0 %v1975, 32
        %v5410 = vpop.permute.xlu0 %5409
        %5411 = vrot.lane.b32.xlu0 %v1976, 32
        %v5412 = vpop.permute.xlu0 %5411
        %v5414 = vsel %vm2001, %v5382, 0
        %v5417 = vsel %vm2001, %v5384, 0
        %v5420 = vsel %vm2001, %v5386, 0
        %v5423 = vsel %vm2001, %v5388, 0
        %v5426 = vsel %vm2001, %v5390, 0
        %v5429 = vsel %vm2001, %v5392, 0
        %v5432 = vsel %vm2001, %v5394, 0
        %v5435 = vsel %vm2001, %v5396, 0
        %v5438 = vsel %vm2001, %v5398, 0
        %v5441 = vsel %vm2001, %v5400, 0
        %v5444 = vsel %vm2001, %v5402, 0
        %v5447 = vsel %vm2001, %v5404, 0
        %v5450 = vsel %vm2001, %v5406, 0
        %v5453 = vsel %vm2001, %v5408, 0
        %v5456 = vsel %vm2001, %v5410, 0
        %v5459 = vsel %vm2001, %v5412, 0
        %5461 = vmatprep.subr.bf16.mxu0 0
        %5462 = vmatpush1.bf16.xpose.msra.mxu0 %v5459
        %5463 = vmatprep.subr.bf16.mxu0 0
        %5464 = vmatpush1.bf16.xpose.msra.mxu0 %v5456
        %5465 = vmatprep.subr.bf16.mxu0 0
        %5466 = vmatpush1.bf16.xpose.msra.mxu0 %v5453
        %5467 = vmatprep.subr.bf16.mxu0 0
        %5468 = vmatpush1.bf16.xpose.msra.mxu0 %v5450
        %5469 = vmatprep.subr.bf16.mxu0 0
        %5470 = vmatpush1.bf16.xpose.msra.mxu0 %v5447
        %5471 = vmatprep.subr.bf16.mxu0 0
        %5472 = vmatpush1.bf16.xpose.msra.mxu0 %v5444
        %5473 = vmatprep.subr.bf16.mxu0 0
        %5474 = vmatpush1.bf16.xpose.msra.mxu0 %v5441
        %5475 = vmatprep.subr.bf16.mxu0 0
        %5476 = vmatpush1.bf16.xpose.msra.mxu0 %v5438
        %5477 = vmatprep.subr.bf16.mxu0 0
        %5478 = vmatpush2.bf16.xpose.msra.mxu0 0
        %5479 = vmatprep.subr.bf16.mxu0 0
        %5480 = vmatpush2.bf16.xpose.msra.mxu0 0
        %5481 = vmatprep.subr.bf16.mxu0 0
        %5482 = vmatpush2.bf16.xpose.msra.mxu0 0
        %5483 = vmatprep.subr.bf16.mxu0 0
        %5484 = vmatpush2.bf16.xpose.msra.mxu0 0
        %5485 = vmatprep.subr.bf16.mxu0 0
        %5486 = vmatpush2.bf16.xpose.msra.mxu0 0
        %5487 = vmatprep.subr.bf16.mxu0 0
        %5488 = vmatpush2.bf16.xpose.msra.mxu0 0
        %5489 = vmatprep.subr.bf16.mxu0 0
        %5490 = vmatpush2.bf16.xpose.msra.mxu0 0
        %5491 = vmatprep.subr.bf16.mxu0 0
        %5492 = vmatpush2.bf16.xpose.msra.mxu0 0
        %5493 = vmatprep.mubr.bf16.mxu0 0
        %5494 = vmatmul.mubr.bf16.gmra.mxu0 %v5414
        %v5495 = vpop.f32.mrf.mxu0
        %v5496 = vadd.f32 %v1889, %v5495
        %v5497 = vpop.f32.mrf.mxu0
        %v5498 = vpop.f32.mrf.mxu0
        %v5499 = vadd.f32 %v1890, %v5498
        %v5500 = vpop.f32.mrf.mxu0
        %5501 = vmatprep.mubr.bf16.mxu0 0
        %5502 = vmatmul.mubr.bf16.gmra.mxu0 %v5417
        %v5503 = vpop.f32.mrf.mxu0
        %v5504 = vadd.f32 %v1891, %v5503
        %v5505 = vpop.f32.mrf.mxu0
        %v5506 = vpop.f32.mrf.mxu0
        %v5507 = vadd.f32 %v1892, %v5506
        %v5508 = vpop.f32.mrf.mxu0
        %5509 = vmatprep.mubr.bf16.mxu0 0
        %5510 = vmatmul.mubr.bf16.gmra.mxu0 %v5420
        %v5511 = vpop.f32.mrf.mxu0
        %v5512 = vadd.f32 %v1893, %v5511
        %v5513 = vpop.f32.mrf.mxu0
        %v5514 = vpop.f32.mrf.mxu0
        %v5515 = vadd.f32 %v1894, %v5514
        %v5516 = vpop.f32.mrf.mxu0
        %5517 = vmatprep.mubr.bf16.mxu0 0
        %5518 = vmatmul.mubr.bf16.gmra.mxu0 %v5423
        %v5519 = vpop.f32.mrf.mxu0
        %v5520 = vadd.f32 %v1895, %v5519
        %v5521 = vpop.f32.mrf.mxu0
        %v5522 = vpop.f32.mrf.mxu0
        %v5523 = vadd.f32 %v1896, %v5522
        %v5524 = vpop.f32.mrf.mxu0
        %5525 = vmatprep.mubr.bf16.mxu0 0
        %5526 = vmatmul.mubr.bf16.gmra.mxu0 %v5426
        %v5527 = vpop.f32.mrf.mxu0
        %v5528 = vadd.f32 %v1897, %v5527
        %v5529 = vpop.f32.mrf.mxu0
        %v5530 = vpop.f32.mrf.mxu0
        %v5531 = vadd.f32 %v1898, %v5530
        %v5532 = vpop.f32.mrf.mxu0
        %5533 = vmatprep.mubr.bf16.mxu0 0
        %5534 = vmatmul.mubr.bf16.gmra.mxu0 %v5429
        %v5535 = vpop.f32.mrf.mxu0
        %v5536 = vadd.f32 %v1899, %v5535
        %v5537 = vpop.f32.mrf.mxu0
        %v5538 = vpop.f32.mrf.mxu0
        %v5539 = vadd.f32 %v1900, %v5538
        %v5540 = vpop.f32.mrf.mxu0
        %5541 = vmatprep.mubr.bf16.mxu0 0
        %5542 = vmatmul.mubr.bf16.gmra.mxu0 %v5432
        %v5543 = vpop.f32.mrf.mxu0
        %v5544 = vadd.f32 %v1901, %v5543
        %v5545 = vpop.f32.mrf.mxu0
        %v5546 = vpop.f32.mrf.mxu0
        %v5547 = vadd.f32 %v1902, %v5546
        %v5548 = vpop.f32.mrf.mxu0
        %5549 = vmatprep.mubr.bf16.mxu0 0
        %5550 = vmatmul.mubr.bf16.gmra.mxu0 %v5435
        %v5551 = vpop.f32.mrf.mxu0
        %v5552 = vadd.f32 %v1903, %v5551
        %v5553 = vpop.f32.mrf.mxu0
        %v5554 = vpop.f32.mrf.mxu0
        %v5555 = vadd.f32 %v1904, %v5554
        %v5556 = vpop.f32.mrf.mxu0
        %5557 = vdwg.mxu0
        %5558 = vrot.lane.b32.xlu0 %v1961, 32
        %v5559 = vpop.permute.xlu0 %5558
        %5560 = vrot.lane.b32.xlu0 %v1962, 32
        %v5561 = vpop.permute.xlu0 %5560
        %5562 = vrot.lane.b32.xlu0 %v1963, 32
        %v5563 = vpop.permute.xlu0 %5562
        %5564 = vrot.lane.b32.xlu0 %v1964, 32
        %v5565 = vpop.permute.xlu0 %5564
        %5566 = vrot.lane.b32.xlu0 %v1965, 32
        %v5567 = vpop.permute.xlu0 %5566
        %5568 = vrot.lane.b32.xlu0 %v1966, 32
        %v5569 = vpop.permute.xlu0 %5568
        %5570 = vrot.lane.b32.xlu0 %v1967, 32
        %v5571 = vpop.permute.xlu0 %5570
        %5572 = vrot.lane.b32.xlu0 %v1968, 32
        %v5573 = vpop.permute.xlu0 %5572
        %5574 = vrot.lane.b32.xlu0 %v1977, 32
        %v5575 = vpop.permute.xlu0 %5574
        %5576 = vrot.lane.b32.xlu0 %v1978, 32
        %v5577 = vpop.permute.xlu0 %5576
        %5578 = vrot.lane.b32.xlu0 %v1979, 32
        %v5579 = vpop.permute.xlu0 %5578
        %5580 = vrot.lane.b32.xlu0 %v1980, 32
        %v5581 = vpop.permute.xlu0 %5580
        %5582 = vrot.lane.b32.xlu0 %v1981, 32
        %v5583 = vpop.permute.xlu0 %5582
        %5584 = vrot.lane.b32.xlu0 %v1982, 32
        %v5585 = vpop.permute.xlu0 %5584
        %5586 = vrot.lane.b32.xlu0 %v1983, 32
        %v5587 = vpop.permute.xlu0 %5586
        %5588 = vrot.lane.b32.xlu0 %v1984, 32
        %v5589 = vpop.permute.xlu0 %5588
        %v5591 = vsel %vm2001, %v5559, 0
        %v5594 = vsel %vm2001, %v5561, 0
        %v5597 = vsel %vm2001, %v5563, 0
        %v5600 = vsel %vm2001, %v5565, 0
        %v5603 = vsel %vm2001, %v5567, 0
        %v5606 = vsel %vm2001, %v5569, 0
        %v5609 = vsel %vm2001, %v5571, 0
        %v5612 = vsel %vm2001, %v5573, 0
        %v5615 = vsel %vm2001, %v5575, 0
        %v5618 = vsel %vm2001, %v5577, 0
        %v5621 = vsel %vm2001, %v5579, 0
        %v5624 = vsel %vm2001, %v5581, 0
        %v5627 = vsel %vm2001, %v5583, 0
        %v5630 = vsel %vm2001, %v5585, 0
        %v5633 = vsel %vm2001, %v5587, 0
        %v5636 = vsel %vm2001, %v5589, 0
        %5638 = vmatprep.subr.bf16.mxu0 0
        %5639 = vmatpush1.bf16.xpose.msra.mxu0 %v5636
        %5640 = vmatprep.subr.bf16.mxu0 0
        %5641 = vmatpush1.bf16.xpose.msra.mxu0 %v5633
        %5642 = vmatprep.subr.bf16.mxu0 0
        %5643 = vmatpush1.bf16.xpose.msra.mxu0 %v5630
        %5644 = vmatprep.subr.bf16.mxu0 0
        %5645 = vmatpush1.bf16.xpose.msra.mxu0 %v5627
        %5646 = vmatprep.subr.bf16.mxu0 0
        %5647 = vmatpush1.bf16.xpose.msra.mxu0 %v5624
        %5648 = vmatprep.subr.bf16.mxu0 0
        %5649 = vmatpush1.bf16.xpose.msra.mxu0 %v5621
        %5650 = vmatprep.subr.bf16.mxu0 0
        %5651 = vmatpush1.bf16.xpose.msra.mxu0 %v5618
        %5652 = vmatprep.subr.bf16.mxu0 0
        %5653 = vmatpush1.bf16.xpose.msra.mxu0 %v5615
        %5654 = vmatprep.subr.bf16.mxu0 0
        %5655 = vmatpush2.bf16.xpose.msra.mxu0 0
        %5656 = vmatprep.subr.bf16.mxu0 0
        %5657 = vmatpush2.bf16.xpose.msra.mxu0 0
        %5658 = vmatprep.subr.bf16.mxu0 0
        %5659 = vmatpush2.bf16.xpose.msra.mxu0 0
        %5660 = vmatprep.subr.bf16.mxu0 0
        %5661 = vmatpush2.bf16.xpose.msra.mxu0 0
        %5662 = vmatprep.subr.bf16.mxu0 0
        %5663 = vmatpush2.bf16.xpose.msra.mxu0 0
        %5664 = vmatprep.subr.bf16.mxu0 0
        %5665 = vmatpush2.bf16.xpose.msra.mxu0 0
        %5666 = vmatprep.subr.bf16.mxu0 0
        %5667 = vmatpush2.bf16.xpose.msra.mxu0 0
        %5668 = vmatprep.subr.bf16.mxu0 0
        %5669 = vmatpush2.bf16.xpose.msra.mxu0 0
        %5670 = vmatprep.mubr.bf16.mxu0 0
        %5671 = vmatmul.mubr.bf16.gmra.mxu0 %v5591
        %v5672 = vpop.f32.mrf.mxu0
        %v5673 = vadd.f32 %v1889, %v5672
        %v5674 = vpop.f32.mrf.mxu0
        %v5675 = vpop.f32.mrf.mxu0
        %v5676 = vadd.f32 %v1890, %v5675
        %v5677 = vpop.f32.mrf.mxu0
        %5678 = vmatprep.mubr.bf16.mxu0 0
        %5679 = vmatmul.mubr.bf16.gmra.mxu0 %v5594
        %v5680 = vpop.f32.mrf.mxu0
        %v5681 = vadd.f32 %v1891, %v5680
        %v5682 = vpop.f32.mrf.mxu0
        %v5683 = vpop.f32.mrf.mxu0
        %v5684 = vadd.f32 %v1892, %v5683
        %v5685 = vpop.f32.mrf.mxu0
        %5686 = vmatprep.mubr.bf16.mxu0 0
        %5687 = vmatmul.mubr.bf16.gmra.mxu0 %v5597
        %v5688 = vpop.f32.mrf.mxu0
        %v5689 = vadd.f32 %v1893, %v5688
        %v5690 = vpop.f32.mrf.mxu0
        %v5691 = vpop.f32.mrf.mxu0
        %v5692 = vadd.f32 %v1894, %v5691
        %v5693 = vpop.f32.mrf.mxu0
        %5694 = vmatprep.mubr.bf16.mxu0 0
        %5695 = vmatmul.mubr.bf16.gmra.mxu0 %v5600
        %v5696 = vpop.f32.mrf.mxu0
        %v5697 = vadd.f32 %v1895, %v5696
        %v5698 = vpop.f32.mrf.mxu0
        %v5699 = vpop.f32.mrf.mxu0
        %v5700 = vadd.f32 %v1896, %v5699
        %v5701 = vpop.f32.mrf.mxu0
        %5702 = vmatprep.mubr.bf16.mxu0 0
        %5703 = vmatmul.mubr.bf16.gmra.mxu0 %v5603
        %v5704 = vpop.f32.mrf.mxu0
        %v5705 = vadd.f32 %v1897, %v5704
        %v5706 = vpop.f32.mrf.mxu0
        %v5707 = vpop.f32.mrf.mxu0
        %v5708 = vadd.f32 %v1898, %v5707
        %v5709 = vpop.f32.mrf.mxu0
        %5710 = vmatprep.mubr.bf16.mxu0 0
        %5711 = vmatmul.mubr.bf16.gmra.mxu0 %v5606
        %v5712 = vpop.f32.mrf.mxu0
        %v5713 = vadd.f32 %v1899, %v5712
        %v5714 = vpop.f32.mrf.mxu0
        %v5715 = vpop.f32.mrf.mxu0
        %v5716 = vadd.f32 %v1900, %v5715
        %v5717 = vpop.f32.mrf.mxu0
        %5718 = vmatprep.mubr.bf16.mxu0 0
        %5719 = vmatmul.mubr.bf16.gmra.mxu0 %v5609
        %v5720 = vpop.f32.mrf.mxu0
        %v5721 = vadd.f32 %v1901, %v5720
        %v5722 = vpop.f32.mrf.mxu0
        %v5723 = vpop.f32.mrf.mxu0
        %v5724 = vadd.f32 %v1902, %v5723
        %v5725 = vpop.f32.mrf.mxu0
        %5726 = vmatprep.mubr.bf16.mxu0 0
        %5727 = vmatmul.mubr.bf16.gmra.mxu0 %v5612
        %v5728 = vpop.f32.mrf.mxu0
        %v5729 = vadd.f32 %v1903, %v5728
        %v5730 = vpop.f32.mrf.mxu0
        %v5731 = vpop.f32.mrf.mxu0
        %v5732 = vadd.f32 %v1904, %v5731
        %v5733 = vpop.f32.mrf.mxu0
        %5734 = vdwg.mxu0
        %5735 = vmax.xlane.f32.xlu0 %v5496
        %v5736 = vpop.xlane.xlu0 %5735
        %5737 = vmax.xlane.f32.xlu0 %v5499
        %v5738 = vpop.xlane.xlu0 %5737
        %5739 = vmax.xlane.f32.xlu0 %v5504
        %v5740 = vpop.xlane.xlu0 %5739
        %5741 = vmax.xlane.f32.xlu0 %v5507
        %v5742 = vpop.xlane.xlu0 %5741
        %5743 = vmax.xlane.f32.xlu0 %v5512
        %v5744 = vpop.xlane.xlu0 %5743
        %5745 = vmax.xlane.f32.xlu0 %v5515
        %v5746 = vpop.xlane.xlu0 %5745
        %5747 = vmax.xlane.f32.xlu0 %v5520
        %v5748 = vpop.xlane.xlu0 %5747
        %5749 = vmax.xlane.f32.xlu0 %v5523
        %v5750 = vpop.xlane.xlu0 %5749
        %5751 = vmax.xlane.f32.xlu0 %v5528
        %v5752 = vpop.xlane.xlu0 %5751
        %5753 = vmax.xlane.f32.xlu0 %v5531
        %v5754 = vpop.xlane.xlu0 %5753
        %5755 = vmax.xlane.f32.xlu0 %v5536
        %v5756 = vpop.xlane.xlu0 %5755
        %5757 = vmax.xlane.f32.xlu0 %v5539
        %v5758 = vpop.xlane.xlu0 %5757
        %5759 = vmax.xlane.f32.xlu0 %v5544
        %v5760 = vpop.xlane.xlu0 %5759
        %5761 = vmax.xlane.f32.xlu0 %v5547
        %v5762 = vpop.xlane.xlu0 %5761
        %5763 = vmax.xlane.f32.xlu0 %v5552
        %v5764 = vpop.xlane.xlu0 %5763
        %5765 = vmax.xlane.f32.xlu0 %v5555
        %v5766 = vpop.xlane.xlu0 %5765
        %5767 = vmax.xlane.f32.xlu0 %v5673
        %v5768 = vpop.xlane.xlu0 %5767
        %5769 = vmax.xlane.f32.xlu0 %v5676
        %v5770 = vpop.xlane.xlu0 %5769
        %5771 = vmax.xlane.f32.xlu0 %v5681
        %v5772 = vpop.xlane.xlu0 %5771
        %5773 = vmax.xlane.f32.xlu0 %v5684
        %v5774 = vpop.xlane.xlu0 %5773
        %5775 = vmax.xlane.f32.xlu0 %v5689
        %v5776 = vpop.xlane.xlu0 %5775
        %5777 = vmax.xlane.f32.xlu0 %v5692
        %v5778 = vpop.xlane.xlu0 %5777
        %5779 = vmax.xlane.f32.xlu0 %v5697
        %v5780 = vpop.xlane.xlu0 %5779
        %5781 = vmax.xlane.f32.xlu0 %v5700
        %v5782 = vpop.xlane.xlu0 %5781
        %5783 = vmax.xlane.f32.xlu0 %v5705
        %v5784 = vpop.xlane.xlu0 %5783
        %5785 = vmax.xlane.f32.xlu0 %v5708
        %v5786 = vpop.xlane.xlu0 %5785
        %5787 = vmax.xlane.f32.xlu0 %v5713
        %v5788 = vpop.xlane.xlu0 %5787
        %5789 = vmax.xlane.f32.xlu0 %v5716
        %v5790 = vpop.xlane.xlu0 %5789
        %5791 = vmax.xlane.f32.xlu0 %v5721
        %v5792 = vpop.xlane.xlu0 %5791
        %5793 = vmax.xlane.f32.xlu0 %v5724
        %v5794 = vpop.xlane.xlu0 %5793
        %5795 = vmax.xlane.f32.xlu0 %v5729
        %v5796 = vpop.xlane.xlu0 %5795
        %5797 = vmax.xlane.f32.xlu0 %v5732
        %v5798 = vpop.xlane.xlu0 %5797
        %v5799 = vsub.f32 %v5496, %v5736
        %v5800 = vsub.f32 %v5499, %v5738
        %v5801 = vsub.f32 %v5504, %v5740
        %v5802 = vsub.f32 %v5507, %v5742
        %v5803 = vsub.f32 %v5512, %v5744
        %v5804 = vsub.f32 %v5515, %v5746
        %v5805 = vsub.f32 %v5520, %v5748
        %v5806 = vsub.f32 %v5523, %v5750
        %v5807 = vsub.f32 %v5528, %v5752
        %v5808 = vsub.f32 %v5531, %v5754
        %v5809 = vsub.f32 %v5536, %v5756
        %v5810 = vsub.f32 %v5539, %v5758
        %v5811 = vsub.f32 %v5544, %v5760
        %v5812 = vsub.f32 %v5547, %v5762
        %v5813 = vsub.f32 %v5552, %v5764
        %v5814 = vsub.f32 %v5555, %v5766
        %v5815 = vsub.f32 %v5673, %v5768
        %v5816 = vsub.f32 %v5676, %v5770
        %v5817 = vsub.f32 %v5681, %v5772
        %v5818 = vsub.f32 %v5684, %v5774
        %v5819 = vsub.f32 %v5689, %v5776
        %v5820 = vsub.f32 %v5692, %v5778
        %v5821 = vsub.f32 %v5697, %v5780
        %v5822 = vsub.f32 %v5700, %v5782
        %v5823 = vsub.f32 %v5705, %v5784
        %v5824 = vsub.f32 %v5708, %v5786
        %v5825 = vsub.f32 %v5713, %v5788
        %v5826 = vsub.f32 %v5716, %v5790
        %v5827 = vsub.f32 %v5721, %v5792
        %v5828 = vsub.f32 %v5724, %v5794
        %v5829 = vsub.f32 %v5729, %v5796
        %v5830 = vsub.f32 %v5732, %v5798
        %v5831 = vmul.f32 %v5799, 1.442695
        %v5832 = vpow.pop %v5831
        %v5833 = vmul.f32 %v5800, 1.442695
        %v5834 = vpow.pop %v5833
        %v5835 = vmul.f32 %v5801, 1.442695
        %v5836 = vpow.pop %v5835
        %v5837 = vmul.f32 %v5802, 1.442695
        %v5838 = vpow.pop %v5837
        %v5839 = vmul.f32 %v5803, 1.442695
        %v5840 = vpow.pop %v5839
        %v5841 = vmul.f32 %v5804, 1.442695
        %v5842 = vpow.pop %v5841
        %v5843 = vmul.f32 %v5805, 1.442695
        %v5844 = vpow.pop %v5843
        %v5845 = vmul.f32 %v5806, 1.442695
        %v5846 = vpow.pop %v5845
        %v5847 = vmul.f32 %v5807, 1.442695
        %v5848 = vpow.pop %v5847
        %v5849 = vmul.f32 %v5808, 1.442695
        %v5850 = vpow.pop %v5849
        %v5851 = vmul.f32 %v5809, 1.442695
        %v5852 = vpow.pop %v5851
        %v5853 = vmul.f32 %v5810, 1.442695
        %v5854 = vpow.pop %v5853
        %v5855 = vmul.f32 %v5811, 1.442695
        %v5856 = vpow.pop %v5855
        %v5857 = vmul.f32 %v5812, 1.442695
        %v5858 = vpow.pop %v5857
        %v5859 = vmul.f32 %v5813, 1.442695
        %v5860 = vpow.pop %v5859
        %v5861 = vmul.f32 %v5814, 1.442695
        %v5862 = vpow.pop %v5861
        %v5863 = vmul.f32 %v5815, 1.442695
        %v5864 = vpow.pop %v5863
        %v5865 = vmul.f32 %v5816, 1.442695
        %v5866 = vpow.pop %v5865
        %v5867 = vmul.f32 %v5817, 1.442695
        %v5868 = vpow.pop %v5867
        %v5869 = vmul.f32 %v5818, 1.442695
        %v5870 = vpow.pop %v5869
        %v5871 = vmul.f32 %v5819, 1.442695
        %v5872 = vpow.pop %v5871
        %v5873 = vmul.f32 %v5820, 1.442695
        %v5874 = vpow.pop %v5873
        %v5875 = vmul.f32 %v5821, 1.442695
        %v5876 = vpow.pop %v5875
        %v5877 = vmul.f32 %v5822, 1.442695
        %v5878 = vpow.pop %v5877
        %v5879 = vmul.f32 %v5823, 1.442695
        %v5880 = vpow.pop %v5879
        %v5881 = vmul.f32 %v5824, 1.442695
        %v5882 = vpow.pop %v5881
        %v5883 = vmul.f32 %v5825, 1.442695
        %v5884 = vpow.pop %v5883
        %v5885 = vmul.f32 %v5826, 1.442695
        %v5886 = vpow.pop %v5885
        %v5887 = vmul.f32 %v5827, 1.442695
        %v5888 = vpow.pop %v5887
        %v5889 = vmul.f32 %v5828, 1.442695
        %v5890 = vpow.pop %v5889
        %v5891 = vmul.f32 %v5829, 1.442695
        %v5892 = vpow.pop %v5891
        %v5893 = vmul.f32 %v5830, 1.442695
        %v5894 = vpow.pop %v5893
        %5895 = vadd.xlane.f32.xlu0 %v5832
        %v5896 = vpop.xlane.xlu0 %5895
        %5897 = vadd.xlane.f32.xlu0 %v5834
        %v5898 = vpop.xlane.xlu0 %5897
        %5899 = vadd.xlane.f32.xlu0 %v5836
        %v5900 = vpop.xlane.xlu0 %5899
        %5901 = vadd.xlane.f32.xlu0 %v5838
        %v5902 = vpop.xlane.xlu0 %5901
        %5903 = vadd.xlane.f32.xlu0 %v5840
        %v5904 = vpop.xlane.xlu0 %5903
        %5905 = vadd.xlane.f32.xlu0 %v5842
        %v5906 = vpop.xlane.xlu0 %5905
        %5907 = vadd.xlane.f32.xlu0 %v5844
        %v5908 = vpop.xlane.xlu0 %5907
        %5909 = vadd.xlane.f32.xlu0 %v5846
        %v5910 = vpop.xlane.xlu0 %5909
        %5911 = vadd.xlane.f32.xlu0 %v5848
        %v5912 = vpop.xlane.xlu0 %5911
        %5913 = vadd.xlane.f32.xlu0 %v5850
        %v5914 = vpop.xlane.xlu0 %5913
        %5915 = vadd.xlane.f32.xlu0 %v5852
        %v5916 = vpop.xlane.xlu0 %5915
        %5917 = vadd.xlane.f32.xlu0 %v5854
        %v5918 = vpop.xlane.xlu0 %5917
        %5919 = vadd.xlane.f32.xlu0 %v5856
        %v5920 = vpop.xlane.xlu0 %5919
        %5921 = vadd.xlane.f32.xlu0 %v5858
        %v5922 = vpop.xlane.xlu0 %5921
        %5923 = vadd.xlane.f32.xlu0 %v5860
        %v5924 = vpop.xlane.xlu0 %5923
        %5925 = vadd.xlane.f32.xlu0 %v5862
        %v5926 = vpop.xlane.xlu0 %5925
        %5927 = vadd.xlane.f32.xlu0 %v5864
        %v5928 = vpop.xlane.xlu0 %5927
        %5929 = vadd.xlane.f32.xlu0 %v5866
        %v5930 = vpop.xlane.xlu0 %5929
        %5931 = vadd.xlane.f32.xlu0 %v5868
        %v5932 = vpop.xlane.xlu0 %5931
        %5933 = vadd.xlane.f32.xlu0 %v5870
        %v5934 = vpop.xlane.xlu0 %5933
        %5935 = vadd.xlane.f32.xlu0 %v5872
        %v5936 = vpop.xlane.xlu0 %5935
        %5937 = vadd.xlane.f32.xlu0 %v5874
        %v5938 = vpop.xlane.xlu0 %5937
        %5939 = vadd.xlane.f32.xlu0 %v5876
        %v5940 = vpop.xlane.xlu0 %5939
        %5941 = vadd.xlane.f32.xlu0 %v5878
        %v5942 = vpop.xlane.xlu0 %5941
        %5943 = vadd.xlane.f32.xlu0 %v5880
        %v5944 = vpop.xlane.xlu0 %5943
        %5945 = vadd.xlane.f32.xlu0 %v5882
        %v5946 = vpop.xlane.xlu0 %5945
        %5947 = vadd.xlane.f32.xlu0 %v5884
        %v5948 = vpop.xlane.xlu0 %5947
        %5949 = vadd.xlane.f32.xlu0 %v5886
        %v5950 = vpop.xlane.xlu0 %5949
        %5951 = vadd.xlane.f32.xlu0 %v5888
        %v5952 = vpop.xlane.xlu0 %5951
        %5953 = vadd.xlane.f32.xlu0 %v5890
        %v5954 = vpop.xlane.xlu0 %5953
        %5955 = vadd.xlane.f32.xlu0 %v5892
        %v5956 = vpop.xlane.xlu0 %5955
        %5957 = vadd.xlane.f32.xlu0 %v5894
        %v5958 = vpop.xlane.xlu0 %5957
        %v5959 = vrcp.pop %v5896
        %v5960 = vrcp.pop %v5898
        %v5961 = vrcp.pop %v5900
        %v5962 = vrcp.pop %v5902
        %v5963 = vrcp.pop %v5904
        %v5964 = vrcp.pop %v5906
        %v5965 = vrcp.pop %v5908
        %v5966 = vrcp.pop %v5910
        %v5967 = vrcp.pop %v5912
        %v5968 = vrcp.pop %v5914
        %v5969 = vrcp.pop %v5916
        %v5970 = vrcp.pop %v5918
        %v5971 = vrcp.pop %v5920
        %v5972 = vrcp.pop %v5922
        %v5973 = vrcp.pop %v5924
        %v5974 = vrcp.pop %v5926
        %v5975 = vrcp.pop %v5928
        %v5976 = vrcp.pop %v5930
        %v5977 = vrcp.pop %v5932
        %v5978 = vrcp.pop %v5934
        %v5979 = vrcp.pop %v5936
        %v5980 = vrcp.pop %v5938
        %v5981 = vrcp.pop %v5940
        %v5982 = vrcp.pop %v5942
        %v5983 = vrcp.pop %v5944
        %v5984 = vrcp.pop %v5946
        %v5985 = vrcp.pop %v5948
        %v5986 = vrcp.pop %v5950
        %v5987 = vrcp.pop %v5952
        %v5988 = vrcp.pop %v5954
        %v5989 = vrcp.pop %v5956
        %v5990 = vrcp.pop %v5958
        %v5991 = vmul.f32 %v5832, %v5959
        %v5992 = vmul.f32 %v5834, %v5960
        %v5993 = vmul.f32 %v5836, %v5961
        %v5994 = vmul.f32 %v5838, %v5962
        %v5995 = vmul.f32 %v5840, %v5963
        %v5996 = vmul.f32 %v5842, %v5964
        %v5997 = vmul.f32 %v5844, %v5965
        %v5998 = vmul.f32 %v5846, %v5966
        %v5999 = vmul.f32 %v5848, %v5967
        %v6000 = vmul.f32 %v5850, %v5968
        %v6001 = vmul.f32 %v5852, %v5969
        %v6002 = vmul.f32 %v5854, %v5970
        %v6003 = vmul.f32 %v5856, %v5971
        %v6004 = vmul.f32 %v5858, %v5972
        %v6005 = vmul.f32 %v5860, %v5973
        %v6006 = vmul.f32 %v5862, %v5974
        %v6007 = vmul.f32 %v5864, %v5975
        %v6008 = vmul.f32 %v5866, %v5976
        %v6009 = vmul.f32 %v5868, %v5977
        %v6010 = vmul.f32 %v5870, %v5978
        %v6011 = vmul.f32 %v5872, %v5979
        %v6012 = vmul.f32 %v5874, %v5980
        %v6013 = vmul.f32 %v5876, %v5981
        %v6014 = vmul.f32 %v5878, %v5982
        %v6015 = vmul.f32 %v5880, %v5983
        %v6016 = vmul.f32 %v5882, %v5984
        %v6017 = vmul.f32 %v5884, %v5985
        %v6018 = vmul.f32 %v5886, %v5986
        %v6019 = vmul.f32 %v5888, %v5987
        %v6020 = vmul.f32 %v5890, %v5988
        %v6021 = vmul.f32 %v5892, %v5989
        %v6022 = vmul.f32 %v5894, %v5990
        %v6023 = vpack.c.bf16 %v5992, %v5991
        %v6024 = vpack.c.bf16 %v5994, %v5993
        %v6025 = vpack.c.bf16 %v5996, %v5995
        %v6026 = vpack.c.bf16 %v5998, %v5997
        %v6027 = vpack.c.bf16 %v6000, %v5999
        %v6028 = vpack.c.bf16 %v6002, %v6001
        %v6029 = vpack.c.bf16 %v6004, %v6003
        %v6030 = vpack.c.bf16 %v6006, %v6005
        %v6031 = vpack.c.bf16 %v6008, %v6007
        %v6032 = vpack.c.bf16 %v6010, %v6009
        %v6033 = vpack.c.bf16 %v6012, %v6011
        %v6034 = vpack.c.bf16 %v6014, %v6013
        %v6035 = vpack.c.bf16 %v6016, %v6015
        %v6036 = vpack.c.bf16 %v6018, %v6017
        %v6037 = vpack.c.bf16 %v6020, %v6019
        %v6038 = vpack.c.bf16 %v6022, %v6021
        %6039 = vrot.lane.b32.xlu0 %v1985, 32
        %v6040 = vpop.permute.xlu0 %6039
        %6041 = vrot.lane.b32.xlu0 %v1986, 32
        %v6042 = vpop.permute.xlu0 %6041
        %6043 = vrot.lane.b32.xlu0 %v1987, 32
        %v6044 = vpop.permute.xlu0 %6043
        %6045 = vrot.lane.b32.xlu0 %v1988, 32
        %v6046 = vpop.permute.xlu0 %6045
        %6047 = vrot.lane.b32.xlu0 %v1989, 32
        %v6048 = vpop.permute.xlu0 %6047
        %6049 = vrot.lane.b32.xlu0 %v1990, 32
        %v6050 = vpop.permute.xlu0 %6049
        %6051 = vrot.lane.b32.xlu0 %v1991, 32
        %v6052 = vpop.permute.xlu0 %6051
        %6053 = vrot.lane.b32.xlu0 %v1992, 32
        %v6054 = vpop.permute.xlu0 %6053
        %6063 = vmatprep.subr.bf16.mxu0 0
        %6064 = vmatpush1.bf16.msra.mxu0 %v6054
        %6065 = vmatprep.subr.bf16.mxu0 0
        %6066 = vmatpush1.bf16.msra.mxu0 %v6052
        %6067 = vmatprep.subr.bf16.mxu0 0
        %6068 = vmatpush1.bf16.msra.mxu0 %v6050
        %6069 = vmatprep.subr.bf16.mxu0 0
        %6070 = vmatpush1.bf16.msra.mxu0 %v6048
        %6071 = vmatprep.subr.bf16.mxu0 0
        %6072 = vmatpush1.bf16.msra.mxu0 %v6046
        %6073 = vmatprep.subr.bf16.mxu0 0
        %6074 = vmatpush1.bf16.msra.mxu0 %v6044
        %6075 = vmatprep.subr.bf16.mxu0 0
        %6076 = vmatpush1.bf16.msra.mxu0 %v6042
        %6077 = vmatprep.subr.bf16.mxu0 0
        %6078 = vmatpush1.bf16.msra.mxu0 %v6040
        %6079 = vmatprep.subr.bf16.mxu0 0
        %6080 = vmatpush2.bf16.msra.mxu0 0
        %6081 = vmatprep.subr.bf16.mxu0 0
        %6082 = vmatpush2.bf16.msra.mxu0 0
        %6083 = vmatprep.subr.bf16.mxu0 0
        %6084 = vmatpush2.bf16.msra.mxu0 0
        %6085 = vmatprep.subr.bf16.mxu0 0
        %6086 = vmatpush2.bf16.msra.mxu0 0
        %6087 = vmatprep.subr.bf16.mxu0 0
        %6088 = vmatpush2.bf16.msra.mxu0 0
        %6089 = vmatprep.subr.bf16.mxu0 0
        %6090 = vmatpush2.bf16.msra.mxu0 0
        %6091 = vmatprep.subr.bf16.mxu0 0
        %6092 = vmatpush2.bf16.msra.mxu0 0
        %6093 = vmatprep.subr.bf16.mxu0 0
        %6094 = vmatpush2.bf16.msra.mxu0 0
        %6095 = vmatprep.mubr.bf16.mxu0 0
        %6096 = vmatmul.mubr.bf16.gmra.mxu0 %v6023
        %v6097 = vpop.f32.mrf.mxu0
        %v6098 = vadd.f32 0.0, %v6097
        %v6099 = vpop.f32.mrf.mxu0
        %v6100 = vpop.f32.mrf.mxu0
        %v6101 = vadd.f32 0.0, %v6100
        %v6102 = vpop.f32.mrf.mxu0
        %6103 = vmatprep.mubr.bf16.mxu0 0
        %6104 = vmatmul.mubr.bf16.gmra.mxu0 %v6024
        %v6105 = vpop.f32.mrf.mxu0
        %v6106 = vadd.f32 0.0, %v6105
        %v6107 = vpop.f32.mrf.mxu0
        %v6108 = vpop.f32.mrf.mxu0
        %v6109 = vadd.f32 0.0, %v6108
        %v6110 = vpop.f32.mrf.mxu0
        %6111 = vmatprep.mubr.bf16.mxu0 0
        %6112 = vmatmul.mubr.bf16.gmra.mxu0 %v6025
        %v6113 = vpop.f32.mrf.mxu0
        %v6114 = vadd.f32 0.0, %v6113
        %v6115 = vpop.f32.mrf.mxu0
        %v6116 = vpop.f32.mrf.mxu0
        %v6117 = vadd.f32 0.0, %v6116
        %v6118 = vpop.f32.mrf.mxu0
        %6119 = vmatprep.mubr.bf16.mxu0 0
        %6120 = vmatmul.mubr.bf16.gmra.mxu0 %v6026
        %v6121 = vpop.f32.mrf.mxu0
        %v6122 = vadd.f32 0.0, %v6121
        %v6123 = vpop.f32.mrf.mxu0
        %v6124 = vpop.f32.mrf.mxu0
        %v6125 = vadd.f32 0.0, %v6124
        %v6126 = vpop.f32.mrf.mxu0
        %6127 = vmatprep.mubr.bf16.mxu0 0
        %6128 = vmatmul.mubr.bf16.gmra.mxu0 %v6027
        %v6129 = vpop.f32.mrf.mxu0
        %v6130 = vadd.f32 0.0, %v6129
        %v6131 = vpop.f32.mrf.mxu0
        %v6132 = vpop.f32.mrf.mxu0
        %v6133 = vadd.f32 0.0, %v6132
        %v6134 = vpop.f32.mrf.mxu0
        %6135 = vmatprep.mubr.bf16.mxu0 0
        %6136 = vmatmul.mubr.bf16.gmra.mxu0 %v6028
        %v6137 = vpop.f32.mrf.mxu0
        %v6138 = vadd.f32 0.0, %v6137
        %v6139 = vpop.f32.mrf.mxu0
        %v6140 = vpop.f32.mrf.mxu0
        %v6141 = vadd.f32 0.0, %v6140
        %v6142 = vpop.f32.mrf.mxu0
        %6143 = vmatprep.mubr.bf16.mxu0 0
        %6144 = vmatmul.mubr.bf16.gmra.mxu0 %v6029
        %v6145 = vpop.f32.mrf.mxu0
        %v6146 = vadd.f32 0.0, %v6145
        %v6147 = vpop.f32.mrf.mxu0
        %v6148 = vpop.f32.mrf.mxu0
        %v6149 = vadd.f32 0.0, %v6148
        %v6150 = vpop.f32.mrf.mxu0
        %6151 = vmatprep.mubr.bf16.mxu0 0
        %6152 = vmatmul.mubr.bf16.gmra.mxu0 %v6030
        %v6153 = vpop.f32.mrf.mxu0
        %v6154 = vadd.f32 0.0, %v6153
        %v6155 = vpop.f32.mrf.mxu0
        %v6156 = vpop.f32.mrf.mxu0
        %v6157 = vadd.f32 0.0, %v6156
        %v6158 = vpop.f32.mrf.mxu0
        %6159 = vdwg.mxu0
        %6160 = vrot.lane.b32.xlu0 %v1993, 32
        %v6161 = vpop.permute.xlu0 %6160
        %6162 = vrot.lane.b32.xlu0 %v1994, 32
        %v6163 = vpop.permute.xlu0 %6162
        %6164 = vrot.lane.b32.xlu0 %v1995, 32
        %v6165 = vpop.permute.xlu0 %6164
        %6166 = vrot.lane.b32.xlu0 %v1996, 32
        %v6167 = vpop.permute.xlu0 %6166
        %6168 = vrot.lane.b32.xlu0 %v1997, 32
        %v6169 = vpop.permute.xlu0 %6168
        %6170 = vrot.lane.b32.xlu0 %v1998, 32
        %v6171 = vpop.permute.xlu0 %6170
        %6172 = vrot.lane.b32.xlu0 %v1999, 32
        %v6173 = vpop.permute.xlu0 %6172
        %6174 = vrot.lane.b32.xlu0 %v2000, 32
        %v6175 = vpop.permute.xlu0 %6174
        %6184 = vmatprep.subr.bf16.mxu0 0
        %6185 = vmatpush1.bf16.msra.mxu0 %v6175
        %6186 = vmatprep.subr.bf16.mxu0 0
        %6187 = vmatpush1.bf16.msra.mxu0 %v6173
        %6188 = vmatprep.subr.bf16.mxu0 0
        %6189 = vmatpush1.bf16.msra.mxu0 %v6171
        %6190 = vmatprep.subr.bf16.mxu0 0
        %6191 = vmatpush1.bf16.msra.mxu0 %v6169
        %6192 = vmatprep.subr.bf16.mxu0 0
        %6193 = vmatpush1.bf16.msra.mxu0 %v6167
        %6194 = vmatprep.subr.bf16.mxu0 0
        %6195 = vmatpush1.bf16.msra.mxu0 %v6165
        %6196 = vmatprep.subr.bf16.mxu0 0
        %6197 = vmatpush1.bf16.msra.mxu0 %v6163
        %6198 = vmatprep.subr.bf16.mxu0 0
        %6199 = vmatpush1.bf16.msra.mxu0 %v6161
        %6200 = vmatprep.subr.bf16.mxu0 0
        %6201 = vmatpush2.bf16.msra.mxu0 0
        %6202 = vmatprep.subr.bf16.mxu0 0
        %6203 = vmatpush2.bf16.msra.mxu0 0
        %6204 = vmatprep.subr.bf16.mxu0 0
        %6205 = vmatpush2.bf16.msra.mxu0 0
        %6206 = vmatprep.subr.bf16.mxu0 0
        %6207 = vmatpush2.bf16.msra.mxu0 0
        %6208 = vmatprep.subr.bf16.mxu0 0
        %6209 = vmatpush2.bf16.msra.mxu0 0
        %6210 = vmatprep.subr.bf16.mxu0 0
        %6211 = vmatpush2.bf16.msra.mxu0 0
        %6212 = vmatprep.subr.bf16.mxu0 0
        %6213 = vmatpush2.bf16.msra.mxu0 0
        %6214 = vmatprep.subr.bf16.mxu0 0
        %6215 = vmatpush2.bf16.msra.mxu0 0
        %6216 = vmatprep.mubr.bf16.mxu0 0
        %6217 = vmatmul.mubr.bf16.gmra.mxu0 %v6031
        %v6218 = vpop.f32.mrf.mxu0
        %v6219 = vadd.f32 0.0, %v6218
        %v6220 = vpop.f32.mrf.mxu0
        %v6221 = vpop.f32.mrf.mxu0
        %v6222 = vadd.f32 0.0, %v6221
        %v6223 = vpop.f32.mrf.mxu0
        %6224 = vmatprep.mubr.bf16.mxu0 0
        %6225 = vmatmul.mubr.bf16.gmra.mxu0 %v6032
        %v6226 = vpop.f32.mrf.mxu0
        %v6227 = vadd.f32 0.0, %v6226
        %v6228 = vpop.f32.mrf.mxu0
        %v6229 = vpop.f32.mrf.mxu0
        %v6230 = vadd.f32 0.0, %v6229
        %v6231 = vpop.f32.mrf.mxu0
        %6232 = vmatprep.mubr.bf16.mxu0 0
        %6233 = vmatmul.mubr.bf16.gmra.mxu0 %v6033
        %v6234 = vpop.f32.mrf.mxu0
        %v6235 = vadd.f32 0.0, %v6234
        %v6236 = vpop.f32.mrf.mxu0
        %v6237 = vpop.f32.mrf.mxu0
        %v6238 = vadd.f32 0.0, %v6237
        %v6239 = vpop.f32.mrf.mxu0
        %6240 = vmatprep.mubr.bf16.mxu0 0
        %6241 = vmatmul.mubr.bf16.gmra.mxu0 %v6034
        %v6242 = vpop.f32.mrf.mxu0
        %v6243 = vadd.f32 0.0, %v6242
        %v6244 = vpop.f32.mrf.mxu0
        %v6245 = vpop.f32.mrf.mxu0
        %v6246 = vadd.f32 0.0, %v6245
        %v6247 = vpop.f32.mrf.mxu0
        %6248 = vmatprep.mubr.bf16.mxu0 0
        %6249 = vmatmul.mubr.bf16.gmra.mxu0 %v6035
        %v6250 = vpop.f32.mrf.mxu0
        %v6251 = vadd.f32 0.0, %v6250
        %v6252 = vpop.f32.mrf.mxu0
        %v6253 = vpop.f32.mrf.mxu0
        %v6254 = vadd.f32 0.0, %v6253
        %v6255 = vpop.f32.mrf.mxu0
        %6256 = vmatprep.mubr.bf16.mxu0 0
        %6257 = vmatmul.mubr.bf16.gmra.mxu0 %v6036
        %v6258 = vpop.f32.mrf.mxu0
        %v6259 = vadd.f32 0.0, %v6258
        %v6260 = vpop.f32.mrf.mxu0
        %v6261 = vpop.f32.mrf.mxu0
        %v6262 = vadd.f32 0.0, %v6261
        %v6263 = vpop.f32.mrf.mxu0
        %6264 = vmatprep.mubr.bf16.mxu0 0
        %6265 = vmatmul.mubr.bf16.gmra.mxu0 %v6037
        %v6266 = vpop.f32.mrf.mxu0
        %v6267 = vadd.f32 0.0, %v6266
        %v6268 = vpop.f32.mrf.mxu0
        %v6269 = vpop.f32.mrf.mxu0
        %v6270 = vadd.f32 0.0, %v6269
        %v6271 = vpop.f32.mrf.mxu0
        %6272 = vmatprep.mubr.bf16.mxu0 0
        %6273 = vmatmul.mubr.bf16.gmra.mxu0 %v6038
        %v6274 = vpop.f32.mrf.mxu0
        %v6275 = vadd.f32 0.0, %v6274
        %v6276 = vpop.f32.mrf.mxu0
        %v6277 = vpop.f32.mrf.mxu0
        %v6278 = vadd.f32 0.0, %v6277
        %v6279 = vpop.f32.mrf.mxu0
        %6280 = vdwg.mxu0
        %v6281 = vpack.c.bf16 %v6101, %v6098
        %v6282 = vpack.c.bf16 %v6109, %v6106
        %v6283 = vpack.c.bf16 %v6117, %v6114
        %v6284 = vpack.c.bf16 %v6125, %v6122
        %v6285 = vpack.c.bf16 %v6133, %v6130
        %v6286 = vpack.c.bf16 %v6141, %v6138
        %v6287 = vpack.c.bf16 %v6149, %v6146
        %v6288 = vpack.c.bf16 %v6157, %v6154
        %v6289 = vpack.c.bf16 %v6222, %v6219
        %v6290 = vpack.c.bf16 %v6230, %v6227
        %v6291 = vpack.c.bf16 %v6238, %v6235
        %v6292 = vpack.c.bf16 %v6246, %v6243
        %v6293 = vpack.c.bf16 %v6254, %v6251
        %v6294 = vpack.c.bf16 %v6262, %v6259
        %v6295 = vpack.c.bf16 %v6270, %v6267
        %v6296 = vpack.c.bf16 %v6278, %v6275
        %v6301 = vunpack.c.l.b16 %v1917
        %v6302 = vunpack.c.l.b16 %v1918
        %v6303 = vunpack.c.l.b16 %v1919
        %v6304 = vunpack.c.l.b16 %v1920
        %v6305 = vpack.c.b16 %v6302, %v6301
        %v6306 = vpack.c.b16 %v6304, %v6303
        %v6310 = vsel %vm2001, %v6281, 0
        %v6313 = vsel %vm2001, %v6282, 0
        %v6316 = vsel %vm2001, %v6283, 0
        %v6319 = vsel %vm2001, %v6284, 0
        %v6322 = vsel %vm2001, %v6285, 0
        %v6325 = vsel %vm2001, %v6286, 0
        %v6328 = vsel %vm2001, %v6287, 0
        %v6331 = vsel %vm2001, %v6288, 0
        %v6334 = vsel %vm2001, %v6289, 0
        %v6337 = vsel %vm2001, %v6290, 0
        %v6340 = vsel %vm2001, %v6291, 0
        %v6343 = vsel %vm2001, %v6292, 0
        %v6346 = vsel %vm2001, %v6293, 0
        %v6349 = vsel %vm2001, %v6294, 0
        %v6352 = vsel %vm2001, %v6295, 0
        %v6355 = vsel %vm2001, %v6296, 0
        %6357 = vmatprep.subr.bf16.mxu0 0
        %6358 = vmatpush1.bf16.msra.mxu0 0
        %6359 = vmatprep.subr.bf16.mxu0 0
        %6360 = vmatpush1.bf16.msra.mxu0 0
        %6361 = vmatprep.subr.bf16.mxu0 0
        %6362 = vmatpush1.bf16.msra.mxu0 0
        %6363 = vmatprep.subr.bf16.mxu0 0
        %6364 = vmatpush1.bf16.msra.mxu0 0
        %6365 = vmatprep.subr.bf16.mxu0 0
        %6366 = vmatpush1.bf16.msra.mxu0 0
        %6367 = vmatprep.subr.bf16.mxu0 0
        %6368 = vmatpush1.bf16.msra.mxu0 0
        %6369 = vmatprep.subr.bf16.mxu0 0
        %6370 = vmatpush1.bf16.msra.mxu0 %v6306
        %6371 = vmatprep.subr.bf16.mxu0 0
        %6372 = vmatpush1.bf16.msra.mxu0 %v6305
        %6373 = vmatprep.subr.bf16.mxu0 0
        %6374 = vmatpush2.bf16.msra.mxu0 0
        %6375 = vmatprep.subr.bf16.mxu0 0
        %6376 = vmatpush2.bf16.msra.mxu0 0
        %6377 = vmatprep.subr.bf16.mxu0 0
        %6378 = vmatpush2.bf16.msra.mxu0 0
        %6379 = vmatprep.subr.bf16.mxu0 0
        %6380 = vmatpush2.bf16.msra.mxu0 0
        %6381 = vmatprep.subr.bf16.mxu0 0
        %6382 = vmatpush2.bf16.msra.mxu0 0
        %6383 = vmatprep.subr.bf16.mxu0 0
        %6384 = vmatpush2.bf16.msra.mxu0 0
        %6385 = vmatprep.subr.bf16.mxu0 0
        %6386 = vmatpush2.bf16.msra.mxu0 0
        %6387 = vmatprep.subr.bf16.mxu0 0
        %6388 = vmatpush2.bf16.msra.mxu0 0
        %6389 = vmatprep.mubr.bf16.mxu0 0
        %6390 = vmatmul.mubr.bf16.gmra.mxu0 %v6310
        %v6391 = vpop.f32.mrf.mxu0
        %v6392 = vadd.f32 0.0, %v6391
        %v6393 = vpop.f32.mrf.mxu0
        %v6394 = vpop.f32.mrf.mxu0
        %v6395 = vadd.f32 0.0, %v6394
        %v6396 = vpop.f32.mrf.mxu0
        %6397 = vmatprep.mubr.bf16.mxu0 0
        %6398 = vmatmul.mubr.bf16.gmra.mxu0 %v6313
        %v6399 = vpop.f32.mrf.mxu0
        %v6400 = vadd.f32 0.0, %v6399
        %v6401 = vpop.f32.mrf.mxu0
        %v6402 = vpop.f32.mrf.mxu0
        %v6403 = vadd.f32 0.0, %v6402
        %v6404 = vpop.f32.mrf.mxu0
        %6405 = vmatprep.mubr.bf16.mxu0 0
        %6406 = vmatmul.mubr.bf16.gmra.mxu0 %v6316
        %v6407 = vpop.f32.mrf.mxu0
        %v6408 = vadd.f32 0.0, %v6407
        %v6409 = vpop.f32.mrf.mxu0
        %v6410 = vpop.f32.mrf.mxu0
        %v6411 = vadd.f32 0.0, %v6410
        %v6412 = vpop.f32.mrf.mxu0
        %6413 = vmatprep.mubr.bf16.mxu0 0
        %6414 = vmatmul.mubr.bf16.gmra.mxu0 %v6319
        %v6415 = vpop.f32.mrf.mxu0
        %v6416 = vadd.f32 0.0, %v6415
        %v6417 = vpop.f32.mrf.mxu0
        %v6418 = vpop.f32.mrf.mxu0
        %v6419 = vadd.f32 0.0, %v6418
        %v6420 = vpop.f32.mrf.mxu0
        %6421 = vmatprep.mubr.bf16.mxu0 0
        %6422 = vmatmul.mubr.bf16.gmra.mxu0 %v6322
        %v6423 = vpop.f32.mrf.mxu0
        %v6424 = vadd.f32 0.0, %v6423
        %v6425 = vpop.f32.mrf.mxu0
        %v6426 = vpop.f32.mrf.mxu0
        %v6427 = vadd.f32 0.0, %v6426
        %v6428 = vpop.f32.mrf.mxu0
        %6429 = vmatprep.mubr.bf16.mxu0 0
        %6430 = vmatmul.mubr.bf16.gmra.mxu0 %v6325
        %v6431 = vpop.f32.mrf.mxu0
        %v6432 = vadd.f32 0.0, %v6431
        %v6433 = vpop.f32.mrf.mxu0
        %v6434 = vpop.f32.mrf.mxu0
        %v6435 = vadd.f32 0.0, %v6434
        %v6436 = vpop.f32.mrf.mxu0
        %6437 = vmatprep.mubr.bf16.mxu0 0
        %6438 = vmatmul.mubr.bf16.gmra.mxu0 %v6328
        %v6439 = vpop.f32.mrf.mxu0
        %v6440 = vadd.f32 0.0, %v6439
        %v6441 = vpop.f32.mrf.mxu0
        %v6442 = vpop.f32.mrf.mxu0
        %v6443 = vadd.f32 0.0, %v6442
        %v6444 = vpop.f32.mrf.mxu0
        %6445 = vmatprep.mubr.bf16.mxu0 0
        %6446 = vmatmul.mubr.bf16.gmra.mxu0 %v6331
        %v6447 = vpop.f32.mrf.mxu0
        %v6448 = vadd.f32 0.0, %v6447
        %v6449 = vpop.f32.mrf.mxu0
        %v6450 = vpop.f32.mrf.mxu0
        %v6451 = vadd.f32 0.0, %v6450
        %v6452 = vpop.f32.mrf.mxu0
        %6453 = vmatprep.mubr.bf16.mxu0 0
        %6454 = vmatmul.mubr.bf16.gmra.mxu0 %v6334
        %v6455 = vpop.f32.mrf.mxu0
        %v6456 = vadd.f32 0.0, %v6455
        %v6457 = vpop.f32.mrf.mxu0
        %v6458 = vpop.f32.mrf.mxu0
        %v6459 = vadd.f32 0.0, %v6458
        %v6460 = vpop.f32.mrf.mxu0
        %6461 = vmatprep.mubr.bf16.mxu0 0
        %6462 = vmatmul.mubr.bf16.gmra.mxu0 %v6337
        %v6463 = vpop.f32.mrf.mxu0
        %v6464 = vadd.f32 0.0, %v6463
        %v6465 = vpop.f32.mrf.mxu0
        %v6466 = vpop.f32.mrf.mxu0
        %v6467 = vadd.f32 0.0, %v6466
        %v6468 = vpop.f32.mrf.mxu0
        %6469 = vmatprep.mubr.bf16.mxu0 0
        %6470 = vmatmul.mubr.bf16.gmra.mxu0 %v6340
        %v6471 = vpop.f32.mrf.mxu0
        %v6472 = vadd.f32 0.0, %v6471
        %v6473 = vpop.f32.mrf.mxu0
        %v6474 = vpop.f32.mrf.mxu0
        %v6475 = vadd.f32 0.0, %v6474
        %v6476 = vpop.f32.mrf.mxu0
        %6477 = vmatprep.mubr.bf16.mxu0 0
        %6478 = vmatmul.mubr.bf16.gmra.mxu0 %v6343
        %v6479 = vpop.f32.mrf.mxu0
        %v6480 = vadd.f32 0.0, %v6479
        %v6481 = vpop.f32.mrf.mxu0
        %v6482 = vpop.f32.mrf.mxu0
        %v6483 = vadd.f32 0.0, %v6482
        %v6484 = vpop.f32.mrf.mxu0
        %6485 = vmatprep.mubr.bf16.mxu0 0
        %6486 = vmatmul.mubr.bf16.gmra.mxu0 %v6346
        %v6487 = vpop.f32.mrf.mxu0
        %v6488 = vadd.f32 0.0, %v6487
        %v6489 = vpop.f32.mrf.mxu0
        %v6490 = vpop.f32.mrf.mxu0
        %v6491 = vadd.f32 0.0, %v6490
        %v6492 = vpop.f32.mrf.mxu0
        %6493 = vmatprep.mubr.bf16.mxu0 0
        %6494 = vmatmul.mubr.bf16.gmra.mxu0 %v6349
        %v6495 = vpop.f32.mrf.mxu0
        %v6496 = vadd.f32 0.0, %v6495
        %v6497 = vpop.f32.mrf.mxu0
        %v6498 = vpop.f32.mrf.mxu0
        %v6499 = vadd.f32 0.0, %v6498
        %v6500 = vpop.f32.mrf.mxu0
        %6501 = vmatprep.mubr.bf16.mxu0 0
        %6502 = vmatmul.mubr.bf16.gmra.mxu0 %v6352
        %v6503 = vpop.f32.mrf.mxu0
        %v6504 = vadd.f32 0.0, %v6503
        %v6505 = vpop.f32.mrf.mxu0
        %v6506 = vpop.f32.mrf.mxu0
        %v6507 = vadd.f32 0.0, %v6506
        %v6508 = vpop.f32.mrf.mxu0
        %6509 = vmatprep.mubr.bf16.mxu0 0
        %6510 = vmatmul.mubr.bf16.gmra.mxu0 %v6355
        %v6511 = vpop.f32.mrf.mxu0
        %v6512 = vadd.f32 0.0, %v6511
        %v6513 = vpop.f32.mrf.mxu0
        %v6514 = vpop.f32.mrf.mxu0
        %v6515 = vadd.f32 0.0, %v6514
        %v6516 = vpop.f32.mrf.mxu0
        %6517 = vdwg.mxu0
        %v6518 = vadd.f32 %v5349, %v6392
        %v6519 = vadd.f32 %v5350, %v6395
        %v6520 = vadd.f32 %v5351, %v6400
        %v6521 = vadd.f32 %v5352, %v6403
        %v6522 = vadd.f32 %v5353, %v6408
        %v6523 = vadd.f32 %v5354, %v6411
        %v6524 = vadd.f32 %v5355, %v6416
        %v6525 = vadd.f32 %v5356, %v6419
        %v6526 = vadd.f32 %v5357, %v6424
        %v6527 = vadd.f32 %v5358, %v6427
        %v6528 = vadd.f32 %v5359, %v6432
        %v6529 = vadd.f32 %v5360, %v6435
        %v6530 = vadd.f32 %v5361, %v6440
        %v6531 = vadd.f32 %v5362, %v6443
        %v6532 = vadd.f32 %v5363, %v6448
        %v6533 = vadd.f32 %v5364, %v6451
        %v6534 = vadd.f32 %v5365, %v6456
        %v6535 = vadd.f32 %v5366, %v6459
        %v6536 = vadd.f32 %v5367, %v6464
        %v6537 = vadd.f32 %v5368, %v6467
        %v6538 = vadd.f32 %v5369, %v6472
        %v6539 = vadd.f32 %v5370, %v6475
        %v6540 = vadd.f32 %v5371, %v6480
        %v6541 = vadd.f32 %v5372, %v6483
        %v6542 = vadd.f32 %v5373, %v6488
        %v6543 = vadd.f32 %v5374, %v6491
        %v6544 = vadd.f32 %v5375, %v6496
        %v6545 = vadd.f32 %v5376, %v6499
        %v6546 = vadd.f32 %v5377, %v6504
        %v6547 = vadd.f32 %v5378, %v6507
        %v6548 = vadd.f32 %v5379, %v6512
        %v6549 = vadd.f32 %v5380, %v6515
        %v6550 = vadd.f32 %v861, %v6518
        %v6551 = vadd.f32 %v862, %v6519
        %v6552 = vadd.f32 %v863, %v6520
        %v6553 = vadd.f32 %v864, %v6521
        %v6554 = vadd.f32 %v865, %v6522
        %v6555 = vadd.f32 %v866, %v6523
        %v6556 = vadd.f32 %v867, %v6524
        %v6557 = vadd.f32 %v868, %v6525
        %v6558 = vadd.f32 %v869, %v6526
        %v6559 = vadd.f32 %v870, %v6527
        %v6560 = vadd.f32 %v871, %v6528
        %v6561 = vadd.f32 %v872, %v6529
        %v6562 = vadd.f32 %v873, %v6530
        %v6563 = vadd.f32 %v874, %v6531
        %v6564 = vadd.f32 %v875, %v6532
        %v6565 = vadd.f32 %v876, %v6533
        %v6566 = vadd.f32 %v877, %v6534
        %v6567 = vadd.f32 %v878, %v6535
        %v6568 = vadd.f32 %v879, %v6536
        %v6569 = vadd.f32 %v880, %v6537
        %v6570 = vadd.f32 %v881, %v6538
        %v6571 = vadd.f32 %v882, %v6539
        %v6572 = vadd.f32 %v883, %v6540
        %v6573 = vadd.f32 %v884, %v6541
        %v6574 = vadd.f32 %v885, %v6542
        %v6575 = vadd.f32 %v886, %v6543
        %v6576 = vadd.f32 %v887, %v6544
        %v6577 = vadd.f32 %v888, %v6545
        %v6578 = vadd.f32 %v889, %v6546
        %v6579 = vadd.f32 %v890, %v6547
        %v6580 = vadd.f32 %v891, %v6548
        %v6581 = vadd.f32 %v892, %v6549
        %v6582 = vld [vmem:[%s775] sm:$0x1]
        %v6584 = vlaneseq
        %v6585 = vshrl.u32 %v6584, 7
        %v6586 = vsub.s32 0, %v6585
        %v6587 = vrot.slane %v6582, %v6586
        %v6589 = vadd.f32 %v6550, %v6587
        %v6590 = vadd.f32 %v6551, %v6587
        %v6591 = vadd.f32 %v6552, %v6587
        %v6592 = vadd.f32 %v6553, %v6587
        %v6593 = vadd.f32 %v6554, %v6587
        %v6594 = vadd.f32 %v6555, %v6587
        %v6595 = vadd.f32 %v6556, %v6587
        %v6596 = vadd.f32 %v6557, %v6587
        %v6597 = vadd.f32 %v6558, %v6587
        %v6598 = vadd.f32 %v6559, %v6587
        %v6599 = vadd.f32 %v6560, %v6587
        %v6600 = vadd.f32 %v6561, %v6587
        %v6601 = vadd.f32 %v6562, %v6587
        %v6602 = vadd.f32 %v6563, %v6587
        %v6603 = vadd.f32 %v6564, %v6587
        %v6604 = vadd.f32 %v6565, %v6587
        %v6605 = vadd.f32 %v6566, %v6587
        %v6606 = vadd.f32 %v6567, %v6587
        %v6607 = vadd.f32 %v6568, %v6587
        %v6608 = vadd.f32 %v6569, %v6587
        %v6609 = vadd.f32 %v6570, %v6587
        %v6610 = vadd.f32 %v6571, %v6587
        %v6611 = vadd.f32 %v6572, %v6587
        %v6612 = vadd.f32 %v6573, %v6587
        %v6613 = vadd.f32 %v6574, %v6587
        %v6614 = vadd.f32 %v6575, %v6587
        %v6615 = vadd.f32 %v6576, %v6587
        %v6616 = vadd.f32 %v6577, %v6587
        %v6617 = vadd.f32 %v6578, %v6587
        %v6618 = vadd.f32 %v6579, %v6587
        %v6619 = vadd.f32 %v6580, %v6587
        %v6620 = vadd.f32 %v6581, %v6587
        %v6621 = vld [vmem:[%s784] sm:$0x1]
        %v6622 = vld [vmem:[%s669] sm:$0x1]
        %6623 = vadd.xlane.f32.xlu0 %v6589
        %v6624 = vpop.xlane.xlu0 %6623
        %6625 = vadd.xlane.f32.xlu0 %v6590
        %v6626 = vpop.xlane.xlu0 %6625
        %6627 = vadd.xlane.f32.xlu0 %v6591
        %v6628 = vpop.xlane.xlu0 %6627
        %6629 = vadd.xlane.f32.xlu0 %v6592
        %v6630 = vpop.xlane.xlu0 %6629
        %6631 = vadd.xlane.f32.xlu0 %v6593
        %v6632 = vpop.xlane.xlu0 %6631
        %6633 = vadd.xlane.f32.xlu0 %v6594
        %v6634 = vpop.xlane.xlu0 %6633
        %6635 = vadd.xlane.f32.xlu0 %v6595
        %v6636 = vpop.xlane.xlu0 %6635
        %6637 = vadd.xlane.f32.xlu0 %v6596
        %v6638 = vpop.xlane.xlu0 %6637
        %6639 = vadd.xlane.f32.xlu0 %v6597
        %v6640 = vpop.xlane.xlu0 %6639
        %6641 = vadd.xlane.f32.xlu0 %v6598
        %v6642 = vpop.xlane.xlu0 %6641
        %6643 = vadd.xlane.f32.xlu0 %v6599
        %v6644 = vpop.xlane.xlu0 %6643
        %6645 = vadd.xlane.f32.xlu0 %v6600
        %v6646 = vpop.xlane.xlu0 %6645
        %6647 = vadd.xlane.f32.xlu0 %v6601
        %v6648 = vpop.xlane.xlu0 %6647
        %6649 = vadd.xlane.f32.xlu0 %v6602
        %v6650 = vpop.xlane.xlu0 %6649
        %6651 = vadd.xlane.f32.xlu0 %v6603
        %v6652 = vpop.xlane.xlu0 %6651
        %6653 = vadd.xlane.f32.xlu0 %v6604
        %v6654 = vpop.xlane.xlu0 %6653
        %6655 = vadd.xlane.f32.xlu0 %v6605
        %v6656 = vpop.xlane.xlu0 %6655
        %6657 = vadd.xlane.f32.xlu0 %v6606
        %v6658 = vpop.xlane.xlu0 %6657
        %6659 = vadd.xlane.f32.xlu0 %v6607
        %v6660 = vpop.xlane.xlu0 %6659
        %6661 = vadd.xlane.f32.xlu0 %v6608
        %v6662 = vpop.xlane.xlu0 %6661
        %6663 = vadd.xlane.f32.xlu0 %v6609
        %v6664 = vpop.xlane.xlu0 %6663
        %6665 = vadd.xlane.f32.xlu0 %v6610
        %v6666 = vpop.xlane.xlu0 %6665
        %6667 = vadd.xlane.f32.xlu0 %v6611
        %v6668 = vpop.xlane.xlu0 %6667
        %6669 = vadd.xlane.f32.xlu0 %v6612
        %v6670 = vpop.xlane.xlu0 %6669
        %6671 = vadd.xlane.f32.xlu0 %v6613
        %v6672 = vpop.xlane.xlu0 %6671
        %6673 = vadd.xlane.f32.xlu0 %v6614
        %v6674 = vpop.xlane.xlu0 %6673
        %6675 = vadd.xlane.f32.xlu0 %v6615
        %v6676 = vpop.xlane.xlu0 %6675
        %6677 = vadd.xlane.f32.xlu0 %v6616
        %v6678 = vpop.xlane.xlu0 %6677
        %6679 = vadd.xlane.f32.xlu0 %v6617
        %v6680 = vpop.xlane.xlu0 %6679
        %6681 = vadd.xlane.f32.xlu0 %v6618
        %v6682 = vpop.xlane.xlu0 %6681
        %6683 = vadd.xlane.f32.xlu0 %v6619
        %v6684 = vpop.xlane.xlu0 %6683
        %6685 = vadd.xlane.f32.xlu0 %v6620
        %v6686 = vpop.xlane.xlu0 %6685
        %v6687 = vmul.f32 %v6624, %v959
        %v6688 = vmul.f32 %v6626, %v959
        %v6689 = vmul.f32 %v6628, %v959
        %v6690 = vmul.f32 %v6630, %v959
        %v6691 = vmul.f32 %v6632, %v959
        %v6692 = vmul.f32 %v6634, %v959
        %v6693 = vmul.f32 %v6636, %v959
        %v6694 = vmul.f32 %v6638, %v959
        %v6695 = vmul.f32 %v6640, %v959
        %v6696 = vmul.f32 %v6642, %v959
        %v6697 = vmul.f32 %v6644, %v959
        %v6698 = vmul.f32 %v6646, %v959
        %v6699 = vmul.f32 %v6648, %v959
        %v6700 = vmul.f32 %v6650, %v959
        %v6701 = vmul.f32 %v6652, %v959
        %v6702 = vmul.f32 %v6654, %v959
        %v6703 = vmul.f32 %v6656, %v959
        %v6704 = vmul.f32 %v6658, %v959
        %v6705 = vmul.f32 %v6660, %v959
        %v6706 = vmul.f32 %v6662, %v959
        %v6707 = vmul.f32 %v6664, %v959
        %v6708 = vmul.f32 %v6666, %v959
        %v6709 = vmul.f32 %v6668, %v959
        %v6710 = vmul.f32 %v6670, %v959
        %v6711 = vmul.f32 %v6672, %v959
        %v6712 = vmul.f32 %v6674, %v959
        %v6713 = vmul.f32 %v6676, %v959
        %v6714 = vmul.f32 %v6678, %v959
        %v6715 = vmul.f32 %v6680, %v959
        %v6716 = vmul.f32 %v6682, %v959
        %v6717 = vmul.f32 %v6684, %v959
        %v6718 = vmul.f32 %v6686, %v959
        %v6719 = vsub.f32 %v6589, %v6687
        %v6720 = vsub.f32 %v6590, %v6688
        %v6721 = vsub.f32 %v6591, %v6689
        %v6722 = vsub.f32 %v6592, %v6690
        %v6723 = vsub.f32 %v6593, %v6691
        %v6724 = vsub.f32 %v6594, %v6692
        %v6725 = vsub.f32 %v6595, %v6693
        %v6726 = vsub.f32 %v6596, %v6694
        %v6727 = vsub.f32 %v6597, %v6695
        %v6728 = vsub.f32 %v6598, %v6696
        %v6729 = vsub.f32 %v6599, %v6697
        %v6730 = vsub.f32 %v6600, %v6698
        %v6731 = vsub.f32 %v6601, %v6699
        %v6732 = vsub.f32 %v6602, %v6700
        %v6733 = vsub.f32 %v6603, %v6701
        %v6734 = vsub.f32 %v6604, %v6702
        %v6735 = vsub.f32 %v6605, %v6703
        %v6736 = vsub.f32 %v6606, %v6704
        %v6737 = vsub.f32 %v6607, %v6705
        %v6738 = vsub.f32 %v6608, %v6706
        %v6739 = vsub.f32 %v6609, %v6707
        %v6740 = vsub.f32 %v6610, %v6708
        %v6741 = vsub.f32 %v6611, %v6709
        %v6742 = vsub.f32 %v6612, %v6710
        %v6743 = vsub.f32 %v6613, %v6711
        %v6744 = vsub.f32 %v6614, %v6712
        %v6745 = vsub.f32 %v6615, %v6713
        %v6746 = vsub.f32 %v6616, %v6714
        %v6747 = vsub.f32 %v6617, %v6715
        %v6748 = vsub.f32 %v6618, %v6716
        %v6749 = vsub.f32 %v6619, %v6717
        %v6750 = vsub.f32 %v6620, %v6718
        %v6751 = vmul.f32 %v6719, %v6719
        %v6752 = vmul.f32 %v6720, %v6720
        %v6753 = vmul.f32 %v6721, %v6721
        %v6754 = vmul.f32 %v6722, %v6722
        %v6755 = vmul.f32 %v6723, %v6723
        %v6756 = vmul.f32 %v6724, %v6724
        %v6757 = vmul.f32 %v6725, %v6725
        %v6758 = vmul.f32 %v6726, %v6726
        %v6759 = vmul.f32 %v6727, %v6727
        %v6760 = vmul.f32 %v6728, %v6728
        %v6761 = vmul.f32 %v6729, %v6729
        %v6762 = vmul.f32 %v6730, %v6730
        %v6763 = vmul.f32 %v6731, %v6731
        %v6764 = vmul.f32 %v6732, %v6732
        %v6765 = vmul.f32 %v6733, %v6733
        %v6766 = vmul.f32 %v6734, %v6734
        %v6767 = vmul.f32 %v6735, %v6735
        %v6768 = vmul.f32 %v6736, %v6736
        %v6769 = vmul.f32 %v6737, %v6737
        %v6770 = vmul.f32 %v6738, %v6738
        %v6771 = vmul.f32 %v6739, %v6739
        %v6772 = vmul.f32 %v6740, %v6740
        %v6773 = vmul.f32 %v6741, %v6741
        %v6774 = vmul.f32 %v6742, %v6742
        %v6775 = vmul.f32 %v6743, %v6743
        %v6776 = vmul.f32 %v6744, %v6744
        %v6777 = vmul.f32 %v6745, %v6745
        %v6778 = vmul.f32 %v6746, %v6746
        %v6779 = vmul.f32 %v6747, %v6747
        %v6780 = vmul.f32 %v6748, %v6748
        %v6781 = vmul.f32 %v6749, %v6749
        %v6782 = vmul.f32 %v6750, %v6750
        %6783 = vadd.xlane.f32.xlu0 %v6751
        %v6784 = vpop.xlane.xlu0 %6783
        %6785 = vadd.xlane.f32.xlu0 %v6752
        %v6786 = vpop.xlane.xlu0 %6785
        %6787 = vadd.xlane.f32.xlu0 %v6753
        %v6788 = vpop.xlane.xlu0 %6787
        %6789 = vadd.xlane.f32.xlu0 %v6754
        %v6790 = vpop.xlane.xlu0 %6789
        %6791 = vadd.xlane.f32.xlu0 %v6755
        %v6792 = vpop.xlane.xlu0 %6791
        %6793 = vadd.xlane.f32.xlu0 %v6756
        %v6794 = vpop.xlane.xlu0 %6793
        %6795 = vadd.xlane.f32.xlu0 %v6757
        %v6796 = vpop.xlane.xlu0 %6795
        %6797 = vadd.xlane.f32.xlu0 %v6758
        %v6798 = vpop.xlane.xlu0 %6797
        %6799 = vadd.xlane.f32.xlu0 %v6759
        %v6800 = vpop.xlane.xlu0 %6799
        %6801 = vadd.xlane.f32.xlu0 %v6760
        %v6802 = vpop.xlane.xlu0 %6801
        %6803 = vadd.xlane.f32.xlu0 %v6761
        %v6804 = vpop.xlane.xlu0 %6803
        %6805 = vadd.xlane.f32.xlu0 %v6762
        %v6806 = vpop.xlane.xlu0 %6805
        %6807 = vadd.xlane.f32.xlu0 %v6763
        %v6808 = vpop.xlane.xlu0 %6807
        %6809 = vadd.xlane.f32.xlu0 %v6764
        %v6810 = vpop.xlane.xlu0 %6809
        %6811 = vadd.xlane.f32.xlu0 %v6765
        %v6812 = vpop.xlane.xlu0 %6811
        %6813 = vadd.xlane.f32.xlu0 %v6766
        %v6814 = vpop.xlane.xlu0 %6813
        %6815 = vadd.xlane.f32.xlu0 %v6767
        %v6816 = vpop.xlane.xlu0 %6815
        %6817 = vadd.xlane.f32.xlu0 %v6768
        %v6818 = vpop.xlane.xlu0 %6817
        %6819 = vadd.xlane.f32.xlu0 %v6769
        %v6820 = vpop.xlane.xlu0 %6819
        %6821 = vadd.xlane.f32.xlu0 %v6770
        %v6822 = vpop.xlane.xlu0 %6821
        %6823 = vadd.xlane.f32.xlu0 %v6771
        %v6824 = vpop.xlane.xlu0 %6823
        %6825 = vadd.xlane.f32.xlu0 %v6772
        %v6826 = vpop.xlane.xlu0 %6825
        %6827 = vadd.xlane.f32.xlu0 %v6773
        %v6828 = vpop.xlane.xlu0 %6827
        %6829 = vadd.xlane.f32.xlu0 %v6774
        %v6830 = vpop.xlane.xlu0 %6829
        %6831 = vadd.xlane.f32.xlu0 %v6775
        %v6832 = vpop.xlane.xlu0 %6831
        %6833 = vadd.xlane.f32.xlu0 %v6776
        %v6834 = vpop.xlane.xlu0 %6833
        %6835 = vadd.xlane.f32.xlu0 %v6777
        %v6836 = vpop.xlane.xlu0 %6835
        %6837 = vadd.xlane.f32.xlu0 %v6778
        %v6838 = vpop.xlane.xlu0 %6837
        %6839 = vadd.xlane.f32.xlu0 %v6779
        %v6840 = vpop.xlane.xlu0 %6839
        %6841 = vadd.xlane.f32.xlu0 %v6780
        %v6842 = vpop.xlane.xlu0 %6841
        %6843 = vadd.xlane.f32.xlu0 %v6781
        %v6844 = vpop.xlane.xlu0 %6843
        %6845 = vadd.xlane.f32.xlu0 %v6782
        %v6846 = vpop.xlane.xlu0 %6845
        %v6847 = vmul.f32 %v6784, %v959
        %v6848 = vmul.f32 %v6786, %v959
        %v6849 = vmul.f32 %v6788, %v959
        %v6850 = vmul.f32 %v6790, %v959
        %v6851 = vmul.f32 %v6792, %v959
        %v6852 = vmul.f32 %v6794, %v959
        %v6853 = vmul.f32 %v6796, %v959
        %v6854 = vmul.f32 %v6798, %v959
        %v6855 = vmul.f32 %v6800, %v959
        %v6856 = vmul.f32 %v6802, %v959
        %v6857 = vmul.f32 %v6804, %v959
        %v6858 = vmul.f32 %v6806, %v959
        %v6859 = vmul.f32 %v6808, %v959
        %v6860 = vmul.f32 %v6810, %v959
        %v6861 = vmul.f32 %v6812, %v959
        %v6862 = vmul.f32 %v6814, %v959
        %v6863 = vmul.f32 %v6816, %v959
        %v6864 = vmul.f32 %v6818, %v959
        %v6865 = vmul.f32 %v6820, %v959
        %v6866 = vmul.f32 %v6822, %v959
        %v6867 = vmul.f32 %v6824, %v959
        %v6868 = vmul.f32 %v6826, %v959
        %v6869 = vmul.f32 %v6828, %v959
        %v6870 = vmul.f32 %v6830, %v959
        %v6871 = vmul.f32 %v6832, %v959
        %v6872 = vmul.f32 %v6834, %v959
        %v6873 = vmul.f32 %v6836, %v959
        %v6874 = vmul.f32 %v6838, %v959
        %v6875 = vmul.f32 %v6840, %v959
        %v6876 = vmul.f32 %v6842, %v959
        %v6877 = vmul.f32 %v6844, %v959
        %v6878 = vmul.f32 %v6846, %v959
        %v6879 = vadd.f32 %v6847, 1e-05
        %v6880 = vadd.f32 %v6848, 1e-05
        %v6881 = vadd.f32 %v6849, 1e-05
        %v6882 = vadd.f32 %v6850, 1e-05
        %v6883 = vadd.f32 %v6851, 1e-05
        %v6884 = vadd.f32 %v6852, 1e-05
        %v6885 = vadd.f32 %v6853, 1e-05
        %v6886 = vadd.f32 %v6854, 1e-05
        %v6887 = vadd.f32 %v6855, 1e-05
        %v6888 = vadd.f32 %v6856, 1e-05
        %v6889 = vadd.f32 %v6857, 1e-05
        %v6890 = vadd.f32 %v6858, 1e-05
        %v6891 = vadd.f32 %v6859, 1e-05
        %v6892 = vadd.f32 %v6860, 1e-05
        %v6893 = vadd.f32 %v6861, 1e-05
        %v6894 = vadd.f32 %v6862, 1e-05
        %v6895 = vadd.f32 %v6863, 1e-05
        %v6896 = vadd.f32 %v6864, 1e-05
        %v6897 = vadd.f32 %v6865, 1e-05
        %v6898 = vadd.f32 %v6866, 1e-05
        %v6899 = vadd.f32 %v6867, 1e-05
        %v6900 = vadd.f32 %v6868, 1e-05
        %v6901 = vadd.f32 %v6869, 1e-05
        %v6902 = vadd.f32 %v6870, 1e-05
        %v6903 = vadd.f32 %v6871, 1e-05
        %v6904 = vadd.f32 %v6872, 1e-05
        %v6905 = vadd.f32 %v6873, 1e-05
        %v6906 = vadd.f32 %v6874, 1e-05
        %v6907 = vadd.f32 %v6875, 1e-05
        %v6908 = vadd.f32 %v6876, 1e-05
        %v6909 = vadd.f32 %v6877, 1e-05
        %v6910 = vadd.f32 %v6878, 1e-05
        %v6911 = vrsqrt.pop %v6879
        %v6912 = vrsqrt.pop %v6880
        %v6913 = vrsqrt.pop %v6881
        %v6914 = vrsqrt.pop %v6882
        %v6915 = vrsqrt.pop %v6883
        %v6916 = vrsqrt.pop %v6884
        %v6917 = vrsqrt.pop %v6885
        %v6918 = vrsqrt.pop %v6886
        %v6919 = vrsqrt.pop %v6887
        %v6920 = vrsqrt.pop %v6888
        %v6921 = vrsqrt.pop %v6889
        %v6922 = vrsqrt.pop %v6890
        %v6923 = vrsqrt.pop %v6891
        %v6924 = vrsqrt.pop %v6892
        %v6925 = vrsqrt.pop %v6893
        %v6926 = vrsqrt.pop %v6894
        %v6927 = vrsqrt.pop %v6895
        %v6928 = vrsqrt.pop %v6896
        %v6929 = vrsqrt.pop %v6897
        %v6930 = vrsqrt.pop %v6898
        %v6931 = vrsqrt.pop %v6899
        %v6932 = vrsqrt.pop %v6900
        %v6933 = vrsqrt.pop %v6901
        %v6934 = vrsqrt.pop %v6902
        %v6935 = vrsqrt.pop %v6903
        %v6936 = vrsqrt.pop %v6904
        %v6937 = vrsqrt.pop %v6905
        %v6938 = vrsqrt.pop %v6906
        %v6939 = vrsqrt.pop %v6907
        %v6940 = vrsqrt.pop %v6908
        %v6941 = vrsqrt.pop %v6909
        %v6942 = vrsqrt.pop %v6910
        %v6943 = vmul.f32 %v6719, %v6911
        %v6944 = vmul.f32 %v6720, %v6912
        %v6945 = vmul.f32 %v6721, %v6913
        %v6946 = vmul.f32 %v6722, %v6914
        %v6947 = vmul.f32 %v6723, %v6915
        %v6948 = vmul.f32 %v6724, %v6916
        %v6949 = vmul.f32 %v6725, %v6917
        %v6950 = vmul.f32 %v6726, %v6918
        %v6951 = vmul.f32 %v6727, %v6919
        %v6952 = vmul.f32 %v6728, %v6920
        %v6953 = vmul.f32 %v6729, %v6921
        %v6954 = vmul.f32 %v6730, %v6922
        %v6955 = vmul.f32 %v6731, %v6923
        %v6956 = vmul.f32 %v6732, %v6924
        %v6957 = vmul.f32 %v6733, %v6925
        %v6958 = vmul.f32 %v6734, %v6926
        %v6959 = vmul.f32 %v6735, %v6927
        %v6960 = vmul.f32 %v6736, %v6928
        %v6961 = vmul.f32 %v6737, %v6929
        %v6962 = vmul.f32 %v6738, %v6930
        %v6963 = vmul.f32 %v6739, %v6931
        %v6964 = vmul.f32 %v6740, %v6932
        %v6965 = vmul.f32 %v6741, %v6933
        %v6966 = vmul.f32 %v6742, %v6934
        %v6967 = vmul.f32 %v6743, %v6935
        %v6968 = vmul.f32 %v6744, %v6936
        %v6969 = vmul.f32 %v6745, %v6937
        %v6970 = vmul.f32 %v6746, %v6938
        %v6971 = vmul.f32 %v6747, %v6939
        %v6972 = vmul.f32 %v6748, %v6940
        %v6973 = vmul.f32 %v6749, %v6941
        %v6974 = vmul.f32 %v6750, %v6942
        %v6976 = vlaneseq
        %v6977 = vshrl.u32 %v6976, 7
        %v6978 = vsub.s32 0, %v6977
        %v6979 = vrot.slane %v6621, %v6978
        %v6981 = vmul.f32 %v6943, %v6979
        %v6982 = vmul.f32 %v6944, %v6979
        %v6983 = vmul.f32 %v6945, %v6979
        %v6984 = vmul.f32 %v6946, %v6979
        %v6985 = vmul.f32 %v6947, %v6979
        %v6986 = vmul.f32 %v6948, %v6979
        %v6987 = vmul.f32 %v6949, %v6979
        %v6988 = vmul.f32 %v6950, %v6979
        %v6989 = vmul.f32 %v6951, %v6979
        %v6990 = vmul.f32 %v6952, %v6979
        %v6991 = vmul.f32 %v6953, %v6979
        %v6992 = vmul.f32 %v6954, %v6979
        %v6993 = vmul.f32 %v6955, %v6979
        %v6994 = vmul.f32 %v6956, %v6979
        %v6995 = vmul.f32 %v6957, %v6979
        %v6996 = vmul.f32 %v6958, %v6979
        %v6997 = vmul.f32 %v6959, %v6979
        %v6998 = vmul.f32 %v6960, %v6979
        %v6999 = vmul.f32 %v6961, %v6979
        %v7000 = vmul.f32 %v6962, %v6979
        %v7001 = vmul.f32 %v6963, %v6979
        %v7002 = vmul.f32 %v6964, %v6979
        %v7003 = vmul.f32 %v6965, %v6979
        %v7004 = vmul.f32 %v6966, %v6979
        %v7005 = vmul.f32 %v6967, %v6979
        %v7006 = vmul.f32 %v6968, %v6979
        %v7007 = vmul.f32 %v6969, %v6979
        %v7008 = vmul.f32 %v6970, %v6979
        %v7009 = vmul.f32 %v6971, %v6979
        %v7010 = vmul.f32 %v6972, %v6979
        %v7011 = vmul.f32 %v6973, %v6979
        %v7012 = vmul.f32 %v6974, %v6979
        %v7014 = vlaneseq
        %v7015 = vshrl.u32 %v7014, 7
        %v7016 = vsub.s32 0, %v7015
        %v7017 = vrot.slane %v6622, %v7016
        %v7019 = vadd.f32 %v6981, %v7017
        %v7020 = vadd.f32 %v6982, %v7017
        %v7021 = vadd.f32 %v6983, %v7017
        %v7022 = vadd.f32 %v6984, %v7017
        %v7023 = vadd.f32 %v6985, %v7017
        %v7024 = vadd.f32 %v6986, %v7017
        %v7025 = vadd.f32 %v6987, %v7017
        %v7026 = vadd.f32 %v6988, %v7017
        %v7027 = vadd.f32 %v6989, %v7017
        %v7028 = vadd.f32 %v6990, %v7017
        %v7029 = vadd.f32 %v6991, %v7017
        %v7030 = vadd.f32 %v6992, %v7017
        %v7031 = vadd.f32 %v6993, %v7017
        %v7032 = vadd.f32 %v6994, %v7017
        %v7033 = vadd.f32 %v6995, %v7017
        %v7034 = vadd.f32 %v6996, %v7017
        %v7035 = vadd.f32 %v6997, %v7017
        %v7036 = vadd.f32 %v6998, %v7017
        %v7037 = vadd.f32 %v6999, %v7017
        %v7038 = vadd.f32 %v7000, %v7017
        %v7039 = vadd.f32 %v7001, %v7017
        %v7040 = vadd.f32 %v7002, %v7017
        %v7041 = vadd.f32 %v7003, %v7017
        %v7042 = vadd.f32 %v7004, %v7017
        %v7043 = vadd.f32 %v7005, %v7017
        %v7044 = vadd.f32 %v7006, %v7017
        %v7045 = vadd.f32 %v7007, %v7017
        %v7046 = vadd.f32 %v7008, %v7017
        %v7047 = vadd.f32 %v7009, %v7017
        %v7048 = vadd.f32 %v7010, %v7017
        %v7049 = vadd.f32 %v7011, %v7017
        %v7050 = vadd.f32 %v7012, %v7017
        %v7051 = vpack.c.bf16 %v7020, %v7019
        %v7052 = vpack.c.bf16 %v7022, %v7021
        %v7053 = vpack.c.bf16 %v7024, %v7023
        %v7054 = vpack.c.bf16 %v7026, %v7025
        %v7055 = vpack.c.bf16 %v7028, %v7027
        %v7056 = vpack.c.bf16 %v7030, %v7029
        %v7057 = vpack.c.bf16 %v7032, %v7031
        %v7058 = vpack.c.bf16 %v7034, %v7033
        %v7059 = vpack.c.bf16 %v7036, %v7035
        %v7060 = vpack.c.bf16 %v7038, %v7037
        %v7061 = vpack.c.bf16 %v7040, %v7039
        %v7062 = vpack.c.bf16 %v7042, %v7041
        %v7063 = vpack.c.bf16 %v7044, %v7043
        %v7064 = vpack.c.bf16 %v7046, %v7045
        %v7065 = vpack.c.bf16 %v7048, %v7047
        %v7066 = vpack.c.bf16 %v7050, %v7049
        %v7067 = vld [vmem:[%s678] sm:$0xff]
        %v7068 = vld [vmem:[%s678 + $0x8] sm:$0xff]
        %v7069 = vld [vmem:[%s678 + $0x10] sm:$0xff]
        %v7070 = vld [vmem:[%s678 + $0x18] sm:$0xff]
        %v7071 = vld [vmem:[%s678 + $0x20] sm:$0xff]
        %v7072 = vld [vmem:[%s678 + $0x28] sm:$0xff]
        %v7073 = vld [vmem:[%s678 + $0x30] sm:$0xff]
        %v7074 = vld [vmem:[%s678 + $0x38] sm:$0xff]
        %v7075 = vld [vmem:[%s678 + $0x40] sm:$0xff]
        %v7076 = vld [vmem:[%s678 + $0x48] sm:$0xff]
        %v7077 = vld [vmem:[%s678 + $0x50] sm:$0xff]
        %v7078 = vld [vmem:[%s678 + $0x58] sm:$0xff]
        %v7079 = vld [vmem:[%s678 + $0x60] sm:$0xff]
        %v7080 = vld [vmem:[%s678 + $0x68] sm:$0xff]
        %v7081 = vld [vmem:[%s678 + $0x70] sm:$0xff]
        %v7082 = vld [vmem:[%s678 + $0x78] sm:$0xff]
        %v7083 = vld [vmem:[%s678 + $0x80] sm:$0xff]
        %v7084 = vld [vmem:[%s678 + $0x88] sm:$0xff]
        %v7085 = vld [vmem:[%s678 + $0x90] sm:$0xff]
        %v7086 = vld [vmem:[%s678 + $0x98] sm:$0xff]
        %v7087 = vld [vmem:[%s678 + $0xa0] sm:$0xff]
        %v7088 = vld [vmem:[%s678 + $0xa8] sm:$0xff]
        %v7089 = vld [vmem:[%s678 + $0xb0] sm:$0xff]
        %v7090 = vld [vmem:[%s678 + $0xb8] sm:$0xff]
        %v7091 = vld [vmem:[%s678 + $0xc0] sm:$0xff]
        %v7092 = vld [vmem:[%s678 + $0xc8] sm:$0xff]
        %v7093 = vld [vmem:[%s678 + $0xd0] sm:$0xff]
        %v7094 = vld [vmem:[%s678 + $0xd8] sm:$0xff]
        %v7095 = vld [vmem:[%s678 + $0xe0] sm:$0xff]
        %v7096 = vld [vmem:[%s678 + $0xe8] sm:$0xff]
        %v7097 = vld [vmem:[%s678 + $0xf0] sm:$0xff]
        %v7098 = vld [vmem:[%s678 + $0xf8] sm:$0xff]
        %v7099 = vld [vmem:[%s788] sm:$0xf]
        %v7101 = vlaneseq
        %v7102 = vshrl.u32 %v7101, 7
        %v7103 = vsub.s32 0, %v7102
        %v7104 = vrot.slane %v7099, %v7103
        %v7105 = vlaneseq
        %v7106 = vshrl.u32 %v7105, 7
        %v7107 = vsub.s32 1, %v7106
        %v7108 = vrot.slane %v7099, %v7107
        %v7109 = vlaneseq
        %v7110 = vshrl.u32 %v7109, 7
        %v7111 = vsub.s32 2, %v7110
        %v7112 = vrot.slane %v7099, %v7111
        %v7113 = vlaneseq
        %v7114 = vshrl.u32 %v7113, 7
        %v7115 = vsub.s32 3, %v7114
        %v7116 = vrot.slane %v7099, %v7115
        %v7153 = vunpack.c.l.b16 %v7067
        %v7154 = vunpack.c.h.b16 %v7067
        %v7155 = vunpack.c.l.b16 %v7068
        %v7156 = vunpack.c.h.b16 %v7068
        %v7157 = vunpack.c.l.b16 %v7069
        %v7158 = vunpack.c.h.b16 %v7069
        %v7159 = vunpack.c.l.b16 %v7070
        %v7160 = vunpack.c.h.b16 %v7070
        %v7161 = vunpack.c.l.b16 %v7071
        %v7162 = vunpack.c.h.b16 %v7071
        %v7163 = vunpack.c.l.b16 %v7072
        %v7164 = vunpack.c.h.b16 %v7072
        %v7165 = vunpack.c.l.b16 %v7073
        %v7166 = vunpack.c.h.b16 %v7073
        %v7167 = vunpack.c.l.b16 %v7074
        %v7168 = vunpack.c.h.b16 %v7074
        %v7169 = vunpack.c.l.b16 %v7075
        %v7170 = vunpack.c.h.b16 %v7075
        %v7171 = vunpack.c.l.b16 %v7076
        %v7172 = vunpack.c.h.b16 %v7076
        %v7173 = vunpack.c.l.b16 %v7077
        %v7174 = vunpack.c.h.b16 %v7077
        %v7175 = vunpack.c.l.b16 %v7078
        %v7176 = vunpack.c.h.b16 %v7078
        %v7177 = vunpack.c.l.b16 %v7079
        %v7178 = vunpack.c.h.b16 %v7079
        %v7179 = vunpack.c.l.b16 %v7080
        %v7180 = vunpack.c.h.b16 %v7080
        %v7181 = vunpack.c.l.b16 %v7081
        %v7182 = vunpack.c.h.b16 %v7081
        %v7183 = vunpack.c.l.b16 %v7082
        %v7184 = vunpack.c.h.b16 %v7082
        %v7185 = vunpack.c.l.b16 %v7083
        %v7186 = vunpack.c.h.b16 %v7083
        %v7187 = vunpack.c.l.b16 %v7084
        %v7188 = vunpack.c.h.b16 %v7084
        %v7189 = vunpack.c.l.b16 %v7085
        %v7190 = vunpack.c.h.b16 %v7085
        %v7191 = vunpack.c.l.b16 %v7086
        %v7192 = vunpack.c.h.b16 %v7086
        %v7193 = vunpack.c.l.b16 %v7087
        %v7194 = vunpack.c.h.b16 %v7087
        %v7195 = vunpack.c.l.b16 %v7088
        %v7196 = vunpack.c.h.b16 %v7088
        %v7197 = vunpack.c.l.b16 %v7089
        %v7198 = vunpack.c.h.b16 %v7089
        %v7199 = vunpack.c.l.b16 %v7090
        %v7200 = vunpack.c.h.b16 %v7090
        %v7201 = vunpack.c.l.b16 %v7091
        %v7202 = vunpack.c.h.b16 %v7091
        %v7203 = vunpack.c.l.b16 %v7092
        %v7204 = vunpack.c.h.b16 %v7092
        %v7205 = vunpack.c.l.b16 %v7093
        %v7206 = vunpack.c.h.b16 %v7093
        %v7207 = vunpack.c.l.b16 %v7094
        %v7208 = vunpack.c.h.b16 %v7094
        %v7209 = vunpack.c.l.b16 %v7095
        %v7210 = vunpack.c.h.b16 %v7095
        %v7211 = vunpack.c.l.b16 %v7096
        %v7212 = vunpack.c.h.b16 %v7096
        %v7213 = vunpack.c.l.b16 %v7097
        %v7214 = vunpack.c.h.b16 %v7097
        %v7215 = vunpack.c.l.b16 %v7098
        %v7216 = vunpack.c.h.b16 %v7098
        %v7217 = vpack.c.b16 %v7157, %v7153
        %v7218 = vpack.c.b16 %v7158, %v7154
        %v7219 = vpack.c.b16 %v7159, %v7155
        %v7220 = vpack.c.b16 %v7160, %v7156
        %v7221 = vpack.c.b16 %v7165, %v7161
        %v7222 = vpack.c.b16 %v7166, %v7162
        %v7223 = vpack.c.b16 %v7167, %v7163
        %v7224 = vpack.c.b16 %v7168, %v7164
        %v7225 = vpack.c.b16 %v7173, %v7169
        %v7226 = vpack.c.b16 %v7174, %v7170
        %v7227 = vpack.c.b16 %v7175, %v7171
        %v7228 = vpack.c.b16 %v7176, %v7172
        %v7229 = vpack.c.b16 %v7181, %v7177
        %v7230 = vpack.c.b16 %v7182, %v7178
        %v7231 = vpack.c.b16 %v7183, %v7179
        %v7232 = vpack.c.b16 %v7184, %v7180
        %v7233 = vpack.c.b16 %v7189, %v7185
        %v7234 = vpack.c.b16 %v7190, %v7186
        %v7235 = vpack.c.b16 %v7191, %v7187
        %v7236 = vpack.c.b16 %v7192, %v7188
        %v7237 = vpack.c.b16 %v7197, %v7193
        %v7238 = vpack.c.b16 %v7198, %v7194
        %v7239 = vpack.c.b16 %v7199, %v7195
        %v7240 = vpack.c.b16 %v7200, %v7196
        %v7241 = vpack.c.b16 %v7205, %v7201
        %v7242 = vpack.c.b16 %v7206, %v7202
        %v7243 = vpack.c.b16 %v7207, %v7203
        %v7244 = vpack.c.b16 %v7208, %v7204
        %v7245 = vpack.c.b16 %v7213, %v7209
        %v7246 = vpack.c.b16 %v7214, %v7210
        %v7247 = vpack.c.b16 %v7215, %v7211
        %v7248 = vpack.c.b16 %v7216, %v7212
        %7281 = vmatprep.subr.bf16.mxu0 %v7246
        %7282 = vmatpush1.bf16.msra.mxu0 %v7245
        %7283 = vmatprep.subr.bf16.mxu0 %v7242
        %7284 = vmatpush1.bf16.msra.mxu0 %v7241
        %7285 = vmatprep.subr.bf16.mxu0 %v7238
        %7286 = vmatpush1.bf16.msra.mxu0 %v7237
        %7287 = vmatprep.subr.bf16.mxu0 %v7234
        %7288 = vmatpush1.bf16.msra.mxu0 %v7233
        %7289 = vmatprep.subr.bf16.mxu0 %v7230
        %7290 = vmatpush1.bf16.msra.mxu0 %v7229
        %7291 = vmatprep.subr.bf16.mxu0 %v7226
        %7292 = vmatpush1.bf16.msra.mxu0 %v7225
        %7293 = vmatprep.subr.bf16.mxu0 %v7222
        %7294 = vmatpush1.bf16.msra.mxu0 %v7221
        %7295 = vmatprep.subr.bf16.mxu0 %v7218
        %7296 = vmatpush1.bf16.msra.mxu0 %v7217
        %7297 = vmatprep.subr.bf16.mxu0 0
        %7298 = vmatpush2.bf16.msra.mxu0 0
        %7299 = vmatprep.subr.bf16.mxu0 0
        %7300 = vmatpush2.bf16.msra.mxu0 0
        %7301 = vmatprep.subr.bf16.mxu0 0
        %7302 = vmatpush2.bf16.msra.mxu0 0
        %7303 = vmatprep.subr.bf16.mxu0 0
        %7304 = vmatpush2.bf16.msra.mxu0 0
        %7305 = vmatprep.subr.bf16.mxu0 0
        %7306 = vmatpush2.bf16.msra.mxu0 0
        %7307 = vmatprep.subr.bf16.mxu0 0
        %7308 = vmatpush2.bf16.msra.mxu0 0
        %7309 = vmatprep.subr.bf16.mxu0 0
        %7310 = vmatpush2.bf16.msra.mxu0 0
        %7311 = vmatprep.subr.bf16.mxu0 0
        %7312 = vmatpush2.bf16.msra.mxu0 0
        %7313 = vmatprep.mubr.bf16.mxu0 0
        %7314 = vmatmul.mubr.bf16.gmra.mxu0 %v7051
        %v7315 = vpop.f32.mrf.mxu0
        %v7316 = vadd.f32 %v7104, %v7315
        %v7317 = vpop.f32.mrf.mxu0
        %v7318 = vadd.f32 %v7108, %v7317
        %v7319 = vpop.f32.mrf.mxu0
        %v7320 = vadd.f32 %v7104, %v7319
        %v7321 = vpop.f32.mrf.mxu0
        %v7322 = vadd.f32 %v7108, %v7321
        %7323 = vmatprep.mubr.bf16.mxu0 0
        %7324 = vmatmul.mubr.bf16.gmra.mxu0 %v7052
        %v7325 = vpop.f32.mrf.mxu0
        %v7326 = vadd.f32 %v7104, %v7325
        %v7327 = vpop.f32.mrf.mxu0
        %v7328 = vadd.f32 %v7108, %v7327
        %v7329 = vpop.f32.mrf.mxu0
        %v7330 = vadd.f32 %v7104, %v7329
        %v7331 = vpop.f32.mrf.mxu0
        %v7332 = vadd.f32 %v7108, %v7331
        %7333 = vmatprep.mubr.bf16.mxu0 0
        %7334 = vmatmul.mubr.bf16.gmra.mxu0 %v7053
        %v7335 = vpop.f32.mrf.mxu0
        %v7336 = vadd.f32 %v7104, %v7335
        %v7337 = vpop.f32.mrf.mxu0
        %v7338 = vadd.f32 %v7108, %v7337
        %v7339 = vpop.f32.mrf.mxu0
        %v7340 = vadd.f32 %v7104, %v7339
        %v7341 = vpop.f32.mrf.mxu0
        %v7342 = vadd.f32 %v7108, %v7341
        %7343 = vmatprep.mubr.bf16.mxu0 0
        %7344 = vmatmul.mubr.bf16.gmra.mxu0 %v7054
        %v7345 = vpop.f32.mrf.mxu0
        %v7346 = vadd.f32 %v7104, %v7345
        %v7347 = vpop.f32.mrf.mxu0
        %v7348 = vadd.f32 %v7108, %v7347
        %v7349 = vpop.f32.mrf.mxu0
        %v7350 = vadd.f32 %v7104, %v7349
        %v7351 = vpop.f32.mrf.mxu0
        %v7352 = vadd.f32 %v7108, %v7351
        %7353 = vmatprep.mubr.bf16.mxu0 0
        %7354 = vmatmul.mubr.bf16.gmra.mxu0 %v7055
        %v7355 = vpop.f32.mrf.mxu0
        %v7356 = vadd.f32 %v7104, %v7355
        %v7357 = vpop.f32.mrf.mxu0
        %v7358 = vadd.f32 %v7108, %v7357
        %v7359 = vpop.f32.mrf.mxu0
        %v7360 = vadd.f32 %v7104, %v7359
        %v7361 = vpop.f32.mrf.mxu0
        %v7362 = vadd.f32 %v7108, %v7361
        %7363 = vmatprep.mubr.bf16.mxu0 0
        %7364 = vmatmul.mubr.bf16.gmra.mxu0 %v7056
        %v7365 = vpop.f32.mrf.mxu0
        %v7366 = vadd.f32 %v7104, %v7365
        %v7367 = vpop.f32.mrf.mxu0
        %v7368 = vadd.f32 %v7108, %v7367
        %v7369 = vpop.f32.mrf.mxu0
        %v7370 = vadd.f32 %v7104, %v7369
        %v7371 = vpop.f32.mrf.mxu0
        %v7372 = vadd.f32 %v7108, %v7371
        %7373 = vmatprep.mubr.bf16.mxu0 0
        %7374 = vmatmul.mubr.bf16.gmra.mxu0 %v7057
        %v7375 = vpop.f32.mrf.mxu0
        %v7376 = vadd.f32 %v7104, %v7375
        %v7377 = vpop.f32.mrf.mxu0
        %v7378 = vadd.f32 %v7108, %v7377
        %v7379 = vpop.f32.mrf.mxu0
        %v7380 = vadd.f32 %v7104, %v7379
        %v7381 = vpop.f32.mrf.mxu0
        %v7382 = vadd.f32 %v7108, %v7381
        %7383 = vmatprep.mubr.bf16.mxu0 0
        %7384 = vmatmul.mubr.bf16.gmra.mxu0 %v7058
        %v7385 = vpop.f32.mrf.mxu0
        %v7386 = vadd.f32 %v7104, %v7385
        %v7387 = vpop.f32.mrf.mxu0
        %v7388 = vadd.f32 %v7108, %v7387
        %v7389 = vpop.f32.mrf.mxu0
        %v7390 = vadd.f32 %v7104, %v7389
        %v7391 = vpop.f32.mrf.mxu0
        %v7392 = vadd.f32 %v7108, %v7391
        %7393 = vmatprep.mubr.bf16.mxu0 0
        %7394 = vmatmul.mubr.bf16.gmra.mxu0 %v7059
        %v7395 = vpop.f32.mrf.mxu0
        %v7396 = vadd.f32 %v7104, %v7395
        %v7397 = vpop.f32.mrf.mxu0
        %v7398 = vadd.f32 %v7108, %v7397
        %v7399 = vpop.f32.mrf.mxu0
        %v7400 = vadd.f32 %v7104, %v7399
        %v7401 = vpop.f32.mrf.mxu0
        %v7402 = vadd.f32 %v7108, %v7401
        %7403 = vmatprep.mubr.bf16.mxu0 0
        %7404 = vmatmul.mubr.bf16.gmra.mxu0 %v7060
        %v7405 = vpop.f32.mrf.mxu0
        %v7406 = vadd.f32 %v7104, %v7405
        %v7407 = vpop.f32.mrf.mxu0
        %v7408 = vadd.f32 %v7108, %v7407
        %v7409 = vpop.f32.mrf.mxu0
        %v7410 = vadd.f32 %v7104, %v7409
        %v7411 = vpop.f32.mrf.mxu0
        %v7412 = vadd.f32 %v7108, %v7411
        %7413 = vmatprep.mubr.bf16.mxu0 0
        %7414 = vmatmul.mubr.bf16.gmra.mxu0 %v7061
        %v7415 = vpop.f32.mrf.mxu0
        %v7416 = vadd.f32 %v7104, %v7415
        %v7417 = vpop.f32.mrf.mxu0
        %v7418 = vadd.f32 %v7108, %v7417
        %v7419 = vpop.f32.mrf.mxu0
        %v7420 = vadd.f32 %v7104, %v7419
        %v7421 = vpop.f32.mrf.mxu0
        %v7422 = vadd.f32 %v7108, %v7421
        %7423 = vmatprep.mubr.bf16.mxu0 0
        %7424 = vmatmul.mubr.bf16.gmra.mxu0 %v7062
        %v7425 = vpop.f32.mrf.mxu0
        %v7426 = vadd.f32 %v7104, %v7425
        %v7427 = vpop.f32.mrf.mxu0
        %v7428 = vadd.f32 %v7108, %v7427
        %v7429 = vpop.f32.mrf.mxu0
        %v7430 = vadd.f32 %v7104, %v7429
        %v7431 = vpop.f32.mrf.mxu0
        %v7432 = vadd.f32 %v7108, %v7431
        %7433 = vmatprep.mubr.bf16.mxu0 0
        %7434 = vmatmul.mubr.bf16.gmra.mxu0 %v7063
        %v7435 = vpop.f32.mrf.mxu0
        %v7436 = vadd.f32 %v7104, %v7435
        %v7437 = vpop.f32.mrf.mxu0
        %v7438 = vadd.f32 %v7108, %v7437
        %v7439 = vpop.f32.mrf.mxu0
        %v7440 = vadd.f32 %v7104, %v7439
        %v7441 = vpop.f32.mrf.mxu0
        %v7442 = vadd.f32 %v7108, %v7441
        %7443 = vmatprep.mubr.bf16.mxu0 0
        %7444 = vmatmul.mubr.bf16.gmra.mxu0 %v7064
        %v7445 = vpop.f32.mrf.mxu0
        %v7446 = vadd.f32 %v7104, %v7445
        %v7447 = vpop.f32.mrf.mxu0
        %v7448 = vadd.f32 %v7108, %v7447
        %v7449 = vpop.f32.mrf.mxu0
        %v7450 = vadd.f32 %v7104, %v7449
        %v7451 = vpop.f32.mrf.mxu0
        %v7452 = vadd.f32 %v7108, %v7451
        %7453 = vmatprep.mubr.bf16.mxu0 0
        %7454 = vmatmul.mubr.bf16.gmra.mxu0 %v7065
        %v7455 = vpop.f32.mrf.mxu0
        %v7456 = vadd.f32 %v7104, %v7455
        %v7457 = vpop.f32.mrf.mxu0
        %v7458 = vadd.f32 %v7108, %v7457
        %v7459 = vpop.f32.mrf.mxu0
        %v7460 = vadd.f32 %v7104, %v7459
        %v7461 = vpop.f32.mrf.mxu0
        %v7462 = vadd.f32 %v7108, %v7461
        %7463 = vmatprep.mubr.bf16.mxu0 0
        %7464 = vmatmul.mubr.bf16.gmra.mxu0 %v7066
        %v7465 = vpop.f32.mrf.mxu0
        %v7466 = vadd.f32 %v7104, %v7465
        %v7467 = vpop.f32.mrf.mxu0
        %v7468 = vadd.f32 %v7108, %v7467
        %v7469 = vpop.f32.mrf.mxu0
        %v7470 = vadd.f32 %v7104, %v7469
        %v7471 = vpop.f32.mrf.mxu0
        %v7472 = vadd.f32 %v7108, %v7471
        %7473 = vdwg.mxu0
        %7474 = vmatprep.subr.bf16.mxu0 %v7248
        %7475 = vmatpush1.bf16.msra.mxu0 %v7247
        %7476 = vmatprep.subr.bf16.mxu0 %v7244
        %7477 = vmatpush1.bf16.msra.mxu0 %v7243
        %7478 = vmatprep.subr.bf16.mxu0 %v7240
        %7479 = vmatpush1.bf16.msra.mxu0 %v7239
        %7480 = vmatprep.subr.bf16.mxu0 %v7236
        %7481 = vmatpush1.bf16.msra.mxu0 %v7235
        %7482 = vmatprep.subr.bf16.mxu0 %v7232
        %7483 = vmatpush1.bf16.msra.mxu0 %v7231
        %7484 = vmatprep.subr.bf16.mxu0 %v7228
        %7485 = vmatpush1.bf16.msra.mxu0 %v7227
        %7486 = vmatprep.subr.bf16.mxu0 %v7224
        %7487 = vmatpush1.bf16.msra.mxu0 %v7223
        %7488 = vmatprep.subr.bf16.mxu0 %v7220
        %7489 = vmatpush1.bf16.msra.mxu0 %v7219
        %7490 = vmatprep.subr.bf16.mxu0 0
        %7491 = vmatpush2.bf16.msra.mxu0 0
        %7492 = vmatprep.subr.bf16.mxu0 0
        %7493 = vmatpush2.bf16.msra.mxu0 0
        %7494 = vmatprep.subr.bf16.mxu0 0
        %7495 = vmatpush2.bf16.msra.mxu0 0
        %7496 = vmatprep.subr.bf16.mxu0 0
        %7497 = vmatpush2.bf16.msra.mxu0 0
        %7498 = vmatprep.subr.bf16.mxu0 0
        %7499 = vmatpush2.bf16.msra.mxu0 0
        %7500 = vmatprep.subr.bf16.mxu0 0
        %7501 = vmatpush2.bf16.msra.mxu0 0
        %7502 = vmatprep.subr.bf16.mxu0 0
        %7503 = vmatpush2.bf16.msra.mxu0 0
        %7504 = vmatprep.subr.bf16.mxu0 0
        %7505 = vmatpush2.bf16.msra.mxu0 0
        %7506 = vmatprep.mubr.bf16.mxu0 0
        %7507 = vmatmul.mubr.bf16.gmra.mxu0 %v7051
        %v7508 = vpop.f32.mrf.mxu0
        %v7509 = vadd.f32 %v7112, %v7508
        %v7510 = vpop.f32.mrf.mxu0
        %v7511 = vadd.f32 %v7116, %v7510
        %v7512 = vpop.f32.mrf.mxu0
        %v7513 = vadd.f32 %v7112, %v7512
        %v7514 = vpop.f32.mrf.mxu0
        %v7515 = vadd.f32 %v7116, %v7514
        %7516 = vmatprep.mubr.bf16.mxu0 0
        %7517 = vmatmul.mubr.bf16.gmra.mxu0 %v7052
        %v7518 = vpop.f32.mrf.mxu0
        %v7519 = vadd.f32 %v7112, %v7518
        %v7520 = vpop.f32.mrf.mxu0
        %v7521 = vadd.f32 %v7116, %v7520
        %v7522 = vpop.f32.mrf.mxu0
        %v7523 = vadd.f32 %v7112, %v7522
        %v7524 = vpop.f32.mrf.mxu0
        %v7525 = vadd.f32 %v7116, %v7524
        %7526 = vmatprep.mubr.bf16.mxu0 0
        %7527 = vmatmul.mubr.bf16.gmra.mxu0 %v7053
        %v7528 = vpop.f32.mrf.mxu0
        %v7529 = vadd.f32 %v7112, %v7528
        %v7530 = vpop.f32.mrf.mxu0
        %v7531 = vadd.f32 %v7116, %v7530
        %v7532 = vpop.f32.mrf.mxu0
        %v7533 = vadd.f32 %v7112, %v7532
        %v7534 = vpop.f32.mrf.mxu0
        %v7535 = vadd.f32 %v7116, %v7534
        %7536 = vmatprep.mubr.bf16.mxu0 0
        %7537 = vmatmul.mubr.bf16.gmra.mxu0 %v7054
        %v7538 = vpop.f32.mrf.mxu0
        %v7539 = vadd.f32 %v7112, %v7538
        %v7540 = vpop.f32.mrf.mxu0
        %v7541 = vadd.f32 %v7116, %v7540
        %v7542 = vpop.f32.mrf.mxu0
        %v7543 = vadd.f32 %v7112, %v7542
        %v7544 = vpop.f32.mrf.mxu0
        %v7545 = vadd.f32 %v7116, %v7544
        %7546 = vmatprep.mubr.bf16.mxu0 0
        %7547 = vmatmul.mubr.bf16.gmra.mxu0 %v7055
        %v7548 = vpop.f32.mrf.mxu0
        %v7549 = vadd.f32 %v7112, %v7548
        %v7550 = vpop.f32.mrf.mxu0
        %v7551 = vadd.f32 %v7116, %v7550
        %v7552 = vpop.f32.mrf.mxu0
        %v7553 = vadd.f32 %v7112, %v7552
        %v7554 = vpop.f32.mrf.mxu0
        %v7555 = vadd.f32 %v7116, %v7554
        %7556 = vmatprep.mubr.bf16.mxu0 0
        %7557 = vmatmul.mubr.bf16.gmra.mxu0 %v7056
        %v7558 = vpop.f32.mrf.mxu0
        %v7559 = vadd.f32 %v7112, %v7558
        %v7560 = vpop.f32.mrf.mxu0
        %v7561 = vadd.f32 %v7116, %v7560
        %v7562 = vpop.f32.mrf.mxu0
        %v7563 = vadd.f32 %v7112, %v7562
        %v7564 = vpop.f32.mrf.mxu0
        %v7565 = vadd.f32 %v7116, %v7564
        %7566 = vmatprep.mubr.bf16.mxu0 0
        %7567 = vmatmul.mubr.bf16.gmra.mxu0 %v7057
        %v7568 = vpop.f32.mrf.mxu0
        %v7569 = vadd.f32 %v7112, %v7568
        %v7570 = vpop.f32.mrf.mxu0
        %v7571 = vadd.f32 %v7116, %v7570
        %v7572 = vpop.f32.mrf.mxu0
        %v7573 = vadd.f32 %v7112, %v7572
        %v7574 = vpop.f32.mrf.mxu0
        %v7575 = vadd.f32 %v7116, %v7574
        %7576 = vmatprep.mubr.bf16.mxu0 0
        %7577 = vmatmul.mubr.bf16.gmra.mxu0 %v7058
        %v7578 = vpop.f32.mrf.mxu0
        %v7579 = vadd.f32 %v7112, %v7578
        %v7580 = vpop.f32.mrf.mxu0
        %v7581 = vadd.f32 %v7116, %v7580
        %v7582 = vpop.f32.mrf.mxu0
        %v7583 = vadd.f32 %v7112, %v7582
        %v7584 = vpop.f32.mrf.mxu0
        %v7585 = vadd.f32 %v7116, %v7584
        %7586 = vmatprep.mubr.bf16.mxu0 0
        %7587 = vmatmul.mubr.bf16.gmra.mxu0 %v7059
        %v7588 = vpop.f32.mrf.mxu0
        %v7589 = vadd.f32 %v7112, %v7588
        %v7590 = vpop.f32.mrf.mxu0
        %v7591 = vadd.f32 %v7116, %v7590
        %v7592 = vpop.f32.mrf.mxu0
        %v7593 = vadd.f32 %v7112, %v7592
        %v7594 = vpop.f32.mrf.mxu0
        %v7595 = vadd.f32 %v7116, %v7594
        %7596 = vmatprep.mubr.bf16.mxu0 0
        %7597 = vmatmul.mubr.bf16.gmra.mxu0 %v7060
        %v7598 = vpop.f32.mrf.mxu0
        %v7599 = vadd.f32 %v7112, %v7598
        %v7600 = vpop.f32.mrf.mxu0
        %v7601 = vadd.f32 %v7116, %v7600
        %v7602 = vpop.f32.mrf.mxu0
        %v7603 = vadd.f32 %v7112, %v7602
        %v7604 = vpop.f32.mrf.mxu0
        %v7605 = vadd.f32 %v7116, %v7604
        %7606 = vmatprep.mubr.bf16.mxu0 0
        %7607 = vmatmul.mubr.bf16.gmra.mxu0 %v7061
        %v7608 = vpop.f32.mrf.mxu0
        %v7609 = vadd.f32 %v7112, %v7608
        %v7610 = vpop.f32.mrf.mxu0
        %v7611 = vadd.f32 %v7116, %v7610
        %v7612 = vpop.f32.mrf.mxu0
        %v7613 = vadd.f32 %v7112, %v7612
        %v7614 = vpop.f32.mrf.mxu0
        %v7615 = vadd.f32 %v7116, %v7614
        %7616 = vmatprep.mubr.bf16.mxu0 0
        %7617 = vmatmul.mubr.bf16.gmra.mxu0 %v7062
        %v7618 = vpop.f32.mrf.mxu0
        %v7619 = vadd.f32 %v7112, %v7618
        %v7620 = vpop.f32.mrf.mxu0
        %v7621 = vadd.f32 %v7116, %v7620
        %v7622 = vpop.f32.mrf.mxu0
        %v7623 = vadd.f32 %v7112, %v7622
        %v7624 = vpop.f32.mrf.mxu0
        %v7625 = vadd.f32 %v7116, %v7624
        %7626 = vmatprep.mubr.bf16.mxu0 0
        %7627 = vmatmul.mubr.bf16.gmra.mxu0 %v7063
        %v7628 = vpop.f32.mrf.mxu0
        %v7629 = vadd.f32 %v7112, %v7628
        %v7630 = vpop.f32.mrf.mxu0
        %v7631 = vadd.f32 %v7116, %v7630
        %v7632 = vpop.f32.mrf.mxu0
        %v7633 = vadd.f32 %v7112, %v7632
        %v7634 = vpop.f32.mrf.mxu0
        %v7635 = vadd.f32 %v7116, %v7634
        %7636 = vmatprep.mubr.bf16.mxu0 0
        %7637 = vmatmul.mubr.bf16.gmra.mxu0 %v7064
        %v7638 = vpop.f32.mrf.mxu0
        %v7639 = vadd.f32 %v7112, %v7638
        %v7640 = vpop.f32.mrf.mxu0
        %v7641 = vadd.f32 %v7116, %v7640
        %v7642 = vpop.f32.mrf.mxu0
        %v7643 = vadd.f32 %v7112, %v7642
        %v7644 = vpop.f32.mrf.mxu0
        %v7645 = vadd.f32 %v7116, %v7644
        %7646 = vmatprep.mubr.bf16.mxu0 0
        %7647 = vmatmul.mubr.bf16.gmra.mxu0 %v7065
        %v7648 = vpop.f32.mrf.mxu0
        %v7649 = vadd.f32 %v7112, %v7648
        %v7650 = vpop.f32.mrf.mxu0
        %v7651 = vadd.f32 %v7116, %v7650
        %v7652 = vpop.f32.mrf.mxu0
        %v7653 = vadd.f32 %v7112, %v7652
        %v7654 = vpop.f32.mrf.mxu0
        %v7655 = vadd.f32 %v7116, %v7654
        %7656 = vmatprep.mubr.bf16.mxu0 0
        %7657 = vmatmul.mubr.bf16.gmra.mxu0 %v7066
        %v7658 = vpop.f32.mrf.mxu0
        %v7659 = vadd.f32 %v7112, %v7658
        %v7660 = vpop.f32.mrf.mxu0
        %v7661 = vadd.f32 %v7116, %v7660
        %v7662 = vpop.f32.mrf.mxu0
        %v7663 = vadd.f32 %v7112, %v7662
        %v7664 = vpop.f32.mrf.mxu0
        %v7665 = vadd.f32 %v7116, %v7664
        %7666 = vdwg.mxu0
        %v7667 = vmax.f32 %v7316, 0.0
        %v7668 = vmax.f32 %v7318, 0.0
        %v7669 = vmax.f32 %v7509, 0.0
        %v7670 = vmax.f32 %v7511, 0.0
        %v7671 = vmax.f32 %v7320, 0.0
        %v7672 = vmax.f32 %v7322, 0.0
        %v7673 = vmax.f32 %v7513, 0.0
        %v7674 = vmax.f32 %v7515, 0.0
        %v7675 = vmax.f32 %v7326, 0.0
        %v7676 = vmax.f32 %v7328, 0.0
        %v7677 = vmax.f32 %v7519, 0.0
        %v7678 = vmax.f32 %v7521, 0.0
        %v7679 = vmax.f32 %v7330, 0.0
        %v7680 = vmax.f32 %v7332, 0.0
        %v7681 = vmax.f32 %v7523, 0.0
        %v7682 = vmax.f32 %v7525, 0.0
        %v7683 = vmax.f32 %v7336, 0.0
        %v7684 = vmax.f32 %v7338, 0.0
        %v7685 = vmax.f32 %v7529, 0.0
        %v7686 = vmax.f32 %v7531, 0.0
        %v7687 = vmax.f32 %v7340, 0.0
        %v7688 = vmax.f32 %v7342, 0.0
        %v7689 = vmax.f32 %v7533, 0.0
        %v7690 = vmax.f32 %v7535, 0.0
        %v7691 = vmax.f32 %v7346, 0.0
        %v7692 = vmax.f32 %v7348, 0.0
        %v7693 = vmax.f32 %v7539, 0.0
        %v7694 = vmax.f32 %v7541, 0.0
        %v7695 = vmax.f32 %v7350, 0.0
        %v7696 = vmax.f32 %v7352, 0.0
        %v7697 = vmax.f32 %v7543, 0.0
        %v7698 = vmax.f32 %v7545, 0.0
        %v7699 = vmax.f32 %v7356, 0.0
        %v7700 = vmax.f32 %v7358, 0.0
        %v7701 = vmax.f32 %v7549, 0.0
        %v7702 = vmax.f32 %v7551, 0.0
        %v7703 = vmax.f32 %v7360, 0.0
        %v7704 = vmax.f32 %v7362, 0.0
        %v7705 = vmax.f32 %v7553, 0.0
        %v7706 = vmax.f32 %v7555, 0.0
        %v7707 = vmax.f32 %v7366, 0.0
        %v7708 = vmax.f32 %v7368, 0.0
        %v7709 = vmax.f32 %v7559, 0.0
        %v7710 = vmax.f32 %v7561, 0.0
        %v7711 = vmax.f32 %v7370, 0.0
        %v7712 = vmax.f32 %v7372, 0.0
        %v7713 = vmax.f32 %v7563, 0.0
        %v7714 = vmax.f32 %v7565, 0.0
        %v7715 = vmax.f32 %v7376, 0.0
        %v7716 = vmax.f32 %v7378, 0.0
        %v7717 = vmax.f32 %v7569, 0.0
        %v7718 = vmax.f32 %v7571, 0.0
        %v7719 = vmax.f32 %v7380, 0.0
        %v7720 = vmax.f32 %v7382, 0.0
        %v7721 = vmax.f32 %v7573, 0.0
        %v7722 = vmax.f32 %v7575, 0.0
        %v7723 = vmax.f32 %v7386, 0.0
        %v7724 = vmax.f32 %v7388, 0.0
        %v7725 = vmax.f32 %v7579, 0.0
        %v7726 = vmax.f32 %v7581, 0.0
        %v7727 = vmax.f32 %v7390, 0.0
        %v7728 = vmax.f32 %v7392, 0.0
        %v7729 = vmax.f32 %v7583, 0.0
        %v7730 = vmax.f32 %v7585, 0.0
        %v7731 = vmax.f32 %v7396, 0.0
        %v7732 = vmax.f32 %v7398, 0.0
        %v7733 = vmax.f32 %v7589, 0.0
        %v7734 = vmax.f32 %v7591, 0.0
        %v7735 = vmax.f32 %v7400, 0.0
        %v7736 = vmax.f32 %v7402, 0.0
        %v7737 = vmax.f32 %v7593, 0.0
        %v7738 = vmax.f32 %v7595, 0.0
        %v7739 = vmax.f32 %v7406, 0.0
        %v7740 = vmax.f32 %v7408, 0.0
        %v7741 = vmax.f32 %v7599, 0.0
        %v7742 = vmax.f32 %v7601, 0.0
        %v7743 = vmax.f32 %v7410, 0.0
        %v7744 = vmax.f32 %v7412, 0.0
        %v7745 = vmax.f32 %v7603, 0.0
        %v7746 = vmax.f32 %v7605, 0.0
        %v7747 = vmax.f32 %v7416, 0.0
        %v7748 = vmax.f32 %v7418, 0.0
        %v7749 = vmax.f32 %v7609, 0.0
        %v7750 = vmax.f32 %v7611, 0.0
        %v7751 = vmax.f32 %v7420, 0.0
        %v7752 = vmax.f32 %v7422, 0.0
        %v7753 = vmax.f32 %v7613, 0.0
        %v7754 = vmax.f32 %v7615, 0.0
        %v7755 = vmax.f32 %v7426, 0.0
        %v7756 = vmax.f32 %v7428, 0.0
        %v7757 = vmax.f32 %v7619, 0.0
        %v7758 = vmax.f32 %v7621, 0.0
        %v7759 = vmax.f32 %v7430, 0.0
        %v7760 = vmax.f32 %v7432, 0.0
        %v7761 = vmax.f32 %v7623, 0.0
        %v7762 = vmax.f32 %v7625, 0.0
        %v7763 = vmax.f32 %v7436, 0.0
        %v7764 = vmax.f32 %v7438, 0.0
        %v7765 = vmax.f32 %v7629, 0.0
        %v7766 = vmax.f32 %v7631, 0.0
        %v7767 = vmax.f32 %v7440, 0.0
        %v7768 = vmax.f32 %v7442, 0.0
        %v7769 = vmax.f32 %v7633, 0.0
        %v7770 = vmax.f32 %v7635, 0.0
        %v7771 = vmax.f32 %v7446, 0.0
        %v7772 = vmax.f32 %v7448, 0.0
        %v7773 = vmax.f32 %v7639, 0.0
        %v7774 = vmax.f32 %v7641, 0.0
        %v7775 = vmax.f32 %v7450, 0.0
        %v7776 = vmax.f32 %v7452, 0.0
        %v7777 = vmax.f32 %v7643, 0.0
        %v7778 = vmax.f32 %v7645, 0.0
        %v7779 = vmax.f32 %v7456, 0.0
        %v7780 = vmax.f32 %v7458, 0.0
        %v7781 = vmax.f32 %v7649, 0.0
        %v7782 = vmax.f32 %v7651, 0.0
        %v7783 = vmax.f32 %v7460, 0.0
        %v7784 = vmax.f32 %v7462, 0.0
        %v7785 = vmax.f32 %v7653, 0.0
        %v7786 = vmax.f32 %v7655, 0.0
        %v7787 = vmax.f32 %v7466, 0.0
        %v7788 = vmax.f32 %v7468, 0.0
        %v7789 = vmax.f32 %v7659, 0.0
        %v7790 = vmax.f32 %v7661, 0.0
        %v7791 = vmax.f32 %v7470, 0.0
        %v7792 = vmax.f32 %v7472, 0.0
        %v7793 = vmax.f32 %v7663, 0.0
        %v7794 = vmax.f32 %v7665, 0.0
        %v7795 = vpack.c.bf16 %v7671, %v7667
        %v7796 = vpack.c.bf16 %v7672, %v7668
        %v7797 = vpack.c.bf16 %v7673, %v7669
        %v7798 = vpack.c.bf16 %v7674, %v7670
        %v7799 = vpack.c.bf16 %v7679, %v7675
        %v7800 = vpack.c.bf16 %v7680, %v7676
        %v7801 = vpack.c.bf16 %v7681, %v7677
        %v7802 = vpack.c.bf16 %v7682, %v7678
        %v7803 = vpack.c.bf16 %v7687, %v7683
        %v7804 = vpack.c.bf16 %v7688, %v7684
        %v7805 = vpack.c.bf16 %v7689, %v7685
        %v7806 = vpack.c.bf16 %v7690, %v7686
        %v7807 = vpack.c.bf16 %v7695, %v7691
        %v7808 = vpack.c.bf16 %v7696, %v7692
        %v7809 = vpack.c.bf16 %v7697, %v7693
        %v7810 = vpack.c.bf16 %v7698, %v7694
        %v7811 = vpack.c.bf16 %v7703, %v7699
        %v7812 = vpack.c.bf16 %v7704, %v7700
        %v7813 = vpack.c.bf16 %v7705, %v7701
        %v7814 = vpack.c.bf16 %v7706, %v7702
        %v7815 = vpack.c.bf16 %v7711, %v7707
        %v7816 = vpack.c.bf16 %v7712, %v7708
        %v7817 = vpack.c.bf16 %v7713, %v7709
        %v7818 = vpack.c.bf16 %v7714, %v7710
        %v7819 = vpack.c.bf16 %v7719, %v7715
        %v7820 = vpack.c.bf16 %v7720, %v7716
        %v7821 = vpack.c.bf16 %v7721, %v7717
        %v7822 = vpack.c.bf16 %v7722, %v7718
        %v7823 = vpack.c.bf16 %v7727, %v7723
        %v7824 = vpack.c.bf16 %v7728, %v7724
        %v7825 = vpack.c.bf16 %v7729, %v7725
        %v7826 = vpack.c.bf16 %v7730, %v7726
        %v7827 = vpack.c.bf16 %v7735, %v7731
        %v7828 = vpack.c.bf16 %v7736, %v7732
        %v7829 = vpack.c.bf16 %v7737, %v7733
        %v7830 = vpack.c.bf16 %v7738, %v7734
        %v7831 = vpack.c.bf16 %v7743, %v7739
        %v7832 = vpack.c.bf16 %v7744, %v7740
        %v7833 = vpack.c.bf16 %v7745, %v7741
        %v7834 = vpack.c.bf16 %v7746, %v7742
        %v7835 = vpack.c.bf16 %v7751, %v7747
        %v7836 = vpack.c.bf16 %v7752, %v7748
        %v7837 = vpack.c.bf16 %v7753, %v7749
        %v7838 = vpack.c.bf16 %v7754, %v7750
        %v7839 = vpack.c.bf16 %v7759, %v7755
        %v7840 = vpack.c.bf16 %v7760, %v7756
        %v7841 = vpack.c.bf16 %v7761, %v7757
        %v7842 = vpack.c.bf16 %v7762, %v7758
        %v7843 = vpack.c.bf16 %v7767, %v7763
        %v7844 = vpack.c.bf16 %v7768, %v7764
        %v7845 = vpack.c.bf16 %v7769, %v7765
        %v7846 = vpack.c.bf16 %v7770, %v7766
        %v7847 = vpack.c.bf16 %v7775, %v7771
        %v7848 = vpack.c.bf16 %v7776, %v7772
        %v7849 = vpack.c.bf16 %v7777, %v7773
        %v7850 = vpack.c.bf16 %v7778, %v7774
        %v7851 = vpack.c.bf16 %v7783, %v7779
        %v7852 = vpack.c.bf16 %v7784, %v7780
        %v7853 = vpack.c.bf16 %v7785, %v7781
        %v7854 = vpack.c.bf16 %v7786, %v7782
        %v7855 = vpack.c.bf16 %v7791, %v7787
        %v7856 = vpack.c.bf16 %v7792, %v7788
        %v7857 = vpack.c.bf16 %v7793, %v7789
        %v7858 = vpack.c.bf16 %v7794, %v7790
        %v7859 = vld [vmem:[%s687] sm:$0xf]
        %v7860 = vld [vmem:[%s687 + $0x4] sm:$0xf]
        %v7861 = vld [vmem:[%s687 + $0x8] sm:$0xf]
        %v7862 = vld [vmem:[%s687 + $0xc] sm:$0xf]
        %v7863 = vld [vmem:[%s687 + $0x10] sm:$0xf]
        %v7864 = vld [vmem:[%s687 + $0x14] sm:$0xf]
        %v7865 = vld [vmem:[%s687 + $0x18] sm:$0xf]
        %v7866 = vld [vmem:[%s687 + $0x1c] sm:$0xf]
        %v7867 = vld [vmem:[%s687 + $0x20] sm:$0xf]
        %v7868 = vld [vmem:[%s687 + $0x24] sm:$0xf]
        %v7869 = vld [vmem:[%s687 + $0x28] sm:$0xf]
        %v7870 = vld [vmem:[%s687 + $0x2c] sm:$0xf]
        %v7871 = vld [vmem:[%s687 + $0x30] sm:$0xf]
        %v7872 = vld [vmem:[%s687 + $0x34] sm:$0xf]
        %v7873 = vld [vmem:[%s687 + $0x38] sm:$0xf]
        %v7874 = vld [vmem:[%s687 + $0x3c] sm:$0xf]
        %v7875 = vld [vmem:[%s687 + $0x40] sm:$0xf]
        %v7876 = vld [vmem:[%s687 + $0x44] sm:$0xf]
        %v7877 = vld [vmem:[%s687 + $0x48] sm:$0xf]
        %v7878 = vld [vmem:[%s687 + $0x4c] sm:$0xf]
        %v7879 = vld [vmem:[%s687 + $0x50] sm:$0xf]
        %v7880 = vld [vmem:[%s687 + $0x54] sm:$0xf]
        %v7881 = vld [vmem:[%s687 + $0x58] sm:$0xf]
        %v7882 = vld [vmem:[%s687 + $0x5c] sm:$0xf]
        %v7883 = vld [vmem:[%s687 + $0x60] sm:$0xf]
        %v7884 = vld [vmem:[%s687 + $0x64] sm:$0xf]
        %v7885 = vld [vmem:[%s687 + $0x68] sm:$0xf]
        %v7886 = vld [vmem:[%s687 + $0x6c] sm:$0xf]
        %v7887 = vld [vmem:[%s687 + $0x70] sm:$0xf]
        %v7888 = vld [vmem:[%s687 + $0x74] sm:$0xf]
        %v7889 = vld [vmem:[%s687 + $0x78] sm:$0xf]
        %v7890 = vld [vmem:[%s687 + $0x7c] sm:$0xf]
        %v7891 = vld [vmem:[%s687 + $0x80] sm:$0xf]
        %v7892 = vld [vmem:[%s687 + $0x84] sm:$0xf]
        %v7893 = vld [vmem:[%s687 + $0x88] sm:$0xf]
        %v7894 = vld [vmem:[%s687 + $0x8c] sm:$0xf]
        %v7895 = vld [vmem:[%s687 + $0x90] sm:$0xf]
        %v7896 = vld [vmem:[%s687 + $0x94] sm:$0xf]
        %v7897 = vld [vmem:[%s687 + $0x98] sm:$0xf]
        %v7898 = vld [vmem:[%s687 + $0x9c] sm:$0xf]
        %v7899 = vld [vmem:[%s687 + $0xa0] sm:$0xf]
        %v7900 = vld [vmem:[%s687 + $0xa4] sm:$0xf]
        %v7901 = vld [vmem:[%s687 + $0xa8] sm:$0xf]
        %v7902 = vld [vmem:[%s687 + $0xac] sm:$0xf]
        %v7903 = vld [vmem:[%s687 + $0xb0] sm:$0xf]
        %v7904 = vld [vmem:[%s687 + $0xb4] sm:$0xf]
        %v7905 = vld [vmem:[%s687 + $0xb8] sm:$0xf]
        %v7906 = vld [vmem:[%s687 + $0xbc] sm:$0xf]
        %v7907 = vld [vmem:[%s687 + $0xc0] sm:$0xf]
        %v7908 = vld [vmem:[%s687 + $0xc4] sm:$0xf]
        %v7909 = vld [vmem:[%s687 + $0xc8] sm:$0xf]
        %v7910 = vld [vmem:[%s687 + $0xcc] sm:$0xf]
        %v7911 = vld [vmem:[%s687 + $0xd0] sm:$0xf]
        %v7912 = vld [vmem:[%s687 + $0xd4] sm:$0xf]
        %v7913 = vld [vmem:[%s687 + $0xd8] sm:$0xf]
        %v7914 = vld [vmem:[%s687 + $0xdc] sm:$0xf]
        %v7915 = vld [vmem:[%s687 + $0xe0] sm:$0xf]
        %v7916 = vld [vmem:[%s687 + $0xe4] sm:$0xf]
        %v7917 = vld [vmem:[%s687 + $0xe8] sm:$0xf]
        %v7918 = vld [vmem:[%s687 + $0xec] sm:$0xf]
        %v7919 = vld [vmem:[%s687 + $0xf0] sm:$0xf]
        %v7920 = vld [vmem:[%s687 + $0xf4] sm:$0xf]
        %v7921 = vld [vmem:[%s687 + $0xf8] sm:$0xf]
        %v7922 = vld [vmem:[%s687 + $0xfc] sm:$0xf]
        %v7923 = vld [vmem:[%s791] sm:$0x1]
        %v7925 = vlaneseq
        %v7926 = vshrl.u32 %v7925, 7
        %v7927 = vsub.s32 0, %v7926
        %v7928 = vrot.slane %v7923, %v7927
        %v7994 = vunpack.c.l.b16 %v7859
        %v7995 = vunpack.c.l.b16 %v7860
        %v7996 = vunpack.c.l.b16 %v7861
        %v7997 = vunpack.c.l.b16 %v7862
        %v7998 = vunpack.c.l.b16 %v7863
        %v7999 = vunpack.c.l.b16 %v7864
        %v8000 = vunpack.c.l.b16 %v7865
        %v8001 = vunpack.c.l.b16 %v7866
        %v8002 = vunpack.c.l.b16 %v7867
        %v8003 = vunpack.c.l.b16 %v7868
        %v8004 = vunpack.c.l.b16 %v7869
        %v8005 = vunpack.c.l.b16 %v7870
        %v8006 = vunpack.c.l.b16 %v7871
        %v8007 = vunpack.c.l.b16 %v7872
        %v8008 = vunpack.c.l.b16 %v7873
        %v8009 = vunpack.c.l.b16 %v7874
        %v8010 = vunpack.c.l.b16 %v7875
        %v8011 = vunpack.c.l.b16 %v7876
        %v8012 = vunpack.c.l.b16 %v7877
        %v8013 = vunpack.c.l.b16 %v7878
        %v8014 = vunpack.c.l.b16 %v7879
        %v8015 = vunpack.c.l.b16 %v7880
        %v8016 = vunpack.c.l.b16 %v7881
        %v8017 = vunpack.c.l.b16 %v7882
        %v8018 = vunpack.c.l.b16 %v7883
        %v8019 = vunpack.c.l.b16 %v7884
        %v8020 = vunpack.c.l.b16 %v7885
        %v8021 = vunpack.c.l.b16 %v7886
        %v8022 = vunpack.c.l.b16 %v7887
        %v8023 = vunpack.c.l.b16 %v7888
        %v8024 = vunpack.c.l.b16 %v7889
        %v8025 = vunpack.c.l.b16 %v7890
        %v8026 = vunpack.c.l.b16 %v7891
        %v8027 = vunpack.c.l.b16 %v7892
        %v8028 = vunpack.c.l.b16 %v7893
        %v8029 = vunpack.c.l.b16 %v7894
        %v8030 = vunpack.c.l.b16 %v7895
        %v8031 = vunpack.c.l.b16 %v7896
        %v8032 = vunpack.c.l.b16 %v7897
        %v8033 = vunpack.c.l.b16 %v7898
        %v8034 = vunpack.c.l.b16 %v7899
        %v8035 = vunpack.c.l.b16 %v7900
        %v8036 = vunpack.c.l.b16 %v7901
        %v8037 = vunpack.c.l.b16 %v7902
        %v8038 = vunpack.c.l.b16 %v7903
        %v8039 = vunpack.c.l.b16 %v7904
        %v8040 = vunpack.c.l.b16 %v7905
        %v8041 = vunpack.c.l.b16 %v7906
        %v8042 = vunpack.c.l.b16 %v7907
        %v8043 = vunpack.c.l.b16 %v7908
        %v8044 = vunpack.c.l.b16 %v7909
        %v8045 = vunpack.c.l.b16 %v7910
        %v8046 = vunpack.c.l.b16 %v7911
        %v8047 = vunpack.c.l.b16 %v7912
        %v8048 = vunpack.c.l.b16 %v7913
        %v8049 = vunpack.c.l.b16 %v7914
        %v8050 = vunpack.c.l.b16 %v7915
        %v8051 = vunpack.c.l.b16 %v7916
        %v8052 = vunpack.c.l.b16 %v7917
        %v8053 = vunpack.c.l.b16 %v7918
        %v8054 = vunpack.c.l.b16 %v7919
        %v8055 = vunpack.c.l.b16 %v7920
        %v8056 = vunpack.c.l.b16 %v7921
        %v8057 = vunpack.c.l.b16 %v7922
        %v8058 = vpack.c.b16 %v7995, %v7994
        %v8059 = vpack.c.b16 %v7997, %v7996
        %v8060 = vpack.c.b16 %v7999, %v7998
        %v8061 = vpack.c.b16 %v8001, %v8000
        %v8062 = vpack.c.b16 %v8003, %v8002
        %v8063 = vpack.c.b16 %v8005, %v8004
        %v8064 = vpack.c.b16 %v8007, %v8006
        %v8065 = vpack.c.b16 %v8009, %v8008
        %v8066 = vpack.c.b16 %v8011, %v8010
        %v8067 = vpack.c.b16 %v8013, %v8012
        %v8068 = vpack.c.b16 %v8015, %v8014
        %v8069 = vpack.c.b16 %v8017, %v8016
        %v8070 = vpack.c.b16 %v8019, %v8018
        %v8071 = vpack.c.b16 %v8021, %v8020
        %v8072 = vpack.c.b16 %v8023, %v8022
        %v8073 = vpack.c.b16 %v8025, %v8024
        %v8074 = vpack.c.b16 %v8027, %v8026
        %v8075 = vpack.c.b16 %v8029, %v8028
        %v8076 = vpack.c.b16 %v8031, %v8030
        %v8077 = vpack.c.b16 %v8033, %v8032
        %v8078 = vpack.c.b16 %v8035, %v8034
        %v8079 = vpack.c.b16 %v8037, %v8036
        %v8080 = vpack.c.b16 %v8039, %v8038
        %v8081 = vpack.c.b16 %v8041, %v8040
        %v8082 = vpack.c.b16 %v8043, %v8042
        %v8083 = vpack.c.b16 %v8045, %v8044
        %v8084 = vpack.c.b16 %v8047, %v8046
        %v8085 = vpack.c.b16 %v8049, %v8048
        %v8086 = vpack.c.b16 %v8051, %v8050
        %v8087 = vpack.c.b16 %v8053, %v8052
        %v8088 = vpack.c.b16 %v8055, %v8054
        %v8089 = vpack.c.b16 %v8057, %v8056
        %8122 = vmatprep.subr.bf16.mxu0 0
        %8123 = vmatpush1.bf16.msra.mxu0 %v8065
        %8124 = vmatprep.subr.bf16.mxu0 0
        %8125 = vmatpush1.bf16.msra.mxu0 %v8064
        %8126 = vmatprep.subr.bf16.mxu0 0
        %8127 = vmatpush1.bf16.msra.mxu0 %v8063
        %8128 = vmatprep.subr.bf16.mxu0 0
        %8129 = vmatpush1.bf16.msra.mxu0 %v8062
        %8130 = vmatprep.subr.bf16.mxu0 0
        %8131 = vmatpush1.bf16.msra.mxu0 %v8061
        %8132 = vmatprep.subr.bf16.mxu0 0
        %8133 = vmatpush1.bf16.msra.mxu0 %v8060
        %8134 = vmatprep.subr.bf16.mxu0 0
        %8135 = vmatpush1.bf16.msra.mxu0 %v8059
        %8136 = vmatprep.subr.bf16.mxu0 0
        %8137 = vmatpush1.bf16.msra.mxu0 %v8058
        %8138 = vmatprep.subr.bf16.mxu0 0
        %8139 = vmatpush2.bf16.msra.mxu0 %v8073
        %8140 = vmatprep.subr.bf16.mxu0 0
        %8141 = vmatpush2.bf16.msra.mxu0 %v8072
        %8142 = vmatprep.subr.bf16.mxu0 0
        %8143 = vmatpush2.bf16.msra.mxu0 %v8071
        %8144 = vmatprep.subr.bf16.mxu0 0
        %8145 = vmatpush2.bf16.msra.mxu0 %v8070
        %8146 = vmatprep.subr.bf16.mxu0 0
        %8147 = vmatpush2.bf16.msra.mxu0 %v8069
        %8148 = vmatprep.subr.bf16.mxu0 0
        %8149 = vmatpush2.bf16.msra.mxu0 %v8068
        %8150 = vmatprep.subr.bf16.mxu0 0
        %8151 = vmatpush2.bf16.msra.mxu0 %v8067
        %8152 = vmatprep.subr.bf16.mxu0 0
        %8153 = vmatpush2.bf16.msra.mxu0 %v8066
        %8154 = vmatprep.mubr.bf16.mxu0 %v7796
        %8155 = vmatmul.mubr.bf16.gmra.mxu0 %v7795
        %v8156 = vpop.f32.mrf.mxu0
        %v8157 = vadd.f32 %v7928, %v8156
        %v8158 = vpop.f32.mrf.mxu0
        %v8159 = vpop.f32.mrf.mxu0
        %v8160 = vadd.f32 %v7928, %v8159
        %v8161 = vpop.f32.mrf.mxu0
        %8162 = vmatprep.mubr.bf16.mxu0 %v7800
        %8163 = vmatmul.mubr.bf16.gmra.mxu0 %v7799
        %v8164 = vpop.f32.mrf.mxu0
        %v8165 = vadd.f32 %v7928, %v8164
        %v8166 = vpop.f32.mrf.mxu0
        %v8167 = vpop.f32.mrf.mxu0
        %v8168 = vadd.f32 %v7928, %v8167
        %v8169 = vpop.f32.mrf.mxu0
        %8170 = vmatprep.mubr.bf16.mxu0 %v7804
        %8171 = vmatmul.mubr.bf16.gmra.mxu0 %v7803
        %v8172 = vpop.f32.mrf.mxu0
        %v8173 = vadd.f32 %v7928, %v8172
        %v8174 = vpop.f32.mrf.mxu0
        %v8175 = vpop.f32.mrf.mxu0
        %v8176 = vadd.f32 %v7928, %v8175
        %v8177 = vpop.f32.mrf.mxu0
        %8178 = vmatprep.mubr.bf16.mxu0 %v7808
        %8179 = vmatmul.mubr.bf16.gmra.mxu0 %v7807
        %v8180 = vpop.f32.mrf.mxu0
        %v8181 = vadd.f32 %v7928, %v8180
        %v8182 = vpop.f32.mrf.mxu0
        %v8183 = vpop.f32.mrf.mxu0
        %v8184 = vadd.f32 %v7928, %v8183
        %v8185 = vpop.f32.mrf.mxu0
        %8186 = vmatprep.mubr.bf16.mxu0 %v7812
        %8187 = vmatmul.mubr.bf16.gmra.mxu0 %v7811
        %v8188 = vpop.f32.mrf.mxu0
        %v8189 = vadd.f32 %v7928, %v8188
        %v8190 = vpop.f32.mrf.mxu0
        %v8191 = vpop.f32.mrf.mxu0
        %v8192 = vadd.f32 %v7928, %v8191
        %v8193 = vpop.f32.mrf.mxu0
        %8194 = vmatprep.mubr.bf16.mxu0 %v7816
        %8195 = vmatmul.mubr.bf16.gmra.mxu0 %v7815
        %v8196 = vpop.f32.mrf.mxu0
        %v8197 = vadd.f32 %v7928, %v8196
        %v8198 = vpop.f32.mrf.mxu0
        %v8199 = vpop.f32.mrf.mxu0
        %v8200 = vadd.f32 %v7928, %v8199
        %v8201 = vpop.f32.mrf.mxu0
        %8202 = vmatprep.mubr.bf16.mxu0 %v7820
        %8203 = vmatmul.mubr.bf16.gmra.mxu0 %v7819
        %v8204 = vpop.f32.mrf.mxu0
        %v8205 = vadd.f32 %v7928, %v8204
        %v8206 = vpop.f32.mrf.mxu0
        %v8207 = vpop.f32.mrf.mxu0
        %v8208 = vadd.f32 %v7928, %v8207
        %v8209 = vpop.f32.mrf.mxu0
        %8210 = vmatprep.mubr.bf16.mxu0 %v7824
        %8211 = vmatmul.mubr.bf16.gmra.mxu0 %v7823
        %v8212 = vpop.f32.mrf.mxu0
        %v8213 = vadd.f32 %v7928, %v8212
        %v8214 = vpop.f32.mrf.mxu0
        %v8215 = vpop.f32.mrf.mxu0
        %v8216 = vadd.f32 %v7928, %v8215
        %v8217 = vpop.f32.mrf.mxu0
        %8218 = vmatprep.mubr.bf16.mxu0 %v7828
        %8219 = vmatmul.mubr.bf16.gmra.mxu0 %v7827
        %v8220 = vpop.f32.mrf.mxu0
        %v8221 = vadd.f32 %v7928, %v8220
        %v8222 = vpop.f32.mrf.mxu0
        %v8223 = vpop.f32.mrf.mxu0
        %v8224 = vadd.f32 %v7928, %v8223
        %v8225 = vpop.f32.mrf.mxu0
        %8226 = vmatprep.mubr.bf16.mxu0 %v7832
        %8227 = vmatmul.mubr.bf16.gmra.mxu0 %v7831
        %v8228 = vpop.f32.mrf.mxu0
        %v8229 = vadd.f32 %v7928, %v8228
        %v8230 = vpop.f32.mrf.mxu0
        %v8231 = vpop.f32.mrf.mxu0
        %v8232 = vadd.f32 %v7928, %v8231
        %v8233 = vpop.f32.mrf.mxu0
        %8234 = vmatprep.mubr.bf16.mxu0 %v7836
        %8235 = vmatmul.mubr.bf16.gmra.mxu0 %v7835
        %v8236 = vpop.f32.mrf.mxu0
        %v8237 = vadd.f32 %v7928, %v8236
        %v8238 = vpop.f32.mrf.mxu0
        %v8239 = vpop.f32.mrf.mxu0
        %v8240 = vadd.f32 %v7928, %v8239
        %v8241 = vpop.f32.mrf.mxu0
        %8242 = vmatprep.mubr.bf16.mxu0 %v7840
        %8243 = vmatmul.mubr.bf16.gmra.mxu0 %v7839
        %v8244 = vpop.f32.mrf.mxu0
        %v8245 = vadd.f32 %v7928, %v8244
        %v8246 = vpop.f32.mrf.mxu0
        %v8247 = vpop.f32.mrf.mxu0
        %v8248 = vadd.f32 %v7928, %v8247
        %v8249 = vpop.f32.mrf.mxu0
        %8250 = vmatprep.mubr.bf16.mxu0 %v7844
        %8251 = vmatmul.mubr.bf16.gmra.mxu0 %v7843
        %v8252 = vpop.f32.mrf.mxu0
        %v8253 = vadd.f32 %v7928, %v8252
        %v8254 = vpop.f32.mrf.mxu0
        %v8255 = vpop.f32.mrf.mxu0
        %v8256 = vadd.f32 %v7928, %v8255
        %v8257 = vpop.f32.mrf.mxu0
        %8258 = vmatprep.mubr.bf16.mxu0 %v7848
        %8259 = vmatmul.mubr.bf16.gmra.mxu0 %v7847
        %v8260 = vpop.f32.mrf.mxu0
        %v8261 = vadd.f32 %v7928, %v8260
        %v8262 = vpop.f32.mrf.mxu0
        %v8263 = vpop.f32.mrf.mxu0
        %v8264 = vadd.f32 %v7928, %v8263
        %v8265 = vpop.f32.mrf.mxu0
        %8266 = vmatprep.mubr.bf16.mxu0 %v7852
        %8267 = vmatmul.mubr.bf16.gmra.mxu0 %v7851
        %v8268 = vpop.f32.mrf.mxu0
        %v8269 = vadd.f32 %v7928, %v8268
        %v8270 = vpop.f32.mrf.mxu0
        %v8271 = vpop.f32.mrf.mxu0
        %v8272 = vadd.f32 %v7928, %v8271
        %v8273 = vpop.f32.mrf.mxu0
        %8274 = vmatprep.mubr.bf16.mxu0 %v7856
        %8275 = vmatmul.mubr.bf16.gmra.mxu0 %v7855
        %v8276 = vpop.f32.mrf.mxu0
        %v8277 = vadd.f32 %v7928, %v8276
        %v8278 = vpop.f32.mrf.mxu0
        %v8279 = vpop.f32.mrf.mxu0
        %v8280 = vadd.f32 %v7928, %v8279
        %v8281 = vpop.f32.mrf.mxu0
        %8282 = vdwg.mxu0
        %8283 = vmatprep.subr.bf16.mxu0 0
        %8284 = vmatpush1.bf16.msra.mxu0 %v8081
        %8285 = vmatprep.subr.bf16.mxu0 0
        %8286 = vmatpush1.bf16.msra.mxu0 %v8080
        %8287 = vmatprep.subr.bf16.mxu0 0
        %8288 = vmatpush1.bf16.msra.mxu0 %v8079
        %8289 = vmatprep.subr.bf16.mxu0 0
        %8290 = vmatpush1.bf16.msra.mxu0 %v8078
        %8291 = vmatprep.subr.bf16.mxu0 0
        %8292 = vmatpush1.bf16.msra.mxu0 %v8077
        %8293 = vmatprep.subr.bf16.mxu0 0
        %8294 = vmatpush1.bf16.msra.mxu0 %v8076
        %8295 = vmatprep.subr.bf16.mxu0 0
        %8296 = vmatpush1.bf16.msra.mxu0 %v8075
        %8297 = vmatprep.subr.bf16.mxu0 0
        %8298 = vmatpush1.bf16.msra.mxu0 %v8074
        %8299 = vmatprep.subr.bf16.mxu0 0
        %8300 = vmatpush2.bf16.msra.mxu0 %v8089
        %8301 = vmatprep.subr.bf16.mxu0 0
        %8302 = vmatpush2.bf16.msra.mxu0 %v8088
        %8303 = vmatprep.subr.bf16.mxu0 0
        %8304 = vmatpush2.bf16.msra.mxu0 %v8087
        %8305 = vmatprep.subr.bf16.mxu0 0
        %8306 = vmatpush2.bf16.msra.mxu0 %v8086
        %8307 = vmatprep.subr.bf16.mxu0 0
        %8308 = vmatpush2.bf16.msra.mxu0 %v8085
        %8309 = vmatprep.subr.bf16.mxu0 0
        %8310 = vmatpush2.bf16.msra.mxu0 %v8084
        %8311 = vmatprep.subr.bf16.mxu0 0
        %8312 = vmatpush2.bf16.msra.mxu0 %v8083
        %8313 = vmatprep.subr.bf16.mxu0 0
        %8314 = vmatpush2.bf16.msra.mxu0 %v8082
        %8315 = vmatprep.mubr.bf16.mxu0 %v7798
        %8316 = vmatmul.mubr.bf16.gmra.mxu0 %v7797
        %v8317 = vpop.f32.mrf.mxu0
        %v8318 = vadd.f32 %v8157, %v8317
        %v8319 = vpop.f32.mrf.mxu0
        %v8320 = vpop.f32.mrf.mxu0
        %v8321 = vadd.f32 %v8160, %v8320
        %v8322 = vpop.f32.mrf.mxu0
        %8323 = vmatprep.mubr.bf16.mxu0 %v7802
        %8324 = vmatmul.mubr.bf16.gmra.mxu0 %v7801
        %v8325 = vpop.f32.mrf.mxu0
        %v8326 = vadd.f32 %v8165, %v8325
        %v8327 = vpop.f32.mrf.mxu0
        %v8328 = vpop.f32.mrf.mxu0
        %v8329 = vadd.f32 %v8168, %v8328
        %v8330 = vpop.f32.mrf.mxu0
        %8331 = vmatprep.mubr.bf16.mxu0 %v7806
        %8332 = vmatmul.mubr.bf16.gmra.mxu0 %v7805
        %v8333 = vpop.f32.mrf.mxu0
        %v8334 = vadd.f32 %v8173, %v8333
        %v8335 = vpop.f32.mrf.mxu0
        %v8336 = vpop.f32.mrf.mxu0
        %v8337 = vadd.f32 %v8176, %v8336
        %v8338 = vpop.f32.mrf.mxu0
        %8339 = vmatprep.mubr.bf16.mxu0 %v7810
        %8340 = vmatmul.mubr.bf16.gmra.mxu0 %v7809
        %v8341 = vpop.f32.mrf.mxu0
        %v8342 = vadd.f32 %v8181, %v8341
        %v8343 = vpop.f32.mrf.mxu0
        %v8344 = vpop.f32.mrf.mxu0
        %v8345 = vadd.f32 %v8184, %v8344
        %v8346 = vpop.f32.mrf.mxu0
        %8347 = vmatprep.mubr.bf16.mxu0 %v7814
        %8348 = vmatmul.mubr.bf16.gmra.mxu0 %v7813
        %v8349 = vpop.f32.mrf.mxu0
        %v8350 = vadd.f32 %v8189, %v8349
        %v8351 = vpop.f32.mrf.mxu0
        %v8352 = vpop.f32.mrf.mxu0
        %v8353 = vadd.f32 %v8192, %v8352
        %v8354 = vpop.f32.mrf.mxu0
        %8355 = vmatprep.mubr.bf16.mxu0 %v7818
        %8356 = vmatmul.mubr.bf16.gmra.mxu0 %v7817
        %v8357 = vpop.f32.mrf.mxu0
        %v8358 = vadd.f32 %v8197, %v8357
        %v8359 = vpop.f32.mrf.mxu0
        %v8360 = vpop.f32.mrf.mxu0
        %v8361 = vadd.f32 %v8200, %v8360
        %v8362 = vpop.f32.mrf.mxu0
        %8363 = vmatprep.mubr.bf16.mxu0 %v7822
        %8364 = vmatmul.mubr.bf16.gmra.mxu0 %v7821
        %v8365 = vpop.f32.mrf.mxu0
        %v8366 = vadd.f32 %v8205, %v8365
        %v8367 = vpop.f32.mrf.mxu0
        %v8368 = vpop.f32.mrf.mxu0
        %v8369 = vadd.f32 %v8208, %v8368
        %v8370 = vpop.f32.mrf.mxu0
        %8371 = vmatprep.mubr.bf16.mxu0 %v7826
        %8372 = vmatmul.mubr.bf16.gmra.mxu0 %v7825
        %v8373 = vpop.f32.mrf.mxu0
        %v8374 = vadd.f32 %v8213, %v8373
        %v8375 = vpop.f32.mrf.mxu0
        %v8376 = vpop.f32.mrf.mxu0
        %v8377 = vadd.f32 %v8216, %v8376
        %v8378 = vpop.f32.mrf.mxu0
        %8379 = vmatprep.mubr.bf16.mxu0 %v7830
        %8380 = vmatmul.mubr.bf16.gmra.mxu0 %v7829
        %v8381 = vpop.f32.mrf.mxu0
        %v8382 = vadd.f32 %v8221, %v8381
        %v8383 = vpop.f32.mrf.mxu0
        %v8384 = vpop.f32.mrf.mxu0
        %v8385 = vadd.f32 %v8224, %v8384
        %v8386 = vpop.f32.mrf.mxu0
        %8387 = vmatprep.mubr.bf16.mxu0 %v7834
        %8388 = vmatmul.mubr.bf16.gmra.mxu0 %v7833
        %v8389 = vpop.f32.mrf.mxu0
        %v8390 = vadd.f32 %v8229, %v8389
        %v8391 = vpop.f32.mrf.mxu0
        %v8392 = vpop.f32.mrf.mxu0
        %v8393 = vadd.f32 %v8232, %v8392
        %v8394 = vpop.f32.mrf.mxu0
        %8395 = vmatprep.mubr.bf16.mxu0 %v7838
        %8396 = vmatmul.mubr.bf16.gmra.mxu0 %v7837
        %v8397 = vpop.f32.mrf.mxu0
        %v8398 = vadd.f32 %v8237, %v8397
        %v8399 = vpop.f32.mrf.mxu0
        %v8400 = vpop.f32.mrf.mxu0
        %v8401 = vadd.f32 %v8240, %v8400
        %v8402 = vpop.f32.mrf.mxu0
        %8403 = vmatprep.mubr.bf16.mxu0 %v7842
        %8404 = vmatmul.mubr.bf16.gmra.mxu0 %v7841
        %v8405 = vpop.f32.mrf.mxu0
        %v8406 = vadd.f32 %v8245, %v8405
        %v8407 = vpop.f32.mrf.mxu0
        %v8408 = vpop.f32.mrf.mxu0
        %v8409 = vadd.f32 %v8248, %v8408
        %v8410 = vpop.f32.mrf.mxu0
        %8411 = vmatprep.mubr.bf16.mxu0 %v7846
        %8412 = vmatmul.mubr.bf16.gmra.mxu0 %v7845
        %v8413 = vpop.f32.mrf.mxu0
        %v8414 = vadd.f32 %v8253, %v8413
        %v8415 = vpop.f32.mrf.mxu0
        %v8416 = vpop.f32.mrf.mxu0
        %v8417 = vadd.f32 %v8256, %v8416
        %v8418 = vpop.f32.mrf.mxu0
        %8419 = vmatprep.mubr.bf16.mxu0 %v7850
        %8420 = vmatmul.mubr.bf16.gmra.mxu0 %v7849
        %v8421 = vpop.f32.mrf.mxu0
        %v8422 = vadd.f32 %v8261, %v8421
        %v8423 = vpop.f32.mrf.mxu0
        %v8424 = vpop.f32.mrf.mxu0
        %v8425 = vadd.f32 %v8264, %v8424
        %v8426 = vpop.f32.mrf.mxu0
        %8427 = vmatprep.mubr.bf16.mxu0 %v7854
        %8428 = vmatmul.mubr.bf16.gmra.mxu0 %v7853
        %v8429 = vpop.f32.mrf.mxu0
        %v8430 = vadd.f32 %v8269, %v8429
        %v8431 = vpop.f32.mrf.mxu0
        %v8432 = vpop.f32.mrf.mxu0
        %v8433 = vadd.f32 %v8272, %v8432
        %v8434 = vpop.f32.mrf.mxu0
        %8435 = vmatprep.mubr.bf16.mxu0 %v7858
        %8436 = vmatmul.mubr.bf16.gmra.mxu0 %v7857
        %v8437 = vpop.f32.mrf.mxu0
        %v8438 = vadd.f32 %v8277, %v8437
        %v8439 = vpop.f32.mrf.mxu0
        %v8440 = vpop.f32.mrf.mxu0
        %v8441 = vadd.f32 %v8280, %v8440
        %v8442 = vpop.f32.mrf.mxu0
        %8443 = vdwg.mxu0
        %v8444 = vadd.f32 %v6589, %v8318
        %v8445 = vadd.f32 %v6590, %v8321
        %v8446 = vadd.f32 %v6591, %v8326
        %v8447 = vadd.f32 %v6592, %v8329
        %v8448 = vadd.f32 %v6593, %v8334
        %v8449 = vadd.f32 %v6594, %v8337
        %v8450 = vadd.f32 %v6595, %v8342
        %v8451 = vadd.f32 %v6596, %v8345
        %v8452 = vadd.f32 %v6597, %v8350
        %v8453 = vadd.f32 %v6598, %v8353
        %v8454 = vadd.f32 %v6599, %v8358
        %v8455 = vadd.f32 %v6600, %v8361
        %v8456 = vadd.f32 %v6601, %v8366
        %v8457 = vadd.f32 %v6602, %v8369
        %v8458 = vadd.f32 %v6603, %v8374
        %v8459 = vadd.f32 %v6604, %v8377
        %v8460 = vadd.f32 %v6605, %v8382
        %v8461 = vadd.f32 %v6606, %v8385
        %v8462 = vadd.f32 %v6607, %v8390
        %v8463 = vadd.f32 %v6608, %v8393
        %v8464 = vadd.f32 %v6609, %v8398
        %v8465 = vadd.f32 %v6610, %v8401
        %v8466 = vadd.f32 %v6611, %v8406
        %v8467 = vadd.f32 %v6612, %v8409
        %v8468 = vadd.f32 %v6613, %v8414
        %v8469 = vadd.f32 %v6614, %v8417
        %v8470 = vadd.f32 %v6615, %v8422
        %v8471 = vadd.f32 %v6616, %v8425
        %v8472 = vadd.f32 %v6617, %v8430
        %v8473 = vadd.f32 %v6618, %v8433
        %v8474 = vadd.f32 %v6619, %v8438
        %v8475 = vadd.f32 %v6620, %v8441
        %8476 = vst [vmem:[#allocation2] sm:$0xff] %v8444
        %8477 = vst [vmem:[#allocation2 + $0x8] sm:$0xff] %v8445
        %8478 = vst [vmem:[#allocation2 + $0x10] sm:$0xff] %v8446
        %8479 = vst [vmem:[#allocation2 + $0x18] sm:$0xff] %v8447
        %8480 = vst [vmem:[#allocation2 + $0x20] sm:$0xff] %v8448
        %8481 = vst [vmem:[#allocation2 + $0x28] sm:$0xff] %v8449
        %8482 = vst [vmem:[#allocation2 + $0x30] sm:$0xff] %v8450
        %8483 = vst [vmem:[#allocation2 + $0x38] sm:$0xff] %v8451
        %8484 = vst [vmem:[#allocation2 + $0x40] sm:$0xff] %v8452
        %8485 = vst [vmem:[#allocation2 + $0x48] sm:$0xff] %v8453
        %8486 = vst [vmem:[#allocation2 + $0x50] sm:$0xff] %v8454
        %8487 = vst [vmem:[#allocation2 + $0x58] sm:$0xff] %v8455
        %8488 = vst [vmem:[#allocation2 + $0x60] sm:$0xff] %v8456
        %8489 = vst [vmem:[#allocation2 + $0x68] sm:$0xff] %v8457
        %8490 = vst [vmem:[#allocation2 + $0x70] sm:$0xff] %v8458
        %8491 = vst [vmem:[#allocation2 + $0x78] sm:$0xff] %v8459
        %8492 = vst [vmem:[#allocation2 + $0x80] sm:$0xff] %v8460
        %8493 = vst [vmem:[#allocation2 + $0x88] sm:$0xff] %v8461
        %8494 = vst [vmem:[#allocation2 + $0x90] sm:$0xff] %v8462
        %8495 = vst [vmem:[#allocation2 + $0x98] sm:$0xff] %v8463
        %8496 = vst [vmem:[#allocation2 + $0xa0] sm:$0xff] %v8464
        %8497 = vst [vmem:[#allocation2 + $0xa8] sm:$0xff] %v8465
        %8498 = vst [vmem:[#allocation2 + $0xb0] sm:$0xff] %v8466
        %8499 = vst [vmem:[#allocation2 + $0xb8] sm:$0xff] %v8467
        %8500 = vst [vmem:[#allocation2 + $0xc0] sm:$0xff] %v8468
        %8501 = vst [vmem:[#allocation2 + $0xc8] sm:$0xff] %v8469
        %8502 = vst [vmem:[#allocation2 + $0xd0] sm:$0xff] %v8470
        %8503 = vst [vmem:[#allocation2 + $0xd8] sm:$0xff] %v8471
        %8504 = vst [vmem:[#allocation2 + $0xe0] sm:$0xff] %v8472
        %8505 = vst [vmem:[#allocation2 + $0xe8] sm:$0xff] %v8473
        %8506 = vst [vmem:[#allocation2 + $0xf0] sm:$0xff] %v8474
        %8507 = vst [vmem:[#allocation2 + $0xf8] sm:$0xff] %v8475
        %p8508 = scmp.eq.s32.totalorder %s38, 1
        // Predicated region
        $region117: #{tpu_custom_call.1} parent=83 // pred_check
          %p8509 = pneg %p8508
        $region118: #{tpu_custom_call.1} parent=83 // pred_check_branch
          %8511 = sbr.rel (%p8509) target = $region120
        $region119: #{tpu_custom_call.1} parent=83 // pred_region
          %v8512 = vld [vmem:[%s12] sm:$0x1]
          %v8513 = vld [vmem:[%s13] sm:$0x1]
          %8514 = vadd.xlane.f32.xlu0 %v8444
          %v8515 = vpop.xlane.xlu0 %8514
          %8516 = vadd.xlane.f32.xlu0 %v8445
          %v8517 = vpop.xlane.xlu0 %8516
          %8518 = vadd.xlane.f32.xlu0 %v8446
          %v8519 = vpop.xlane.xlu0 %8518
          %8520 = vadd.xlane.f32.xlu0 %v8447
          %v8521 = vpop.xlane.xlu0 %8520
          %8522 = vadd.xlane.f32.xlu0 %v8448
          %v8523 = vpop.xlane.xlu0 %8522
          %8524 = vadd.xlane.f32.xlu0 %v8449
          %v8525 = vpop.xlane.xlu0 %8524
          %8526 = vadd.xlane.f32.xlu0 %v8450
          %v8527 = vpop.xlane.xlu0 %8526
          %8528 = vadd.xlane.f32.xlu0 %v8451
          %v8529 = vpop.xlane.xlu0 %8528
          %8530 = vadd.xlane.f32.xlu0 %v8452
          %v8531 = vpop.xlane.xlu0 %8530
          %8532 = vadd.xlane.f32.xlu0 %v8453
          %v8533 = vpop.xlane.xlu0 %8532
          %8534 = vadd.xlane.f32.xlu0 %v8454
          %v8535 = vpop.xlane.xlu0 %8534
          %8536 = vadd.xlane.f32.xlu0 %v8455
          %v8537 = vpop.xlane.xlu0 %8536
          %8538 = vadd.xlane.f32.xlu0 %v8456
          %v8539 = vpop.xlane.xlu0 %8538
          %8540 = vadd.xlane.f32.xlu0 %v8457
          %v8541 = vpop.xlane.xlu0 %8540
          %8542 = vadd.xlane.f32.xlu0 %v8458
          %v8543 = vpop.xlane.xlu0 %8542
          %8544 = vadd.xlane.f32.xlu0 %v8459
          %v8545 = vpop.xlane.xlu0 %8544
          %8546 = vadd.xlane.f32.xlu0 %v8460
          %v8547 = vpop.xlane.xlu0 %8546
          %8548 = vadd.xlane.f32.xlu0 %v8461
          %v8549 = vpop.xlane.xlu0 %8548
          %8550 = vadd.xlane.f32.xlu0 %v8462
          %v8551 = vpop.xlane.xlu0 %8550
          %8552 = vadd.xlane.f32.xlu0 %v8463
          %v8553 = vpop.xlane.xlu0 %8552
          %8554 = vadd.xlane.f32.xlu0 %v8464
          %v8555 = vpop.xlane.xlu0 %8554
          %8556 = vadd.xlane.f32.xlu0 %v8465
          %v8557 = vpop.xlane.xlu0 %8556
          %8558 = vadd.xlane.f32.xlu0 %v8466
          %v8559 = vpop.xlane.xlu0 %8558
          %8560 = vadd.xlane.f32.xlu0 %v8467
          %v8561 = vpop.xlane.xlu0 %8560
          %8562 = vadd.xlane.f32.xlu0 %v8468
          %v8563 = vpop.xlane.xlu0 %8562
          %8564 = vadd.xlane.f32.xlu0 %v8469
          %v8565 = vpop.xlane.xlu0 %8564
          %8566 = vadd.xlane.f32.xlu0 %v8470
          %v8567 = vpop.xlane.xlu0 %8566
          %8568 = vadd.xlane.f32.xlu0 %v8471
          %v8569 = vpop.xlane.xlu0 %8568
          %8570 = vadd.xlane.f32.xlu0 %v8472
          %v8571 = vpop.xlane.xlu0 %8570
          %8572 = vadd.xlane.f32.xlu0 %v8473
          %v8573 = vpop.xlane.xlu0 %8572
          %8574 = vadd.xlane.f32.xlu0 %v8474
          %v8575 = vpop.xlane.xlu0 %8574
          %8576 = vadd.xlane.f32.xlu0 %v8475
          %v8577 = vpop.xlane.xlu0 %8576
          %v8578 = vmul.f32 %v8515, %v959
          %v8579 = vmul.f32 %v8517, %v959
          %v8580 = vmul.f32 %v8519, %v959
          %v8581 = vmul.f32 %v8521, %v959
          %v8582 = vmul.f32 %v8523, %v959
          %v8583 = vmul.f32 %v8525, %v959
          %v8584 = vmul.f32 %v8527, %v959
          %v8585 = vmul.f32 %v8529, %v959
          %v8586 = vmul.f32 %v8531, %v959
          %v8587 = vmul.f32 %v8533, %v959
          %v8588 = vmul.f32 %v8535, %v959
          %v8589 = vmul.f32 %v8537, %v959
          %v8590 = vmul.f32 %v8539, %v959
          %v8591 = vmul.f32 %v8541, %v959
          %v8592 = vmul.f32 %v8543, %v959
          %v8593 = vmul.f32 %v8545, %v959
          %v8594 = vmul.f32 %v8547, %v959
          %v8595 = vmul.f32 %v8549, %v959
          %v8596 = vmul.f32 %v8551, %v959
          %v8597 = vmul.f32 %v8553, %v959
          %v8598 = vmul.f32 %v8555, %v959
          %v8599 = vmul.f32 %v8557, %v959
          %v8600 = vmul.f32 %v8559, %v959
          %v8601 = vmul.f32 %v8561, %v959
          %v8602 = vmul.f32 %v8563, %v959
          %v8603 = vmul.f32 %v8565, %v959
          %v8604 = vmul.f32 %v8567, %v959
          %v8605 = vmul.f32 %v8569, %v959
          %v8606 = vmul.f32 %v8571, %v959
          %v8607 = vmul.f32 %v8573, %v959
          %v8608 = vmul.f32 %v8575, %v959
          %v8609 = vmul.f32 %v8577, %v959
          %v8610 = vsub.f32 %v8444, %v8578
          %v8611 = vsub.f32 %v8445, %v8579
          %v8612 = vsub.f32 %v8446, %v8580
          %v8613 = vsub.f32 %v8447, %v8581
          %v8614 = vsub.f32 %v8448, %v8582
          %v8615 = vsub.f32 %v8449, %v8583
          %v8616 = vsub.f32 %v8450, %v8584
          %v8617 = vsub.f32 %v8451, %v8585
          %v8618 = vsub.f32 %v8452, %v8586
          %v8619 = vsub.f32 %v8453, %v8587
          %v8620 = vsub.f32 %v8454, %v8588
          %v8621 = vsub.f32 %v8455, %v8589
          %v8622 = vsub.f32 %v8456, %v8590
          %v8623 = vsub.f32 %v8457, %v8591
          %v8624 = vsub.f32 %v8458, %v8592
          %v8625 = vsub.f32 %v8459, %v8593
          %v8626 = vsub.f32 %v8460, %v8594
          %v8627 = vsub.f32 %v8461, %v8595
          %v8628 = vsub.f32 %v8462, %v8596
          %v8629 = vsub.f32 %v8463, %v8597
          %v8630 = vsub.f32 %v8464, %v8598
          %v8631 = vsub.f32 %v8465, %v8599
          %v8632 = vsub.f32 %v8466, %v8600
          %v8633 = vsub.f32 %v8467, %v8601
          %v8634 = vsub.f32 %v8468, %v8602
          %v8635 = vsub.f32 %v8469, %v8603
          %v8636 = vsub.f32 %v8470, %v8604
          %v8637 = vsub.f32 %v8471, %v8605
          %v8638 = vsub.f32 %v8472, %v8606
          %v8639 = vsub.f32 %v8473, %v8607
          %v8640 = vsub.f32 %v8474, %v8608
          %v8641 = vsub.f32 %v8475, %v8609
          %v8642 = vmul.f32 %v8610, %v8610
          %v8643 = vmul.f32 %v8611, %v8611
          %v8644 = vmul.f32 %v8612, %v8612
          %v8645 = vmul.f32 %v8613, %v8613
          %v8646 = vmul.f32 %v8614, %v8614
          %v8647 = vmul.f32 %v8615, %v8615
          %v8648 = vmul.f32 %v8616, %v8616
          %v8649 = vmul.f32 %v8617, %v8617
          %v8650 = vmul.f32 %v8618, %v8618
          %v8651 = vmul.f32 %v8619, %v8619
          %v8652 = vmul.f32 %v8620, %v8620
          %v8653 = vmul.f32 %v8621, %v8621
          %v8654 = vmul.f32 %v8622, %v8622
          %v8655 = vmul.f32 %v8623, %v8623
          %v8656 = vmul.f32 %v8624, %v8624
          %v8657 = vmul.f32 %v8625, %v8625
          %v8658 = vmul.f32 %v8626, %v8626
          %v8659 = vmul.f32 %v8627, %v8627
          %v8660 = vmul.f32 %v8628, %v8628
          %v8661 = vmul.f32 %v8629, %v8629
          %v8662 = vmul.f32 %v8630, %v8630
          %v8663 = vmul.f32 %v8631, %v8631
          %v8664 = vmul.f32 %v8632, %v8632
          %v8665 = vmul.f32 %v8633, %v8633
          %v8666 = vmul.f32 %v8634, %v8634
          %v8667 = vmul.f32 %v8635, %v8635
          %v8668 = vmul.f32 %v8636, %v8636
          %v8669 = vmul.f32 %v8637, %v8637
          %v8670 = vmul.f32 %v8638, %v8638
          %v8671 = vmul.f32 %v8639, %v8639
          %v8672 = vmul.f32 %v8640, %v8640
          %v8673 = vmul.f32 %v8641, %v8641
          %8674 = vadd.xlane.f32.xlu0 %v8642
          %v8675 = vpop.xlane.xlu0 %8674
          %8676 = vadd.xlane.f32.xlu0 %v8643
          %v8677 = vpop.xlane.xlu0 %8676
          %8678 = vadd.xlane.f32.xlu0 %v8644
          %v8679 = vpop.xlane.xlu0 %8678
          %8680 = vadd.xlane.f32.xlu0 %v8645
          %v8681 = vpop.xlane.xlu0 %8680
          %8682 = vadd.xlane.f32.xlu0 %v8646
          %v8683 = vpop.xlane.xlu0 %8682
          %8684 = vadd.xlane.f32.xlu0 %v8647
          %v8685 = vpop.xlane.xlu0 %8684
          %8686 = vadd.xlane.f32.xlu0 %v8648
          %v8687 = vpop.xlane.xlu0 %8686
          %8688 = vadd.xlane.f32.xlu0 %v8649
          %v8689 = vpop.xlane.xlu0 %8688
          %8690 = vadd.xlane.f32.xlu0 %v8650
          %v8691 = vpop.xlane.xlu0 %8690
          %8692 = vadd.xlane.f32.xlu0 %v8651
          %v8693 = vpop.xlane.xlu0 %8692
          %8694 = vadd.xlane.f32.xlu0 %v8652
          %v8695 = vpop.xlane.xlu0 %8694
          %8696 = vadd.xlane.f32.xlu0 %v8653
          %v8697 = vpop.xlane.xlu0 %8696
          %8698 = vadd.xlane.f32.xlu0 %v8654
          %v8699 = vpop.xlane.xlu0 %8698
          %8700 = vadd.xlane.f32.xlu0 %v8655
          %v8701 = vpop.xlane.xlu0 %8700
          %8702 = vadd.xlane.f32.xlu0 %v8656
          %v8703 = vpop.xlane.xlu0 %8702
          %8704 = vadd.xlane.f32.xlu0 %v8657
          %v8705 = vpop.xlane.xlu0 %8704
          %8706 = vadd.xlane.f32.xlu0 %v8658
          %v8707 = vpop.xlane.xlu0 %8706
          %8708 = vadd.xlane.f32.xlu0 %v8659
          %v8709 = vpop.xlane.xlu0 %8708
          %8710 = vadd.xlane.f32.xlu0 %v8660
          %v8711 = vpop.xlane.xlu0 %8710
          %8712 = vadd.xlane.f32.xlu0 %v8661
          %v8713 = vpop.xlane.xlu0 %8712
          %8714 = vadd.xlane.f32.xlu0 %v8662
          %v8715 = vpop.xlane.xlu0 %8714
          %8716 = vadd.xlane.f32.xlu0 %v8663
          %v8717 = vpop.xlane.xlu0 %8716
          %8718 = vadd.xlane.f32.xlu0 %v8664
          %v8719 = vpop.xlane.xlu0 %8718
          %8720 = vadd.xlane.f32.xlu0 %v8665
          %v8721 = vpop.xlane.xlu0 %8720
          %8722 = vadd.xlane.f32.xlu0 %v8666
          %v8723 = vpop.xlane.xlu0 %8722
          %8724 = vadd.xlane.f32.xlu0 %v8667
          %v8725 = vpop.xlane.xlu0 %8724
          %8726 = vadd.xlane.f32.xlu0 %v8668
          %v8727 = vpop.xlane.xlu0 %8726
          %8728 = vadd.xlane.f32.xlu0 %v8669
          %v8729 = vpop.xlane.xlu0 %8728
          %8730 = vadd.xlane.f32.xlu0 %v8670
          %v8731 = vpop.xlane.xlu0 %8730
          %8732 = vadd.xlane.f32.xlu0 %v8671
          %v8733 = vpop.xlane.xlu0 %8732
          %8734 = vadd.xlane.f32.xlu0 %v8672
          %v8735 = vpop.xlane.xlu0 %8734
          %8736 = vadd.xlane.f32.xlu0 %v8673
          %v8737 = vpop.xlane.xlu0 %8736
          %v8738 = vmul.f32 %v8675, %v959
          %v8739 = vmul.f32 %v8677, %v959
          %v8740 = vmul.f32 %v8679, %v959
          %v8741 = vmul.f32 %v8681, %v959
          %v8742 = vmul.f32 %v8683, %v959
          %v8743 = vmul.f32 %v8685, %v959
          %v8744 = vmul.f32 %v8687, %v959
          %v8745 = vmul.f32 %v8689, %v959
          %v8746 = vmul.f32 %v8691, %v959
          %v8747 = vmul.f32 %v8693, %v959
          %v8748 = vmul.f32 %v8695, %v959
          %v8749 = vmul.f32 %v8697, %v959
          %v8750 = vmul.f32 %v8699, %v959
          %v8751 = vmul.f32 %v8701, %v959
          %v8752 = vmul.f32 %v8703, %v959
          %v8753 = vmul.f32 %v8705, %v959
          %v8754 = vmul.f32 %v8707, %v959
          %v8755 = vmul.f32 %v8709, %v959
          %v8756 = vmul.f32 %v8711, %v959
          %v8757 = vmul.f32 %v8713, %v959
          %v8758 = vmul.f32 %v8715, %v959
          %v8759 = vmul.f32 %v8717, %v959
          %v8760 = vmul.f32 %v8719, %v959
          %v8761 = vmul.f32 %v8721, %v959
          %v8762 = vmul.f32 %v8723, %v959
          %v8763 = vmul.f32 %v8725, %v959
          %v8764 = vmul.f32 %v8727, %v959
          %v8765 = vmul.f32 %v8729, %v959
          %v8766 = vmul.f32 %v8731, %v959
          %v8767 = vmul.f32 %v8733, %v959
          %v8768 = vmul.f32 %v8735, %v959
          %v8769 = vmul.f32 %v8737, %v959
          %v8770 = vadd.f32 %v8738, 1e-05
          %v8771 = vadd.f32 %v8739, 1e-05
          %v8772 = vadd.f32 %v8740, 1e-05
          %v8773 = vadd.f32 %v8741, 1e-05
          %v8774 = vadd.f32 %v8742, 1e-05
          %v8775 = vadd.f32 %v8743, 1e-05
          %v8776 = vadd.f32 %v8744, 1e-05
          %v8777 = vadd.f32 %v8745, 1e-05
          %v8778 = vadd.f32 %v8746, 1e-05
          %v8779 = vadd.f32 %v8747, 1e-05
          %v8780 = vadd.f32 %v8748, 1e-05
          %v8781 = vadd.f32 %v8749, 1e-05
          %v8782 = vadd.f32 %v8750, 1e-05
          %v8783 = vadd.f32 %v8751, 1e-05
          %v8784 = vadd.f32 %v8752, 1e-05
          %v8785 = vadd.f32 %v8753, 1e-05
          %v8786 = vadd.f32 %v8754, 1e-05
          %v8787 = vadd.f32 %v8755, 1e-05
          %v8788 = vadd.f32 %v8756, 1e-05
          %v8789 = vadd.f32 %v8757, 1e-05
          %v8790 = vadd.f32 %v8758, 1e-05
          %v8791 = vadd.f32 %v8759, 1e-05
          %v8792 = vadd.f32 %v8760, 1e-05
          %v8793 = vadd.f32 %v8761, 1e-05
          %v8794 = vadd.f32 %v8762, 1e-05
          %v8795 = vadd.f32 %v8763, 1e-05
          %v8796 = vadd.f32 %v8764, 1e-05
          %v8797 = vadd.f32 %v8765, 1e-05
          %v8798 = vadd.f32 %v8766, 1e-05
          %v8799 = vadd.f32 %v8767, 1e-05
          %v8800 = vadd.f32 %v8768, 1e-05
          %v8801 = vadd.f32 %v8769, 1e-05
          %v8802 = vrsqrt.pop %v8770
          %v8803 = vrsqrt.pop %v8771
          %v8804 = vrsqrt.pop %v8772
          %v8805 = vrsqrt.pop %v8773
          %v8806 = vrsqrt.pop %v8774
          %v8807 = vrsqrt.pop %v8775
          %v8808 = vrsqrt.pop %v8776
          %v8809 = vrsqrt.pop %v8777
          %v8810 = vrsqrt.pop %v8778
          %v8811 = vrsqrt.pop %v8779
          %v8812 = vrsqrt.pop %v8780
          %v8813 = vrsqrt.pop %v8781
          %v8814 = vrsqrt.pop %v8782
          %v8815 = vrsqrt.pop %v8783
          %v8816 = vrsqrt.pop %v8784
          %v8817 = vrsqrt.pop %v8785
          %v8818 = vrsqrt.pop %v8786
          %v8819 = vrsqrt.pop %v8787
          %v8820 = vrsqrt.pop %v8788
          %v8821 = vrsqrt.pop %v8789
          %v8822 = vrsqrt.pop %v8790
          %v8823 = vrsqrt.pop %v8791
          %v8824 = vrsqrt.pop %v8792
          %v8825 = vrsqrt.pop %v8793
          %v8826 = vrsqrt.pop %v8794
          %v8827 = vrsqrt.pop %v8795
          %v8828 = vrsqrt.pop %v8796
          %v8829 = vrsqrt.pop %v8797
          %v8830 = vrsqrt.pop %v8798
          %v8831 = vrsqrt.pop %v8799
          %v8832 = vrsqrt.pop %v8800
          %v8833 = vrsqrt.pop %v8801
          %v8834 = vmul.f32 %v8610, %v8802
          %v8835 = vmul.f32 %v8611, %v8803
          %v8836 = vmul.f32 %v8612, %v8804
          %v8837 = vmul.f32 %v8613, %v8805
          %v8838 = vmul.f32 %v8614, %v8806
          %v8839 = vmul.f32 %v8615, %v8807
          %v8840 = vmul.f32 %v8616, %v8808
          %v8841 = vmul.f32 %v8617, %v8809
          %v8842 = vmul.f32 %v8618, %v8810
          %v8843 = vmul.f32 %v8619, %v8811
          %v8844 = vmul.f32 %v8620, %v8812
          %v8845 = vmul.f32 %v8621, %v8813
          %v8846 = vmul.f32 %v8622, %v8814
          %v8847 = vmul.f32 %v8623, %v8815
          %v8848 = vmul.f32 %v8624, %v8816
          %v8849 = vmul.f32 %v8625, %v8817
          %v8850 = vmul.f32 %v8626, %v8818
          %v8851 = vmul.f32 %v8627, %v8819
          %v8852 = vmul.f32 %v8628, %v8820
          %v8853 = vmul.f32 %v8629, %v8821
          %v8854 = vmul.f32 %v8630, %v8822
          %v8855 = vmul.f32 %v8631, %v8823
          %v8856 = vmul.f32 %v8632, %v8824
          %v8857 = vmul.f32 %v8633, %v8825
          %v8858 = vmul.f32 %v8634, %v8826
          %v8859 = vmul.f32 %v8635, %v8827
          %v8860 = vmul.f32 %v8636, %v8828
          %v8861 = vmul.f32 %v8637, %v8829
          %v8862 = vmul.f32 %v8638, %v8830
          %v8863 = vmul.f32 %v8639, %v8831
          %v8864 = vmul.f32 %v8640, %v8832
          %v8865 = vmul.f32 %v8641, %v8833
          %v8867 = vlaneseq
          %v8868 = vshrl.u32 %v8867, 7
          %v8869 = vsub.s32 0, %v8868
          %v8870 = vrot.slane %v8512, %v8869
          %v8872 = vmul.f32 %v8834, %v8870
          %v8873 = vmul.f32 %v8835, %v8870
          %v8874 = vmul.f32 %v8836, %v8870
          %v8875 = vmul.f32 %v8837, %v8870
          %v8876 = vmul.f32 %v8838, %v8870
          %v8877 = vmul.f32 %v8839, %v8870
          %v8878 = vmul.f32 %v8840, %v8870
          %v8879 = vmul.f32 %v8841, %v8870
          %v8880 = vmul.f32 %v8842, %v8870
          %v8881 = vmul.f32 %v8843, %v8870
          %v8882 = vmul.f32 %v8844, %v8870
          %v8883 = vmul.f32 %v8845, %v8870
          %v8884 = vmul.f32 %v8846, %v8870
          %v8885 = vmul.f32 %v8847, %v8870
          %v8886 = vmul.f32 %v8848, %v8870
          %v8887 = vmul.f32 %v8849, %v8870
          %v8888 = vmul.f32 %v8850, %v8870
          %v8889 = vmul.f32 %v8851, %v8870
          %v8890 = vmul.f32 %v8852, %v8870
          %v8891 = vmul.f32 %v8853, %v8870
          %v8892 = vmul.f32 %v8854, %v8870
          %v8893 = vmul.f32 %v8855, %v8870
          %v8894 = vmul.f32 %v8856, %v8870
          %v8895 = vmul.f32 %v8857, %v8870
          %v8896 = vmul.f32 %v8858, %v8870
          %v8897 = vmul.f32 %v8859, %v8870
          %v8898 = vmul.f32 %v8860, %v8870
          %v8899 = vmul.f32 %v8861, %v8870
          %v8900 = vmul.f32 %v8862, %v8870
          %v8901 = vmul.f32 %v8863, %v8870
          %v8902 = vmul.f32 %v8864, %v8870
          %v8903 = vmul.f32 %v8865, %v8870
          %v8905 = vlaneseq
          %v8906 = vshrl.u32 %v8905, 7
          %v8907 = vsub.s32 0, %v8906
          %v8908 = vrot.slane %v8513, %v8907
          %v8910 = vadd.f32 %v8872, %v8908
          %v8911 = vadd.f32 %v8873, %v8908
          %v8912 = vadd.f32 %v8874, %v8908
          %v8913 = vadd.f32 %v8875, %v8908
          %v8914 = vadd.f32 %v8876, %v8908
          %v8915 = vadd.f32 %v8877, %v8908
          %v8916 = vadd.f32 %v8878, %v8908
          %v8917 = vadd.f32 %v8879, %v8908
          %v8918 = vadd.f32 %v8880, %v8908
          %v8919 = vadd.f32 %v8881, %v8908
          %v8920 = vadd.f32 %v8882, %v8908
          %v8921 = vadd.f32 %v8883, %v8908
          %v8922 = vadd.f32 %v8884, %v8908
          %v8923 = vadd.f32 %v8885, %v8908
          %v8924 = vadd.f32 %v8886, %v8908
          %v8925 = vadd.f32 %v8887, %v8908
          %v8926 = vadd.f32 %v8888, %v8908
          %v8927 = vadd.f32 %v8889, %v8908
          %v8928 = vadd.f32 %v8890, %v8908
          %v8929 = vadd.f32 %v8891, %v8908
          %v8930 = vadd.f32 %v8892, %v8908
          %v8931 = vadd.f32 %v8893, %v8908
          %v8932 = vadd.f32 %v8894, %v8908
          %v8933 = vadd.f32 %v8895, %v8908
          %v8934 = vadd.f32 %v8896, %v8908
          %v8935 = vadd.f32 %v8897, %v8908
          %v8936 = vadd.f32 %v8898, %v8908
          %v8937 = vadd.f32 %v8899, %v8908
          %v8938 = vadd.f32 %v8900, %v8908
          %v8939 = vadd.f32 %v8901, %v8908
          %v8940 = vadd.f32 %v8902, %v8908
          %v8941 = vadd.f32 %v8903, %v8908
          %v8942 = vpack.c.bf16 %v8911, %v8910
          %v8943 = vpack.c.bf16 %v8913, %v8912
          %v8944 = vpack.c.bf16 %v8915, %v8914
          %v8945 = vpack.c.bf16 %v8917, %v8916
          %v8946 = vpack.c.bf16 %v8919, %v8918
          %v8947 = vpack.c.bf16 %v8921, %v8920
          %v8948 = vpack.c.bf16 %v8923, %v8922
          %v8949 = vpack.c.bf16 %v8925, %v8924
          %v8950 = vpack.c.bf16 %v8927, %v8926
          %v8951 = vpack.c.bf16 %v8929, %v8928
          %v8952 = vpack.c.bf16 %v8931, %v8930
          %v8953 = vpack.c.bf16 %v8933, %v8932
          %v8954 = vpack.c.bf16 %v8935, %v8934
          %v8955 = vpack.c.bf16 %v8937, %v8936
          %v8956 = vpack.c.bf16 %v8939, %v8938
          %v8957 = vpack.c.bf16 %v8941, %v8940
          %v8958 = vld [vmem:[#allocation14] sm:$0xf]
          %v8959 = vld [vmem:[#allocation14 + $0x4] sm:$0xf]
          %v8960 = vld [vmem:[#allocation14 + $0x8] sm:$0xf]
          %v8961 = vld [vmem:[#allocation14 + $0xc] sm:$0xf]
          %v8962 = vld [vmem:[#allocation14 + $0x10] sm:$0xf]
          %v8963 = vld [vmem:[#allocation14 + $0x14] sm:$0xf]
          %v8964 = vld [vmem:[#allocation14 + $0x18] sm:$0xf]
          %v8965 = vld [vmem:[#allocation14 + $0x1c] sm:$0xf]
          %v8966 = vld [vmem:[#allocation14 + $0x20] sm:$0xf]
          %v8967 = vld [vmem:[#allocation14 + $0x24] sm:$0xf]
          %v8968 = vld [vmem:[#allocation14 + $0x28] sm:$0xf]
          %v8969 = vld [vmem:[#allocation14 + $0x2c] sm:$0xf]
          %v8970 = vld [vmem:[#allocation14 + $0x30] sm:$0xf]
          %v8971 = vld [vmem:[#allocation14 + $0x34] sm:$0xf]
          %v8972 = vld [vmem:[#allocation14 + $0x38] sm:$0xf]
          %v8973 = vld [vmem:[#allocation14 + $0x3c] sm:$0xf]
          %v8974 = vld [vmem:[%s15] sm:$0x1]
          %v8976 = vlaneseq
          %v8977 = vshrl.u32 %v8976, 7
          %v8978 = vsub.s32 0, %v8977
          %v8979 = vrot.slane %v8974, %v8978
          %v8997 = vunpack.c.l.b16 %v8958
          %v8998 = vunpack.c.l.b16 %v8959
          %v8999 = vunpack.c.l.b16 %v8960
          %v9000 = vunpack.c.l.b16 %v8961
          %v9001 = vunpack.c.l.b16 %v8962
          %v9002 = vunpack.c.l.b16 %v8963
          %v9003 = vunpack.c.l.b16 %v8964
          %v9004 = vunpack.c.l.b16 %v8965
          %v9005 = vunpack.c.l.b16 %v8966
          %v9006 = vunpack.c.l.b16 %v8967
          %v9007 = vunpack.c.l.b16 %v8968
          %v9008 = vunpack.c.l.b16 %v8969
          %v9009 = vunpack.c.l.b16 %v8970
          %v9010 = vunpack.c.l.b16 %v8971
          %v9011 = vunpack.c.l.b16 %v8972
          %v9012 = vunpack.c.l.b16 %v8973
          %v9013 = vpack.c.b16 %v8998, %v8997
          %v9014 = vpack.c.b16 %v9000, %v8999
          %v9015 = vpack.c.b16 %v9002, %v9001
          %v9016 = vpack.c.b16 %v9004, %v9003
          %v9017 = vpack.c.b16 %v9006, %v9005
          %v9018 = vpack.c.b16 %v9008, %v9007
          %v9019 = vpack.c.b16 %v9010, %v9009
          %v9020 = vpack.c.b16 %v9012, %v9011
          %9029 = vmatprep.subr.bf16.mxu0 0
          %9030 = vmatpush1.bf16.msra.mxu0 %v9020
          %9031 = vmatprep.subr.bf16.mxu0 0
          %9032 = vmatpush1.bf16.msra.mxu0 %v9019
          %9033 = vmatprep.subr.bf16.mxu0 0
          %9034 = vmatpush1.bf16.msra.mxu0 %v9018
          %9035 = vmatprep.subr.bf16.mxu0 0
          %9036 = vmatpush1.bf16.msra.mxu0 %v9017
          %9037 = vmatprep.subr.bf16.mxu0 0
          %9038 = vmatpush1.bf16.msra.mxu0 %v9016
          %9039 = vmatprep.subr.bf16.mxu0 0
          %9040 = vmatpush1.bf16.msra.mxu0 %v9015
          %9041 = vmatprep.subr.bf16.mxu0 0
          %9042 = vmatpush1.bf16.msra.mxu0 %v9014
          %9043 = vmatprep.subr.bf16.mxu0 0
          %9044 = vmatpush1.bf16.msra.mxu0 %v9013
          %9045 = vmatprep.subr.bf16.mxu0 0
          %9046 = vmatpush2.bf16.msra.mxu0 0
          %9047 = vmatprep.subr.bf16.mxu0 0
          %9048 = vmatpush2.bf16.msra.mxu0 0
          %9049 = vmatprep.subr.bf16.mxu0 0
          %9050 = vmatpush2.bf16.msra.mxu0 0
          %9051 = vmatprep.subr.bf16.mxu0 0
          %9052 = vmatpush2.bf16.msra.mxu0 0
          %9053 = vmatprep.subr.bf16.mxu0 0
          %9054 = vmatpush2.bf16.msra.mxu0 0
          %9055 = vmatprep.subr.bf16.mxu0 0
          %9056 = vmatpush2.bf16.msra.mxu0 0
          %9057 = vmatprep.subr.bf16.mxu0 0
          %9058 = vmatpush2.bf16.msra.mxu0 0
          %9059 = vmatprep.subr.bf16.mxu0 0
          %9060 = vmatpush2.bf16.msra.mxu0 0
          %9061 = vmatprep.mubr.bf16.mxu0 0
          %9062 = vmatmul.mubr.bf16.gmra.mxu0 %v8942
          %v9063 = vpop.f32.mrf.mxu0
          %v9064 = vadd.f32 %v8979, %v9063
          %v9065 = vpop.f32.mrf.mxu0
          %v9066 = vpop.f32.mrf.mxu0
          %v9067 = vadd.f32 %v8979, %v9066
          %v9068 = vpop.f32.mrf.mxu0
          %9069 = vmatprep.mubr.bf16.mxu0 0
          %9070 = vmatmul.mubr.bf16.gmra.mxu0 %v8943
          %v9071 = vpop.f32.mrf.mxu0
          %v9072 = vadd.f32 %v8979, %v9071
          %v9073 = vpop.f32.mrf.mxu0
          %v9074 = vpop.f32.mrf.mxu0
          %v9075 = vadd.f32 %v8979, %v9074
          %v9076 = vpop.f32.mrf.mxu0
          %9077 = vmatprep.mubr.bf16.mxu0 0
          %9078 = vmatmul.mubr.bf16.gmra.mxu0 %v8944
          %v9079 = vpop.f32.mrf.mxu0
          %v9080 = vadd.f32 %v8979, %v9079
          %v9081 = vpop.f32.mrf.mxu0
          %v9082 = vpop.f32.mrf.mxu0
          %v9083 = vadd.f32 %v8979, %v9082
          %v9084 = vpop.f32.mrf.mxu0
          %9085 = vmatprep.mubr.bf16.mxu0 0
          %9086 = vmatmul.mubr.bf16.gmra.mxu0 %v8945
          %v9087 = vpop.f32.mrf.mxu0
          %v9088 = vadd.f32 %v8979, %v9087
          %v9089 = vpop.f32.mrf.mxu0
          %v9090 = vpop.f32.mrf.mxu0
          %v9091 = vadd.f32 %v8979, %v9090
          %v9092 = vpop.f32.mrf.mxu0
          %9093 = vmatprep.mubr.bf16.mxu0 0
          %9094 = vmatmul.mubr.bf16.gmra.mxu0 %v8946
          %v9095 = vpop.f32.mrf.mxu0
          %v9096 = vadd.f32 %v8979, %v9095
          %v9097 = vpop.f32.mrf.mxu0
          %v9098 = vpop.f32.mrf.mxu0
          %v9099 = vadd.f32 %v8979, %v9098
          %v9100 = vpop.f32.mrf.mxu0
          %9101 = vmatprep.mubr.bf16.mxu0 0
          %9102 = vmatmul.mubr.bf16.gmra.mxu0 %v8947
          %v9103 = vpop.f32.mrf.mxu0
          %v9104 = vadd.f32 %v8979, %v9103
          %v9105 = vpop.f32.mrf.mxu0
          %v9106 = vpop.f32.mrf.mxu0
          %v9107 = vadd.f32 %v8979, %v9106
          %v9108 = vpop.f32.mrf.mxu0
          %9109 = vmatprep.mubr.bf16.mxu0 0
          %9110 = vmatmul.mubr.bf16.gmra.mxu0 %v8948
          %v9111 = vpop.f32.mrf.mxu0
          %v9112 = vadd.f32 %v8979, %v9111
          %v9113 = vpop.f32.mrf.mxu0
          %v9114 = vpop.f32.mrf.mxu0
          %v9115 = vadd.f32 %v8979, %v9114
          %v9116 = vpop.f32.mrf.mxu0
          %9117 = vmatprep.mubr.bf16.mxu0 0
          %9118 = vmatmul.mubr.bf16.gmra.mxu0 %v8949
          %v9119 = vpop.f32.mrf.mxu0
          %v9120 = vadd.f32 %v8979, %v9119
          %v9121 = vpop.f32.mrf.mxu0
          %v9122 = vpop.f32.mrf.mxu0
          %v9123 = vadd.f32 %v8979, %v9122
          %v9124 = vpop.f32.mrf.mxu0
          %9125 = vmatprep.mubr.bf16.mxu0 0
          %9126 = vmatmul.mubr.bf16.gmra.mxu0 %v8950
          %v9127 = vpop.f32.mrf.mxu0
          %v9128 = vadd.f32 %v8979, %v9127
          %v9129 = vpop.f32.mrf.mxu0
          %v9130 = vpop.f32.mrf.mxu0
          %v9131 = vadd.f32 %v8979, %v9130
          %v9132 = vpop.f32.mrf.mxu0
          %9133 = vmatprep.mubr.bf16.mxu0 0
          %9134 = vmatmul.mubr.bf16.gmra.mxu0 %v8951
          %v9135 = vpop.f32.mrf.mxu0
          %v9136 = vadd.f32 %v8979, %v9135
          %v9137 = vpop.f32.mrf.mxu0
          %v9138 = vpop.f32.mrf.mxu0
          %v9139 = vadd.f32 %v8979, %v9138
          %v9140 = vpop.f32.mrf.mxu0
          %9141 = vmatprep.mubr.bf16.mxu0 0
          %9142 = vmatmul.mubr.bf16.gmra.mxu0 %v8952
          %v9143 = vpop.f32.mrf.mxu0
          %v9144 = vadd.f32 %v8979, %v9143
          %v9145 = vpop.f32.mrf.mxu0
          %v9146 = vpop.f32.mrf.mxu0
          %v9147 = vadd.f32 %v8979, %v9146
          %v9148 = vpop.f32.mrf.mxu0
          %9149 = vmatprep.mubr.bf16.mxu0 0
          %9150 = vmatmul.mubr.bf16.gmra.mxu0 %v8953
          %v9151 = vpop.f32.mrf.mxu0
          %v9152 = vadd.f32 %v8979, %v9151
          %v9153 = vpop.f32.mrf.mxu0
          %v9154 = vpop.f32.mrf.mxu0
          %v9155 = vadd.f32 %v8979, %v9154
          %v9156 = vpop.f32.mrf.mxu0
          %9157 = vmatprep.mubr.bf16.mxu0 0
          %9158 = vmatmul.mubr.bf16.gmra.mxu0 %v8954
          %v9159 = vpop.f32.mrf.mxu0
          %v9160 = vadd.f32 %v8979, %v9159
          %v9161 = vpop.f32.mrf.mxu0
          %v9162 = vpop.f32.mrf.mxu0
          %v9163 = vadd.f32 %v8979, %v9162
          %v9164 = vpop.f32.mrf.mxu0
          %9165 = vmatprep.mubr.bf16.mxu0 0
          %9166 = vmatmul.mubr.bf16.gmra.mxu0 %v8955
          %v9167 = vpop.f32.mrf.mxu0
          %v9168 = vadd.f32 %v8979, %v9167
          %v9169 = vpop.f32.mrf.mxu0
          %v9170 = vpop.f32.mrf.mxu0
          %v9171 = vadd.f32 %v8979, %v9170
          %v9172 = vpop.f32.mrf.mxu0
          %9173 = vmatprep.mubr.bf16.mxu0 0
          %9174 = vmatmul.mubr.bf16.gmra.mxu0 %v8956
          %v9175 = vpop.f32.mrf.mxu0
          %v9176 = vadd.f32 %v8979, %v9175
          %v9177 = vpop.f32.mrf.mxu0
          %v9178 = vpop.f32.mrf.mxu0
          %v9179 = vadd.f32 %v8979, %v9178
          %v9180 = vpop.f32.mrf.mxu0
          %9181 = vmatprep.mubr.bf16.mxu0 0
          %9182 = vmatmul.mubr.bf16.gmra.mxu0 %v8957
          %v9183 = vpop.f32.mrf.mxu0
          %v9184 = vadd.f32 %v8979, %v9183
          %v9185 = vpop.f32.mrf.mxu0
          %v9186 = vpop.f32.mrf.mxu0
          %v9187 = vadd.f32 %v8979, %v9186
          %v9188 = vpop.f32.mrf.mxu0
          %9189 = vdwg.mxu0
          %9190 = vst [vmem:[#allocation15] sm:$0xff] %v9064
          %9191 = vst [vmem:[#allocation15 + $0x8] sm:$0xff] %v9067
          %9192 = vst [vmem:[#allocation15 + $0x10] sm:$0xff] %v9072
          %9193 = vst [vmem:[#allocation15 + $0x18] sm:$0xff] %v9075
          %9194 = vst [vmem:[#allocation15 + $0x20] sm:$0xff] %v9080
          %9195 = vst [vmem:[#allocation15 + $0x28] sm:$0xff] %v9083
          %9196 = vst [vmem:[#allocation15 + $0x30] sm:$0xff] %v9088
          %9197 = vst [vmem:[#allocation15 + $0x38] sm:$0xff] %v9091
          %9198 = vst [vmem:[#allocation15 + $0x40] sm:$0xff] %v9096
          %9199 = vst [vmem:[#allocation15 + $0x48] sm:$0xff] %v9099
          %9200 = vst [vmem:[#allocation15 + $0x50] sm:$0xff] %v9104
          %9201 = vst [vmem:[#allocation15 + $0x58] sm:$0xff] %v9107
          %9202 = vst [vmem:[#allocation15 + $0x60] sm:$0xff] %v9112
          %9203 = vst [vmem:[#allocation15 + $0x68] sm:$0xff] %v9115
          %9204 = vst [vmem:[#allocation15 + $0x70] sm:$0xff] %v9120
          %9205 = vst [vmem:[#allocation15 + $0x78] sm:$0xff] %v9123
          %9206 = vst [vmem:[#allocation15 + $0x80] sm:$0xff] %v9128
          %9207 = vst [vmem:[#allocation15 + $0x88] sm:$0xff] %v9131
          %9208 = vst [vmem:[#allocation15 + $0x90] sm:$0xff] %v9136
          %9209 = vst [vmem:[#allocation15 + $0x98] sm:$0xff] %v9139
          %9210 = vst [vmem:[#allocation15 + $0xa0] sm:$0xff] %v9144
          %9211 = vst [vmem:[#allocation15 + $0xa8] sm:$0xff] %v9147
          %9212 = vst [vmem:[#allocation15 + $0xb0] sm:$0xff] %v9152
          %9213 = vst [vmem:[#allocation15 + $0xb8] sm:$0xff] %v9155
          %9214 = vst [vmem:[#allocation15 + $0xc0] sm:$0xff] %v9160
          %9215 = vst [vmem:[#allocation15 + $0xc8] sm:$0xff] %v9163
          %9216 = vst [vmem:[#allocation15 + $0xd0] sm:$0xff] %v9168
          %9217 = vst [vmem:[#allocation15 + $0xd8] sm:$0xff] %v9171
          %9218 = vst [vmem:[#allocation15 + $0xe0] sm:$0xff] %v9176
          %9219 = vst [vmem:[#allocation15 + $0xe8] sm:$0xff] %v9179
          %9220 = vst [vmem:[#allocation15 + $0xf0] sm:$0xff] %v9184
          %9221 = vst [vmem:[#allocation15 + $0xf8] sm:$0xff] %v9187
        $region120: #{tpu_custom_call.1} parent=83 // pred_fallthru
          _
        // Predicated region
        $region121: #{tpu_custom_call.1} parent=83 // pred_check
          %p9222 = pneg %p442
        $region122: #{tpu_custom_call.1} parent=83 // pred_check_branch
          %9224 = sbr.rel (%p9222) target = $region124
        $region123: #{tpu_custom_call.1} parent=83 // pred_region
          %s9226 = ssub.s32 4096, 4096
          %9227 = vsyncadd [#allocation5], %s9226
          %s9228 = sshll.u32 [#allocation15], 4
          %s9229 = int_to_ptr.vmem [resolvable:$true] %s9228
          %9234 = dma.vmem_to_hbm [thread:$0]  %s9229, 4096, %s16, [#allocation5], 128, 128, 8
        $region124: #{tpu_custom_call.1} parent=83 // pred_fallthru
          _
        // Predicated region
        $region125: #{tpu_custom_call.1} parent=83 // pred_check
          %p9235 = pneg %p442
        $region126: #{tpu_custom_call.1} parent=83 // pred_check_branch
          %9237 = sbr.rel (%p9235) target = $region128
        $region127: #{tpu_custom_call.1} parent=83 // pred_region
          %9238 = dma.done [#allocation5], 4096
        $region128: #{tpu_custom_call.1} parent=83 // pred_fallthru
          _
      $region84: #{tpu_custom_call.1} parent=5 // pred_fallthru
        _
      %p9239 = scmp.le.s32.totalorder 2, %s33
      // Predicated region
      $region129: #{tpu_custom_call.1} parent=5 // pred_check
        %p9240 = pneg %p9239
      $region130: #{tpu_custom_call.1} parent=5 // pred_check_branch
        %9242 = sbr.rel (%p9240) target = $region132
      $region131: #{tpu_custom_call.1} parent=5 // pred_region
        %s9243 = ssub.s32 %s33, 2
      $region132: #{tpu_custom_call.1} parent=5 // pred_fallthru
        _
    $region6: #{tpu_custom_call.1} parent=1 // loop_footer
      %s37 = sadd.s32 1, %s33
    $region7: #{tpu_custom_call.1} parent=1 // loop_footer_branch
      %32 = sbr.rel target = $region3
    $region8: #{tpu_custom_call.1} parent=1 // loop_exit
      _
    %9244 = vsyncpa [#allocation4], 1
    %s9245 = scalar_lea.sflag [#allocation4], 1
    %9246 = vsyncpa %s9245, 1
    %9247 = vsyncpa [#allocation7], 1
    %s9248 = scalar_lea.sflag [#allocation7], 1
    %9249 = vsyncpa %s9248, 1
    %9250 = vsyncpa [#allocation10], 1
    %s9251 = scalar_lea.sflag [#allocation10], 1
    %9252 = vsyncpa %s9251, 1
    %9253 = vsyncpa [#allocation13], 1
    %s9254 = scalar_lea.sflag [#allocation13], 1
    %9255 = vsyncpa %s9254, 1
    %9256 = vsyncpa [#allocation5], 1
    %s9257 = scalar_lea.sflag [#allocation5], 1
    %9258 = vsyncpa %s9257, 1

</llo_original>
